<compile_context>
chip_gen: v7x
topology: tpu7x:2x2x1
jax: 0.10.0
libtpu: 0.0.40
codegen_flags: <defaults>
</compile_context>

<pallas_src>
import jax
import jax.numpy as jnp
from jax.experimental import pallas as pl
from jax.experimental.pallas import tpu as pltpu

VOCAB_SIZE = 65          # tinyshakespeare char vocabulary size
VOCAB_PAD = 128          # lane-dense padded vocab for the FC output
EMBEDDING_DIM = 128
HIDDEN_SIZE = 256
NUM_LAYERS = 2

# Explicit scoped-VMEM budget: above v5e's 16 MiB default, within v7x's 64 MiB
# physical / 32 MiB scoped, well within v6e.
_VMEM_LIMIT_BYTES = 32 * 1024 * 1024
# Budget for the double-buffered chunked streams (pre + hseq) in the recurrence.
_CHUNK_BUDGET_BYTES = 6 * 1024 * 1024


# ---------------------------------------------------------------------------
# Pallas kernels
# ---------------------------------------------------------------------------
def _matmul_bias_kernel(x_ref, w_ref, b_ref, o_ref):
    """(TILE_M, K) @ (K, N) + (1, N) -> (TILE_M, N). bf16 inputs, f32 accum."""
    o_ref[...] = (jnp.dot(x_ref[...], w_ref[...],
                          preferred_element_type=jnp.float32)
                  + b_ref[...]).astype(o_ref.dtype)


def _lstm_recurrence_kernel(pre_ref, whh_ref, h0_ref, c0_ref,
                            hseq_ref, hN_ref, cN_ref):
    """Sequential LSTM over one (batch-block, time-chunk) grid cell.

    pre_ref : (T_CHUNK, B_BLK, 4H) bf16  precomputed x @ W_ih^T + (b_ih + b_hh)
    whh_ref : (H, 4H)              bf16
    hN_ref / cN_ref are constant-index (over time) outputs and hold the running
    (h, c) state across the sequential time axis (accumulator pattern).
    Gate column order is [i, f, o, g] (reordered offline at init).
    """
    chunk = pl.program_id(1)                 # time-chunk index (sequential axis)

    @pl.when(chunk == 0)
    def _():
        hN_ref[...] = h0_ref[...]
        cN_ref[...] = c0_ref[...]

    H = hN_ref.shape[-1]
    t_chunk = pre_ref.shape[0]

    def step(t, carry):
        h_prev, c_prev = carry                               # f32 state
        # W_hh read inside the step: feeds the MXU directly, no 128-vreg
        # long-lived hoisted value.
        gates = (pre_ref[t].astype(jnp.float32)
                 + jnp.dot(h_prev.astype(jnp.bfloat16), whh_ref[...],
                           preferred_element_type=jnp.float32))
        sig = jax.nn.sigmoid(gates[:, :3 * H])               # one (B, 3H) EUP call
        g_g = jnp.tanh(gates[:, 3 * H:])                     # one (B, H)  EUP call
        i_g = sig[:, 0 * H:1 * H]
        f_g = sig[:, 1 * H:2 * H]
        o_g = sig[:, 2 * H:3 * H]
        c_new = f_g * c_prev + i_g * g_g
        h_new = o_g * jnp.tanh(c_new)
        hseq_ref[t] = h_new.astype(hseq_ref.dtype)           # bf16 layer output
        return h_new, c_new

    h_fin, c_fin = jax.lax.fori_loop(
        0, t_chunk, step, (hN_ref[...], cN_ref[...]),
        unroll=min(t_chunk, 8))                              # bounded unroll
    hN_ref[...] = h_fin
    cN_ref[...] = c_fin


# ---------------------------------------------------------------------------
# Wrappers
# ---------------------------------------------------------------------------
def matmul_bias(x, w, b, *, out_dtype=jnp.float32, tile_m=None):
    """x: (M, K) bf16, w: (K, N) bf16, b: (1, N) f32 -> (M, N) out_dtype."""
    M, K = x.shape
    N = w.shape[1]
    if tile_m is None:
        tile_m = 1024 if out_dtype == jnp.bfloat16 else 512
    tile_m = min(tile_m, ((M + 7) // 8) * 8)     # don't over-pad small inputs
    m_pad = ((M + tile_m - 1) // tile_m) * tile_m
    if m_pad != M:
        x = jnp.pad(x, ((0, m_pad - M), (0, 0)))
    out = pl.pallas_call(
        _matmul_bias_kernel,
        out_shape=jax.ShapeDtypeStruct((m_pad, N), out_dtype),
        grid_spec=pltpu.PrefetchScalarGridSpec(
            num_scalar_prefetch=0,
            grid=(m_pad // tile_m,),
            in_specs=[
                pl.BlockSpec((tile_m, K), lambda i: (i, 0)),     # activations
                pl.BlockSpec((K, N), lambda i: (0, 0)),          # weights (resident)
                pl.BlockSpec((1, N), lambda i: (0, 0)),          # bias (resident)
            ],
            out_specs=pl.BlockSpec((tile_m, N), lambda i: (i, 0)),
        ),
        compiler_params=pltpu.CompilerParams(
            dimension_semantics=("parallel",),
            vmem_limit_bytes=_VMEM_LIMIT_BYTES),
    )(x, w, b)
    return out[:M] if m_pad != M else out


def lstm_recurrence(pre, w_hh_t, h0, c0, *, t_chunk, n_batch_blocks=1):
    """pre: (T, B, 4H) bf16.  Returns (hseq (T,B,H) bf16, hN (B,H) f32, cN f32)."""
    T, B, G = pre.shape
    H = h0.shape[-1]
    b_blk = B // n_batch_blocks
    grid_spec = pltpu.PrefetchScalarGridSpec(
        num_scalar_prefetch=0,
        grid=(n_batch_blocks, T // t_chunk),
        in_specs=[
            pl.BlockSpec((t_chunk, b_blk, G), lambda b, c: (c, b, 0)),  # pre chunk
            pl.BlockSpec((H, G), lambda b, c: (0, 0)),                  # W_hh^T
            pl.BlockSpec((b_blk, H), lambda b, c: (b, 0)),              # h0
            pl.BlockSpec((b_blk, H), lambda b, c: (b, 0)),              # c0
        ],
        out_specs=[
            pl.BlockSpec((t_chunk, b_blk, H), lambda b, c: (c, b, 0)),  # h sequence
            pl.BlockSpec((b_blk, H), lambda b, c: (b, 0)),              # running h
            pl.BlockSpec((b_blk, H), lambda b, c: (b, 0)),              # running c
        ],
    )
    out_shapes = (jax.ShapeDtypeStruct((T, B, H), jnp.bfloat16),
                  jax.ShapeDtypeStruct((B, H), jnp.float32),
                  jax.ShapeDtypeStruct((B, H), jnp.float32))
    return pl.pallas_call(
        _lstm_recurrence_kernel,
        out_shape=out_shapes,
        grid_spec=grid_spec,
        compiler_params=pltpu.CompilerParams(
            # batch blocks independent (megacore on v7x); time is sequential
            dimension_semantics=("parallel", "arbitrary"),
            vmem_limit_bytes=_VMEM_LIMIT_BYTES),
    )(pre, w_hh_t, h0, c0)


def _pick_time_chunk(T, b_blk):
    """Largest divisor-of-T chunk whose double-buffered streams fit the budget."""
    # per-timestep bytes: pre (4H bf16) + hseq (H bf16), x2 pipeline buffers
    per_t = 2 * b_blk * (4 * HIDDEN_SIZE * 2 + HIDDEN_SIZE * 2)
    max_chunk = max(1, _CHUNK_BUDGET_BYTES // per_t)
    for c in (64, 32, 16, 8, 4, 2, 1):
        if T % c == 0 and c <= max_chunk:
            return c
    return 1


def _reorder_gates_rows(w):
    """PyTorch [i, f, g, o] row blocks -> [i, f, o, g] (pure re-parameterization)."""
    H = HIDDEN_SIZE
    return jnp.concatenate([w[:2 * H], w[3 * H:4 * H], w[2 * H:3 * H]], axis=0)


def init_params(key):
    """Deterministic parameter init mirroring the PyTorch module's shapes."""
    keys = jax.random.split(key, 3 + 4 * NUM_LAYERS)
    it = iter(keys)
    params = {}

    emb = 0.02 * jax.random.normal(next(it), (VOCAB_SIZE, EMBEDDING_DIM),
                                   jnp.float32)
    params["embedding"] = emb.astype(jnp.bfloat16)

    bound = 1.0 / float(jnp.sqrt(HIDDEN_SIZE))
    layers = []
    for layer in range(NUM_LAYERS):
        in_dim = EMBEDDING_DIM if layer == 0 else HIDDEN_SIZE
        w_ih = jax.random.uniform(next(it), (4 * HIDDEN_SIZE, in_dim),
                                  jnp.float32, -bound, bound)
        w_hh = jax.random.uniform(next(it), (4 * HIDDEN_SIZE, HIDDEN_SIZE),
                                  jnp.float32, -bound, bound)
        b_ih = jax.random.uniform(next(it), (4 * HIDDEN_SIZE,),
                                  jnp.float32, -bound, bound)
        b_hh = jax.random.uniform(next(it), (4 * HIDDEN_SIZE,),
                                  jnp.float32, -bound, bound)
        # Offline gate reorder [i,f,g,o] -> [i,f,o,g]
        w_ih = _reorder_gates_rows(w_ih)
        w_hh = _reorder_gates_rows(w_hh)
        bias = _reorder_gates_rows((b_ih + b_hh)[:, None])[:, 0]
        layers.append(dict(
            w_ih_t=w_ih.T.astype(jnp.bfloat16),              # (in_dim, 4H) bf16
            w_hh_t=w_hh.T.astype(jnp.bfloat16),              # (H, 4H)     bf16
            bias=bias.reshape(1, 4 * HIDDEN_SIZE)))          # f32
    params["lstm"] = layers

    # Fused embedding + layer-0 input projection:
    #   pre0[token] = emb[token] @ W_ih0^T + (b_ih0 + b_hh0)   -> (VOCAB, 4H)
    l0 = layers[0]
    params["l0_table"] = (
        params["embedding"].astype(jnp.float32)
        @ l0["w_ih_t"].astype(jnp.float32) + l0["bias"]
    ).astype(jnp.bfloat16)

    w_fc = jax.random.uniform(next(it), (VOCAB_SIZE, HIDDEN_SIZE),
                              jnp.float32, -bound, bound)
    b_fc = jax.random.uniform(next(it), (VOCAB_SIZE,),
                              jnp.float32, -bound, bound)
    w_fc_t = jnp.zeros((HIDDEN_SIZE, VOCAB_PAD),
                       jnp.float32).at[:, :VOCAB_SIZE].set(w_fc.T)
    b_fc_p = jnp.zeros((1, VOCAB_PAD), jnp.float32).at[:, :VOCAB_SIZE].set(b_fc)
    params["fc_w_t"] = w_fc_t.astype(jnp.bfloat16)           # (H, 128) lane-dense
    params["fc_b"] = b_fc_p                                  # (1, 128) f32
    return params


@jax.jit
def char_lstm_forward(params, tokens, hidden=None):
    """tokens: (B, T) int32 -> (logits (B,T,V), (h_n (L,B,H), c_n (L,B,H)))."""
    B, T = tokens.shape
    b_pad = ((B + 15) // 16) * 16              # packed-bf16 sublane-aligned batch
    n_bblk = 2 if (b_pad % 32 == 0) else 1     # split batch across TCs (v7x)
    t_chunk = _pick_time_chunk(T, b_pad // n_bblk)

    tok_tm = tokens.T                          # (T, B), time-major
    if b_pad != B:
        tok_tm = jnp.pad(tok_tm, ((0, 0), (0, b_pad - B)))

    if hidden is None:
        h_all = jnp.zeros((NUM_LAYERS, b_pad, HIDDEN_SIZE), jnp.float32)
        c_all = jnp.zeros((NUM_LAYERS, b_pad, HIDDEN_SIZE), jnp.float32)
    else:
        h_in, c_in = hidden
        pad = b_pad - B
        h_all = jnp.pad(h_in.astype(jnp.float32), ((0, 0), (0, pad), (0, 0)))
        c_all = jnp.pad(c_in.astype(jnp.float32), ((0, 0), (0, pad), (0, 0)))

    h_finals, c_finals = [], []
    x = None
    for layer in range(NUM_LAYERS):
        p = params["lstm"][layer]
        if layer == 0:
            # Fused embedding + input projection: one gather, no matmul pass.
            pre = jnp.take(params["l0_table"], tok_tm, axis=0)   # (T,b_pad,4H) bf16
        else:
            d_in = x.shape[-1]
            pre = matmul_bias(x.reshape(T * b_pad, d_in), p["w_ih_t"], p["bias"],
                              out_dtype=jnp.bfloat16)
            pre = pre.reshape(T, b_pad, 4 * HIDDEN_SIZE)
        x, h_n, c_n = lstm_recurrence(pre, p["w_hh_t"],
                                      h_all[layer], c_all[layer],
                                      t_chunk=t_chunk, n_batch_blocks=n_bblk)
        h_finals.append(h_n)
        c_finals.append(c_n)
        # TODO(synk): inter-layer LSTM dropout (p=0.3) is identity in eval mode.

    # TODO(synk): nn.Dropout before the FC layer is identity in eval mode.
    flat = x.reshape(T * b_pad, HIDDEN_SIZE)                 # bf16
    logits = matmul_bias(flat, params["fc_w_t"], params["fc_b"],
                         out_dtype=jnp.float32)
    logits = logits.reshape(T, b_pad, VOCAB_PAD)
    logits = jnp.transpose(logits, (1, 0, 2))[:B, :, :VOCAB_SIZE]  # (B, T, V)

    h_n = jnp.stack(h_finals, axis=0)[:, :B]                 # (L, B, H)
    c_n = jnp.stack(c_finals, axis=0)[:, :B]
    return logits, (h_n, c_n)


# ---------------------------------------------------------------------------
# Pure-JAX f32 reference (same math, f32 copies of the bf16 weights;
# gate order [i, f, o, g] matches the offline reorder)
# ---------------------------------------------------------------------------
def _reference_forward(params, tokens):
    B, T = tokens.shape
    H = HIDDEN_SIZE
    emb = params["embedding"].astype(jnp.float32)
    x = jnp.take(emb, tokens, axis=0)                        # (B, T, D)

    h_finals, c_finals = [], []
    for layer in range(NUM_LAYERS):
        p = params["lstm"][layer]
        w_ih_t = p["w_ih_t"].astype(jnp.float32)
        w_hh_t = p["w_hh_t"].astype(jnp.float32)
        bias = p["bias"]
        h = jnp.zeros((B, H), jnp.float32)
        c = jnp.zeros((B, H), jnp.float32)
        outs = []
        for t in range(T):
            g = x[:, t] @ w_ih_t + h @ w_hh_t + bias
            i = jax.nn.sigmoid(g[:, :H])
            f = jax.nn.sigmoid(g[:, H:2 * H])
            o = jax.nn.sigmoid(g[:, 2 * H:3 * H])
            gg = jnp.tanh(g[:, 3 * H:])
            c = f * c + i * gg
            h = o * jnp.tanh(c)
            outs.append(h)
        x = jnp.stack(outs, axis=1)                          # (B, T, H)
        h_finals.append(h)
        c_finals.append(c)

    w_fc = params["fc_w_t"].astype(jnp.float32)[:, :VOCAB_SIZE]
    b_fc = params["fc_b"][:, :VOCAB_SIZE]
    logits = x @ w_fc + b_fc
    return logits, (jnp.stack(h_finals), jnp.stack(c_finals))


if __name__ == "__main__":
    key = jax.random.PRNGKey(0)
    pkey, tkey = jax.random.split(key)
    params = init_params(pkey)

    B, T = 2, 8
    tokens = jax.random.randint(tkey, (B, T), 0, VOCAB_SIZE, dtype=jnp.int32)

    logits, (h_n, c_n) = char_lstm_forward(params, tokens)
    jax.block_until_ready((logits, h_n, c_n))

    assert logits.shape == (B, T, VOCAB_SIZE), logits.shape
    assert h_n.shape == (NUM_LAYERS, B, HIDDEN_SIZE), h_n.shape
    assert c_n.shape == (NUM_LAYERS, B, HIDDEN_SIZE), c_n.shape

    ref_logits, (ref_h, ref_c) = _reference_forward(params, tokens)
    # bf16 matmul inputs / bf16 pre-gates / bf16 layer-to-layer activations
    # => loose tolerance.
    assert jnp.allclose(logits, ref_logits, atol=5e-2, rtol=5e-2), \
        float(jnp.max(jnp.abs(logits - ref_logits)))
    assert jnp.allclose(h_n, ref_h, atol=5e-2, rtol=5e-2), \
        float(jnp.max(jnp.abs(h_n - ref_h)))
    assert jnp.allclose(c_n, ref_c, atol=5e-2, rtol=5e-2), \
        float(jnp.max(jnp.abs(c_n - ref_c)))

    print("KERNEL_OK")
</pallas_src>

<mosaic_0001>
module attributes {stable_mosaic.version = 11 : i64} {
  func.func @_matmul_bias_kernel(%arg0: i32, %arg1: memref<128x256xbf16, #tpu.memory_space<vmem>>, %arg2: memref<256x1024xbf16, #tpu.memory_space<vmem>>, %arg3: memref<1x1024xf32, #tpu.memory_space<vmem>>, %arg4: memref<128x1024xbf16, #tpu.memory_space<vmem>>) attributes {dimension_semantics = [#tpu.dimension_semantics<parallel>], iteration_bounds = array<i64: 1>, scalar_prefetch = 0 : i64, scratch_operands = 0 : i64, tpu.core_type = #tpu.core_type<tc>, window_params = [{transform_indices = @transform_0, window_bounds = array<i64: 128, 256>}, {pipeline_mode = #tpu.pipeline_mode<synchronous>, transform_indices = @transform_1, window_bounds = array<i64: 256, 1024>}, {pipeline_mode = #tpu.pipeline_mode<synchronous>, transform_indices = @transform_2, window_bounds = array<i64: 1, 1024>}, {transform_indices = @transform_3, window_bounds = array<i64: 128, 1024>}]} {
    %c0 = arith.constant 0 : index
    %c0_0 = arith.constant 0 : index
    %0 = vector.load %arg1[%c0, %c0_0] : memref<128x256xbf16, #tpu.memory_space<vmem>>, vector<128x256xbf16>
    %c0_1 = arith.constant 0 : index
    %c0_2 = arith.constant 0 : index
    %1 = vector.load %arg2[%c0_1, %c0_2] : memref<256x1024xbf16, #tpu.memory_space<vmem>>, vector<256x1024xbf16>
    %cst = arith.constant dense<0.000000e+00> : vector<128x1024xf32>
    %2 = tpu.matmul %0, %1, %cst {dimension_numbers = #tpu.dot_dimension_numbers<[1], [0], [0], [1], [0, 0, 1, 1], [], []>} : vector<128x256xbf16>, vector<256x1024xbf16>, vector<128x1024xf32> -> vector<128x1024xf32>
    %c0_3 = arith.constant 0 : index
    %c0_4 = arith.constant 0 : index
    %3 = vector.load %arg3[%c0_3, %c0_4] : memref<1x1024xf32, #tpu.memory_space<vmem>>, vector<1x1024xf32>
    %4 = vector.broadcast %3 : vector<1x1024xf32> to vector<128x1024xf32>
    %5 = arith.addf %2, %4 : vector<128x1024xf32>
    %6 = arith.truncf %5 : vector<128x1024xf32> to vector<128x1024xbf16>
    %c0_5 = arith.constant 0 : index
    %c0_6 = arith.constant 0 : index
    %7 = vector.load %arg4[%c0_5, %c0_6] : memref<128x1024xbf16, #tpu.memory_space<vmem>>, vector<128x1024xbf16>
    tpu.vector_store %arg4[%c0_5, %c0_6], %6 {strides = array<i32>} : memref<128x1024xbf16, #tpu.memory_space<vmem>>, vector<128x1024xbf16>,
    return
  }
  func.func @transform_0(%arg0: i32) -> (i32, i32) {
    %c0_i32 = arith.constant 0 : i32
    %c0_i32_0 = arith.constant 0 : i32
    return %arg0, %c0_i32 : i32, i32
  }
  func.func @transform_1(%arg0: i32) -> (i32, i32) {
    %c0_i32 = arith.constant 0 : i32
    %c0_i32_0 = arith.constant 0 : i32
    %c0_i32_1 = arith.constant 0 : i32
    return %c0_i32, %c0_i32_0 : i32, i32
  }
  func.func @transform_2(%arg0: i32) -> (i32, i32) {
    %c0_i32 = arith.constant 0 : i32
    %c0_i32_0 = arith.constant 0 : i32
    %c0_i32_1 = arith.constant 0 : i32
    return %c0_i32, %c0_i32_0 : i32, i32
  }
  func.func @transform_3(%arg0: i32) -> (i32, i32) {
    %c0_i32 = arith.constant 0 : i32
    %c0_i32_0 = arith.constant 0 : i32
    return %arg0, %c0_i32 : i32, i32
  }
}

module attributes {stable_mosaic.version = 11 : i64} {
  func.func @_matmul_bias_kernel(%arg0: i32, %arg1: memref<128x256xbf16, #tpu.memory_space<vmem>>, %arg2: memref<256x128xbf16, #tpu.memory_space<vmem>>, %arg3: memref<1x128xf32, #tpu.memory_space<vmem>>, %arg4: memref<128x128xf32, #tpu.memory_space<vmem>>) attributes {dimension_semantics = [#tpu.dimension_semantics<parallel>], iteration_bounds = array<i64: 1>, scalar_prefetch = 0 : i64, scratch_operands = 0 : i64, tpu.core_type = #tpu.core_type<tc>, window_params = [{transform_indices = @transform_0, window_bounds = array<i64: 128, 256>}, {pipeline_mode = #tpu.pipeline_mode<synchronous>, transform_indices = @transform_1, window_bounds = array<i64: 256, 128>}, {pipeline_mode = #tpu.pipeline_mode<synchronous>, transform_indices = @transform_2, window_bounds = array<i64: 1, 128>}, {transform_indices = @transform_3, window_bounds = array<i64: 128, 128>}]} {
    %c0 = arith.constant 0 : index
    %c0_0 = arith.constant 0 : index
    %0 = vector.load %arg1[%c0, %c0_0] : memref<128x256xbf16, #tpu.memory_space<vmem>>, vector<128x256xbf16>
    %c0_1 = arith.constant 0 : index
    %c0_2 = arith.constant 0 : index
    %1 = vector.load %arg2[%c0_1, %c0_2] : memref<256x128xbf16, #tpu.memory_space<vmem>>, vector<256x128xbf16>
    %cst = arith.constant dense<0.000000e+00> : vector<128x128xf32>
    %2 = tpu.matmul %0, %1, %cst {dimension_numbers = #tpu.dot_dimension_numbers<[1], [0], [0], [1], [0, 0, 1, 1], [], []>} : vector<128x256xbf16>, vector<256x128xbf16>, vector<128x128xf32> -> vector<128x128xf32>
    %c0_3 = arith.constant 0 : index
    %c0_4 = arith.constant 0 : index
    %3 = vector.load %arg3[%c0_3, %c0_4] : memref<1x128xf32, #tpu.memory_space<vmem>>, vector<1x128xf32>
    %4 = vector.broadcast %3 : vector<1x128xf32> to vector<128x128xf32>
    %5 = arith.addf %2, %4 : vector<128x128xf32>
    %c0_5 = arith.constant 0 : index
    %c0_6 = arith.constant 0 : index
    %6 = vector.load %arg4[%c0_5, %c0_6] : memref<128x128xf32, #tpu.memory_space<vmem>>, vector<128x128xf32>
    tpu.vector_store %arg4[%c0_5, %c0_6], %5 {strides = array<i32>} : memref<128x128xf32, #tpu.memory_space<vmem>>, vector<128x128xf32>,
    return
  }
  func.func @transform_0(%arg0: i32) -> (i32, i32) {
    %c0_i32 = arith.constant 0 : i32
    %c0_i32_0 = arith.constant 0 : i32
    return %arg0, %c0_i32 : i32, i32
  }
  func.func @transform_1(%arg0: i32) -> (i32, i32) {
    %c0_i32 = arith.constant 0 : i32
    %c0_i32_0 = arith.constant 0 : i32
    %c0_i32_1 = arith.constant 0 : i32
    return %c0_i32, %c0_i32_0 : i32, i32
  }
  func.func @transform_2(%arg0: i32) -> (i32, i32) {
    %c0_i32 = arith.constant 0 : i32
    %c0_i32_0 = arith.constant 0 : i32
    %c0_i32_1 = arith.constant 0 : i32
    return %c0_i32, %c0_i32_0 : i32, i32
  }
  func.func @transform_3(%arg0: i32) -> (i32, i32) {
    %c0_i32 = arith.constant 0 : i32
    %c0_i32_0 = arith.constant 0 : i32
    return %arg0, %c0_i32 : i32, i32
  }
}

module attributes {stable_mosaic.version = 11 : i64} {
  func.func @_lstm_recurrence_kernel(%arg0: i32, %arg1: i32, %arg2: memref<8x16x1024xbf16, #tpu.memory_space<vmem>>, %arg3: memref<256x1024xbf16, #tpu.memory_space<vmem>>, %arg4: memref<16x256xf32, #tpu.memory_space<vmem>>, %arg5: memref<16x256xf32, #tpu.memory_space<vmem>>, %arg6: memref<8x16x256xbf16, #tpu.memory_space<vmem>>, %arg7: memref<16x256xf32, #tpu.memory_space<vmem>>, %arg8: memref<16x256xf32, #tpu.memory_space<vmem>>) attributes {dimension_semantics = [#tpu.dimension_semantics<parallel>, #tpu.dimension_semantics<arbitrary>], iteration_bounds = array<i64: 1, 1>, scalar_prefetch = 0 : i64, scratch_operands = 0 : i64, tpu.core_type = #tpu.core_type<tc>, window_params = [{transform_indices = @transform_0, window_bounds = array<i64: 8, 16, 1024>}, {pipeline_mode = #tpu.pipeline_mode<synchronous>, transform_indices = @transform_1, window_bounds = array<i64: 256, 1024>}, {transform_indices = @transform_2, window_bounds = array<i64: 16, 256>}, {transform_indices = @transform_3, window_bounds = array<i64: 16, 256>}, {transform_indices = @transform_4, window_bounds = array<i64: 8, 16, 256>}, {transform_indices = @transform_5, window_bounds = array<i64: 16, 256>}, {transform_indices = @transform_6, window_bounds = array<i64: 16, 256>}]} {
    %c0_i32 = arith.constant 0 : i32
    %0 = arith.cmpi eq, %arg1, %c0_i32 : i32
    %1 = arith.extui %0 : i1 to i32
    %c0_i32_0 = arith.constant 0 : i32
    %2 = arith.cmpi ne, %1, %c0_i32_0 : i32
    scf.if %2 {
      %c0_72 = arith.constant 0 : index
      %c0_73 = arith.constant 0 : index
      %239 = vector.load %arg4[%c0_72, %c0_73] : memref<16x256xf32, #tpu.memory_space<vmem>>, vector<16x256xf32>
      %c0_74 = arith.constant 0 : index
      %c0_75 = arith.constant 0 : index
      %240 = vector.load %arg7[%c0_74, %c0_75] : memref<16x256xf32, #tpu.memory_space<vmem>>, vector<16x256xf32>
      tpu.vector_store %arg7[%c0_74, %c0_75], %239 {strides = array<i32>} : memref<16x256xf32, #tpu.memory_space<vmem>>, vector<16x256xf32>,
      %c0_76 = arith.constant 0 : index
      %c0_77 = arith.constant 0 : index
      %241 = vector.load %arg5[%c0_76, %c0_77] : memref<16x256xf32, #tpu.memory_space<vmem>>, vector<16x256xf32>
      %c0_78 = arith.constant 0 : index
      %c0_79 = arith.constant 0 : index
      %242 = vector.load %arg8[%c0_78, %c0_79] : memref<16x256xf32, #tpu.memory_space<vmem>>, vector<16x256xf32>
      tpu.vector_store %arg8[%c0_78, %c0_79], %241 {strides = array<i32>} : memref<16x256xf32, #tpu.memory_space<vmem>>, vector<16x256xf32>,
    } else {
    }
    %c0 = arith.constant 0 : index
    %c0_1 = arith.constant 0 : index
    %3 = vector.load %arg7[%c0, %c0_1] : memref<16x256xf32, #tpu.memory_space<vmem>>, vector<16x256xf32>
    %c0_2 = arith.constant 0 : index
    %c0_3 = arith.constant 0 : index
    %4 = vector.load %arg8[%c0_2, %c0_3] : memref<16x256xf32, #tpu.memory_space<vmem>>, vector<16x256xf32>
    %c0_i32_4 = arith.constant 0 : i32
    %5 = arith.index_cast %c0_i32_4 : i32 to index
    %c0_5 = arith.constant 0 : index
    %c0_6 = arith.constant 0 : index
    %6 = vector.load %arg2[%5, %c0_5, %c0_6] : memref<8x16x1024xbf16, #tpu.memory_space<vmem>>, vector<1x16x1024xbf16>
    %7 = vector.shape_cast %6 : vector<1x16x1024xbf16> to vector<16x1024xbf16>
    %8 = arith.extf %7 : vector<16x1024xbf16> to vector<16x1024xf32>
    %9 = arith.truncf %3 : vector<16x256xf32> to vector<16x256xbf16>
    %c0_7 = arith.constant 0 : index
    %c0_8 = arith.constant 0 : index
    %10 = vector.load %arg3[%c0_7, %c0_8] : memref<256x1024xbf16, #tpu.memory_space<vmem>>, vector<256x1024xbf16>
    %cst = arith.constant dense<0.000000e+00> : vector<16x1024xf32>
    %11 = tpu.matmul %9, %10, %cst {dimension_numbers = #tpu.dot_dimension_numbers<[1], [0], [0], [1], [0, 0, 1, 1], [], []>} : vector<16x256xbf16>, vector<256x1024xbf16>, vector<16x1024xf32> -> vector<16x1024xf32>
    %12 = arith.addf %8, %11 : vector<16x1024xf32>
    %13 = vector.extract_strided_slice %12 {offsets = [0, 0], sizes = [16, 768], strides = [1, 1]} : vector<16x1024xf32> to vector<16x768xf32>
    %14 = arith.negf %13 : vector<16x768xf32>
    %15 = math.exp %14 : vector<16x768xf32>
    %cst_9 = arith.constant 1.000000e+00 : f32
    %16 = vector.broadcast %cst_9 : f32 to vector<16x768xf32>
    %17 = arith.addf %16, %15 : vector<16x768xf32>
    %18 = arith.divf %16, %17 : vector<16x768xf32>
    %19 = vector.extract_strided_slice %12 {offsets = [0, 768], sizes = [16, 256], strides = [1, 1]} : vector<16x1024xf32> to vector<16x256xf32>
    %20 = math.tanh %19 : vector<16x256xf32>
    %21 = vector.extract_strided_slice %18 {offsets = [0, 0], sizes = [16, 256], strides = [1, 1]} : vector<16x768xf32> to vector<16x256xf32>
    %22 = vector.extract_strided_slice %18 {offsets = [0, 256], sizes = [16, 256], strides = [1, 1]} : vector<16x768xf32> to vector<16x256xf32>
    %23 = vector.extract_strided_slice %18 {offsets = [0, 512], sizes = [16, 256], strides = [1, 1]} : vector<16x768xf32> to vector<16x256xf32>
    %24 = arith.mulf %22, %4 : vector<16x256xf32>
    %25 = arith.mulf %21, %20 : vector<16x256xf32>
    %26 = arith.addf %24, %25 : vector<16x256xf32>
    %27 = math.tanh %26 : vector<16x256xf32>
    %28 = arith.mulf %23, %27 : vector<16x256xf32>
    %29 = arith.truncf %28 : vector<16x256xf32> to vector<16x256xbf16>
    %30 = arith.index_cast %c0_i32_4 : i32 to index
    %c0_10 = arith.constant 0 : index
    %c0_11 = arith.constant 0 : index
    %31 = vector.load %arg6[%30, %c0_10, %c0_11] : memref<8x16x256xbf16, #tpu.memory_space<vmem>>, vector<1x16x256xbf16>
    %32 = vector.shape_cast %31 : vector<1x16x256xbf16> to vector<16x256xbf16>
    %33 = vector.shape_cast %29 : vector<16x256xbf16> to vector<1x16x256xbf16>
    tpu.vector_store %arg6[%30, %c0_10, %c0_11], %33 {strides = array<i32>} : memref<8x16x256xbf16, #tpu.memory_space<vmem>>, vector<1x16x256xbf16>,
    %c1_i32 = arith.constant 1 : i32
    %34 = arith.index_cast %c1_i32 : i32 to index
    %c0_12 = arith.constant 0 : index
    %c0_13 = arith.constant 0 : index
    %35 = vector.load %arg2[%34, %c0_12, %c0_13] : memref<8x16x1024xbf16, #tpu.memory_space<vmem>>, vector<1x16x1024xbf16>
    %36 = vector.shape_cast %35 : vector<1x16x1024xbf16> to vector<16x1024xbf16>
    %37 = arith.extf %36 : vector<16x1024xbf16> to vector<16x1024xf32>
    %38 = arith.truncf %28 : vector<16x256xf32> to vector<16x256xbf16>
    %c0_14 = arith.constant 0 : index
    %c0_15 = arith.constant 0 : index
    %39 = vector.load %arg3[%c0_14, %c0_15] : memref<256x1024xbf16, #tpu.memory_space<vmem>>, vector<256x1024xbf16>
    %cst_16 = arith.constant dense<0.000000e+00> : vector<16x1024xf32>
    %40 = tpu.matmul %38, %39, %cst_16 {dimension_numbers = #tpu.dot_dimension_numbers<[1], [0], [0], [1], [0, 0, 1, 1], [], []>} : vector<16x256xbf16>, vector<256x1024xbf16>, vector<16x1024xf32> -> vector<16x1024xf32>
    %41 = arith.addf %37, %40 : vector<16x1024xf32>
    %42 = vector.extract_strided_slice %41 {offsets = [0, 0], sizes = [16, 768], strides = [1, 1]} : vector<16x1024xf32> to vector<16x768xf32>
    %43 = arith.negf %42 : vector<16x768xf32>
    %44 = math.exp %43 : vector<16x768xf32>
    %cst_17 = arith.constant 1.000000e+00 : f32
    %45 = vector.broadcast %cst_17 : f32 to vector<16x768xf32>
    %46 = arith.addf %45, %44 : vector<16x768xf32>
    %47 = arith.divf %45, %46 : vector<16x768xf32>
    %48 = vector.extract_strided_slice %41 {offsets = [0, 768], sizes = [16, 256], strides = [1, 1]} : vector<16x1024xf32> to vector<16x256xf32>
    %49 = math.tanh %48 : vector<16x256xf32>
    %50 = vector.extract_strided_slice %47 {offsets = [0, 0], sizes = [16, 256], strides = [1, 1]} : vector<16x768xf32> to vector<16x256xf32>
    %51 = vector.extract_strided_slice %47 {offsets = [0, 256], sizes = [16, 256], strides = [1, 1]} : vector<16x768xf32> to vector<16x256xf32>
    %52 = vector.extract_strided_slice %47 {offsets = [0, 512], sizes = [16, 256], strides = [1, 1]} : vector<16x768xf32> to vector<16x256xf32>
    %53 = arith.mulf %51, %26 : vector<16x256xf32>
    %54 = arith.mulf %50, %49 : vector<16x256xf32>
    %55 = arith.addf %53, %54 : vector<16x256xf32>
    %56 = math.tanh %55 : vector<16x256xf32>
    %57 = arith.mulf %52, %56 : vector<16x256xf32>
    %58 = arith.truncf %57 : vector<16x256xf32> to vector<16x256xbf16>
    %59 = arith.index_cast %c1_i32 : i32 to index
    %c0_18 = arith.constant 0 : index
    %c0_19 = arith.constant 0 : index
    %60 = vector.load %arg6[%59, %c0_18, %c0_19] : memref<8x16x256xbf16, #tpu.memory_space<vmem>>, vector<1x16x256xbf16>
    %61 = vector.shape_cast %60 : vector<1x16x256xbf16> to vector<16x256xbf16>
    %62 = vector.shape_cast %58 : vector<16x256xbf16> to vector<1x16x256xbf16>
    tpu.vector_store %arg6[%59, %c0_18, %c0_19], %62 {strides = array<i32>} : memref<8x16x256xbf16, #tpu.memory_space<vmem>>, vector<1x16x256xbf16>,
    %c2_i32 = arith.constant 2 : i32
    %63 = arith.index_cast %c2_i32 : i32 to index
    %c0_20 = arith.constant 0 : index
    %c0_21 = arith.constant 0 : index
    %64 = vector.load %arg2[%63, %c0_20, %c0_21] : memref<8x16x1024xbf16, #tpu.memory_space<vmem>>, vector<1x16x1024xbf16>
    %65 = vector.shape_cast %64 : vector<1x16x1024xbf16> to vector<16x1024xbf16>
    %66 = arith.extf %65 : vector<16x1024xbf16> to vector<16x1024xf32>
    %67 = arith.truncf %57 : vector<16x256xf32> to vector<16x256xbf16>
    %c0_22 = arith.constant 0 : index
    %c0_23 = arith.constant 0 : index
    %68 = vector.load %arg3[%c0_22, %c0_23] : memref<256x1024xbf16, #tpu.memory_space<vmem>>, vector<256x1024xbf16>
    %cst_24 = arith.constant dense<0.000000e+00> : vector<16x1024xf32>
    %69 = tpu.matmul %67, %68, %cst_24 {dimension_numbers = #tpu.dot_dimension_numbers<[1], [0], [0], [1], [0, 0, 1, 1], [], []>} : vector<16x256xbf16>, vector<256x1024xbf16>, vector<16x1024xf32> -> vector<16x1024xf32>
    %70 = arith.addf %66, %69 : vector<16x1024xf32>
    %71 = vector.extract_strided_slice %70 {offsets = [0, 0], sizes = [16, 768], strides = [1, 1]} : vector<16x1024xf32> to vector<16x768xf32>
    %72 = arith.negf %71 : vector<16x768xf32>
    %73 = math.exp %72 : vector<16x768xf32>
    %cst_25 = arith.constant 1.000000e+00 : f32
    %74 = vector.broadcast %cst_25 : f32 to vector<16x768xf32>
    %75 = arith.addf %74, %73 : vector<16x768xf32>
    %76 = arith.divf %74, %75 : vector<16x768xf32>
    %77 = vector.extract_strided_slice %70 {offsets = [0, 768], sizes = [16, 256], strides = [1, 1]} : vector<16x1024xf32> to vector<16x256xf32>
    %78 = math.tanh %77 : vector<16x256xf32>
    %79 = vector.extract_strided_slice %76 {offsets = [0, 0], sizes = [16, 256], strides = [1, 1]} : vector<16x768xf32> to vector<16x256xf32>
    %80 = vector.extract_strided_slice %76 {offsets = [0, 256], sizes = [16, 256], strides = [1, 1]} : vector<16x768xf32> to vector<16x256xf32>
    %81 = vector.extract_strided_slice %76 {offsets = [0, 512], sizes = [16, 256], strides = [1, 1]} : vector<16x768xf32> to vector<16x256xf32>
    %82 = arith.mulf %80, %55 : vector<16x256xf32>
    %83 = arith.mulf %79, %78 : vector<16x256xf32>
    %84 = arith.addf %82, %83 : vector<16x256xf32>
    %85 = math.tanh %84 : vector<16x256xf32>
    %86 = arith.mulf %81, %85 : vector<16x256xf32>
    %87 = arith.truncf %86 : vector<16x256xf32> to vector<16x256xbf16>
    %88 = arith.index_cast %c2_i32 : i32 to index
    %c0_26 = arith.constant 0 : index
    %c0_27 = arith.constant 0 : index
    %89 = vector.load %arg6[%88, %c0_26, %c0_27] : memref<8x16x256xbf16, #tpu.memory_space<vmem>>, vector<1x16x256xbf16>
    %90 = vector.shape_cast %89 : vector<1x16x256xbf16> to vector<16x256xbf16>
    %91 = vector.shape_cast %87 : vector<16x256xbf16> to vector<1x16x256xbf16>
    tpu.vector_store %arg6[%88, %c0_26, %c0_27], %91 {strides = array<i32>} : memref<8x16x256xbf16, #tpu.memory_space<vmem>>, vector<1x16x256xbf16>,
    %c3_i32 = arith.constant 3 : i32
    %92 = arith.index_cast %c3_i32 : i32 to index
    %c0_28 = arith.constant 0 : index
    %c0_29 = arith.constant 0 : index
    %93 = vector.load %arg2[%92, %c0_28, %c0_29] : memref<8x16x1024xbf16, #tpu.memory_space<vmem>>, vector<1x16x1024xbf16>
    %94 = vector.shape_cast %93 : vector<1x16x1024xbf16> to vector<16x1024xbf16>
    %95 = arith.extf %94 : vector<16x1024xbf16> to vector<16x1024xf32>
    %96 = arith.truncf %86 : vector<16x256xf32> to vector<16x256xbf16>
    %c0_30 = arith.constant 0 : index
    %c0_31 = arith.constant 0 : index
    %97 = vector.load %arg3[%c0_30, %c0_31] : memref<256x1024xbf16, #tpu.memory_space<vmem>>, vector<256x1024xbf16>
    %cst_32 = arith.constant dense<0.000000e+00> : vector<16x1024xf32>
    %98 = tpu.matmul %96, %97, %cst_32 {dimension_numbers = #tpu.dot_dimension_numbers<[1], [0], [0], [1], [0, 0, 1, 1], [], []>} : vector<16x256xbf16>, vector<256x1024xbf16>, vector<16x1024xf32> -> vector<16x1024xf32>
    %99 = arith.addf %95, %98 : vector<16x1024xf32>
    %100 = vector.extract_strided_slice %99 {offsets = [0, 0], sizes = [16, 768], strides = [1, 1]} : vector<16x1024xf32> to vector<16x768xf32>
    %101 = arith.negf %100 : vector<16x768xf32>
    %102 = math.exp %101 : vector<16x768xf32>
    %cst_33 = arith.constant 1.000000e+00 : f32
    %103 = vector.broadcast %cst_33 : f32 to vector<16x768xf32>
    %104 = arith.addf %103, %102 : vector<16x768xf32>
    %105 = arith.divf %103, %104 : vector<16x768xf32>
    %106 = vector.extract_strided_slice %99 {offsets = [0, 768], sizes = [16, 256], strides = [1, 1]} : vector<16x1024xf32> to vector<16x256xf32>
    %107 = math.tanh %106 : vector<16x256xf32>
    %108 = vector.extract_strided_slice %105 {offsets = [0, 0], sizes = [16, 256], strides = [1, 1]} : vector<16x768xf32> to vector<16x256xf32>
    %109 = vector.extract_strided_slice %105 {offsets = [0, 256], sizes = [16, 256], strides = [1, 1]} : vector<16x768xf32> to vector<16x256xf32>
    %110 = vector.extract_strided_slice %105 {offsets = [0, 512], sizes = [16, 256], strides = [1, 1]} : vector<16x768xf32> to vector<16x256xf32>
    %111 = arith.mulf %109, %84 : vector<16x256xf32>
    %112 = arith.mulf %108, %107 : vector<16x256xf32>
    %113 = arith.addf %111, %112 : vector<16x256xf32>
    %114 = math.tanh %113 : vector<16x256xf32>
    %115 = arith.mulf %110, %114 : vector<16x256xf32>
    %116 = arith.truncf %115 : vector<16x256xf32> to vector<16x256xbf16>
    %117 = arith.index_cast %c3_i32 : i32 to index
    %c0_34 = arith.constant 0 : index
    %c0_35 = arith.constant 0 : index
    %118 = vector.load %arg6[%117, %c0_34, %c0_35] : memref<8x16x256xbf16, #tpu.memory_space<vmem>>, vector<1x16x256xbf16>
    %119 = vector.shape_cast %118 : vector<1x16x256xbf16> to vector<16x256xbf16>
    %120 = vector.shape_cast %116 : vector<16x256xbf16> to vector<1x16x256xbf16>
    tpu.vector_store %arg6[%117, %c0_34, %c0_35], %120 {strides = array<i32>} : memref<8x16x256xbf16, #tpu.memory_space<vmem>>, vector<1x16x256xbf16>,
    %c4_i32 = arith.constant 4 : i32
    %121 = arith.index_cast %c4_i32 : i32 to index
    %c0_36 = arith.constant 0 : index
    %c0_37 = arith.constant 0 : index
    %122 = vector.load %arg2[%121, %c0_36, %c0_37] : memref<8x16x1024xbf16, #tpu.memory_space<vmem>>, vector<1x16x1024xbf16>
    %123 = vector.shape_cast %122 : vector<1x16x1024xbf16> to vector<16x1024xbf16>
    %124 = arith.extf %123 : vector<16x1024xbf16> to vector<16x1024xf32>
    %125 = arith.truncf %115 : vector<16x256xf32> to vector<16x256xbf16>
    %c0_38 = arith.constant 0 : index
    %c0_39 = arith.constant 0 : index
    %126 = vector.load %arg3[%c0_38, %c0_39] : memref<256x1024xbf16, #tpu.memory_space<vmem>>, vector<256x1024xbf16>
    %cst_40 = arith.constant dense<0.000000e+00> : vector<16x1024xf32>
    %127 = tpu.matmul %125, %126, %cst_40 {dimension_numbers = #tpu.dot_dimension_numbers<[1], [0], [0], [1], [0, 0, 1, 1], [], []>} : vector<16x256xbf16>, vector<256x1024xbf16>, vector<16x1024xf32> -> vector<16x1024xf32>
    %128 = arith.addf %124, %127 : vector<16x1024xf32>
    %129 = vector.extract_strided_slice %128 {offsets = [0, 0], sizes = [16, 768], strides = [1, 1]} : vector<16x1024xf32> to vector<16x768xf32>
    %130 = arith.negf %129 : vector<16x768xf32>
    %131 = math.exp %130 : vector<16x768xf32>
    %cst_41 = arith.constant 1.000000e+00 : f32
    %132 = vector.broadcast %cst_41 : f32 to vector<16x768xf32>
    %133 = arith.addf %132, %131 : vector<16x768xf32>
    %134 = arith.divf %132, %133 : vector<16x768xf32>
    %135 = vector.extract_strided_slice %128 {offsets = [0, 768], sizes = [16, 256], strides = [1, 1]} : vector<16x1024xf32> to vector<16x256xf32>
    %136 = math.tanh %135 : vector<16x256xf32>
    %137 = vector.extract_strided_slice %134 {offsets = [0, 0], sizes = [16, 256], strides = [1, 1]} : vector<16x768xf32> to vector<16x256xf32>
    %138 = vector.extract_strided_slice %134 {offsets = [0, 256], sizes = [16, 256], strides = [1, 1]} : vector<16x768xf32> to vector<16x256xf32>
    %139 = vector.extract_strided_slice %134 {offsets = [0, 512], sizes = [16, 256], strides = [1, 1]} : vector<16x768xf32> to vector<16x256xf32>
    %140 = arith.mulf %138, %113 : vector<16x256xf32>
    %141 = arith.mulf %137, %136 : vector<16x256xf32>
    %142 = arith.addf %140, %141 : vector<16x256xf32>
    %143 = math.tanh %142 : vector<16x256xf32>
    %144 = arith.mulf %139, %143 : vector<16x256xf32>
    %145 = arith.truncf %144 : vector<16x256xf32> to vector<16x256xbf16>
    %146 = arith.index_cast %c4_i32 : i32 to index
    %c0_42 = arith.constant 0 : index
    %c0_43 = arith.constant 0 : index
    %147 = vector.load %arg6[%146, %c0_42, %c0_43] : memref<8x16x256xbf16, #tpu.memory_space<vmem>>, vector<1x16x256xbf16>
    %148 = vector.shape_cast %147 : vector<1x16x256xbf16> to vector<16x256xbf16>
    %149 = vector.shape_cast %145 : vector<16x256xbf16> to vector<1x16x256xbf16>
    tpu.vector_store %arg6[%146, %c0_42, %c0_43], %149 {strides = array<i32>} : memref<8x16x256xbf16, #tpu.memory_space<vmem>>, vector<1x16x256xbf16>,
    %c5_i32 = arith.constant 5 : i32
    %150 = arith.index_cast %c5_i32 : i32 to index
    %c0_44 = arith.constant 0 : index
    %c0_45 = arith.constant 0 : index
    %151 = vector.load %arg2[%150, %c0_44, %c0_45] : memref<8x16x1024xbf16, #tpu.memory_space<vmem>>, vector<1x16x1024xbf16>
    %152 = vector.shape_cast %151 : vector<1x16x1024xbf16> to vector<16x1024xbf16>
    %153 = arith.extf %152 : vector<16x1024xbf16> to vector<16x1024xf32>
    %154 = arith.truncf %144 : vector<16x256xf32> to vector<16x256xbf16>
    %c0_46 = arith.constant 0 : index
    %c0_47 = arith.constant 0 : index
    %155 = vector.load %arg3[%c0_46, %c0_47] : memref<256x1024xbf16, #tpu.memory_space<vmem>>, vector<256x1024xbf16>
    %cst_48 = arith.constant dense<0.000000e+00> : vector<16x1024xf32>
    %156 = tpu.matmul %154, %155, %cst_48 {dimension_numbers = #tpu.dot_dimension_numbers<[1], [0], [0], [1], [0, 0, 1, 1], [], []>} : vector<16x256xbf16>, vector<256x1024xbf16>, vector<16x1024xf32> -> vector<16x1024xf32>
    %157 = arith.addf %153, %156 : vector<16x1024xf32>
    %158 = vector.extract_strided_slice %157 {offsets = [0, 0], sizes = [16, 768], strides = [1, 1]} : vector<16x1024xf32> to vector<16x768xf32>
    %159 = arith.negf %158 : vector<16x768xf32>
    %160 = math.exp %159 : vector<16x768xf32>
    %cst_49 = arith.constant 1.000000e+00 : f32
    %161 = vector.broadcast %cst_49 : f32 to vector<16x768xf32>
    %162 = arith.addf %161, %160 : vector<16x768xf32>
    %163 = arith.divf %161, %162 : vector<16x768xf32>
    %164 = vector.extract_strided_slice %157 {offsets = [0, 768], sizes = [16, 256], strides = [1, 1]} : vector<16x1024xf32> to vector<16x256xf32>
    %165 = math.tanh %164 : vector<16x256xf32>
    %166 = vector.extract_strided_slice %163 {offsets = [0, 0], sizes = [16, 256], strides = [1, 1]} : vector<16x768xf32> to vector<16x256xf32>
    %167 = vector.extract_strided_slice %163 {offsets = [0, 256], sizes = [16, 256], strides = [1, 1]} : vector<16x768xf32> to vector<16x256xf32>
    %168 = vector.extract_strided_slice %163 {offsets = [0, 512], sizes = [16, 256], strides = [1, 1]} : vector<16x768xf32> to vector<16x256xf32>
    %169 = arith.mulf %167, %142 : vector<16x256xf32>
    %170 = arith.mulf %166, %165 : vector<16x256xf32>
    %171 = arith.addf %169, %170 : vector<16x256xf32>
    %172 = math.tanh %171 : vector<16x256xf32>
    %173 = arith.mulf %168, %172 : vector<16x256xf32>
    %174 = arith.truncf %173 : vector<16x256xf32> to vector<16x256xbf16>
    %175 = arith.index_cast %c5_i32 : i32 to index
    %c0_50 = arith.constant 0 : index
    %c0_51 = arith.constant 0 : index
    %176 = vector.load %arg6[%175, %c0_50, %c0_51] : memref<8x16x256xbf16, #tpu.memory_space<vmem>>, vector<1x16x256xbf16>
    %177 = vector.shape_cast %176 : vector<1x16x256xbf16> to vector<16x256xbf16>
    %178 = vector.shape_cast %174 : vector<16x256xbf16> to vector<1x16x256xbf16>
    tpu.vector_store %arg6[%175, %c0_50, %c0_51], %178 {strides = array<i32>} : memref<8x16x256xbf16, #tpu.memory_space<vmem>>, vector<1x16x256xbf16>,
    %c6_i32 = arith.constant 6 : i32
    %179 = arith.index_cast %c6_i32 : i32 to index
    %c0_52 = arith.constant 0 : index
    %c0_53 = arith.constant 0 : index
    %180 = vector.load %arg2[%179, %c0_52, %c0_53] : memref<8x16x1024xbf16, #tpu.memory_space<vmem>>, vector<1x16x1024xbf16>
    %181 = vector.shape_cast %180 : vector<1x16x1024xbf16> to vector<16x1024xbf16>
    %182 = arith.extf %181 : vector<16x1024xbf16> to vector<16x1024xf32>
    %183 = arith.truncf %173 : vector<16x256xf32> to vector<16x256xbf16>
    %c0_54 = arith.constant 0 : index
    %c0_55 = arith.constant 0 : index
    %184 = vector.load %arg3[%c0_54, %c0_55] : memref<256x1024xbf16, #tpu.memory_space<vmem>>, vector<256x1024xbf16>
    %cst_56 = arith.constant dense<0.000000e+00> : vector<16x1024xf32>
    %185 = tpu.matmul %183, %184, %cst_56 {dimension_numbers = #tpu.dot_dimension_numbers<[1], [0], [0], [1], [0, 0, 1, 1], [], []>} : vector<16x256xbf16>, vector<256x1024xbf16>, vector<16x1024xf32> -> vector<16x1024xf32>
    %186 = arith.addf %182, %185 : vector<16x1024xf32>
    %187 = vector.extract_strided_slice %186 {offsets = [0, 0], sizes = [16, 768], strides = [1, 1]} : vector<16x1024xf32> to vector<16x768xf32>
    %188 = arith.negf %187 : vector<16x768xf32>
    %189 = math.exp %188 : vector<16x768xf32>
    %cst_57 = arith.constant 1.000000e+00 : f32
    %190 = vector.broadcast %cst_57 : f32 to vector<16x768xf32>
    %191 = arith.addf %190, %189 : vector<16x768xf32>
    %192 = arith.divf %190, %191 : vector<16x768xf32>
    %193 = vector.extract_strided_slice %186 {offsets = [0, 768], sizes = [16, 256], strides = [1, 1]} : vector<16x1024xf32> to vector<16x256xf32>
    %194 = math.tanh %193 : vector<16x256xf32>
    %195 = vector.extract_strided_slice %192 {offsets = [0, 0], sizes = [16, 256], strides = [1, 1]} : vector<16x768xf32> to vector<16x256xf32>
    %196 = vector.extract_strided_slice %192 {offsets = [0, 256], sizes = [16, 256], strides = [1, 1]} : vector<16x768xf32> to vector<16x256xf32>
    %197 = vector.extract_strided_slice %192 {offsets = [0, 512], sizes = [16, 256], strides = [1, 1]} : vector<16x768xf32> to vector<16x256xf32>
    %198 = arith.mulf %196, %171 : vector<16x256xf32>
    %199 = arith.mulf %195, %194 : vector<16x256xf32>
    %200 = arith.addf %198, %199 : vector<16x256xf32>
    %201 = math.tanh %200 : vector<16x256xf32>
    %202 = arith.mulf %197, %201 : vector<16x256xf32>
    %203 = arith.truncf %202 : vector<16x256xf32> to vector<16x256xbf16>
    %204 = arith.index_cast %c6_i32 : i32 to index
    %c0_58 = arith.constant 0 : index
    %c0_59 = arith.constant 0 : index
    %205 = vector.load %arg6[%204, %c0_58, %c0_59] : memref<8x16x256xbf16, #tpu.memory_space<vmem>>, vector<1x16x256xbf16>
    %206 = vector.shape_cast %205 : vector<1x16x256xbf16> to vector<16x256xbf16>
    %207 = vector.shape_cast %203 : vector<16x256xbf16> to vector<1x16x256xbf16>
    tpu.vector_store %arg6[%204, %c0_58, %c0_59], %207 {strides = array<i32>} : memref<8x16x256xbf16, #tpu.memory_space<vmem>>, vector<1x16x256xbf16>,
    %c7_i32 = arith.constant 7 : i32
    %208 = arith.index_cast %c7_i32 : i32 to index
    %c0_60 = arith.constant 0 : index
    %c0_61 = arith.constant 0 : index
    %209 = vector.load %arg2[%208, %c0_60, %c0_61] : memref<8x16x1024xbf16, #tpu.memory_space<vmem>>, vector<1x16x1024xbf16>
    %210 = vector.shape_cast %209 : vector<1x16x1024xbf16> to vector<16x1024xbf16>
    %211 = arith.extf %210 : vector<16x1024xbf16> to vector<16x1024xf32>
    %212 = arith.truncf %202 : vector<16x256xf32> to vector<16x256xbf16>
    %c0_62 = arith.constant 0 : index
    %c0_63 = arith.constant 0 : index
    %213 = vector.load %arg3[%c0_62, %c0_63] : memref<256x1024xbf16, #tpu.memory_space<vmem>>, vector<256x1024xbf16>
    %cst_64 = arith.constant dense<0.000000e+00> : vector<16x1024xf32>
    %214 = tpu.matmul %212, %213, %cst_64 {dimension_numbers = #tpu.dot_dimension_numbers<[1], [0], [0], [1], [0, 0, 1, 1], [], []>} : vector<16x256xbf16>, vector<256x1024xbf16>, vector<16x1024xf32> -> vector<16x1024xf32>
    %215 = arith.addf %211, %214 : vector<16x1024xf32>
    %216 = vector.extract_strided_slice %215 {offsets = [0, 0], sizes = [16, 768], strides = [1, 1]} : vector<16x1024xf32> to vector<16x768xf32>
    %217 = arith.negf %216 : vector<16x768xf32>
    %218 = math.exp %217 : vector<16x768xf32>
    %cst_65 = arith.constant 1.000000e+00 : f32
    %219 = vector.broadcast %cst_65 : f32 to vector<16x768xf32>
    %220 = arith.addf %219, %218 : vector<16x768xf32>
    %221 = arith.divf %219, %220 : vector<16x768xf32>
    %222 = vector.extract_strided_slice %215 {offsets = [0, 768], sizes = [16, 256], strides = [1, 1]} : vector<16x1024xf32> to vector<16x256xf32>
    %223 = math.tanh %222 : vector<16x256xf32>
    %224 = vector.extract_strided_slice %221 {offsets = [0, 0], sizes = [16, 256], strides = [1, 1]} : vector<16x768xf32> to vector<16x256xf32>
    %225 = vector.extract_strided_slice %221 {offsets = [0, 256], sizes = [16, 256], strides = [1, 1]} : vector<16x768xf32> to vector<16x256xf32>
    %226 = vector.extract_strided_slice %221 {offsets = [0, 512], sizes = [16, 256], strides = [1, 1]} : vector<16x768xf32> to vector<16x256xf32>
    %227 = arith.mulf %225, %200 : vector<16x256xf32>
    %228 = arith.mulf %224, %223 : vector<16x256xf32>
    %229 = arith.addf %227, %228 : vector<16x256xf32>
    %230 = math.tanh %229 : vector<16x256xf32>
    %231 = arith.mulf %226, %230 : vector<16x256xf32>
    %232 = arith.truncf %231 : vector<16x256xf32> to vector<16x256xbf16>
    %233 = arith.index_cast %c7_i32 : i32 to index
    %c0_66 = arith.constant 0 : index
    %c0_67 = arith.constant 0 : index
    %234 = vector.load %arg6[%233, %c0_66, %c0_67] : memref<8x16x256xbf16, #tpu.memory_space<vmem>>, vector<1x16x256xbf16>
    %235 = vector.shape_cast %234 : vector<1x16x256xbf16> to vector<16x256xbf16>
    %236 = vector.shape_cast %232 : vector<16x256xbf16> to vector<1x16x256xbf16>
    tpu.vector_store %arg6[%233, %c0_66, %c0_67], %236 {strides = array<i32>} : memref<8x16x256xbf16, #tpu.memory_space<vmem>>, vector<1x16x256xbf16>,
    %c8_i32 = arith.constant 8 : i32
    %c0_68 = arith.constant 0 : index
    %c0_69 = arith.constant 0 : index
    %237 = vector.load %arg7[%c0_68, %c0_69] : memref<16x256xf32, #tpu.memory_space<vmem>>, vector<16x256xf32>
    tpu.vector_store %arg7[%c0_68, %c0_69], %231 {strides = array<i32>} : memref<16x256xf32, #tpu.memory_space<vmem>>, vector<16x256xf32>,
    %c0_70 = arith.constant 0 : index
    %c0_71 = arith.constant 0 : index
    %238 = vector.load %arg8[%c0_70, %c0_71] : memref<16x256xf32, #tpu.memory_space<vmem>>, vector<16x256xf32>
    tpu.vector_store %arg8[%c0_70, %c0_71], %229 {strides = array<i32>} : memref<16x256xf32, #tpu.memory_space<vmem>>, vector<16x256xf32>,
    return
  }
  func.func @transform_0(%arg0: i32, %arg1: i32) -> (i32, i32, i32) {
    %c0_i32 = arith.constant 0 : i32
    %c0_i32_0 = arith.constant 0 : i32
    return %arg1, %arg0, %c0_i32 : i32, i32, i32
  }
  func.func @transform_1(%arg0: i32, %arg1: i32) -> (i32, i32) {
    %c0_i32 = arith.constant 0 : i32
    %c0_i32_0 = arith.constant 0 : i32
    %c0_i32_1 = arith.constant 0 : i32
    return %c0_i32, %c0_i32_0 : i32, i32
  }
  func.func @transform_2(%arg0: i32, %arg1: i32) -> (i32, i32) {
    %c0_i32 = arith.constant 0 : i32
    %c0_i32_0 = arith.constant 0 : i32
    return %arg0, %c0_i32 : i32, i32
  }
  func.func @transform_3(%arg0: i32, %arg1: i32) -> (i32, i32) {
    %c0_i32 = arith.constant 0 : i32
    %c0_i32_0 = arith.constant 0 : i32
    return %arg0, %c0_i32 : i32, i32
  }
  func.func @transform_4(%arg0: i32, %arg1: i32) -> (i32, i32, i32) {
    %c0_i32 = arith.constant 0 : i32
    %c0_i32_0 = arith.constant 0 : i32
    return %arg1, %arg0, %c0_i32 : i32, i32, i32
  }
  func.func @transform_5(%arg0: i32, %arg1: i32) -> (i32, i32) {
    %c0_i32 = arith.constant 0 : i32
    %c0_i32_0 = arith.constant 0 : i32
    return %arg0, %c0_i32 : i32, i32
  }
  func.func @transform_6(%arg0: i32, %arg1: i32) -> (i32, i32) {
    %c0_i32 = arith.constant 0 : i32
    %c0_i32_0 = arith.constant 0 : i32
    return %arg0, %c0_i32 : i32, i32
  }
}

</mosaic_0001>

<llo_original>
// kernel: char_lstm_forward.7
$region0: #{char_lstm_forward.7}
  #allocation0 [shape = 'u32[]', space=smem, size = 0x4, offset = 0x4, fixed_abs, tag = 'smem constant byte address 0x4 - core index']
  #allocation1 [shape = 'u32[144,128]{1,0:T(1,128)}', space=vmem, size = 0x12000, scoped, tag = 'internal scratch']
  %s0 = inlined_call_operand.vmem [shape: bf16[128,256], index: 0, kind: input, shape index: {}]
  %s1 = inlined_call_operand.vmem [shape: bf16[256,128], index: 1, kind: input, shape index: {}]
  %s2 = inlined_call_operand.vmem [shape: f32[1,128], index: 2, kind: input, shape index: {}]
  %s3 = inlined_call_operand.vmem [shape: f32[128,128], index: 3, kind: output, shape index: {}]
  %s4 = sld [smem:[#allocation0]]
  $region22: #{char_lstm_forward.7} parent=0
    _
  %s6 = ssub.s32 1, %s4
  %s7 = scalar_select 0, %s6, %s4
  // Predicated region
  $region2: #{char_lstm_forward.7} parent=0 // pred_check
    _
  $region3: #{char_lstm_forward.7} parent=0 // pred_check_branch
    %9 = sbr.rel (0) target = $region5
  $region4: #{char_lstm_forward.7} parent=0 // pred_region
    _
  $region5: #{char_lstm_forward.7} parent=0 // pred_fallthru
    _
  // Predicated region
  $region6: #{char_lstm_forward.7} parent=0 // pred_check
    _
  $region7: #{char_lstm_forward.7} parent=0 // pred_check_branch
    %11 = sbr.rel (0) target = $region9
  $region8: #{char_lstm_forward.7} parent=0 // pred_region
    _
  $region9: #{char_lstm_forward.7} parent=0 // pred_fallthru
    _
  // Predicated region
  $region10: #{char_lstm_forward.7} parent=0 // pred_check
    _
  $region11: #{char_lstm_forward.7} parent=0 // pred_check_branch
    %13 = sbr.rel (0) target = $region13
  $region12: #{char_lstm_forward.7} parent=0 // pred_region
    _
  $region13: #{char_lstm_forward.7} parent=0 // pred_fallthru
    _
  %v15 = vld [vmem:[%s0] sm:$0xff]
  %v16 = vld [vmem:[%s0 + $0x8] sm:$0xff]
  %v17 = vld [vmem:[%s0 + $0x10] sm:$0xff]
  %v18 = vld [vmem:[%s0 + $0x18] sm:$0xff]
  %v19 = vld [vmem:[%s0 + $0x20] sm:$0xff]
  %v20 = vld [vmem:[%s0 + $0x28] sm:$0xff]
  %v21 = vld [vmem:[%s0 + $0x30] sm:$0xff]
  %v22 = vld [vmem:[%s0 + $0x38] sm:$0xff]
  %v23 = vld [vmem:[%s0 + $0x40] sm:$0xff]
  %v24 = vld [vmem:[%s0 + $0x48] sm:$0xff]
  %v25 = vld [vmem:[%s0 + $0x50] sm:$0xff]
  %v26 = vld [vmem:[%s0 + $0x58] sm:$0xff]
  %v27 = vld [vmem:[%s0 + $0x60] sm:$0xff]
  %v28 = vld [vmem:[%s0 + $0x68] sm:$0xff]
  %v29 = vld [vmem:[%s0 + $0x70] sm:$0xff]
  %v30 = vld [vmem:[%s0 + $0x78] sm:$0xff]
  %v31 = vld [vmem:[%s1] sm:$0xf]
  %v32 = vld [vmem:[%s1 + $0x4] sm:$0xf]
  %v33 = vld [vmem:[%s1 + $0x8] sm:$0xf]
  %v34 = vld [vmem:[%s1 + $0xc] sm:$0xf]
  %v35 = vld [vmem:[%s1 + $0x10] sm:$0xf]
  %v36 = vld [vmem:[%s1 + $0x14] sm:$0xf]
  %v37 = vld [vmem:[%s1 + $0x18] sm:$0xf]
  %v38 = vld [vmem:[%s1 + $0x1c] sm:$0xf]
  %v39 = vld [vmem:[%s1 + $0x20] sm:$0xf]
  %v40 = vld [vmem:[%s1 + $0x24] sm:$0xf]
  %v41 = vld [vmem:[%s1 + $0x28] sm:$0xf]
  %v42 = vld [vmem:[%s1 + $0x2c] sm:$0xf]
  %v43 = vld [vmem:[%s1 + $0x30] sm:$0xf]
  %v44 = vld [vmem:[%s1 + $0x34] sm:$0xf]
  %v45 = vld [vmem:[%s1 + $0x38] sm:$0xf]
  %v46 = vld [vmem:[%s1 + $0x3c] sm:$0xf]
  %v47 = vld [vmem:[%s1 + $0x40] sm:$0xf]
  %v48 = vld [vmem:[%s1 + $0x44] sm:$0xf]
  %v49 = vld [vmem:[%s1 + $0x48] sm:$0xf]
  %v50 = vld [vmem:[%s1 + $0x4c] sm:$0xf]
  %v51 = vld [vmem:[%s1 + $0x50] sm:$0xf]
  %v52 = vld [vmem:[%s1 + $0x54] sm:$0xf]
  %v53 = vld [vmem:[%s1 + $0x58] sm:$0xf]
  %v54 = vld [vmem:[%s1 + $0x5c] sm:$0xf]
  %v55 = vld [vmem:[%s1 + $0x60] sm:$0xf]
  %v56 = vld [vmem:[%s1 + $0x64] sm:$0xf]
  %v57 = vld [vmem:[%s1 + $0x68] sm:$0xf]
  %v58 = vld [vmem:[%s1 + $0x6c] sm:$0xf]
  %v59 = vld [vmem:[%s1 + $0x70] sm:$0xf]
  %v60 = vld [vmem:[%s1 + $0x74] sm:$0xf]
  %v61 = vld [vmem:[%s1 + $0x78] sm:$0xf]
  %v62 = vld [vmem:[%s1 + $0x7c] sm:$0xf]
  %v63 = vld [vmem:[%s2] sm:$0x1]
  %v65 = vlaneseq
  %v66 = vshrl.u32 %v65, 7
  %v67 = vsub.s32 0, %v66
  %v68 = vrot.slane %v63, %v67
  %v86 = vunpack.c.l.b16 %v15
  %v87 = vunpack.c.h.b16 %v15
  %v88 = vunpack.c.l.b16 %v16
  %v89 = vunpack.c.h.b16 %v16
  %v90 = vunpack.c.l.b16 %v17
  %v91 = vunpack.c.h.b16 %v17
  %v92 = vunpack.c.l.b16 %v18
  %v93 = vunpack.c.h.b16 %v18
  %v94 = vunpack.c.l.b16 %v19
  %v95 = vunpack.c.h.b16 %v19
  %v96 = vunpack.c.l.b16 %v20
  %v97 = vunpack.c.h.b16 %v20
  %v98 = vunpack.c.l.b16 %v21
  %v99 = vunpack.c.h.b16 %v21
  %v100 = vunpack.c.l.b16 %v22
  %v101 = vunpack.c.h.b16 %v22
  %v102 = vunpack.c.l.b16 %v23
  %v103 = vunpack.c.h.b16 %v23
  %v104 = vunpack.c.l.b16 %v24
  %v105 = vunpack.c.h.b16 %v24
  %v106 = vunpack.c.l.b16 %v25
  %v107 = vunpack.c.h.b16 %v25
  %v108 = vunpack.c.l.b16 %v26
  %v109 = vunpack.c.h.b16 %v26
  %v110 = vunpack.c.l.b16 %v27
  %v111 = vunpack.c.h.b16 %v27
  %v112 = vunpack.c.l.b16 %v28
  %v113 = vunpack.c.h.b16 %v28
  %v114 = vunpack.c.l.b16 %v29
  %v115 = vunpack.c.h.b16 %v29
  %v116 = vunpack.c.l.b16 %v30
  %v117 = vunpack.c.h.b16 %v30
  %v118 = vpack.c.b16 %v88, %v86
  %v119 = vpack.c.b16 %v89, %v87
  %v120 = vpack.c.b16 %v92, %v90
  %v121 = vpack.c.b16 %v93, %v91
  %v122 = vpack.c.b16 %v96, %v94
  %v123 = vpack.c.b16 %v97, %v95
  %v124 = vpack.c.b16 %v100, %v98
  %v125 = vpack.c.b16 %v101, %v99
  %v126 = vpack.c.b16 %v104, %v102
  %v127 = vpack.c.b16 %v105, %v103
  %v128 = vpack.c.b16 %v108, %v106
  %v129 = vpack.c.b16 %v109, %v107
  %v130 = vpack.c.b16 %v112, %v110
  %v131 = vpack.c.b16 %v113, %v111
  %v132 = vpack.c.b16 %v116, %v114
  %v133 = vpack.c.b16 %v117, %v115
  %v182 = vunpack.c.l.b16 %v31
  %v183 = vunpack.c.l.b16 %v32
  %v184 = vunpack.c.l.b16 %v33
  %v185 = vunpack.c.l.b16 %v34
  %v186 = vunpack.c.l.b16 %v35
  %v187 = vunpack.c.l.b16 %v36
  %v188 = vunpack.c.l.b16 %v37
  %v189 = vunpack.c.l.b16 %v38
  %v190 = vunpack.c.l.b16 %v39
  %v191 = vunpack.c.l.b16 %v40
  %v192 = vunpack.c.l.b16 %v41
  %v193 = vunpack.c.l.b16 %v42
  %v194 = vunpack.c.l.b16 %v43
  %v195 = vunpack.c.l.b16 %v44
  %v196 = vunpack.c.l.b16 %v45
  %v197 = vunpack.c.l.b16 %v46
  %v198 = vunpack.c.l.b16 %v47
  %v199 = vunpack.c.l.b16 %v48
  %v200 = vunpack.c.l.b16 %v49
  %v201 = vunpack.c.l.b16 %v50
  %v202 = vunpack.c.l.b16 %v51
  %v203 = vunpack.c.l.b16 %v52
  %v204 = vunpack.c.l.b16 %v53
  %v205 = vunpack.c.l.b16 %v54
  %v206 = vunpack.c.l.b16 %v55
  %v207 = vunpack.c.l.b16 %v56
  %v208 = vunpack.c.l.b16 %v57
  %v209 = vunpack.c.l.b16 %v58
  %v210 = vunpack.c.l.b16 %v59
  %v211 = vunpack.c.l.b16 %v60
  %v212 = vunpack.c.l.b16 %v61
  %v213 = vunpack.c.l.b16 %v62
  %v214 = vpack.c.b16 %v183, %v182
  %v215 = vpack.c.b16 %v185, %v184
  %v216 = vpack.c.b16 %v187, %v186
  %v217 = vpack.c.b16 %v189, %v188
  %v218 = vpack.c.b16 %v191, %v190
  %v219 = vpack.c.b16 %v193, %v192
  %v220 = vpack.c.b16 %v195, %v194
  %v221 = vpack.c.b16 %v197, %v196
  %v222 = vpack.c.b16 %v199, %v198
  %v223 = vpack.c.b16 %v201, %v200
  %v224 = vpack.c.b16 %v203, %v202
  %v225 = vpack.c.b16 %v205, %v204
  %v226 = vpack.c.b16 %v207, %v206
  %v227 = vpack.c.b16 %v209, %v208
  %v228 = vpack.c.b16 %v211, %v210
  %v229 = vpack.c.b16 %v213, %v212
  %246 = vmatprep.subr.bf16.mxu0 0
  %247 = vmatpush1.bf16.msra.mxu0 %v214
  %248 = vmatprep.subr.bf16.mxu0 0
  %249 = vmatpush1.bf16.msra.mxu0 %v215
  %250 = vmatprep.subr.bf16.mxu0 0
  %251 = vmatpush1.bf16.msra.mxu0 %v216
  %252 = vmatprep.subr.bf16.mxu0 0
  %253 = vmatpush1.bf16.msra.mxu0 %v217
  %254 = vmatprep.subr.bf16.mxu0 0
  %255 = vmatpush1.bf16.msra.mxu0 %v218
  %256 = vmatprep.subr.bf16.mxu0 0
  %257 = vmatpush1.bf16.msra.mxu0 %v219
  %258 = vmatprep.subr.bf16.mxu0 0
  %259 = vmatpush1.bf16.msra.mxu0 %v220
  %260 = vmatprep.subr.bf16.mxu0 0
  %261 = vmatpush1.bf16.msra.mxu0 %v221
  %262 = vmatprep.subr.bf16.mxu0 0
  %263 = vmatpush1.bf16.msra.mxu0 %v222
  %264 = vmatprep.subr.bf16.mxu0 0
  %265 = vmatpush1.bf16.msra.mxu0 %v223
  %266 = vmatprep.subr.bf16.mxu0 0
  %267 = vmatpush1.bf16.msra.mxu0 %v224
  %268 = vmatprep.subr.bf16.mxu0 0
  %269 = vmatpush1.bf16.msra.mxu0 %v225
  %270 = vmatprep.subr.bf16.mxu0 0
  %271 = vmatpush1.bf16.msra.mxu0 %v226
  %272 = vmatprep.subr.bf16.mxu0 0
  %273 = vmatpush1.bf16.msra.mxu0 %v227
  %274 = vmatprep.subr.bf16.mxu0 0
  %275 = vmatpush1.bf16.msra.mxu0 %v228
  %276 = vmatprep.subr.bf16.mxu0 0
  %277 = vmatpush1.bf16.msra.mxu0 %v229
  %278 = vmatprep.mubr.bf16.mxu0 %v119
  %279 = vmatmul.mubr.bf16.gmra.mrb[0].mxu0 %v118
  %v280 = vpop.f32.mrb[0].mxu0
  %v281 = vadd.f32 %v68, %v280
  %v282 = vpop.f32.mrb[0].mxu0
  %v283 = vpop.f32.mrb[0].mxu0
  %v284 = vadd.f32 %v68, %v283
  %v285 = vpop.f32.mrb[0].mxu0
  %286 = vmatprep.mubr.bf16.mxu0 %v121
  %287 = vmatmul.mubr.bf16.gmra.mrb[0].mxu0 %v120
  %v288 = vpop.f32.mrb[0].mxu0
  %v289 = vadd.f32 %v68, %v288
  %v290 = vpop.f32.mrb[0].mxu0
  %v291 = vpop.f32.mrb[0].mxu0
  %v292 = vadd.f32 %v68, %v291
  %v293 = vpop.f32.mrb[0].mxu0
  %294 = vmatprep.mubr.bf16.mxu0 %v123
  %295 = vmatmul.mubr.bf16.gmra.mrb[0].mxu0 %v122
  %v296 = vpop.f32.mrb[0].mxu0
  %v297 = vadd.f32 %v68, %v296
  %v298 = vpop.f32.mrb[0].mxu0
  %v299 = vpop.f32.mrb[0].mxu0
  %v300 = vadd.f32 %v68, %v299
  %v301 = vpop.f32.mrb[0].mxu0
  %302 = vmatprep.mubr.bf16.mxu0 %v125
  %303 = vmatmul.mubr.bf16.gmra.mrb[0].mxu0 %v124
  %v304 = vpop.f32.mrb[0].mxu0
  %v305 = vadd.f32 %v68, %v304
  %v306 = vpop.f32.mrb[0].mxu0
  %v307 = vpop.f32.mrb[0].mxu0
  %v308 = vadd.f32 %v68, %v307
  %v309 = vpop.f32.mrb[0].mxu0
  %310 = vmatprep.mubr.bf16.mxu0 %v127
  %311 = vmatmul.mubr.bf16.gmra.mrb[0].mxu0 %v126
  %v312 = vpop.f32.mrb[0].mxu0
  %v313 = vadd.f32 %v68, %v312
  %v314 = vpop.f32.mrb[0].mxu0
  %v315 = vpop.f32.mrb[0].mxu0
  %v316 = vadd.f32 %v68, %v315
  %v317 = vpop.f32.mrb[0].mxu0
  %318 = vmatprep.mubr.bf16.mxu0 %v129
  %319 = vmatmul.mubr.bf16.gmra.mrb[0].mxu0 %v128
  %v320 = vpop.f32.mrb[0].mxu0
  %v321 = vadd.f32 %v68, %v320
  %v322 = vpop.f32.mrb[0].mxu0
  %v323 = vpop.f32.mrb[0].mxu0
  %v324 = vadd.f32 %v68, %v323
  %v325 = vpop.f32.mrb[0].mxu0
  %326 = vmatprep.mubr.bf16.mxu0 %v131
  %327 = vmatmul.mubr.bf16.gmra.mrb[0].mxu0 %v130
  %v328 = vpop.f32.mrb[0].mxu0
  %v329 = vadd.f32 %v68, %v328
  %v330 = vpop.f32.mrb[0].mxu0
  %v331 = vpop.f32.mrb[0].mxu0
  %v332 = vadd.f32 %v68, %v331
  %v333 = vpop.f32.mrb[0].mxu0
  %334 = vmatprep.mubr.bf16.mxu0 %v133
  %335 = vmatmul.mubr.bf16.gmra.mrb[0].mxu0 %v132
  %v336 = vpop.f32.mrb[0].mxu0
  %v337 = vadd.f32 %v68, %v336
  %v338 = vpop.f32.mrb[0].mxu0
  %v339 = vpop.f32.mrb[0].mxu0
  %v340 = vadd.f32 %v68, %v339
  %v341 = vpop.f32.mrb[0].mxu0
  %342 = vdwg.mxu0
  %343 = vst [vmem:[%s3] sm:$0xff] %v281
  %344 = vst [vmem:[%s3 + $0x8] sm:$0xff] %v284
  %345 = vst [vmem:[%s3 + $0x10] sm:$0xff] %v289
  %346 = vst [vmem:[%s3 + $0x18] sm:$0xff] %v292
  %347 = vst [vmem:[%s3 + $0x20] sm:$0xff] %v297
  %348 = vst [vmem:[%s3 + $0x28] sm:$0xff] %v300
  %349 = vst [vmem:[%s3 + $0x30] sm:$0xff] %v305
  %350 = vst [vmem:[%s3 + $0x38] sm:$0xff] %v308
  %351 = vst [vmem:[%s3 + $0x40] sm:$0xff] %v313
  %352 = vst [vmem:[%s3 + $0x48] sm:$0xff] %v316
  %353 = vst [vmem:[%s3 + $0x50] sm:$0xff] %v321
  %354 = vst [vmem:[%s3 + $0x58] sm:$0xff] %v324
  %355 = vst [vmem:[%s3 + $0x60] sm:$0xff] %v329
  %356 = vst [vmem:[%s3 + $0x68] sm:$0xff] %v332
  %357 = vst [vmem:[%s3 + $0x70] sm:$0xff] %v337
  %358 = vst [vmem:[%s3 + $0x78] sm:$0xff] %v340
  // Predicated region
  $region14: #{char_lstm_forward.7} parent=0 // pred_check
    _
  $region15: #{char_lstm_forward.7} parent=0 // pred_check_branch
    %360 = sbr.rel (0) target = $region17
  $region16: #{char_lstm_forward.7} parent=0 // pred_region
    _
  $region17: #{char_lstm_forward.7} parent=0 // pred_fallthru
    _
  // Predicated region
  $region18: #{char_lstm_forward.7} parent=0 // pred_check
    _
  $region19: #{char_lstm_forward.7} parent=0 // pred_check_branch
    %362 = sbr.rel (0) target = $region21
  $region20: #{char_lstm_forward.7} parent=0 // pred_region
    _
  $region21: #{char_lstm_forward.7} parent=0 // pred_fallthru
    _

// kernel: char_lstm_forward.5
$region0: #{char_lstm_forward.5}
  #allocation0 [shape = 'u32[]', space=smem, size = 0x4, offset = 0x4, fixed_abs, tag = 'smem constant byte address 0x4 - core index']
  #allocation1 [shape = 'u32[144,128]{1,0:T(1,128)}', space=vmem, size = 0x12000, scoped, tag = 'internal scratch']
  %s0 = inlined_call_operand.vmem [shape: bf16[128,256], index: 0, kind: input, shape index: {}]
  %s1 = inlined_call_operand.vmem [shape: bf16[256,1024], index: 1, kind: input, shape index: {}]
  %s2 = inlined_call_operand.vmem [shape: f32[1,1024], index: 2, kind: input, shape index: {}]
  %s3 = inlined_call_operand.vmem [shape: bf16[128,1024], index: 3, kind: output, shape index: {}]
  %s4 = sld [smem:[#allocation0]]
  $region22: #{char_lstm_forward.5} parent=0
    _
  %s6 = ssub.s32 1, %s4
  %s7 = scalar_select 0, %s6, %s4
  // Predicated region
  $region2: #{char_lstm_forward.5} parent=0 // pred_check
    _
  $region3: #{char_lstm_forward.5} parent=0 // pred_check_branch
    %9 = sbr.rel (0) target = $region5
  $region4: #{char_lstm_forward.5} parent=0 // pred_region
    _
  $region5: #{char_lstm_forward.5} parent=0 // pred_fallthru
    _
  // Predicated region
  $region6: #{char_lstm_forward.5} parent=0 // pred_check
    _
  $region7: #{char_lstm_forward.5} parent=0 // pred_check_branch
    %11 = sbr.rel (0) target = $region9
  $region8: #{char_lstm_forward.5} parent=0 // pred_region
    _
  $region9: #{char_lstm_forward.5} parent=0 // pred_fallthru
    _
  // Predicated region
  $region10: #{char_lstm_forward.5} parent=0 // pred_check
    _
  $region11: #{char_lstm_forward.5} parent=0 // pred_check_branch
    %13 = sbr.rel (0) target = $region13
  $region12: #{char_lstm_forward.5} parent=0 // pred_region
    _
  $region13: #{char_lstm_forward.5} parent=0 // pred_fallthru
    _
  %v14 = vld [vmem:[%s0] sm:$0xff]
  %v15 = vld [vmem:[%s0 + $0x8] sm:$0xff]
  %v16 = vld [vmem:[%s0 + $0x10] sm:$0xff]
  %v17 = vld [vmem:[%s0 + $0x18] sm:$0xff]
  %v18 = vld [vmem:[%s0 + $0x20] sm:$0xff]
  %v19 = vld [vmem:[%s0 + $0x28] sm:$0xff]
  %v20 = vld [vmem:[%s0 + $0x30] sm:$0xff]
  %v21 = vld [vmem:[%s0 + $0x38] sm:$0xff]
  %v22 = vld [vmem:[%s0 + $0x40] sm:$0xff]
  %v23 = vld [vmem:[%s0 + $0x48] sm:$0xff]
  %v24 = vld [vmem:[%s0 + $0x50] sm:$0xff]
  %v25 = vld [vmem:[%s0 + $0x58] sm:$0xff]
  %v26 = vld [vmem:[%s0 + $0x60] sm:$0xff]
  %v27 = vld [vmem:[%s0 + $0x68] sm:$0xff]
  %v28 = vld [vmem:[%s0 + $0x70] sm:$0xff]
  %v29 = vld [vmem:[%s0 + $0x78] sm:$0xff]
  %v30 = vld [vmem:[%s1] sm:$0xff]
  %v31 = vld [vmem:[%s1 + $0x8] sm:$0xff]
  %v32 = vld [vmem:[%s1 + $0x10] sm:$0xff]
  %v33 = vld [vmem:[%s1 + $0x18] sm:$0xff]
  %v34 = vld [vmem:[%s1 + $0x20] sm:$0xff]
  %v35 = vld [vmem:[%s1 + $0x28] sm:$0xff]
  %v36 = vld [vmem:[%s1 + $0x30] sm:$0xff]
  %v37 = vld [vmem:[%s1 + $0x38] sm:$0xff]
  %v38 = vld [vmem:[%s1 + $0x40] sm:$0xff]
  %v39 = vld [vmem:[%s1 + $0x48] sm:$0xff]
  %v40 = vld [vmem:[%s1 + $0x50] sm:$0xff]
  %v41 = vld [vmem:[%s1 + $0x58] sm:$0xff]
  %v42 = vld [vmem:[%s1 + $0x60] sm:$0xff]
  %v43 = vld [vmem:[%s1 + $0x68] sm:$0xff]
  %v44 = vld [vmem:[%s1 + $0x70] sm:$0xff]
  %v45 = vld [vmem:[%s1 + $0x78] sm:$0xff]
  %v46 = vld [vmem:[%s1 + $0x80] sm:$0xff]
  %v47 = vld [vmem:[%s1 + $0x88] sm:$0xff]
  %v48 = vld [vmem:[%s1 + $0x90] sm:$0xff]
  %v49 = vld [vmem:[%s1 + $0x98] sm:$0xff]
  %v50 = vld [vmem:[%s1 + $0xa0] sm:$0xff]
  %v51 = vld [vmem:[%s1 + $0xa8] sm:$0xff]
  %v52 = vld [vmem:[%s1 + $0xb0] sm:$0xff]
  %v53 = vld [vmem:[%s1 + $0xb8] sm:$0xff]
  %v54 = vld [vmem:[%s1 + $0xc0] sm:$0xff]
  %v55 = vld [vmem:[%s1 + $0xc8] sm:$0xff]
  %v56 = vld [vmem:[%s1 + $0xd0] sm:$0xff]
  %v57 = vld [vmem:[%s1 + $0xd8] sm:$0xff]
  %v58 = vld [vmem:[%s1 + $0xe0] sm:$0xff]
  %v59 = vld [vmem:[%s1 + $0xe8] sm:$0xff]
  %v60 = vld [vmem:[%s1 + $0xf0] sm:$0xff]
  %v61 = vld [vmem:[%s1 + $0xf8] sm:$0xff]
  %v62 = vld [vmem:[%s1 + $0x100] sm:$0xff]
  %v63 = vld [vmem:[%s1 + $0x108] sm:$0xff]
  %v64 = vld [vmem:[%s1 + $0x110] sm:$0xff]
  %v65 = vld [vmem:[%s1 + $0x118] sm:$0xff]
  %v66 = vld [vmem:[%s1 + $0x120] sm:$0xff]
  %v67 = vld [vmem:[%s1 + $0x128] sm:$0xff]
  %v68 = vld [vmem:[%s1 + $0x130] sm:$0xff]
  %v69 = vld [vmem:[%s1 + $0x138] sm:$0xff]
  %v70 = vld [vmem:[%s1 + $0x140] sm:$0xff]
  %v71 = vld [vmem:[%s1 + $0x148] sm:$0xff]
  %v72 = vld [vmem:[%s1 + $0x150] sm:$0xff]
  %v73 = vld [vmem:[%s1 + $0x158] sm:$0xff]
  %v74 = vld [vmem:[%s1 + $0x160] sm:$0xff]
  %v75 = vld [vmem:[%s1 + $0x168] sm:$0xff]
  %v76 = vld [vmem:[%s1 + $0x170] sm:$0xff]
  %v77 = vld [vmem:[%s1 + $0x178] sm:$0xff]
  %v78 = vld [vmem:[%s1 + $0x180] sm:$0xff]
  %v79 = vld [vmem:[%s1 + $0x188] sm:$0xff]
  %v80 = vld [vmem:[%s1 + $0x190] sm:$0xff]
  %v81 = vld [vmem:[%s1 + $0x198] sm:$0xff]
  %v82 = vld [vmem:[%s1 + $0x1a0] sm:$0xff]
  %v83 = vld [vmem:[%s1 + $0x1a8] sm:$0xff]
  %v84 = vld [vmem:[%s1 + $0x1b0] sm:$0xff]
  %v85 = vld [vmem:[%s1 + $0x1b8] sm:$0xff]
  %v86 = vld [vmem:[%s1 + $0x1c0] sm:$0xff]
  %v87 = vld [vmem:[%s1 + $0x1c8] sm:$0xff]
  %v88 = vld [vmem:[%s1 + $0x1d0] sm:$0xff]
  %v89 = vld [vmem:[%s1 + $0x1d8] sm:$0xff]
  %v90 = vld [vmem:[%s1 + $0x1e0] sm:$0xff]
  %v91 = vld [vmem:[%s1 + $0x1e8] sm:$0xff]
  %v92 = vld [vmem:[%s1 + $0x1f0] sm:$0xff]
  %v93 = vld [vmem:[%s1 + $0x1f8] sm:$0xff]
  %v94 = vld [vmem:[%s1 + $0x200] sm:$0xff]
  %v95 = vld [vmem:[%s1 + $0x208] sm:$0xff]
  %v96 = vld [vmem:[%s1 + $0x210] sm:$0xff]
  %v97 = vld [vmem:[%s1 + $0x218] sm:$0xff]
  %v98 = vld [vmem:[%s1 + $0x220] sm:$0xff]
  %v99 = vld [vmem:[%s1 + $0x228] sm:$0xff]
  %v100 = vld [vmem:[%s1 + $0x230] sm:$0xff]
  %v101 = vld [vmem:[%s1 + $0x238] sm:$0xff]
  %v102 = vld [vmem:[%s1 + $0x240] sm:$0xff]
  %v103 = vld [vmem:[%s1 + $0x248] sm:$0xff]
  %v104 = vld [vmem:[%s1 + $0x250] sm:$0xff]
  %v105 = vld [vmem:[%s1 + $0x258] sm:$0xff]
  %v106 = vld [vmem:[%s1 + $0x260] sm:$0xff]
  %v107 = vld [vmem:[%s1 + $0x268] sm:$0xff]
  %v108 = vld [vmem:[%s1 + $0x270] sm:$0xff]
  %v109 = vld [vmem:[%s1 + $0x278] sm:$0xff]
  %v110 = vld [vmem:[%s1 + $0x280] sm:$0xff]
  %v111 = vld [vmem:[%s1 + $0x288] sm:$0xff]
  %v112 = vld [vmem:[%s1 + $0x290] sm:$0xff]
  %v113 = vld [vmem:[%s1 + $0x298] sm:$0xff]
  %v114 = vld [vmem:[%s1 + $0x2a0] sm:$0xff]
  %v115 = vld [vmem:[%s1 + $0x2a8] sm:$0xff]
  %v116 = vld [vmem:[%s1 + $0x2b0] sm:$0xff]
  %v117 = vld [vmem:[%s1 + $0x2b8] sm:$0xff]
  %v118 = vld [vmem:[%s1 + $0x2c0] sm:$0xff]
  %v119 = vld [vmem:[%s1 + $0x2c8] sm:$0xff]
  %v120 = vld [vmem:[%s1 + $0x2d0] sm:$0xff]
  %v121 = vld [vmem:[%s1 + $0x2d8] sm:$0xff]
  %v122 = vld [vmem:[%s1 + $0x2e0] sm:$0xff]
  %v123 = vld [vmem:[%s1 + $0x2e8] sm:$0xff]
  %v124 = vld [vmem:[%s1 + $0x2f0] sm:$0xff]
  %v125 = vld [vmem:[%s1 + $0x2f8] sm:$0xff]
  %v126 = vld [vmem:[%s1 + $0x300] sm:$0xff]
  %v127 = vld [vmem:[%s1 + $0x308] sm:$0xff]
  %v128 = vld [vmem:[%s1 + $0x310] sm:$0xff]
  %v129 = vld [vmem:[%s1 + $0x318] sm:$0xff]
  %v130 = vld [vmem:[%s1 + $0x320] sm:$0xff]
  %v131 = vld [vmem:[%s1 + $0x328] sm:$0xff]
  %v132 = vld [vmem:[%s1 + $0x330] sm:$0xff]
  %v133 = vld [vmem:[%s1 + $0x338] sm:$0xff]
  %v134 = vld [vmem:[%s1 + $0x340] sm:$0xff]
  %v135 = vld [vmem:[%s1 + $0x348] sm:$0xff]
  %v136 = vld [vmem:[%s1 + $0x350] sm:$0xff]
  %v137 = vld [vmem:[%s1 + $0x358] sm:$0xff]
  %v138 = vld [vmem:[%s1 + $0x360] sm:$0xff]
  %v139 = vld [vmem:[%s1 + $0x368] sm:$0xff]
  %v140 = vld [vmem:[%s1 + $0x370] sm:$0xff]
  %v141 = vld [vmem:[%s1 + $0x378] sm:$0xff]
  %v142 = vld [vmem:[%s1 + $0x380] sm:$0xff]
  %v143 = vld [vmem:[%s1 + $0x388] sm:$0xff]
  %v144 = vld [vmem:[%s1 + $0x390] sm:$0xff]
  %v145 = vld [vmem:[%s1 + $0x398] sm:$0xff]
  %v146 = vld [vmem:[%s1 + $0x3a0] sm:$0xff]
  %v147 = vld [vmem:[%s1 + $0x3a8] sm:$0xff]
  %v148 = vld [vmem:[%s1 + $0x3b0] sm:$0xff]
  %v149 = vld [vmem:[%s1 + $0x3b8] sm:$0xff]
  %v150 = vld [vmem:[%s1 + $0x3c0] sm:$0xff]
  %v151 = vld [vmem:[%s1 + $0x3c8] sm:$0xff]
  %v152 = vld [vmem:[%s1 + $0x3d0] sm:$0xff]
  %v153 = vld [vmem:[%s1 + $0x3d8] sm:$0xff]
  %v154 = vld [vmem:[%s1 + $0x3e0] sm:$0xff]
  %v155 = vld [vmem:[%s1 + $0x3e8] sm:$0xff]
  %v156 = vld [vmem:[%s1 + $0x3f0] sm:$0xff]
  %v157 = vld [vmem:[%s1 + $0x3f8] sm:$0xff]
  %v158 = vld [vmem:[%s2] sm:$0xff]
  %v160 = vlaneseq
  %v161 = vshrl.u32 %v160, 7
  %v162 = vsub.s32 0, %v161
  %v163 = vrot.slane %v158, %v162
  %v164 = vlaneseq
  %v165 = vshrl.u32 %v164, 7
  %v166 = vsub.s32 1, %v165
  %v167 = vrot.slane %v158, %v166
  %v168 = vlaneseq
  %v169 = vshrl.u32 %v168, 7
  %v170 = vsub.s32 2, %v169
  %v171 = vrot.slane %v158, %v170
  %v172 = vlaneseq
  %v173 = vshrl.u32 %v172, 7
  %v174 = vsub.s32 3, %v173
  %v175 = vrot.slane %v158, %v174
  %v176 = vlaneseq
  %v177 = vshrl.u32 %v176, 7
  %v178 = vsub.s32 4, %v177
  %v179 = vrot.slane %v158, %v178
  %v180 = vlaneseq
  %v181 = vshrl.u32 %v180, 7
  %v182 = vsub.s32 5, %v181
  %v183 = vrot.slane %v158, %v182
  %v184 = vlaneseq
  %v185 = vshrl.u32 %v184, 7
  %v186 = vsub.s32 6, %v185
  %v187 = vrot.slane %v158, %v186
  %v188 = vlaneseq
  %v189 = vshrl.u32 %v188, 7
  %v190 = vsub.s32 7, %v189
  %v191 = vrot.slane %v158, %v190
  %v216 = vunpack.c.l.b16 %v14
  %v217 = vunpack.c.h.b16 %v14
  %v218 = vunpack.c.l.b16 %v15
  %v219 = vunpack.c.h.b16 %v15
  %v220 = vunpack.c.l.b16 %v16
  %v221 = vunpack.c.h.b16 %v16
  %v222 = vunpack.c.l.b16 %v17
  %v223 = vunpack.c.h.b16 %v17
  %v224 = vunpack.c.l.b16 %v18
  %v225 = vunpack.c.h.b16 %v18
  %v226 = vunpack.c.l.b16 %v19
  %v227 = vunpack.c.h.b16 %v19
  %v228 = vunpack.c.l.b16 %v20
  %v229 = vunpack.c.h.b16 %v20
  %v230 = vunpack.c.l.b16 %v21
  %v231 = vunpack.c.h.b16 %v21
  %v232 = vunpack.c.l.b16 %v22
  %v233 = vunpack.c.h.b16 %v22
  %v234 = vunpack.c.l.b16 %v23
  %v235 = vunpack.c.h.b16 %v23
  %v236 = vunpack.c.l.b16 %v24
  %v237 = vunpack.c.h.b16 %v24
  %v238 = vunpack.c.l.b16 %v25
  %v239 = vunpack.c.h.b16 %v25
  %v240 = vunpack.c.l.b16 %v26
  %v241 = vunpack.c.h.b16 %v26
  %v242 = vunpack.c.l.b16 %v27
  %v243 = vunpack.c.h.b16 %v27
  %v244 = vunpack.c.l.b16 %v28
  %v245 = vunpack.c.h.b16 %v28
  %v246 = vunpack.c.l.b16 %v29
  %v247 = vunpack.c.h.b16 %v29
  %v248 = vpack.c.b16 %v218, %v216
  %v249 = vpack.c.b16 %v219, %v217
  %v250 = vpack.c.b16 %v222, %v220
  %v251 = vpack.c.b16 %v223, %v221
  %v252 = vpack.c.b16 %v226, %v224
  %v253 = vpack.c.b16 %v227, %v225
  %v254 = vpack.c.b16 %v230, %v228
  %v255 = vpack.c.b16 %v231, %v229
  %v256 = vpack.c.b16 %v234, %v232
  %v257 = vpack.c.b16 %v235, %v233
  %v258 = vpack.c.b16 %v238, %v236
  %v259 = vpack.c.b16 %v239, %v237
  %v260 = vpack.c.b16 %v242, %v240
  %v261 = vpack.c.b16 %v243, %v241
  %v262 = vpack.c.b16 %v246, %v244
  %v263 = vpack.c.b16 %v247, %v245
  %v408 = vunpack.c.l.b16 %v30
  %v409 = vunpack.c.h.b16 %v30
  %v410 = vunpack.c.l.b16 %v31
  %v411 = vunpack.c.h.b16 %v31
  %v412 = vunpack.c.l.b16 %v32
  %v413 = vunpack.c.h.b16 %v32
  %v414 = vunpack.c.l.b16 %v33
  %v415 = vunpack.c.h.b16 %v33
  %v416 = vunpack.c.l.b16 %v34
  %v417 = vunpack.c.h.b16 %v34
  %v418 = vunpack.c.l.b16 %v35
  %v419 = vunpack.c.h.b16 %v35
  %v420 = vunpack.c.l.b16 %v36
  %v421 = vunpack.c.h.b16 %v36
  %v422 = vunpack.c.l.b16 %v37
  %v423 = vunpack.c.h.b16 %v37
  %v424 = vunpack.c.l.b16 %v38
  %v425 = vunpack.c.h.b16 %v38
  %v426 = vunpack.c.l.b16 %v39
  %v427 = vunpack.c.h.b16 %v39
  %v428 = vunpack.c.l.b16 %v40
  %v429 = vunpack.c.h.b16 %v40
  %v430 = vunpack.c.l.b16 %v41
  %v431 = vunpack.c.h.b16 %v41
  %v432 = vunpack.c.l.b16 %v42
  %v433 = vunpack.c.h.b16 %v42
  %v434 = vunpack.c.l.b16 %v43
  %v435 = vunpack.c.h.b16 %v43
  %v436 = vunpack.c.l.b16 %v44
  %v437 = vunpack.c.h.b16 %v44
  %v438 = vunpack.c.l.b16 %v45
  %v439 = vunpack.c.h.b16 %v45
  %v440 = vunpack.c.l.b16 %v46
  %v441 = vunpack.c.h.b16 %v46
  %v442 = vunpack.c.l.b16 %v47
  %v443 = vunpack.c.h.b16 %v47
  %v444 = vunpack.c.l.b16 %v48
  %v445 = vunpack.c.h.b16 %v48
  %v446 = vunpack.c.l.b16 %v49
  %v447 = vunpack.c.h.b16 %v49
  %v448 = vunpack.c.l.b16 %v50
  %v449 = vunpack.c.h.b16 %v50
  %v450 = vunpack.c.l.b16 %v51
  %v451 = vunpack.c.h.b16 %v51
  %v452 = vunpack.c.l.b16 %v52
  %v453 = vunpack.c.h.b16 %v52
  %v454 = vunpack.c.l.b16 %v53
  %v455 = vunpack.c.h.b16 %v53
  %v456 = vunpack.c.l.b16 %v54
  %v457 = vunpack.c.h.b16 %v54
  %v458 = vunpack.c.l.b16 %v55
  %v459 = vunpack.c.h.b16 %v55
  %v460 = vunpack.c.l.b16 %v56
  %v461 = vunpack.c.h.b16 %v56
  %v462 = vunpack.c.l.b16 %v57
  %v463 = vunpack.c.h.b16 %v57
  %v464 = vunpack.c.l.b16 %v58
  %v465 = vunpack.c.h.b16 %v58
  %v466 = vunpack.c.l.b16 %v59
  %v467 = vunpack.c.h.b16 %v59
  %v468 = vunpack.c.l.b16 %v60
  %v469 = vunpack.c.h.b16 %v60
  %v470 = vunpack.c.l.b16 %v61
  %v471 = vunpack.c.h.b16 %v61
  %v472 = vunpack.c.l.b16 %v62
  %v473 = vunpack.c.h.b16 %v62
  %v474 = vunpack.c.l.b16 %v63
  %v475 = vunpack.c.h.b16 %v63
  %v476 = vunpack.c.l.b16 %v64
  %v477 = vunpack.c.h.b16 %v64
  %v478 = vunpack.c.l.b16 %v65
  %v479 = vunpack.c.h.b16 %v65
  %v480 = vunpack.c.l.b16 %v66
  %v481 = vunpack.c.h.b16 %v66
  %v482 = vunpack.c.l.b16 %v67
  %v483 = vunpack.c.h.b16 %v67
  %v484 = vunpack.c.l.b16 %v68
  %v485 = vunpack.c.h.b16 %v68
  %v486 = vunpack.c.l.b16 %v69
  %v487 = vunpack.c.h.b16 %v69
  %v488 = vunpack.c.l.b16 %v70
  %v489 = vunpack.c.h.b16 %v70
  %v490 = vunpack.c.l.b16 %v71
  %v491 = vunpack.c.h.b16 %v71
  %v492 = vunpack.c.l.b16 %v72
  %v493 = vunpack.c.h.b16 %v72
  %v494 = vunpack.c.l.b16 %v73
  %v495 = vunpack.c.h.b16 %v73
  %v496 = vunpack.c.l.b16 %v74
  %v497 = vunpack.c.h.b16 %v74
  %v498 = vunpack.c.l.b16 %v75
  %v499 = vunpack.c.h.b16 %v75
  %v500 = vunpack.c.l.b16 %v76
  %v501 = vunpack.c.h.b16 %v76
  %v502 = vunpack.c.l.b16 %v77
  %v503 = vunpack.c.h.b16 %v77
  %v504 = vunpack.c.l.b16 %v78
  %v505 = vunpack.c.h.b16 %v78
  %v506 = vunpack.c.l.b16 %v79
  %v507 = vunpack.c.h.b16 %v79
  %v508 = vunpack.c.l.b16 %v80
  %v509 = vunpack.c.h.b16 %v80
  %v510 = vunpack.c.l.b16 %v81
  %v511 = vunpack.c.h.b16 %v81
  %v512 = vunpack.c.l.b16 %v82
  %v513 = vunpack.c.h.b16 %v82
  %v514 = vunpack.c.l.b16 %v83
  %v515 = vunpack.c.h.b16 %v83
  %v516 = vunpack.c.l.b16 %v84
  %v517 = vunpack.c.h.b16 %v84
  %v518 = vunpack.c.l.b16 %v85
  %v519 = vunpack.c.h.b16 %v85
  %v520 = vunpack.c.l.b16 %v86
  %v521 = vunpack.c.h.b16 %v86
  %v522 = vunpack.c.l.b16 %v87
  %v523 = vunpack.c.h.b16 %v87
  %v524 = vunpack.c.l.b16 %v88
  %v525 = vunpack.c.h.b16 %v88
  %v526 = vunpack.c.l.b16 %v89
  %v527 = vunpack.c.h.b16 %v89
  %v528 = vunpack.c.l.b16 %v90
  %v529 = vunpack.c.h.b16 %v90
  %v530 = vunpack.c.l.b16 %v91
  %v531 = vunpack.c.h.b16 %v91
  %v532 = vunpack.c.l.b16 %v92
  %v533 = vunpack.c.h.b16 %v92
  %v534 = vunpack.c.l.b16 %v93
  %v535 = vunpack.c.h.b16 %v93
  %v536 = vunpack.c.l.b16 %v94
  %v537 = vunpack.c.h.b16 %v94
  %v538 = vunpack.c.l.b16 %v95
  %v539 = vunpack.c.h.b16 %v95
  %v540 = vunpack.c.l.b16 %v96
  %v541 = vunpack.c.h.b16 %v96
  %v542 = vunpack.c.l.b16 %v97
  %v543 = vunpack.c.h.b16 %v97
  %v544 = vunpack.c.l.b16 %v98
  %v545 = vunpack.c.h.b16 %v98
  %v546 = vunpack.c.l.b16 %v99
  %v547 = vunpack.c.h.b16 %v99
  %v548 = vunpack.c.l.b16 %v100
  %v549 = vunpack.c.h.b16 %v100
  %v550 = vunpack.c.l.b16 %v101
  %v551 = vunpack.c.h.b16 %v101
  %v552 = vunpack.c.l.b16 %v102
  %v553 = vunpack.c.h.b16 %v102
  %v554 = vunpack.c.l.b16 %v103
  %v555 = vunpack.c.h.b16 %v103
  %v556 = vunpack.c.l.b16 %v104
  %v557 = vunpack.c.h.b16 %v104
  %v558 = vunpack.c.l.b16 %v105
  %v559 = vunpack.c.h.b16 %v105
  %v560 = vunpack.c.l.b16 %v106
  %v561 = vunpack.c.h.b16 %v106
  %v562 = vunpack.c.l.b16 %v107
  %v563 = vunpack.c.h.b16 %v107
  %v564 = vunpack.c.l.b16 %v108
  %v565 = vunpack.c.h.b16 %v108
  %v566 = vunpack.c.l.b16 %v109
  %v567 = vunpack.c.h.b16 %v109
  %v568 = vunpack.c.l.b16 %v110
  %v569 = vunpack.c.h.b16 %v110
  %v570 = vunpack.c.l.b16 %v111
  %v571 = vunpack.c.h.b16 %v111
  %v572 = vunpack.c.l.b16 %v112
  %v573 = vunpack.c.h.b16 %v112
  %v574 = vunpack.c.l.b16 %v113
  %v575 = vunpack.c.h.b16 %v113
  %v576 = vunpack.c.l.b16 %v114
  %v577 = vunpack.c.h.b16 %v114
  %v578 = vunpack.c.l.b16 %v115
  %v579 = vunpack.c.h.b16 %v115
  %v580 = vunpack.c.l.b16 %v116
  %v581 = vunpack.c.h.b16 %v116
  %v582 = vunpack.c.l.b16 %v117
  %v583 = vunpack.c.h.b16 %v117
  %v584 = vunpack.c.l.b16 %v118
  %v585 = vunpack.c.h.b16 %v118
  %v586 = vunpack.c.l.b16 %v119
  %v587 = vunpack.c.h.b16 %v119
  %v588 = vunpack.c.l.b16 %v120
  %v589 = vunpack.c.h.b16 %v120
  %v590 = vunpack.c.l.b16 %v121
  %v591 = vunpack.c.h.b16 %v121
  %v592 = vunpack.c.l.b16 %v122
  %v593 = vunpack.c.h.b16 %v122
  %v594 = vunpack.c.l.b16 %v123
  %v595 = vunpack.c.h.b16 %v123
  %v596 = vunpack.c.l.b16 %v124
  %v597 = vunpack.c.h.b16 %v124
  %v598 = vunpack.c.l.b16 %v125
  %v599 = vunpack.c.h.b16 %v125
  %v600 = vunpack.c.l.b16 %v126
  %v601 = vunpack.c.h.b16 %v126
  %v602 = vunpack.c.l.b16 %v127
  %v603 = vunpack.c.h.b16 %v127
  %v604 = vunpack.c.l.b16 %v128
  %v605 = vunpack.c.h.b16 %v128
  %v606 = vunpack.c.l.b16 %v129
  %v607 = vunpack.c.h.b16 %v129
  %v608 = vunpack.c.l.b16 %v130
  %v609 = vunpack.c.h.b16 %v130
  %v610 = vunpack.c.l.b16 %v131
  %v611 = vunpack.c.h.b16 %v131
  %v612 = vunpack.c.l.b16 %v132
  %v613 = vunpack.c.h.b16 %v132
  %v614 = vunpack.c.l.b16 %v133
  %v615 = vunpack.c.h.b16 %v133
  %v616 = vunpack.c.l.b16 %v134
  %v617 = vunpack.c.h.b16 %v134
  %v618 = vunpack.c.l.b16 %v135
  %v619 = vunpack.c.h.b16 %v135
  %v620 = vunpack.c.l.b16 %v136
  %v621 = vunpack.c.h.b16 %v136
  %v622 = vunpack.c.l.b16 %v137
  %v623 = vunpack.c.h.b16 %v137
  %v624 = vunpack.c.l.b16 %v138
  %v625 = vunpack.c.h.b16 %v138
  %v626 = vunpack.c.l.b16 %v139
  %v627 = vunpack.c.h.b16 %v139
  %v628 = vunpack.c.l.b16 %v140
  %v629 = vunpack.c.h.b16 %v140
  %v630 = vunpack.c.l.b16 %v141
  %v631 = vunpack.c.h.b16 %v141
  %v632 = vunpack.c.l.b16 %v142
  %v633 = vunpack.c.h.b16 %v142
  %v634 = vunpack.c.l.b16 %v143
  %v635 = vunpack.c.h.b16 %v143
  %v636 = vunpack.c.l.b16 %v144
  %v637 = vunpack.c.h.b16 %v144
  %v638 = vunpack.c.l.b16 %v145
  %v639 = vunpack.c.h.b16 %v145
  %v640 = vunpack.c.l.b16 %v146
  %v641 = vunpack.c.h.b16 %v146
  %v642 = vunpack.c.l.b16 %v147
  %v643 = vunpack.c.h.b16 %v147
  %v644 = vunpack.c.l.b16 %v148
  %v645 = vunpack.c.h.b16 %v148
  %v646 = vunpack.c.l.b16 %v149
  %v647 = vunpack.c.h.b16 %v149
  %v648 = vunpack.c.l.b16 %v150
  %v649 = vunpack.c.h.b16 %v150
  %v650 = vunpack.c.l.b16 %v151
  %v651 = vunpack.c.h.b16 %v151
  %v652 = vunpack.c.l.b16 %v152
  %v653 = vunpack.c.h.b16 %v152
  %v654 = vunpack.c.l.b16 %v153
  %v655 = vunpack.c.h.b16 %v153
  %v656 = vunpack.c.l.b16 %v154
  %v657 = vunpack.c.h.b16 %v154
  %v658 = vunpack.c.l.b16 %v155
  %v659 = vunpack.c.h.b16 %v155
  %v660 = vunpack.c.l.b16 %v156
  %v661 = vunpack.c.h.b16 %v156
  %v662 = vunpack.c.l.b16 %v157
  %v663 = vunpack.c.h.b16 %v157
  %v664 = vpack.c.b16 %v416, %v408
  %v665 = vpack.c.b16 %v417, %v409
  %v666 = vpack.c.b16 %v418, %v410
  %v667 = vpack.c.b16 %v419, %v411
  %v668 = vpack.c.b16 %v420, %v412
  %v669 = vpack.c.b16 %v421, %v413
  %v670 = vpack.c.b16 %v422, %v414
  %v671 = vpack.c.b16 %v423, %v415
  %v672 = vpack.c.b16 %v432, %v424
  %v673 = vpack.c.b16 %v433, %v425
  %v674 = vpack.c.b16 %v434, %v426
  %v675 = vpack.c.b16 %v435, %v427
  %v676 = vpack.c.b16 %v436, %v428
  %v677 = vpack.c.b16 %v437, %v429
  %v678 = vpack.c.b16 %v438, %v430
  %v679 = vpack.c.b16 %v439, %v431
  %v680 = vpack.c.b16 %v448, %v440
  %v681 = vpack.c.b16 %v449, %v441
  %v682 = vpack.c.b16 %v450, %v442
  %v683 = vpack.c.b16 %v451, %v443
  %v684 = vpack.c.b16 %v452, %v444
  %v685 = vpack.c.b16 %v453, %v445
  %v686 = vpack.c.b16 %v454, %v446
  %v687 = vpack.c.b16 %v455, %v447
  %v688 = vpack.c.b16 %v464, %v456
  %v689 = vpack.c.b16 %v465, %v457
  %v690 = vpack.c.b16 %v466, %v458
  %v691 = vpack.c.b16 %v467, %v459
  %v692 = vpack.c.b16 %v468, %v460
  %v693 = vpack.c.b16 %v469, %v461
  %v694 = vpack.c.b16 %v470, %v462
  %v695 = vpack.c.b16 %v471, %v463
  %v696 = vpack.c.b16 %v480, %v472
  %v697 = vpack.c.b16 %v481, %v473
  %v698 = vpack.c.b16 %v482, %v474
  %v699 = vpack.c.b16 %v483, %v475
  %v700 = vpack.c.b16 %v484, %v476
  %v701 = vpack.c.b16 %v485, %v477
  %v702 = vpack.c.b16 %v486, %v478
  %v703 = vpack.c.b16 %v487, %v479
  %v704 = vpack.c.b16 %v496, %v488
  %v705 = vpack.c.b16 %v497, %v489
  %v706 = vpack.c.b16 %v498, %v490
  %v707 = vpack.c.b16 %v499, %v491
  %v708 = vpack.c.b16 %v500, %v492
  %v709 = vpack.c.b16 %v501, %v493
  %v710 = vpack.c.b16 %v502, %v494
  %v711 = vpack.c.b16 %v503, %v495
  %v712 = vpack.c.b16 %v512, %v504
  %v713 = vpack.c.b16 %v513, %v505
  %v714 = vpack.c.b16 %v514, %v506
  %v715 = vpack.c.b16 %v515, %v507
  %v716 = vpack.c.b16 %v516, %v508
  %v717 = vpack.c.b16 %v517, %v509
  %v718 = vpack.c.b16 %v518, %v510
  %v719 = vpack.c.b16 %v519, %v511
  %v720 = vpack.c.b16 %v528, %v520
  %v721 = vpack.c.b16 %v529, %v521
  %v722 = vpack.c.b16 %v530, %v522
  %v723 = vpack.c.b16 %v531, %v523
  %v724 = vpack.c.b16 %v532, %v524
  %v725 = vpack.c.b16 %v533, %v525
  %v726 = vpack.c.b16 %v534, %v526
  %v727 = vpack.c.b16 %v535, %v527
  %v728 = vpack.c.b16 %v544, %v536
  %v729 = vpack.c.b16 %v545, %v537
  %v730 = vpack.c.b16 %v546, %v538
  %v731 = vpack.c.b16 %v547, %v539
  %v732 = vpack.c.b16 %v548, %v540
  %v733 = vpack.c.b16 %v549, %v541
  %v734 = vpack.c.b16 %v550, %v542
  %v735 = vpack.c.b16 %v551, %v543
  %v736 = vpack.c.b16 %v560, %v552
  %v737 = vpack.c.b16 %v561, %v553
  %v738 = vpack.c.b16 %v562, %v554
  %v739 = vpack.c.b16 %v563, %v555
  %v740 = vpack.c.b16 %v564, %v556
  %v741 = vpack.c.b16 %v565, %v557
  %v742 = vpack.c.b16 %v566, %v558
  %v743 = vpack.c.b16 %v567, %v559
  %v744 = vpack.c.b16 %v576, %v568
  %v745 = vpack.c.b16 %v577, %v569
  %v746 = vpack.c.b16 %v578, %v570
  %v747 = vpack.c.b16 %v579, %v571
  %v748 = vpack.c.b16 %v580, %v572
  %v749 = vpack.c.b16 %v581, %v573
  %v750 = vpack.c.b16 %v582, %v574
  %v751 = vpack.c.b16 %v583, %v575
  %v752 = vpack.c.b16 %v592, %v584
  %v753 = vpack.c.b16 %v593, %v585
  %v754 = vpack.c.b16 %v594, %v586
  %v755 = vpack.c.b16 %v595, %v587
  %v756 = vpack.c.b16 %v596, %v588
  %v757 = vpack.c.b16 %v597, %v589
  %v758 = vpack.c.b16 %v598, %v590
  %v759 = vpack.c.b16 %v599, %v591
  %v760 = vpack.c.b16 %v608, %v600
  %v761 = vpack.c.b16 %v609, %v601
  %v762 = vpack.c.b16 %v610, %v602
  %v763 = vpack.c.b16 %v611, %v603
  %v764 = vpack.c.b16 %v612, %v604
  %v765 = vpack.c.b16 %v613, %v605
  %v766 = vpack.c.b16 %v614, %v606
  %v767 = vpack.c.b16 %v615, %v607
  %v768 = vpack.c.b16 %v624, %v616
  %v769 = vpack.c.b16 %v625, %v617
  %v770 = vpack.c.b16 %v626, %v618
  %v771 = vpack.c.b16 %v627, %v619
  %v772 = vpack.c.b16 %v628, %v620
  %v773 = vpack.c.b16 %v629, %v621
  %v774 = vpack.c.b16 %v630, %v622
  %v775 = vpack.c.b16 %v631, %v623
  %v776 = vpack.c.b16 %v640, %v632
  %v777 = vpack.c.b16 %v641, %v633
  %v778 = vpack.c.b16 %v642, %v634
  %v779 = vpack.c.b16 %v643, %v635
  %v780 = vpack.c.b16 %v644, %v636
  %v781 = vpack.c.b16 %v645, %v637
  %v782 = vpack.c.b16 %v646, %v638
  %v783 = vpack.c.b16 %v647, %v639
  %v784 = vpack.c.b16 %v656, %v648
  %v785 = vpack.c.b16 %v657, %v649
  %v786 = vpack.c.b16 %v658, %v650
  %v787 = vpack.c.b16 %v659, %v651
  %v788 = vpack.c.b16 %v660, %v652
  %v789 = vpack.c.b16 %v661, %v653
  %v790 = vpack.c.b16 %v662, %v654
  %v791 = vpack.c.b16 %v663, %v655
  %920 = vmatprep.subr.bf16.mxu0 %v665
  %921 = vmatpush1.bf16.msra.mxu0 %v664
  %922 = vmatprep.subr.bf16.mxu0 %v673
  %923 = vmatpush1.bf16.msra.mxu0 %v672
  %924 = vmatprep.subr.bf16.mxu0 %v681
  %925 = vmatpush1.bf16.msra.mxu0 %v680
  %926 = vmatprep.subr.bf16.mxu0 %v689
  %927 = vmatpush1.bf16.msra.mxu0 %v688
  %928 = vmatprep.subr.bf16.mxu0 %v697
  %929 = vmatpush1.bf16.msra.mxu0 %v696
  %930 = vmatprep.subr.bf16.mxu0 %v705
  %931 = vmatpush1.bf16.msra.mxu0 %v704
  %932 = vmatprep.subr.bf16.mxu0 %v713
  %933 = vmatpush1.bf16.msra.mxu0 %v712
  %934 = vmatprep.subr.bf16.mxu0 %v721
  %935 = vmatpush1.bf16.msra.mxu0 %v720
  %936 = vmatprep.subr.bf16.mxu0 %v729
  %937 = vmatpush1.bf16.msra.mxu0 %v728
  %938 = vmatprep.subr.bf16.mxu0 %v737
  %939 = vmatpush1.bf16.msra.mxu0 %v736
  %940 = vmatprep.subr.bf16.mxu0 %v745
  %941 = vmatpush1.bf16.msra.mxu0 %v744
  %942 = vmatprep.subr.bf16.mxu0 %v753
  %943 = vmatpush1.bf16.msra.mxu0 %v752
  %944 = vmatprep.subr.bf16.mxu0 %v761
  %945 = vmatpush1.bf16.msra.mxu0 %v760
  %946 = vmatprep.subr.bf16.mxu0 %v769
  %947 = vmatpush1.bf16.msra.mxu0 %v768
  %948 = vmatprep.subr.bf16.mxu0 %v777
  %949 = vmatpush1.bf16.msra.mxu0 %v776
  %950 = vmatprep.subr.bf16.mxu0 %v785
  %951 = vmatpush1.bf16.msra.mxu0 %v784
  %952 = vmatprep.mubr.bf16.mxu0 %v249
  %953 = vmatmul.mubr.bf16.gmra.mrb[0].mxu0 %v248
  %v954 = vpop.f32.mrb[0].mxu0
  %v955 = vadd.f32 %v163, %v954
  %v956 = vpop.f32.mrb[0].mxu0
  %v957 = vadd.f32 %v167, %v956
  %v958 = vpop.f32.mrb[0].mxu0
  %v959 = vadd.f32 %v163, %v958
  %v960 = vpop.f32.mrb[0].mxu0
  %v961 = vadd.f32 %v167, %v960
  %962 = vmatprep.mubr.bf16.mxu0 %v251
  %963 = vmatmul.mubr.bf16.gmra.mrb[0].mxu0 %v250
  %v964 = vpop.f32.mrb[0].mxu0
  %v965 = vadd.f32 %v163, %v964
  %v966 = vpop.f32.mrb[0].mxu0
  %v967 = vadd.f32 %v167, %v966
  %v968 = vpop.f32.mrb[0].mxu0
  %v969 = vadd.f32 %v163, %v968
  %v970 = vpop.f32.mrb[0].mxu0
  %v971 = vadd.f32 %v167, %v970
  %972 = vmatprep.mubr.bf16.mxu0 %v253
  %973 = vmatmul.mubr.bf16.gmra.mrb[0].mxu0 %v252
  %v974 = vpop.f32.mrb[0].mxu0
  %v975 = vadd.f32 %v163, %v974
  %v976 = vpop.f32.mrb[0].mxu0
  %v977 = vadd.f32 %v167, %v976
  %v978 = vpop.f32.mrb[0].mxu0
  %v979 = vadd.f32 %v163, %v978
  %v980 = vpop.f32.mrb[0].mxu0
  %v981 = vadd.f32 %v167, %v980
  %982 = vmatprep.mubr.bf16.mxu0 %v255
  %983 = vmatmul.mubr.bf16.gmra.mrb[0].mxu0 %v254
  %v984 = vpop.f32.mrb[0].mxu0
  %v985 = vadd.f32 %v163, %v984
  %v986 = vpop.f32.mrb[0].mxu0
  %v987 = vadd.f32 %v167, %v986
  %v988 = vpop.f32.mrb[0].mxu0
  %v989 = vadd.f32 %v163, %v988
  %v990 = vpop.f32.mrb[0].mxu0
  %v991 = vadd.f32 %v167, %v990
  %992 = vmatprep.mubr.bf16.mxu0 %v257
  %993 = vmatmul.mubr.bf16.gmra.mrb[0].mxu0 %v256
  %v994 = vpop.f32.mrb[0].mxu0
  %v995 = vadd.f32 %v163, %v994
  %v996 = vpop.f32.mrb[0].mxu0
  %v997 = vadd.f32 %v167, %v996
  %v998 = vpop.f32.mrb[0].mxu0
  %v999 = vadd.f32 %v163, %v998
  %v1000 = vpop.f32.mrb[0].mxu0
  %v1001 = vadd.f32 %v167, %v1000
  %1002 = vmatprep.mubr.bf16.mxu0 %v259
  %1003 = vmatmul.mubr.bf16.gmra.mrb[0].mxu0 %v258
  %v1004 = vpop.f32.mrb[0].mxu0
  %v1005 = vadd.f32 %v163, %v1004
  %v1006 = vpop.f32.mrb[0].mxu0
  %v1007 = vadd.f32 %v167, %v1006
  %v1008 = vpop.f32.mrb[0].mxu0
  %v1009 = vadd.f32 %v163, %v1008
  %v1010 = vpop.f32.mrb[0].mxu0
  %v1011 = vadd.f32 %v167, %v1010
  %1012 = vmatprep.mubr.bf16.mxu0 %v261
  %1013 = vmatmul.mubr.bf16.gmra.mrb[0].mxu0 %v260
  %v1014 = vpop.f32.mrb[0].mxu0
  %v1015 = vadd.f32 %v163, %v1014
  %v1016 = vpop.f32.mrb[0].mxu0
  %v1017 = vadd.f32 %v167, %v1016
  %v1018 = vpop.f32.mrb[0].mxu0
  %v1019 = vadd.f32 %v163, %v1018
  %v1020 = vpop.f32.mrb[0].mxu0
  %v1021 = vadd.f32 %v167, %v1020
  %1022 = vmatprep.mubr.bf16.mxu0 %v263
  %1023 = vmatmul.mubr.bf16.gmra.mrb[0].mxu0 %v262
  %v1024 = vpop.f32.mrb[0].mxu0
  %v1025 = vadd.f32 %v163, %v1024
  %v1026 = vpop.f32.mrb[0].mxu0
  %v1027 = vadd.f32 %v167, %v1026
  %v1028 = vpop.f32.mrb[0].mxu0
  %v1029 = vadd.f32 %v163, %v1028
  %v1030 = vpop.f32.mrb[0].mxu0
  %v1031 = vadd.f32 %v167, %v1030
  %1032 = vdwg.mxu0
  %1033 = vmatprep.subr.bf16.mxu0 %v667
  %1034 = vmatpush1.bf16.msra.mxu0 %v666
  %1035 = vmatprep.subr.bf16.mxu0 %v675
  %1036 = vmatpush1.bf16.msra.mxu0 %v674
  %1037 = vmatprep.subr.bf16.mxu0 %v683
  %1038 = vmatpush1.bf16.msra.mxu0 %v682
  %1039 = vmatprep.subr.bf16.mxu0 %v691
  %1040 = vmatpush1.bf16.msra.mxu0 %v690
  %1041 = vmatprep.subr.bf16.mxu0 %v699
  %1042 = vmatpush1.bf16.msra.mxu0 %v698
  %1043 = vmatprep.subr.bf16.mxu0 %v707
  %1044 = vmatpush1.bf16.msra.mxu0 %v706
  %1045 = vmatprep.subr.bf16.mxu0 %v715
  %1046 = vmatpush1.bf16.msra.mxu0 %v714
  %1047 = vmatprep.subr.bf16.mxu0 %v723
  %1048 = vmatpush1.bf16.msra.mxu0 %v722
  %1049 = vmatprep.subr.bf16.mxu0 %v731
  %1050 = vmatpush1.bf16.msra.mxu0 %v730
  %1051 = vmatprep.subr.bf16.mxu0 %v739
  %1052 = vmatpush1.bf16.msra.mxu0 %v738
  %1053 = vmatprep.subr.bf16.mxu0 %v747
  %1054 = vmatpush1.bf16.msra.mxu0 %v746
  %1055 = vmatprep.subr.bf16.mxu0 %v755
  %1056 = vmatpush1.bf16.msra.mxu0 %v754
  %1057 = vmatprep.subr.bf16.mxu0 %v763
  %1058 = vmatpush1.bf16.msra.mxu0 %v762
  %1059 = vmatprep.subr.bf16.mxu0 %v771
  %1060 = vmatpush1.bf16.msra.mxu0 %v770
  %1061 = vmatprep.subr.bf16.mxu0 %v779
  %1062 = vmatpush1.bf16.msra.mxu0 %v778
  %1063 = vmatprep.subr.bf16.mxu0 %v787
  %1064 = vmatpush1.bf16.msra.mxu0 %v786
  %1065 = vmatprep.mubr.bf16.mxu0 %v249
  %1066 = vmatmul.mubr.bf16.gmra.mrb[0].mxu0 %v248
  %v1067 = vpop.f32.mrb[0].mxu0
  %v1068 = vadd.f32 %v171, %v1067
  %v1069 = vpop.f32.mrb[0].mxu0
  %v1070 = vadd.f32 %v175, %v1069
  %v1071 = vpop.f32.mrb[0].mxu0
  %v1072 = vadd.f32 %v171, %v1071
  %v1073 = vpop.f32.mrb[0].mxu0
  %v1074 = vadd.f32 %v175, %v1073
  %1075 = vmatprep.mubr.bf16.mxu0 %v251
  %1076 = vmatmul.mubr.bf16.gmra.mrb[0].mxu0 %v250
  %v1077 = vpop.f32.mrb[0].mxu0
  %v1078 = vadd.f32 %v171, %v1077
  %v1079 = vpop.f32.mrb[0].mxu0
  %v1080 = vadd.f32 %v175, %v1079
  %v1081 = vpop.f32.mrb[0].mxu0
  %v1082 = vadd.f32 %v171, %v1081
  %v1083 = vpop.f32.mrb[0].mxu0
  %v1084 = vadd.f32 %v175, %v1083
  %1085 = vmatprep.mubr.bf16.mxu0 %v253
  %1086 = vmatmul.mubr.bf16.gmra.mrb[0].mxu0 %v252
  %v1087 = vpop.f32.mrb[0].mxu0
  %v1088 = vadd.f32 %v171, %v1087
  %v1089 = vpop.f32.mrb[0].mxu0
  %v1090 = vadd.f32 %v175, %v1089
  %v1091 = vpop.f32.mrb[0].mxu0
  %v1092 = vadd.f32 %v171, %v1091
  %v1093 = vpop.f32.mrb[0].mxu0
  %v1094 = vadd.f32 %v175, %v1093
  %1095 = vmatprep.mubr.bf16.mxu0 %v255
  %1096 = vmatmul.mubr.bf16.gmra.mrb[0].mxu0 %v254
  %v1097 = vpop.f32.mrb[0].mxu0
  %v1098 = vadd.f32 %v171, %v1097
  %v1099 = vpop.f32.mrb[0].mxu0
  %v1100 = vadd.f32 %v175, %v1099
  %v1101 = vpop.f32.mrb[0].mxu0
  %v1102 = vadd.f32 %v171, %v1101
  %v1103 = vpop.f32.mrb[0].mxu0
  %v1104 = vadd.f32 %v175, %v1103
  %1105 = vmatprep.mubr.bf16.mxu0 %v257
  %1106 = vmatmul.mubr.bf16.gmra.mrb[0].mxu0 %v256
  %v1107 = vpop.f32.mrb[0].mxu0
  %v1108 = vadd.f32 %v171, %v1107
  %v1109 = vpop.f32.mrb[0].mxu0
  %v1110 = vadd.f32 %v175, %v1109
  %v1111 = vpop.f32.mrb[0].mxu0
  %v1112 = vadd.f32 %v171, %v1111
  %v1113 = vpop.f32.mrb[0].mxu0
  %v1114 = vadd.f32 %v175, %v1113
  %1115 = vmatprep.mubr.bf16.mxu0 %v259
  %1116 = vmatmul.mubr.bf16.gmra.mrb[0].mxu0 %v258
  %v1117 = vpop.f32.mrb[0].mxu0
  %v1118 = vadd.f32 %v171, %v1117
  %v1119 = vpop.f32.mrb[0].mxu0
  %v1120 = vadd.f32 %v175, %v1119
  %v1121 = vpop.f32.mrb[0].mxu0
  %v1122 = vadd.f32 %v171, %v1121
  %v1123 = vpop.f32.mrb[0].mxu0
  %v1124 = vadd.f32 %v175, %v1123
  %1125 = vmatprep.mubr.bf16.mxu0 %v261
  %1126 = vmatmul.mubr.bf16.gmra.mrb[0].mxu0 %v260
  %v1127 = vpop.f32.mrb[0].mxu0
  %v1128 = vadd.f32 %v171, %v1127
  %v1129 = vpop.f32.mrb[0].mxu0
  %v1130 = vadd.f32 %v175, %v1129
  %v1131 = vpop.f32.mrb[0].mxu0
  %v1132 = vadd.f32 %v171, %v1131
  %v1133 = vpop.f32.mrb[0].mxu0
  %v1134 = vadd.f32 %v175, %v1133
  %1135 = vmatprep.mubr.bf16.mxu0 %v263
  %1136 = vmatmul.mubr.bf16.gmra.mrb[0].mxu0 %v262
  %v1137 = vpop.f32.mrb[0].mxu0
  %v1138 = vadd.f32 %v171, %v1137
  %v1139 = vpop.f32.mrb[0].mxu0
  %v1140 = vadd.f32 %v175, %v1139
  %v1141 = vpop.f32.mrb[0].mxu0
  %v1142 = vadd.f32 %v171, %v1141
  %v1143 = vpop.f32.mrb[0].mxu0
  %v1144 = vadd.f32 %v175, %v1143
  %1145 = vdwg.mxu0
  %1146 = vmatprep.subr.bf16.mxu0 %v669
  %1147 = vmatpush1.bf16.msra.mxu0 %v668
  %1148 = vmatprep.subr.bf16.mxu0 %v677
  %1149 = vmatpush1.bf16.msra.mxu0 %v676
  %1150 = vmatprep.subr.bf16.mxu0 %v685
  %1151 = vmatpush1.bf16.msra.mxu0 %v684
  %1152 = vmatprep.subr.bf16.mxu0 %v693
  %1153 = vmatpush1.bf16.msra.mxu0 %v692
  %1154 = vmatprep.subr.bf16.mxu0 %v701
  %1155 = vmatpush1.bf16.msra.mxu0 %v700
  %1156 = vmatprep.subr.bf16.mxu0 %v709
  %1157 = vmatpush1.bf16.msra.mxu0 %v708
  %1158 = vmatprep.subr.bf16.mxu0 %v717
  %1159 = vmatpush1.bf16.msra.mxu0 %v716
  %1160 = vmatprep.subr.bf16.mxu0 %v725
  %1161 = vmatpush1.bf16.msra.mxu0 %v724
  %1162 = vmatprep.subr.bf16.mxu0 %v733
  %1163 = vmatpush1.bf16.msra.mxu0 %v732
  %1164 = vmatprep.subr.bf16.mxu0 %v741
  %1165 = vmatpush1.bf16.msra.mxu0 %v740
  %1166 = vmatprep.subr.bf16.mxu0 %v749
  %1167 = vmatpush1.bf16.msra.mxu0 %v748
  %1168 = vmatprep.subr.bf16.mxu0 %v757
  %1169 = vmatpush1.bf16.msra.mxu0 %v756
  %1170 = vmatprep.subr.bf16.mxu0 %v765
  %1171 = vmatpush1.bf16.msra.mxu0 %v764
  %1172 = vmatprep.subr.bf16.mxu0 %v773
  %1173 = vmatpush1.bf16.msra.mxu0 %v772
  %1174 = vmatprep.subr.bf16.mxu0 %v781
  %1175 = vmatpush1.bf16.msra.mxu0 %v780
  %1176 = vmatprep.subr.bf16.mxu0 %v789
  %1177 = vmatpush1.bf16.msra.mxu0 %v788
  %1178 = vmatprep.mubr.bf16.mxu0 %v249
  %1179 = vmatmul.mubr.bf16.gmra.mrb[0].mxu0 %v248
  %v1180 = vpop.f32.mrb[0].mxu0
  %v1181 = vadd.f32 %v179, %v1180
  %v1182 = vpop.f32.mrb[0].mxu0
  %v1183 = vadd.f32 %v183, %v1182
  %v1184 = vpop.f32.mrb[0].mxu0
  %v1185 = vadd.f32 %v179, %v1184
  %v1186 = vpop.f32.mrb[0].mxu0
  %v1187 = vadd.f32 %v183, %v1186
  %1188 = vmatprep.mubr.bf16.mxu0 %v251
  %1189 = vmatmul.mubr.bf16.gmra.mrb[0].mxu0 %v250
  %v1190 = vpop.f32.mrb[0].mxu0
  %v1191 = vadd.f32 %v179, %v1190
  %v1192 = vpop.f32.mrb[0].mxu0
  %v1193 = vadd.f32 %v183, %v1192
  %v1194 = vpop.f32.mrb[0].mxu0
  %v1195 = vadd.f32 %v179, %v1194
  %v1196 = vpop.f32.mrb[0].mxu0
  %v1197 = vadd.f32 %v183, %v1196
  %1198 = vmatprep.mubr.bf16.mxu0 %v253
  %1199 = vmatmul.mubr.bf16.gmra.mrb[0].mxu0 %v252
  %v1200 = vpop.f32.mrb[0].mxu0
  %v1201 = vadd.f32 %v179, %v1200
  %v1202 = vpop.f32.mrb[0].mxu0
  %v1203 = vadd.f32 %v183, %v1202
  %v1204 = vpop.f32.mrb[0].mxu0
  %v1205 = vadd.f32 %v179, %v1204
  %v1206 = vpop.f32.mrb[0].mxu0
  %v1207 = vadd.f32 %v183, %v1206
  %1208 = vmatprep.mubr.bf16.mxu0 %v255
  %1209 = vmatmul.mubr.bf16.gmra.mrb[0].mxu0 %v254
  %v1210 = vpop.f32.mrb[0].mxu0
  %v1211 = vadd.f32 %v179, %v1210
  %v1212 = vpop.f32.mrb[0].mxu0
  %v1213 = vadd.f32 %v183, %v1212
  %v1214 = vpop.f32.mrb[0].mxu0
  %v1215 = vadd.f32 %v179, %v1214
  %v1216 = vpop.f32.mrb[0].mxu0
  %v1217 = vadd.f32 %v183, %v1216
  %1218 = vmatprep.mubr.bf16.mxu0 %v257
  %1219 = vmatmul.mubr.bf16.gmra.mrb[0].mxu0 %v256
  %v1220 = vpop.f32.mrb[0].mxu0
  %v1221 = vadd.f32 %v179, %v1220
  %v1222 = vpop.f32.mrb[0].mxu0
  %v1223 = vadd.f32 %v183, %v1222
  %v1224 = vpop.f32.mrb[0].mxu0
  %v1225 = vadd.f32 %v179, %v1224
  %v1226 = vpop.f32.mrb[0].mxu0
  %v1227 = vadd.f32 %v183, %v1226
  %1228 = vmatprep.mubr.bf16.mxu0 %v259
  %1229 = vmatmul.mubr.bf16.gmra.mrb[0].mxu0 %v258
  %v1230 = vpop.f32.mrb[0].mxu0
  %v1231 = vadd.f32 %v179, %v1230
  %v1232 = vpop.f32.mrb[0].mxu0
  %v1233 = vadd.f32 %v183, %v1232
  %v1234 = vpop.f32.mrb[0].mxu0
  %v1235 = vadd.f32 %v179, %v1234
  %v1236 = vpop.f32.mrb[0].mxu0
  %v1237 = vadd.f32 %v183, %v1236
  %1238 = vmatprep.mubr.bf16.mxu0 %v261
  %1239 = vmatmul.mubr.bf16.gmra.mrb[0].mxu0 %v260
  %v1240 = vpop.f32.mrb[0].mxu0
  %v1241 = vadd.f32 %v179, %v1240
  %v1242 = vpop.f32.mrb[0].mxu0
  %v1243 = vadd.f32 %v183, %v1242
  %v1244 = vpop.f32.mrb[0].mxu0
  %v1245 = vadd.f32 %v179, %v1244
  %v1246 = vpop.f32.mrb[0].mxu0
  %v1247 = vadd.f32 %v183, %v1246
  %1248 = vmatprep.mubr.bf16.mxu0 %v263
  %1249 = vmatmul.mubr.bf16.gmra.mrb[0].mxu0 %v262
  %v1250 = vpop.f32.mrb[0].mxu0
  %v1251 = vadd.f32 %v179, %v1250
  %v1252 = vpop.f32.mrb[0].mxu0
  %v1253 = vadd.f32 %v183, %v1252
  %v1254 = vpop.f32.mrb[0].mxu0
  %v1255 = vadd.f32 %v179, %v1254
  %v1256 = vpop.f32.mrb[0].mxu0
  %v1257 = vadd.f32 %v183, %v1256
  %1258 = vdwg.mxu0
  %1259 = vmatprep.subr.bf16.mxu0 %v671
  %1260 = vmatpush1.bf16.msra.mxu0 %v670
  %1261 = vmatprep.subr.bf16.mxu0 %v679
  %1262 = vmatpush1.bf16.msra.mxu0 %v678
  %1263 = vmatprep.subr.bf16.mxu0 %v687
  %1264 = vmatpush1.bf16.msra.mxu0 %v686
  %1265 = vmatprep.subr.bf16.mxu0 %v695
  %1266 = vmatpush1.bf16.msra.mxu0 %v694
  %1267 = vmatprep.subr.bf16.mxu0 %v703
  %1268 = vmatpush1.bf16.msra.mxu0 %v702
  %1269 = vmatprep.subr.bf16.mxu0 %v711
  %1270 = vmatpush1.bf16.msra.mxu0 %v710
  %1271 = vmatprep.subr.bf16.mxu0 %v719
  %1272 = vmatpush1.bf16.msra.mxu0 %v718
  %1273 = vmatprep.subr.bf16.mxu0 %v727
  %1274 = vmatpush1.bf16.msra.mxu0 %v726
  %1275 = vmatprep.subr.bf16.mxu0 %v735
  %1276 = vmatpush1.bf16.msra.mxu0 %v734
  %1277 = vmatprep.subr.bf16.mxu0 %v743
  %1278 = vmatpush1.bf16.msra.mxu0 %v742
  %1279 = vmatprep.subr.bf16.mxu0 %v751
  %1280 = vmatpush1.bf16.msra.mxu0 %v750
  %1281 = vmatprep.subr.bf16.mxu0 %v759
  %1282 = vmatpush1.bf16.msra.mxu0 %v758
  %1283 = vmatprep.subr.bf16.mxu0 %v767
  %1284 = vmatpush1.bf16.msra.mxu0 %v766
  %1285 = vmatprep.subr.bf16.mxu0 %v775
  %1286 = vmatpush1.bf16.msra.mxu0 %v774
  %1287 = vmatprep.subr.bf16.mxu0 %v783
  %1288 = vmatpush1.bf16.msra.mxu0 %v782
  %1289 = vmatprep.subr.bf16.mxu0 %v791
  %1290 = vmatpush1.bf16.msra.mxu0 %v790
  %1291 = vmatprep.mubr.bf16.mxu0 %v249
  %1292 = vmatmul.mubr.bf16.gmra.mrb[0].mxu0 %v248
  %v1293 = vpop.f32.mrb[0].mxu0
  %v1294 = vadd.f32 %v187, %v1293
  %v1295 = vpop.f32.mrb[0].mxu0
  %v1296 = vadd.f32 %v191, %v1295
  %v1297 = vpop.f32.mrb[0].mxu0
  %v1298 = vadd.f32 %v187, %v1297
  %v1299 = vpop.f32.mrb[0].mxu0
  %v1300 = vadd.f32 %v191, %v1299
  %1301 = vmatprep.mubr.bf16.mxu0 %v251
  %1302 = vmatmul.mubr.bf16.gmra.mrb[0].mxu0 %v250
  %v1303 = vpop.f32.mrb[0].mxu0
  %v1304 = vadd.f32 %v187, %v1303
  %v1305 = vpop.f32.mrb[0].mxu0
  %v1306 = vadd.f32 %v191, %v1305
  %v1307 = vpop.f32.mrb[0].mxu0
  %v1308 = vadd.f32 %v187, %v1307
  %v1309 = vpop.f32.mrb[0].mxu0
  %v1310 = vadd.f32 %v191, %v1309
  %1311 = vmatprep.mubr.bf16.mxu0 %v253
  %1312 = vmatmul.mubr.bf16.gmra.mrb[0].mxu0 %v252
  %v1313 = vpop.f32.mrb[0].mxu0
  %v1314 = vadd.f32 %v187, %v1313
  %v1315 = vpop.f32.mrb[0].mxu0
  %v1316 = vadd.f32 %v191, %v1315
  %v1317 = vpop.f32.mrb[0].mxu0
  %v1318 = vadd.f32 %v187, %v1317
  %v1319 = vpop.f32.mrb[0].mxu0
  %v1320 = vadd.f32 %v191, %v1319
  %1321 = vmatprep.mubr.bf16.mxu0 %v255
  %1322 = vmatmul.mubr.bf16.gmra.mrb[0].mxu0 %v254
  %v1323 = vpop.f32.mrb[0].mxu0
  %v1324 = vadd.f32 %v187, %v1323
  %v1325 = vpop.f32.mrb[0].mxu0
  %v1326 = vadd.f32 %v191, %v1325
  %v1327 = vpop.f32.mrb[0].mxu0
  %v1328 = vadd.f32 %v187, %v1327
  %v1329 = vpop.f32.mrb[0].mxu0
  %v1330 = vadd.f32 %v191, %v1329
  %1331 = vmatprep.mubr.bf16.mxu0 %v257
  %1332 = vmatmul.mubr.bf16.gmra.mrb[0].mxu0 %v256
  %v1333 = vpop.f32.mrb[0].mxu0
  %v1334 = vadd.f32 %v187, %v1333
  %v1335 = vpop.f32.mrb[0].mxu0
  %v1336 = vadd.f32 %v191, %v1335
  %v1337 = vpop.f32.mrb[0].mxu0
  %v1338 = vadd.f32 %v187, %v1337
  %v1339 = vpop.f32.mrb[0].mxu0
  %v1340 = vadd.f32 %v191, %v1339
  %1341 = vmatprep.mubr.bf16.mxu0 %v259
  %1342 = vmatmul.mubr.bf16.gmra.mrb[0].mxu0 %v258
  %v1343 = vpop.f32.mrb[0].mxu0
  %v1344 = vadd.f32 %v187, %v1343
  %v1345 = vpop.f32.mrb[0].mxu0
  %v1346 = vadd.f32 %v191, %v1345
  %v1347 = vpop.f32.mrb[0].mxu0
  %v1348 = vadd.f32 %v187, %v1347
  %v1349 = vpop.f32.mrb[0].mxu0
  %v1350 = vadd.f32 %v191, %v1349
  %1351 = vmatprep.mubr.bf16.mxu0 %v261
  %1352 = vmatmul.mubr.bf16.gmra.mrb[0].mxu0 %v260
  %v1353 = vpop.f32.mrb[0].mxu0
  %v1354 = vadd.f32 %v187, %v1353
  %v1355 = vpop.f32.mrb[0].mxu0
  %v1356 = vadd.f32 %v191, %v1355
  %v1357 = vpop.f32.mrb[0].mxu0
  %v1358 = vadd.f32 %v187, %v1357
  %v1359 = vpop.f32.mrb[0].mxu0
  %v1360 = vadd.f32 %v191, %v1359
  %1361 = vmatprep.mubr.bf16.mxu0 %v263
  %1362 = vmatmul.mubr.bf16.gmra.mrb[0].mxu0 %v262
  %v1363 = vpop.f32.mrb[0].mxu0
  %v1364 = vadd.f32 %v187, %v1363
  %v1365 = vpop.f32.mrb[0].mxu0
  %v1366 = vadd.f32 %v191, %v1365
  %v1367 = vpop.f32.mrb[0].mxu0
  %v1368 = vadd.f32 %v187, %v1367
  %v1369 = vpop.f32.mrb[0].mxu0
  %v1370 = vadd.f32 %v191, %v1369
  %1371 = vdwg.mxu0
  %v1372 = vpack.c.bf16 %v959, %v955
  %v1373 = vpack.c.bf16 %v961, %v957
  %v1374 = vpack.c.bf16 %v1072, %v1068
  %v1375 = vpack.c.bf16 %v1074, %v1070
  %v1376 = vpack.c.bf16 %v1185, %v1181
  %v1377 = vpack.c.bf16 %v1187, %v1183
  %v1378 = vpack.c.bf16 %v1298, %v1294
  %v1379 = vpack.c.bf16 %v1300, %v1296
  %v1380 = vpack.c.bf16 %v969, %v965
  %v1381 = vpack.c.bf16 %v971, %v967
  %v1382 = vpack.c.bf16 %v1082, %v1078
  %v1383 = vpack.c.bf16 %v1084, %v1080
  %v1384 = vpack.c.bf16 %v1195, %v1191
  %v1385 = vpack.c.bf16 %v1197, %v1193
  %v1386 = vpack.c.bf16 %v1308, %v1304
  %v1387 = vpack.c.bf16 %v1310, %v1306
  %v1388 = vpack.c.bf16 %v979, %v975
  %v1389 = vpack.c.bf16 %v981, %v977
  %v1390 = vpack.c.bf16 %v1092, %v1088
  %v1391 = vpack.c.bf16 %v1094, %v1090
  %v1392 = vpack.c.bf16 %v1205, %v1201
  %v1393 = vpack.c.bf16 %v1207, %v1203
  %v1394 = vpack.c.bf16 %v1318, %v1314
  %v1395 = vpack.c.bf16 %v1320, %v1316
  %v1396 = vpack.c.bf16 %v989, %v985
  %v1397 = vpack.c.bf16 %v991, %v987
  %v1398 = vpack.c.bf16 %v1102, %v1098
  %v1399 = vpack.c.bf16 %v1104, %v1100
  %v1400 = vpack.c.bf16 %v1215, %v1211
  %v1401 = vpack.c.bf16 %v1217, %v1213
  %v1402 = vpack.c.bf16 %v1328, %v1324
  %v1403 = vpack.c.bf16 %v1330, %v1326
  %v1404 = vpack.c.bf16 %v999, %v995
  %v1405 = vpack.c.bf16 %v1001, %v997
  %v1406 = vpack.c.bf16 %v1112, %v1108
  %v1407 = vpack.c.bf16 %v1114, %v1110
  %v1408 = vpack.c.bf16 %v1225, %v1221
  %v1409 = vpack.c.bf16 %v1227, %v1223
  %v1410 = vpack.c.bf16 %v1338, %v1334
  %v1411 = vpack.c.bf16 %v1340, %v1336
  %v1412 = vpack.c.bf16 %v1009, %v1005
  %v1413 = vpack.c.bf16 %v1011, %v1007
  %v1414 = vpack.c.bf16 %v1122, %v1118
  %v1415 = vpack.c.bf16 %v1124, %v1120
  %v1416 = vpack.c.bf16 %v1235, %v1231
  %v1417 = vpack.c.bf16 %v1237, %v1233
  %v1418 = vpack.c.bf16 %v1348, %v1344
  %v1419 = vpack.c.bf16 %v1350, %v1346
  %v1420 = vpack.c.bf16 %v1019, %v1015
  %v1421 = vpack.c.bf16 %v1021, %v1017
  %v1422 = vpack.c.bf16 %v1132, %v1128
  %v1423 = vpack.c.bf16 %v1134, %v1130
  %v1424 = vpack.c.bf16 %v1245, %v1241
  %v1425 = vpack.c.bf16 %v1247, %v1243
  %v1426 = vpack.c.bf16 %v1358, %v1354
  %v1427 = vpack.c.bf16 %v1360, %v1356
  %v1428 = vpack.c.bf16 %v1029, %v1025
  %v1429 = vpack.c.bf16 %v1031, %v1027
  %v1430 = vpack.c.bf16 %v1142, %v1138
  %v1431 = vpack.c.bf16 %v1144, %v1140
  %v1432 = vpack.c.bf16 %v1255, %v1251
  %v1433 = vpack.c.bf16 %v1257, %v1253
  %v1434 = vpack.c.bf16 %v1368, %v1364
  %v1435 = vpack.c.bf16 %v1370, %v1366
  %v1500 = vunpack.c.l.b16 %v1372
  %v1501 = vunpack.c.l.b16 %v1373
  %v1502 = vunpack.c.l.b16 %v1374
  %v1503 = vunpack.c.l.b16 %v1375
  %v1504 = vunpack.c.l.b16 %v1376
  %v1505 = vunpack.c.l.b16 %v1377
  %v1506 = vunpack.c.l.b16 %v1378
  %v1507 = vunpack.c.l.b16 %v1379
  %v1508 = vunpack.c.h.b16 %v1372
  %v1509 = vunpack.c.h.b16 %v1373
  %v1510 = vunpack.c.h.b16 %v1374
  %v1511 = vunpack.c.h.b16 %v1375
  %v1512 = vunpack.c.h.b16 %v1376
  %v1513 = vunpack.c.h.b16 %v1377
  %v1514 = vunpack.c.h.b16 %v1378
  %v1515 = vunpack.c.h.b16 %v1379
  %v1516 = vunpack.c.l.b16 %v1380
  %v1517 = vunpack.c.l.b16 %v1381
  %v1518 = vunpack.c.l.b16 %v1382
  %v1519 = vunpack.c.l.b16 %v1383
  %v1520 = vunpack.c.l.b16 %v1384
  %v1521 = vunpack.c.l.b16 %v1385
  %v1522 = vunpack.c.l.b16 %v1386
  %v1523 = vunpack.c.l.b16 %v1387
  %v1524 = vunpack.c.h.b16 %v1380
  %v1525 = vunpack.c.h.b16 %v1381
  %v1526 = vunpack.c.h.b16 %v1382
  %v1527 = vunpack.c.h.b16 %v1383
  %v1528 = vunpack.c.h.b16 %v1384
  %v1529 = vunpack.c.h.b16 %v1385
  %v1530 = vunpack.c.h.b16 %v1386
  %v1531 = vunpack.c.h.b16 %v1387
  %v1532 = vunpack.c.l.b16 %v1388
  %v1533 = vunpack.c.l.b16 %v1389
  %v1534 = vunpack.c.l.b16 %v1390
  %v1535 = vunpack.c.l.b16 %v1391
  %v1536 = vunpack.c.l.b16 %v1392
  %v1537 = vunpack.c.l.b16 %v1393
  %v1538 = vunpack.c.l.b16 %v1394
  %v1539 = vunpack.c.l.b16 %v1395
  %v1540 = vunpack.c.h.b16 %v1388
  %v1541 = vunpack.c.h.b16 %v1389
  %v1542 = vunpack.c.h.b16 %v1390
  %v1543 = vunpack.c.h.b16 %v1391
  %v1544 = vunpack.c.h.b16 %v1392
  %v1545 = vunpack.c.h.b16 %v1393
  %v1546 = vunpack.c.h.b16 %v1394
  %v1547 = vunpack.c.h.b16 %v1395
  %v1548 = vunpack.c.l.b16 %v1396
  %v1549 = vunpack.c.l.b16 %v1397
  %v1550 = vunpack.c.l.b16 %v1398
  %v1551 = vunpack.c.l.b16 %v1399
  %v1552 = vunpack.c.l.b16 %v1400
  %v1553 = vunpack.c.l.b16 %v1401
  %v1554 = vunpack.c.l.b16 %v1402
  %v1555 = vunpack.c.l.b16 %v1403
  %v1556 = vunpack.c.h.b16 %v1396
  %v1557 = vunpack.c.h.b16 %v1397
  %v1558 = vunpack.c.h.b16 %v1398
  %v1559 = vunpack.c.h.b16 %v1399
  %v1560 = vunpack.c.h.b16 %v1400
  %v1561 = vunpack.c.h.b16 %v1401
  %v1562 = vunpack.c.h.b16 %v1402
  %v1563 = vunpack.c.h.b16 %v1403
  %v1564 = vunpack.c.l.b16 %v1404
  %v1565 = vunpack.c.l.b16 %v1405
  %v1566 = vunpack.c.l.b16 %v1406
  %v1567 = vunpack.c.l.b16 %v1407
  %v1568 = vunpack.c.l.b16 %v1408
  %v1569 = vunpack.c.l.b16 %v1409
  %v1570 = vunpack.c.l.b16 %v1410
  %v1571 = vunpack.c.l.b16 %v1411
  %v1572 = vunpack.c.h.b16 %v1404
  %v1573 = vunpack.c.h.b16 %v1405
  %v1574 = vunpack.c.h.b16 %v1406
  %v1575 = vunpack.c.h.b16 %v1407
  %v1576 = vunpack.c.h.b16 %v1408
  %v1577 = vunpack.c.h.b16 %v1409
  %v1578 = vunpack.c.h.b16 %v1410
  %v1579 = vunpack.c.h.b16 %v1411
  %v1580 = vunpack.c.l.b16 %v1412
  %v1581 = vunpack.c.l.b16 %v1413
  %v1582 = vunpack.c.l.b16 %v1414
  %v1583 = vunpack.c.l.b16 %v1415
  %v1584 = vunpack.c.l.b16 %v1416
  %v1585 = vunpack.c.l.b16 %v1417
  %v1586 = vunpack.c.l.b16 %v1418
  %v1587 = vunpack.c.l.b16 %v1419
  %v1588 = vunpack.c.h.b16 %v1412
  %v1589 = vunpack.c.h.b16 %v1413
  %v1590 = vunpack.c.h.b16 %v1414
  %v1591 = vunpack.c.h.b16 %v1415
  %v1592 = vunpack.c.h.b16 %v1416
  %v1593 = vunpack.c.h.b16 %v1417
  %v1594 = vunpack.c.h.b16 %v1418
  %v1595 = vunpack.c.h.b16 %v1419
  %v1596 = vunpack.c.l.b16 %v1420
  %v1597 = vunpack.c.l.b16 %v1421
  %v1598 = vunpack.c.l.b16 %v1422
  %v1599 = vunpack.c.l.b16 %v1423
  %v1600 = vunpack.c.l.b16 %v1424
  %v1601 = vunpack.c.l.b16 %v1425
  %v1602 = vunpack.c.l.b16 %v1426
  %v1603 = vunpack.c.l.b16 %v1427
  %v1604 = vunpack.c.h.b16 %v1420
  %v1605 = vunpack.c.h.b16 %v1421
  %v1606 = vunpack.c.h.b16 %v1422
  %v1607 = vunpack.c.h.b16 %v1423
  %v1608 = vunpack.c.h.b16 %v1424
  %v1609 = vunpack.c.h.b16 %v1425
  %v1610 = vunpack.c.h.b16 %v1426
  %v1611 = vunpack.c.h.b16 %v1427
  %v1612 = vunpack.c.l.b16 %v1428
  %v1613 = vunpack.c.l.b16 %v1429
  %v1614 = vunpack.c.l.b16 %v1430
  %v1615 = vunpack.c.l.b16 %v1431
  %v1616 = vunpack.c.l.b16 %v1432
  %v1617 = vunpack.c.l.b16 %v1433
  %v1618 = vunpack.c.l.b16 %v1434
  %v1619 = vunpack.c.l.b16 %v1435
  %v1620 = vunpack.c.h.b16 %v1428
  %v1621 = vunpack.c.h.b16 %v1429
  %v1622 = vunpack.c.h.b16 %v1430
  %v1623 = vunpack.c.h.b16 %v1431
  %v1624 = vunpack.c.h.b16 %v1432
  %v1625 = vunpack.c.h.b16 %v1433
  %v1626 = vunpack.c.h.b16 %v1434
  %v1627 = vunpack.c.h.b16 %v1435
  %v1628 = vpack.c.b16 %v1501, %v1500
  %v1629 = vpack.c.b16 %v1503, %v1502
  %v1630 = vpack.c.b16 %v1505, %v1504
  %v1631 = vpack.c.b16 %v1507, %v1506
  %v1632 = vpack.c.b16 %v1509, %v1508
  %v1633 = vpack.c.b16 %v1511, %v1510
  %v1634 = vpack.c.b16 %v1513, %v1512
  %v1635 = vpack.c.b16 %v1515, %v1514
  %v1636 = vpack.c.b16 %v1517, %v1516
  %v1637 = vpack.c.b16 %v1519, %v1518
  %v1638 = vpack.c.b16 %v1521, %v1520
  %v1639 = vpack.c.b16 %v1523, %v1522
  %v1640 = vpack.c.b16 %v1525, %v1524
  %v1641 = vpack.c.b16 %v1527, %v1526
  %v1642 = vpack.c.b16 %v1529, %v1528
  %v1643 = vpack.c.b16 %v1531, %v1530
  %v1644 = vpack.c.b16 %v1533, %v1532
  %v1645 = vpack.c.b16 %v1535, %v1534
  %v1646 = vpack.c.b16 %v1537, %v1536
  %v1647 = vpack.c.b16 %v1539, %v1538
  %v1648 = vpack.c.b16 %v1541, %v1540
  %v1649 = vpack.c.b16 %v1543, %v1542
  %v1650 = vpack.c.b16 %v1545, %v1544
  %v1651 = vpack.c.b16 %v1547, %v1546
  %v1652 = vpack.c.b16 %v1549, %v1548
  %v1653 = vpack.c.b16 %v1551, %v1550
  %v1654 = vpack.c.b16 %v1553, %v1552
  %v1655 = vpack.c.b16 %v1555, %v1554
  %v1656 = vpack.c.b16 %v1557, %v1556
  %v1657 = vpack.c.b16 %v1559, %v1558
  %v1658 = vpack.c.b16 %v1561, %v1560
  %v1659 = vpack.c.b16 %v1563, %v1562
  %v1660 = vpack.c.b16 %v1565, %v1564
  %v1661 = vpack.c.b16 %v1567, %v1566
  %v1662 = vpack.c.b16 %v1569, %v1568
  %v1663 = vpack.c.b16 %v1571, %v1570
  %v1664 = vpack.c.b16 %v1573, %v1572
  %v1665 = vpack.c.b16 %v1575, %v1574
  %v1666 = vpack.c.b16 %v1577, %v1576
  %v1667 = vpack.c.b16 %v1579, %v1578
  %v1668 = vpack.c.b16 %v1581, %v1580
  %v1669 = vpack.c.b16 %v1583, %v1582
  %v1670 = vpack.c.b16 %v1585, %v1584
  %v1671 = vpack.c.b16 %v1587, %v1586
  %v1672 = vpack.c.b16 %v1589, %v1588
  %v1673 = vpack.c.b16 %v1591, %v1590
  %v1674 = vpack.c.b16 %v1593, %v1592
  %v1675 = vpack.c.b16 %v1595, %v1594
  %v1676 = vpack.c.b16 %v1597, %v1596
  %v1677 = vpack.c.b16 %v1599, %v1598
  %v1678 = vpack.c.b16 %v1601, %v1600
  %v1679 = vpack.c.b16 %v1603, %v1602
  %v1680 = vpack.c.b16 %v1605, %v1604
  %v1681 = vpack.c.b16 %v1607, %v1606
  %v1682 = vpack.c.b16 %v1609, %v1608
  %v1683 = vpack.c.b16 %v1611, %v1610
  %v1684 = vpack.c.b16 %v1613, %v1612
  %v1685 = vpack.c.b16 %v1615, %v1614
  %v1686 = vpack.c.b16 %v1617, %v1616
  %v1687 = vpack.c.b16 %v1619, %v1618
  %v1688 = vpack.c.b16 %v1621, %v1620
  %v1689 = vpack.c.b16 %v1623, %v1622
  %v1690 = vpack.c.b16 %v1625, %v1624
  %v1691 = vpack.c.b16 %v1627, %v1626
  %1756 = vst [vmem:[%s3] sm:$0xff] %v1628
  %1757 = vst [vmem:[%s3 + $0x8] sm:$0xff] %v1629
  %1758 = vst [vmem:[%s3 + $0x10] sm:$0xff] %v1630
  %1759 = vst [vmem:[%s3 + $0x18] sm:$0xff] %v1631
  %1760 = vst [vmem:[%s3 + $0x20] sm:$0xff] %v1632
  %1761 = vst [vmem:[%s3 + $0x28] sm:$0xff] %v1633
  %1762 = vst [vmem:[%s3 + $0x30] sm:$0xff] %v1634
  %1763 = vst [vmem:[%s3 + $0x38] sm:$0xff] %v1635
  %1764 = vst [vmem:[%s3 + $0x40] sm:$0xff] %v1636
  %1765 = vst [vmem:[%s3 + $0x48] sm:$0xff] %v1637
  %1766 = vst [vmem:[%s3 + $0x50] sm:$0xff] %v1638
  %1767 = vst [vmem:[%s3 + $0x58] sm:$0xff] %v1639
  %1768 = vst [vmem:[%s3 + $0x60] sm:$0xff] %v1640
  %1769 = vst [vmem:[%s3 + $0x68] sm:$0xff] %v1641
  %1770 = vst [vmem:[%s3 + $0x70] sm:$0xff] %v1642
  %1771 = vst [vmem:[%s3 + $0x78] sm:$0xff] %v1643
  %1772 = vst [vmem:[%s3 + $0x80] sm:$0xff] %v1644
  %1773 = vst [vmem:[%s3 + $0x88] sm:$0xff] %v1645
  %1774 = vst [vmem:[%s3 + $0x90] sm:$0xff] %v1646
  %1775 = vst [vmem:[%s3 + $0x98] sm:$0xff] %v1647
  %1776 = vst [vmem:[%s3 + $0xa0] sm:$0xff] %v1648
  %1777 = vst [vmem:[%s3 + $0xa8] sm:$0xff] %v1649
  %1778 = vst [vmem:[%s3 + $0xb0] sm:$0xff] %v1650
  %1779 = vst [vmem:[%s3 + $0xb8] sm:$0xff] %v1651
  %1780 = vst [vmem:[%s3 + $0xc0] sm:$0xff] %v1652
  %1781 = vst [vmem:[%s3 + $0xc8] sm:$0xff] %v1653
  %1782 = vst [vmem:[%s3 + $0xd0] sm:$0xff] %v1654
  %1783 = vst [vmem:[%s3 + $0xd8] sm:$0xff] %v1655
  %1784 = vst [vmem:[%s3 + $0xe0] sm:$0xff] %v1656
  %1785 = vst [vmem:[%s3 + $0xe8] sm:$0xff] %v1657
  %1786 = vst [vmem:[%s3 + $0xf0] sm:$0xff] %v1658
  %1787 = vst [vmem:[%s3 + $0xf8] sm:$0xff] %v1659
  %1788 = vst [vmem:[%s3 + $0x100] sm:$0xff] %v1660
  %1789 = vst [vmem:[%s3 + $0x108] sm:$0xff] %v1661
  %1790 = vst [vmem:[%s3 + $0x110] sm:$0xff] %v1662
  %1791 = vst [vmem:[%s3 + $0x118] sm:$0xff] %v1663
  %1792 = vst [vmem:[%s3 + $0x120] sm:$0xff] %v1664
  %1793 = vst [vmem:[%s3 + $0x128] sm:$0xff] %v1665
  %1794 = vst [vmem:[%s3 + $0x130] sm:$0xff] %v1666
  %1795 = vst [vmem:[%s3 + $0x138] sm:$0xff] %v1667
  %1796 = vst [vmem:[%s3 + $0x140] sm:$0xff] %v1668
  %1797 = vst [vmem:[%s3 + $0x148] sm:$0xff] %v1669
  %1798 = vst [vmem:[%s3 + $0x150] sm:$0xff] %v1670
  %1799 = vst [vmem:[%s3 + $0x158] sm:$0xff] %v1671
  %1800 = vst [vmem:[%s3 + $0x160] sm:$0xff] %v1672
  %1801 = vst [vmem:[%s3 + $0x168] sm:$0xff] %v1673
  %1802 = vst [vmem:[%s3 + $0x170] sm:$0xff] %v1674
  %1803 = vst [vmem:[%s3 + $0x178] sm:$0xff] %v1675
  %1804 = vst [vmem:[%s3 + $0x180] sm:$0xff] %v1676
  %1805 = vst [vmem:[%s3 + $0x188] sm:$0xff] %v1677
  %1806 = vst [vmem:[%s3 + $0x190] sm:$0xff] %v1678
  %1807 = vst [vmem:[%s3 + $0x198] sm:$0xff] %v1679
  %1808 = vst [vmem:[%s3 + $0x1a0] sm:$0xff] %v1680
  %1809 = vst [vmem:[%s3 + $0x1a8] sm:$0xff] %v1681
  %1810 = vst [vmem:[%s3 + $0x1b0] sm:$0xff] %v1682
  %1811 = vst [vmem:[%s3 + $0x1b8] sm:$0xff] %v1683
  %1812 = vst [vmem:[%s3 + $0x1c0] sm:$0xff] %v1684
  %1813 = vst [vmem:[%s3 + $0x1c8] sm:$0xff] %v1685
  %1814 = vst [vmem:[%s3 + $0x1d0] sm:$0xff] %v1686
  %1815 = vst [vmem:[%s3 + $0x1d8] sm:$0xff] %v1687
  %1816 = vst [vmem:[%s3 + $0x1e0] sm:$0xff] %v1688
  %1817 = vst [vmem:[%s3 + $0x1e8] sm:$0xff] %v1689
  %1818 = vst [vmem:[%s3 + $0x1f0] sm:$0xff] %v1690
  %1819 = vst [vmem:[%s3 + $0x1f8] sm:$0xff] %v1691
  // Predicated region
  $region14: #{char_lstm_forward.5} parent=0 // pred_check
    _
  $region15: #{char_lstm_forward.5} parent=0 // pred_check_branch
    %1821 = sbr.rel (0) target = $region17
  $region16: #{char_lstm_forward.5} parent=0 // pred_region
    _
  $region17: #{char_lstm_forward.5} parent=0 // pred_fallthru
    _
  // Predicated region
  $region18: #{char_lstm_forward.5} parent=0 // pred_check
    _
  $region19: #{char_lstm_forward.5} parent=0 // pred_check_branch
    %1823 = sbr.rel (0) target = $region21
  $region20: #{char_lstm_forward.5} parent=0 // pred_region
    _
  $region21: #{char_lstm_forward.5} parent=0 // pred_fallthru
    _

// kernel: char_lstm_forward.4
$region0: #{char_lstm_forward.4}
  #allocation0 [shape = 'u32[]', space=smem, size = 0x4, offset = 0x4, fixed_abs, tag = 'smem constant byte address 0x4 - core index']
  #allocation1 [shape = 'u32[144,128]{1,0:T(1,128)}', space=vmem, size = 0x12000, scoped, tag = 'internal scratch']
  %s0 = inlined_call_operand.vmem [shape: bf16[8,16,1024], index: 0, kind: input, shape index: {}]
  %s1 = inlined_call_operand.vmem [shape: bf16[256,1024], index: 1, kind: input, shape index: {}]
  %s2 = inlined_call_operand.vmem [shape: f32[16,256], index: 2, kind: input, shape index: {}, may-alias: {2,3}]
  %s3 = inlined_call_operand.vmem [shape: f32[16,256], index: 3, kind: input, shape index: {}, may-alias: {2,3}]
  %s4 = inlined_call_operand.vmem [shape: bf16[8,16,256], index: 4, kind: output, shape index: {0}]
  %s5 = inlined_call_operand.vmem [shape: f32[16,256], index: 5, kind: output, shape index: {1}]
  %s6 = inlined_call_operand.vmem [shape: f32[16,256], index: 6, kind: output, shape index: {2}]
  %7 = xla_tuple %s4, %s5, %s6
  %s8 = sld [smem:[#allocation0]]
  $region46: #{char_lstm_forward.4} parent=0
    _
  %s10 = ssub.s32 1, %s8
  %s11 = scalar_select 0, %s10, %s8
  // Predicated region
  $region2: #{char_lstm_forward.4} parent=0 // pred_check
    _
  $region3: #{char_lstm_forward.4} parent=0 // pred_check_branch
    %13 = sbr.rel (0) target = $region5
  $region4: #{char_lstm_forward.4} parent=0 // pred_region
    _
  $region5: #{char_lstm_forward.4} parent=0 // pred_fallthru
    _
  // Predicated region
  $region6: #{char_lstm_forward.4} parent=0 // pred_check
    _
  $region7: #{char_lstm_forward.4} parent=0 // pred_check_branch
    %15 = sbr.rel (0) target = $region9
  $region8: #{char_lstm_forward.4} parent=0 // pred_region
    _
  $region9: #{char_lstm_forward.4} parent=0 // pred_fallthru
    _
  // Predicated region
  $region10: #{char_lstm_forward.4} parent=0 // pred_check
    _
  $region11: #{char_lstm_forward.4} parent=0 // pred_check_branch
    %17 = sbr.rel (0) target = $region13
  $region12: #{char_lstm_forward.4} parent=0 // pred_region
    _
  $region13: #{char_lstm_forward.4} parent=0 // pred_fallthru
    _
  // Predicated region
  $region14: #{char_lstm_forward.4} parent=0 // pred_check
    _
  $region15: #{char_lstm_forward.4} parent=0 // pred_check_branch
    %19 = sbr.rel (0) target = $region17
  $region16: #{char_lstm_forward.4} parent=0 // pred_region
    _
  $region17: #{char_lstm_forward.4} parent=0 // pred_fallthru
    _
  %p20 = scmp.eq.s32.totalorder 0, 0
  // Predicated region
  $region18: #{char_lstm_forward.4} parent=0 // pred_check
    %p21 = pneg %p20
  $region19: #{char_lstm_forward.4} parent=0 // pred_check_branch
    %23 = sbr.rel (%p21) target = $region21
  $region20: #{char_lstm_forward.4} parent=0 // pred_region
    %v24 = vld [vmem:[%s2] sm:$0xff]
    %v25 = vld [vmem:[%s2 + $0x8] sm:$0xff]
    %v26 = vld [vmem:[%s2 + $0x10] sm:$0xff]
    %v27 = vld [vmem:[%s2 + $0x18] sm:$0xff]
    %28 = vst [vmem:[%s5] sm:$0xff] %v24
    %29 = vst [vmem:[%s5 + $0x8] sm:$0xff] %v25
    %30 = vst [vmem:[%s5 + $0x10] sm:$0xff] %v26
    %31 = vst [vmem:[%s5 + $0x18] sm:$0xff] %v27
    %v32 = vld [vmem:[%s3] sm:$0xff]
    %v33 = vld [vmem:[%s3 + $0x8] sm:$0xff]
    %v34 = vld [vmem:[%s3 + $0x10] sm:$0xff]
    %v35 = vld [vmem:[%s3 + $0x18] sm:$0xff]
    %36 = vst [vmem:[%s6] sm:$0xff] %v32
    %37 = vst [vmem:[%s6 + $0x8] sm:$0xff] %v33
    %38 = vst [vmem:[%s6 + $0x10] sm:$0xff] %v34
    %39 = vst [vmem:[%s6 + $0x18] sm:$0xff] %v35
  $region21: #{char_lstm_forward.4} parent=0 // pred_fallthru
    _
  %v40 = vld [vmem:[%s5] sm:$0xff]
  %v41 = vld [vmem:[%s5 + $0x8] sm:$0xff]
  %v42 = vld [vmem:[%s5 + $0x10] sm:$0xff]
  %v43 = vld [vmem:[%s5 + $0x18] sm:$0xff]
  %v44 = vld [vmem:[%s6] sm:$0xff]
  %v45 = vld [vmem:[%s6 + $0x8] sm:$0xff]
  %v46 = vld [vmem:[%s6 + $0x10] sm:$0xff]
  %v47 = vld [vmem:[%s6 + $0x18] sm:$0xff]
  %v48 = vld [vmem:[%s0] sm:$0xff]
  %v49 = vld [vmem:[%s0 + $0x8] sm:$0xff]
  %v50 = vld [vmem:[%s0 + $0x10] sm:$0xff]
  %v51 = vld [vmem:[%s0 + $0x18] sm:$0xff]
  %v52 = vld [vmem:[%s0 + $0x20] sm:$0xff]
  %v53 = vld [vmem:[%s0 + $0x28] sm:$0xff]
  %v54 = vld [vmem:[%s0 + $0x30] sm:$0xff]
  %v55 = vld [vmem:[%s0 + $0x38] sm:$0xff]
  %v56 = vunpack.c.l.bf16 %v48
  %v57 = vunpack.c.h.bf16 %v48
  %v58 = vunpack.c.l.bf16 %v49
  %v59 = vunpack.c.h.bf16 %v49
  %v60 = vunpack.c.l.bf16 %v50
  %v61 = vunpack.c.h.bf16 %v50
  %v62 = vunpack.c.l.bf16 %v51
  %v63 = vunpack.c.h.bf16 %v51
  %v64 = vunpack.c.l.bf16 %v52
  %v65 = vunpack.c.h.bf16 %v52
  %v66 = vunpack.c.l.bf16 %v53
  %v67 = vunpack.c.h.bf16 %v53
  %v68 = vunpack.c.l.bf16 %v54
  %v69 = vunpack.c.h.bf16 %v54
  %v70 = vunpack.c.l.bf16 %v55
  %v71 = vunpack.c.h.bf16 %v55
  %v72 = vpack.c.bf16 %v42, %v40
  %v73 = vpack.c.bf16 %v43, %v41
  %v74 = vld [vmem:[%s1] sm:$0xff]
  %v75 = vld [vmem:[%s1 + $0x8] sm:$0xff]
  %v76 = vld [vmem:[%s1 + $0x10] sm:$0xff]
  %v77 = vld [vmem:[%s1 + $0x18] sm:$0xff]
  %v78 = vld [vmem:[%s1 + $0x20] sm:$0xff]
  %v79 = vld [vmem:[%s1 + $0x28] sm:$0xff]
  %v80 = vld [vmem:[%s1 + $0x30] sm:$0xff]
  %v81 = vld [vmem:[%s1 + $0x38] sm:$0xff]
  %v82 = vld [vmem:[%s1 + $0x40] sm:$0xff]
  %v83 = vld [vmem:[%s1 + $0x48] sm:$0xff]
  %v84 = vld [vmem:[%s1 + $0x50] sm:$0xff]
  %v85 = vld [vmem:[%s1 + $0x58] sm:$0xff]
  %v86 = vld [vmem:[%s1 + $0x60] sm:$0xff]
  %v87 = vld [vmem:[%s1 + $0x68] sm:$0xff]
  %v88 = vld [vmem:[%s1 + $0x70] sm:$0xff]
  %v89 = vld [vmem:[%s1 + $0x78] sm:$0xff]
  %v90 = vld [vmem:[%s1 + $0x80] sm:$0xff]
  %v91 = vld [vmem:[%s1 + $0x88] sm:$0xff]
  %v92 = vld [vmem:[%s1 + $0x90] sm:$0xff]
  %v93 = vld [vmem:[%s1 + $0x98] sm:$0xff]
  %v94 = vld [vmem:[%s1 + $0xa0] sm:$0xff]
  %v95 = vld [vmem:[%s1 + $0xa8] sm:$0xff]
  %v96 = vld [vmem:[%s1 + $0xb0] sm:$0xff]
  %v97 = vld [vmem:[%s1 + $0xb8] sm:$0xff]
  %v98 = vld [vmem:[%s1 + $0xc0] sm:$0xff]
  %v99 = vld [vmem:[%s1 + $0xc8] sm:$0xff]
  %v100 = vld [vmem:[%s1 + $0xd0] sm:$0xff]
  %v101 = vld [vmem:[%s1 + $0xd8] sm:$0xff]
  %v102 = vld [vmem:[%s1 + $0xe0] sm:$0xff]
  %v103 = vld [vmem:[%s1 + $0xe8] sm:$0xff]
  %v104 = vld [vmem:[%s1 + $0xf0] sm:$0xff]
  %v105 = vld [vmem:[%s1 + $0xf8] sm:$0xff]
  %v106 = vld [vmem:[%s1 + $0x100] sm:$0xff]
  %v107 = vld [vmem:[%s1 + $0x108] sm:$0xff]
  %v108 = vld [vmem:[%s1 + $0x110] sm:$0xff]
  %v109 = vld [vmem:[%s1 + $0x118] sm:$0xff]
  %v110 = vld [vmem:[%s1 + $0x120] sm:$0xff]
  %v111 = vld [vmem:[%s1 + $0x128] sm:$0xff]
  %v112 = vld [vmem:[%s1 + $0x130] sm:$0xff]
  %v113 = vld [vmem:[%s1 + $0x138] sm:$0xff]
  %v114 = vld [vmem:[%s1 + $0x140] sm:$0xff]
  %v115 = vld [vmem:[%s1 + $0x148] sm:$0xff]
  %v116 = vld [vmem:[%s1 + $0x150] sm:$0xff]
  %v117 = vld [vmem:[%s1 + $0x158] sm:$0xff]
  %v118 = vld [vmem:[%s1 + $0x160] sm:$0xff]
  %v119 = vld [vmem:[%s1 + $0x168] sm:$0xff]
  %v120 = vld [vmem:[%s1 + $0x170] sm:$0xff]
  %v121 = vld [vmem:[%s1 + $0x178] sm:$0xff]
  %v122 = vld [vmem:[%s1 + $0x180] sm:$0xff]
  %v123 = vld [vmem:[%s1 + $0x188] sm:$0xff]
  %v124 = vld [vmem:[%s1 + $0x190] sm:$0xff]
  %v125 = vld [vmem:[%s1 + $0x198] sm:$0xff]
  %v126 = vld [vmem:[%s1 + $0x1a0] sm:$0xff]
  %v127 = vld [vmem:[%s1 + $0x1a8] sm:$0xff]
  %v128 = vld [vmem:[%s1 + $0x1b0] sm:$0xff]
  %v129 = vld [vmem:[%s1 + $0x1b8] sm:$0xff]
  %v130 = vld [vmem:[%s1 + $0x1c0] sm:$0xff]
  %v131 = vld [vmem:[%s1 + $0x1c8] sm:$0xff]
  %v132 = vld [vmem:[%s1 + $0x1d0] sm:$0xff]
  %v133 = vld [vmem:[%s1 + $0x1d8] sm:$0xff]
  %v134 = vld [vmem:[%s1 + $0x1e0] sm:$0xff]
  %v135 = vld [vmem:[%s1 + $0x1e8] sm:$0xff]
  %v136 = vld [vmem:[%s1 + $0x1f0] sm:$0xff]
  %v137 = vld [vmem:[%s1 + $0x1f8] sm:$0xff]
  %v138 = vld [vmem:[%s1 + $0x200] sm:$0xff]
  %v139 = vld [vmem:[%s1 + $0x208] sm:$0xff]
  %v140 = vld [vmem:[%s1 + $0x210] sm:$0xff]
  %v141 = vld [vmem:[%s1 + $0x218] sm:$0xff]
  %v142 = vld [vmem:[%s1 + $0x220] sm:$0xff]
  %v143 = vld [vmem:[%s1 + $0x228] sm:$0xff]
  %v144 = vld [vmem:[%s1 + $0x230] sm:$0xff]
  %v145 = vld [vmem:[%s1 + $0x238] sm:$0xff]
  %v146 = vld [vmem:[%s1 + $0x240] sm:$0xff]
  %v147 = vld [vmem:[%s1 + $0x248] sm:$0xff]
  %v148 = vld [vmem:[%s1 + $0x250] sm:$0xff]
  %v149 = vld [vmem:[%s1 + $0x258] sm:$0xff]
  %v150 = vld [vmem:[%s1 + $0x260] sm:$0xff]
  %v151 = vld [vmem:[%s1 + $0x268] sm:$0xff]
  %v152 = vld [vmem:[%s1 + $0x270] sm:$0xff]
  %v153 = vld [vmem:[%s1 + $0x278] sm:$0xff]
  %v154 = vld [vmem:[%s1 + $0x280] sm:$0xff]
  %v155 = vld [vmem:[%s1 + $0x288] sm:$0xff]
  %v156 = vld [vmem:[%s1 + $0x290] sm:$0xff]
  %v157 = vld [vmem:[%s1 + $0x298] sm:$0xff]
  %v158 = vld [vmem:[%s1 + $0x2a0] sm:$0xff]
  %v159 = vld [vmem:[%s1 + $0x2a8] sm:$0xff]
  %v160 = vld [vmem:[%s1 + $0x2b0] sm:$0xff]
  %v161 = vld [vmem:[%s1 + $0x2b8] sm:$0xff]
  %v162 = vld [vmem:[%s1 + $0x2c0] sm:$0xff]
  %v163 = vld [vmem:[%s1 + $0x2c8] sm:$0xff]
  %v164 = vld [vmem:[%s1 + $0x2d0] sm:$0xff]
  %v165 = vld [vmem:[%s1 + $0x2d8] sm:$0xff]
  %v166 = vld [vmem:[%s1 + $0x2e0] sm:$0xff]
  %v167 = vld [vmem:[%s1 + $0x2e8] sm:$0xff]
  %v168 = vld [vmem:[%s1 + $0x2f0] sm:$0xff]
  %v169 = vld [vmem:[%s1 + $0x2f8] sm:$0xff]
  %v170 = vld [vmem:[%s1 + $0x300] sm:$0xff]
  %v171 = vld [vmem:[%s1 + $0x308] sm:$0xff]
  %v172 = vld [vmem:[%s1 + $0x310] sm:$0xff]
  %v173 = vld [vmem:[%s1 + $0x318] sm:$0xff]
  %v174 = vld [vmem:[%s1 + $0x320] sm:$0xff]
  %v175 = vld [vmem:[%s1 + $0x328] sm:$0xff]
  %v176 = vld [vmem:[%s1 + $0x330] sm:$0xff]
  %v177 = vld [vmem:[%s1 + $0x338] sm:$0xff]
  %v178 = vld [vmem:[%s1 + $0x340] sm:$0xff]
  %v179 = vld [vmem:[%s1 + $0x348] sm:$0xff]
  %v180 = vld [vmem:[%s1 + $0x350] sm:$0xff]
  %v181 = vld [vmem:[%s1 + $0x358] sm:$0xff]
  %v182 = vld [vmem:[%s1 + $0x360] sm:$0xff]
  %v183 = vld [vmem:[%s1 + $0x368] sm:$0xff]
  %v184 = vld [vmem:[%s1 + $0x370] sm:$0xff]
  %v185 = vld [vmem:[%s1 + $0x378] sm:$0xff]
  %v186 = vld [vmem:[%s1 + $0x380] sm:$0xff]
  %v187 = vld [vmem:[%s1 + $0x388] sm:$0xff]
  %v188 = vld [vmem:[%s1 + $0x390] sm:$0xff]
  %v189 = vld [vmem:[%s1 + $0x398] sm:$0xff]
  %v190 = vld [vmem:[%s1 + $0x3a0] sm:$0xff]
  %v191 = vld [vmem:[%s1 + $0x3a8] sm:$0xff]
  %v192 = vld [vmem:[%s1 + $0x3b0] sm:$0xff]
  %v193 = vld [vmem:[%s1 + $0x3b8] sm:$0xff]
  %v194 = vld [vmem:[%s1 + $0x3c0] sm:$0xff]
  %v195 = vld [vmem:[%s1 + $0x3c8] sm:$0xff]
  %v196 = vld [vmem:[%s1 + $0x3d0] sm:$0xff]
  %v197 = vld [vmem:[%s1 + $0x3d8] sm:$0xff]
  %v198 = vld [vmem:[%s1 + $0x3e0] sm:$0xff]
  %v199 = vld [vmem:[%s1 + $0x3e8] sm:$0xff]
  %v200 = vld [vmem:[%s1 + $0x3f0] sm:$0xff]
  %v201 = vld [vmem:[%s1 + $0x3f8] sm:$0xff]
  %v330 = vunpack.c.l.b16 %v74
  %v331 = vunpack.c.h.b16 %v74
  %v332 = vunpack.c.l.b16 %v75
  %v333 = vunpack.c.h.b16 %v75
  %v334 = vunpack.c.l.b16 %v76
  %v335 = vunpack.c.h.b16 %v76
  %v336 = vunpack.c.l.b16 %v77
  %v337 = vunpack.c.h.b16 %v77
  %v338 = vunpack.c.l.b16 %v78
  %v339 = vunpack.c.h.b16 %v78
  %v340 = vunpack.c.l.b16 %v79
  %v341 = vunpack.c.h.b16 %v79
  %v342 = vunpack.c.l.b16 %v80
  %v343 = vunpack.c.h.b16 %v80
  %v344 = vunpack.c.l.b16 %v81
  %v345 = vunpack.c.h.b16 %v81
  %v346 = vunpack.c.l.b16 %v82
  %v347 = vunpack.c.h.b16 %v82
  %v348 = vunpack.c.l.b16 %v83
  %v349 = vunpack.c.h.b16 %v83
  %v350 = vunpack.c.l.b16 %v84
  %v351 = vunpack.c.h.b16 %v84
  %v352 = vunpack.c.l.b16 %v85
  %v353 = vunpack.c.h.b16 %v85
  %v354 = vunpack.c.l.b16 %v86
  %v355 = vunpack.c.h.b16 %v86
  %v356 = vunpack.c.l.b16 %v87
  %v357 = vunpack.c.h.b16 %v87
  %v358 = vunpack.c.l.b16 %v88
  %v359 = vunpack.c.h.b16 %v88
  %v360 = vunpack.c.l.b16 %v89
  %v361 = vunpack.c.h.b16 %v89
  %v362 = vunpack.c.l.b16 %v90
  %v363 = vunpack.c.h.b16 %v90
  %v364 = vunpack.c.l.b16 %v91
  %v365 = vunpack.c.h.b16 %v91
  %v366 = vunpack.c.l.b16 %v92
  %v367 = vunpack.c.h.b16 %v92
  %v368 = vunpack.c.l.b16 %v93
  %v369 = vunpack.c.h.b16 %v93
  %v370 = vunpack.c.l.b16 %v94
  %v371 = vunpack.c.h.b16 %v94
  %v372 = vunpack.c.l.b16 %v95
  %v373 = vunpack.c.h.b16 %v95
  %v374 = vunpack.c.l.b16 %v96
  %v375 = vunpack.c.h.b16 %v96
  %v376 = vunpack.c.l.b16 %v97
  %v377 = vunpack.c.h.b16 %v97
  %v378 = vunpack.c.l.b16 %v98
  %v379 = vunpack.c.h.b16 %v98
  %v380 = vunpack.c.l.b16 %v99
  %v381 = vunpack.c.h.b16 %v99
  %v382 = vunpack.c.l.b16 %v100
  %v383 = vunpack.c.h.b16 %v100
  %v384 = vunpack.c.l.b16 %v101
  %v385 = vunpack.c.h.b16 %v101
  %v386 = vunpack.c.l.b16 %v102
  %v387 = vunpack.c.h.b16 %v102
  %v388 = vunpack.c.l.b16 %v103
  %v389 = vunpack.c.h.b16 %v103
  %v390 = vunpack.c.l.b16 %v104
  %v391 = vunpack.c.h.b16 %v104
  %v392 = vunpack.c.l.b16 %v105
  %v393 = vunpack.c.h.b16 %v105
  %v394 = vunpack.c.l.b16 %v106
  %v395 = vunpack.c.h.b16 %v106
  %v396 = vunpack.c.l.b16 %v107
  %v397 = vunpack.c.h.b16 %v107
  %v398 = vunpack.c.l.b16 %v108
  %v399 = vunpack.c.h.b16 %v108
  %v400 = vunpack.c.l.b16 %v109
  %v401 = vunpack.c.h.b16 %v109
  %v402 = vunpack.c.l.b16 %v110
  %v403 = vunpack.c.h.b16 %v110
  %v404 = vunpack.c.l.b16 %v111
  %v405 = vunpack.c.h.b16 %v111
  %v406 = vunpack.c.l.b16 %v112
  %v407 = vunpack.c.h.b16 %v112
  %v408 = vunpack.c.l.b16 %v113
  %v409 = vunpack.c.h.b16 %v113
  %v410 = vunpack.c.l.b16 %v114
  %v411 = vunpack.c.h.b16 %v114
  %v412 = vunpack.c.l.b16 %v115
  %v413 = vunpack.c.h.b16 %v115
  %v414 = vunpack.c.l.b16 %v116
  %v415 = vunpack.c.h.b16 %v116
  %v416 = vunpack.c.l.b16 %v117
  %v417 = vunpack.c.h.b16 %v117
  %v418 = vunpack.c.l.b16 %v118
  %v419 = vunpack.c.h.b16 %v118
  %v420 = vunpack.c.l.b16 %v119
  %v421 = vunpack.c.h.b16 %v119
  %v422 = vunpack.c.l.b16 %v120
  %v423 = vunpack.c.h.b16 %v120
  %v424 = vunpack.c.l.b16 %v121
  %v425 = vunpack.c.h.b16 %v121
  %v426 = vunpack.c.l.b16 %v122
  %v427 = vunpack.c.h.b16 %v122
  %v428 = vunpack.c.l.b16 %v123
  %v429 = vunpack.c.h.b16 %v123
  %v430 = vunpack.c.l.b16 %v124
  %v431 = vunpack.c.h.b16 %v124
  %v432 = vunpack.c.l.b16 %v125
  %v433 = vunpack.c.h.b16 %v125
  %v434 = vunpack.c.l.b16 %v126
  %v435 = vunpack.c.h.b16 %v126
  %v436 = vunpack.c.l.b16 %v127
  %v437 = vunpack.c.h.b16 %v127
  %v438 = vunpack.c.l.b16 %v128
  %v439 = vunpack.c.h.b16 %v128
  %v440 = vunpack.c.l.b16 %v129
  %v441 = vunpack.c.h.b16 %v129
  %v442 = vunpack.c.l.b16 %v130
  %v443 = vunpack.c.h.b16 %v130
  %v444 = vunpack.c.l.b16 %v131
  %v445 = vunpack.c.h.b16 %v131
  %v446 = vunpack.c.l.b16 %v132
  %v447 = vunpack.c.h.b16 %v132
  %v448 = vunpack.c.l.b16 %v133
  %v449 = vunpack.c.h.b16 %v133
  %v450 = vunpack.c.l.b16 %v134
  %v451 = vunpack.c.h.b16 %v134
  %v452 = vunpack.c.l.b16 %v135
  %v453 = vunpack.c.h.b16 %v135
  %v454 = vunpack.c.l.b16 %v136
  %v455 = vunpack.c.h.b16 %v136
  %v456 = vunpack.c.l.b16 %v137
  %v457 = vunpack.c.h.b16 %v137
  %v458 = vunpack.c.l.b16 %v138
  %v459 = vunpack.c.h.b16 %v138
  %v460 = vunpack.c.l.b16 %v139
  %v461 = vunpack.c.h.b16 %v139
  %v462 = vunpack.c.l.b16 %v140
  %v463 = vunpack.c.h.b16 %v140
  %v464 = vunpack.c.l.b16 %v141
  %v465 = vunpack.c.h.b16 %v141
  %v466 = vunpack.c.l.b16 %v142
  %v467 = vunpack.c.h.b16 %v142
  %v468 = vunpack.c.l.b16 %v143
  %v469 = vunpack.c.h.b16 %v143
  %v470 = vunpack.c.l.b16 %v144
  %v471 = vunpack.c.h.b16 %v144
  %v472 = vunpack.c.l.b16 %v145
  %v473 = vunpack.c.h.b16 %v145
  %v474 = vunpack.c.l.b16 %v146
  %v475 = vunpack.c.h.b16 %v146
  %v476 = vunpack.c.l.b16 %v147
  %v477 = vunpack.c.h.b16 %v147
  %v478 = vunpack.c.l.b16 %v148
  %v479 = vunpack.c.h.b16 %v148
  %v480 = vunpack.c.l.b16 %v149
  %v481 = vunpack.c.h.b16 %v149
  %v482 = vunpack.c.l.b16 %v150
  %v483 = vunpack.c.h.b16 %v150
  %v484 = vunpack.c.l.b16 %v151
  %v485 = vunpack.c.h.b16 %v151
  %v486 = vunpack.c.l.b16 %v152
  %v487 = vunpack.c.h.b16 %v152
  %v488 = vunpack.c.l.b16 %v153
  %v489 = vunpack.c.h.b16 %v153
  %v490 = vunpack.c.l.b16 %v154
  %v491 = vunpack.c.h.b16 %v154
  %v492 = vunpack.c.l.b16 %v155
  %v493 = vunpack.c.h.b16 %v155
  %v494 = vunpack.c.l.b16 %v156
  %v495 = vunpack.c.h.b16 %v156
  %v496 = vunpack.c.l.b16 %v157
  %v497 = vunpack.c.h.b16 %v157
  %v498 = vunpack.c.l.b16 %v158
  %v499 = vunpack.c.h.b16 %v158
  %v500 = vunpack.c.l.b16 %v159
  %v501 = vunpack.c.h.b16 %v159
  %v502 = vunpack.c.l.b16 %v160
  %v503 = vunpack.c.h.b16 %v160
  %v504 = vunpack.c.l.b16 %v161
  %v505 = vunpack.c.h.b16 %v161
  %v506 = vunpack.c.l.b16 %v162
  %v507 = vunpack.c.h.b16 %v162
  %v508 = vunpack.c.l.b16 %v163
  %v509 = vunpack.c.h.b16 %v163
  %v510 = vunpack.c.l.b16 %v164
  %v511 = vunpack.c.h.b16 %v164
  %v512 = vunpack.c.l.b16 %v165
  %v513 = vunpack.c.h.b16 %v165
  %v514 = vunpack.c.l.b16 %v166
  %v515 = vunpack.c.h.b16 %v166
  %v516 = vunpack.c.l.b16 %v167
  %v517 = vunpack.c.h.b16 %v167
  %v518 = vunpack.c.l.b16 %v168
  %v519 = vunpack.c.h.b16 %v168
  %v520 = vunpack.c.l.b16 %v169
  %v521 = vunpack.c.h.b16 %v169
  %v522 = vunpack.c.l.b16 %v170
  %v523 = vunpack.c.h.b16 %v170
  %v524 = vunpack.c.l.b16 %v171
  %v525 = vunpack.c.h.b16 %v171
  %v526 = vunpack.c.l.b16 %v172
  %v527 = vunpack.c.h.b16 %v172
  %v528 = vunpack.c.l.b16 %v173
  %v529 = vunpack.c.h.b16 %v173
  %v530 = vunpack.c.l.b16 %v174
  %v531 = vunpack.c.h.b16 %v174
  %v532 = vunpack.c.l.b16 %v175
  %v533 = vunpack.c.h.b16 %v175
  %v534 = vunpack.c.l.b16 %v176
  %v535 = vunpack.c.h.b16 %v176
  %v536 = vunpack.c.l.b16 %v177
  %v537 = vunpack.c.h.b16 %v177
  %v538 = vunpack.c.l.b16 %v178
  %v539 = vunpack.c.h.b16 %v178
  %v540 = vunpack.c.l.b16 %v179
  %v541 = vunpack.c.h.b16 %v179
  %v542 = vunpack.c.l.b16 %v180
  %v543 = vunpack.c.h.b16 %v180
  %v544 = vunpack.c.l.b16 %v181
  %v545 = vunpack.c.h.b16 %v181
  %v546 = vunpack.c.l.b16 %v182
  %v547 = vunpack.c.h.b16 %v182
  %v548 = vunpack.c.l.b16 %v183
  %v549 = vunpack.c.h.b16 %v183
  %v550 = vunpack.c.l.b16 %v184
  %v551 = vunpack.c.h.b16 %v184
  %v552 = vunpack.c.l.b16 %v185
  %v553 = vunpack.c.h.b16 %v185
  %v554 = vunpack.c.l.b16 %v186
  %v555 = vunpack.c.h.b16 %v186
  %v556 = vunpack.c.l.b16 %v187
  %v557 = vunpack.c.h.b16 %v187
  %v558 = vunpack.c.l.b16 %v188
  %v559 = vunpack.c.h.b16 %v188
  %v560 = vunpack.c.l.b16 %v189
  %v561 = vunpack.c.h.b16 %v189
  %v562 = vunpack.c.l.b16 %v190
  %v563 = vunpack.c.h.b16 %v190
  %v564 = vunpack.c.l.b16 %v191
  %v565 = vunpack.c.h.b16 %v191
  %v566 = vunpack.c.l.b16 %v192
  %v567 = vunpack.c.h.b16 %v192
  %v568 = vunpack.c.l.b16 %v193
  %v569 = vunpack.c.h.b16 %v193
  %v570 = vunpack.c.l.b16 %v194
  %v571 = vunpack.c.h.b16 %v194
  %v572 = vunpack.c.l.b16 %v195
  %v573 = vunpack.c.h.b16 %v195
  %v574 = vunpack.c.l.b16 %v196
  %v575 = vunpack.c.h.b16 %v196
  %v576 = vunpack.c.l.b16 %v197
  %v577 = vunpack.c.h.b16 %v197
  %v578 = vunpack.c.l.b16 %v198
  %v579 = vunpack.c.h.b16 %v198
  %v580 = vunpack.c.l.b16 %v199
  %v581 = vunpack.c.h.b16 %v199
  %v582 = vunpack.c.l.b16 %v200
  %v583 = vunpack.c.h.b16 %v200
  %v584 = vunpack.c.l.b16 %v201
  %v585 = vunpack.c.h.b16 %v201
  %v586 = vpack.c.b16 %v338, %v330
  %v587 = vpack.c.b16 %v339, %v331
  %v588 = vpack.c.b16 %v340, %v332
  %v589 = vpack.c.b16 %v341, %v333
  %v590 = vpack.c.b16 %v342, %v334
  %v591 = vpack.c.b16 %v343, %v335
  %v592 = vpack.c.b16 %v344, %v336
  %v593 = vpack.c.b16 %v345, %v337
  %v594 = vpack.c.b16 %v354, %v346
  %v595 = vpack.c.b16 %v355, %v347
  %v596 = vpack.c.b16 %v356, %v348
  %v597 = vpack.c.b16 %v357, %v349
  %v598 = vpack.c.b16 %v358, %v350
  %v599 = vpack.c.b16 %v359, %v351
  %v600 = vpack.c.b16 %v360, %v352
  %v601 = vpack.c.b16 %v361, %v353
  %v602 = vpack.c.b16 %v370, %v362
  %v603 = vpack.c.b16 %v371, %v363
  %v604 = vpack.c.b16 %v372, %v364
  %v605 = vpack.c.b16 %v373, %v365
  %v606 = vpack.c.b16 %v374, %v366
  %v607 = vpack.c.b16 %v375, %v367
  %v608 = vpack.c.b16 %v376, %v368
  %v609 = vpack.c.b16 %v377, %v369
  %v610 = vpack.c.b16 %v386, %v378
  %v611 = vpack.c.b16 %v387, %v379
  %v612 = vpack.c.b16 %v388, %v380
  %v613 = vpack.c.b16 %v389, %v381
  %v614 = vpack.c.b16 %v390, %v382
  %v615 = vpack.c.b16 %v391, %v383
  %v616 = vpack.c.b16 %v392, %v384
  %v617 = vpack.c.b16 %v393, %v385
  %v618 = vpack.c.b16 %v402, %v394
  %v619 = vpack.c.b16 %v403, %v395
  %v620 = vpack.c.b16 %v404, %v396
  %v621 = vpack.c.b16 %v405, %v397
  %v622 = vpack.c.b16 %v406, %v398
  %v623 = vpack.c.b16 %v407, %v399
  %v624 = vpack.c.b16 %v408, %v400
  %v625 = vpack.c.b16 %v409, %v401
  %v626 = vpack.c.b16 %v418, %v410
  %v627 = vpack.c.b16 %v419, %v411
  %v628 = vpack.c.b16 %v420, %v412
  %v629 = vpack.c.b16 %v421, %v413
  %v630 = vpack.c.b16 %v422, %v414
  %v631 = vpack.c.b16 %v423, %v415
  %v632 = vpack.c.b16 %v424, %v416
  %v633 = vpack.c.b16 %v425, %v417
  %v634 = vpack.c.b16 %v434, %v426
  %v635 = vpack.c.b16 %v435, %v427
  %v636 = vpack.c.b16 %v436, %v428
  %v637 = vpack.c.b16 %v437, %v429
  %v638 = vpack.c.b16 %v438, %v430
  %v639 = vpack.c.b16 %v439, %v431
  %v640 = vpack.c.b16 %v440, %v432
  %v641 = vpack.c.b16 %v441, %v433
  %v642 = vpack.c.b16 %v450, %v442
  %v643 = vpack.c.b16 %v451, %v443
  %v644 = vpack.c.b16 %v452, %v444
  %v645 = vpack.c.b16 %v453, %v445
  %v646 = vpack.c.b16 %v454, %v446
  %v647 = vpack.c.b16 %v455, %v447
  %v648 = vpack.c.b16 %v456, %v448
  %v649 = vpack.c.b16 %v457, %v449
  %v650 = vpack.c.b16 %v466, %v458
  %v651 = vpack.c.b16 %v467, %v459
  %v652 = vpack.c.b16 %v468, %v460
  %v653 = vpack.c.b16 %v469, %v461
  %v654 = vpack.c.b16 %v470, %v462
  %v655 = vpack.c.b16 %v471, %v463
  %v656 = vpack.c.b16 %v472, %v464
  %v657 = vpack.c.b16 %v473, %v465
  %v658 = vpack.c.b16 %v482, %v474
  %v659 = vpack.c.b16 %v483, %v475
  %v660 = vpack.c.b16 %v484, %v476
  %v661 = vpack.c.b16 %v485, %v477
  %v662 = vpack.c.b16 %v486, %v478
  %v663 = vpack.c.b16 %v487, %v479
  %v664 = vpack.c.b16 %v488, %v480
  %v665 = vpack.c.b16 %v489, %v481
  %v666 = vpack.c.b16 %v498, %v490
  %v667 = vpack.c.b16 %v499, %v491
  %v668 = vpack.c.b16 %v500, %v492
  %v669 = vpack.c.b16 %v501, %v493
  %v670 = vpack.c.b16 %v502, %v494
  %v671 = vpack.c.b16 %v503, %v495
  %v672 = vpack.c.b16 %v504, %v496
  %v673 = vpack.c.b16 %v505, %v497
  %v674 = vpack.c.b16 %v514, %v506
  %v675 = vpack.c.b16 %v515, %v507
  %v676 = vpack.c.b16 %v516, %v508
  %v677 = vpack.c.b16 %v517, %v509
  %v678 = vpack.c.b16 %v518, %v510
  %v679 = vpack.c.b16 %v519, %v511
  %v680 = vpack.c.b16 %v520, %v512
  %v681 = vpack.c.b16 %v521, %v513
  %v682 = vpack.c.b16 %v530, %v522
  %v683 = vpack.c.b16 %v531, %v523
  %v684 = vpack.c.b16 %v532, %v524
  %v685 = vpack.c.b16 %v533, %v525
  %v686 = vpack.c.b16 %v534, %v526
  %v687 = vpack.c.b16 %v535, %v527
  %v688 = vpack.c.b16 %v536, %v528
  %v689 = vpack.c.b16 %v537, %v529
  %v690 = vpack.c.b16 %v546, %v538
  %v691 = vpack.c.b16 %v547, %v539
  %v692 = vpack.c.b16 %v548, %v540
  %v693 = vpack.c.b16 %v549, %v541
  %v694 = vpack.c.b16 %v550, %v542
  %v695 = vpack.c.b16 %v551, %v543
  %v696 = vpack.c.b16 %v552, %v544
  %v697 = vpack.c.b16 %v553, %v545
  %v698 = vpack.c.b16 %v562, %v554
  %v699 = vpack.c.b16 %v563, %v555
  %v700 = vpack.c.b16 %v564, %v556
  %v701 = vpack.c.b16 %v565, %v557
  %v702 = vpack.c.b16 %v566, %v558
  %v703 = vpack.c.b16 %v567, %v559
  %v704 = vpack.c.b16 %v568, %v560
  %v705 = vpack.c.b16 %v569, %v561
  %v706 = vpack.c.b16 %v578, %v570
  %v707 = vpack.c.b16 %v579, %v571
  %v708 = vpack.c.b16 %v580, %v572
  %v709 = vpack.c.b16 %v581, %v573
  %v710 = vpack.c.b16 %v582, %v574
  %v711 = vpack.c.b16 %v583, %v575
  %v712 = vpack.c.b16 %v584, %v576
  %v713 = vpack.c.b16 %v585, %v577
  %842 = vmatprep.subr.bf16.mxu0 %v587
  %843 = vmatpush1.bf16.msra.mxu0 %v586
  %844 = vmatprep.subr.bf16.mxu0 %v595
  %845 = vmatpush1.bf16.msra.mxu0 %v594
  %846 = vmatprep.subr.bf16.mxu0 %v603
  %847 = vmatpush1.bf16.msra.mxu0 %v602
  %848 = vmatprep.subr.bf16.mxu0 %v611
  %849 = vmatpush1.bf16.msra.mxu0 %v610
  %850 = vmatprep.subr.bf16.mxu0 %v619
  %851 = vmatpush1.bf16.msra.mxu0 %v618
  %852 = vmatprep.subr.bf16.mxu0 %v627
  %853 = vmatpush1.bf16.msra.mxu0 %v626
  %854 = vmatprep.subr.bf16.mxu0 %v635
  %855 = vmatpush1.bf16.msra.mxu0 %v634
  %856 = vmatprep.subr.bf16.mxu0 %v643
  %857 = vmatpush1.bf16.msra.mxu0 %v642
  %858 = vmatprep.subr.bf16.mxu0 %v651
  %859 = vmatpush1.bf16.msra.mxu0 %v650
  %860 = vmatprep.subr.bf16.mxu0 %v659
  %861 = vmatpush1.bf16.msra.mxu0 %v658
  %862 = vmatprep.subr.bf16.mxu0 %v667
  %863 = vmatpush1.bf16.msra.mxu0 %v666
  %864 = vmatprep.subr.bf16.mxu0 %v675
  %865 = vmatpush1.bf16.msra.mxu0 %v674
  %866 = vmatprep.subr.bf16.mxu0 %v683
  %867 = vmatpush1.bf16.msra.mxu0 %v682
  %868 = vmatprep.subr.bf16.mxu0 %v691
  %869 = vmatpush1.bf16.msra.mxu0 %v690
  %870 = vmatprep.subr.bf16.mxu0 %v699
  %871 = vmatpush1.bf16.msra.mxu0 %v698
  %872 = vmatprep.subr.bf16.mxu0 %v707
  %873 = vmatpush1.bf16.msra.mxu0 %v706
  %874 = vmatprep.mubr.bf16.mxu0 %v73
  %875 = vmatmul.mubr.bf16.gmra.mrb[0].mxu0 %v72
  %v876 = vpop.f32.mrb[0].mxu0
  %v877 = vadd.f32 0.0, %v876
  %v878 = vpop.f32.mrb[0].mxu0
  %v879 = vadd.f32 0.0, %v878
  %v880 = vpop.f32.mrb[0].mxu0
  %v881 = vadd.f32 0.0, %v880
  %v882 = vpop.f32.mrb[0].mxu0
  %v883 = vadd.f32 0.0, %v882
  %884 = vdwg.mxu0
  %885 = vmatprep.subr.bf16.mxu0 %v589
  %886 = vmatpush1.bf16.msra.mxu0 %v588
  %887 = vmatprep.subr.bf16.mxu0 %v597
  %888 = vmatpush1.bf16.msra.mxu0 %v596
  %889 = vmatprep.subr.bf16.mxu0 %v605
  %890 = vmatpush1.bf16.msra.mxu0 %v604
  %891 = vmatprep.subr.bf16.mxu0 %v613
  %892 = vmatpush1.bf16.msra.mxu0 %v612
  %893 = vmatprep.subr.bf16.mxu0 %v621
  %894 = vmatpush1.bf16.msra.mxu0 %v620
  %895 = vmatprep.subr.bf16.mxu0 %v629
  %896 = vmatpush1.bf16.msra.mxu0 %v628
  %897 = vmatprep.subr.bf16.mxu0 %v637
  %898 = vmatpush1.bf16.msra.mxu0 %v636
  %899 = vmatprep.subr.bf16.mxu0 %v645
  %900 = vmatpush1.bf16.msra.mxu0 %v644
  %901 = vmatprep.subr.bf16.mxu0 %v653
  %902 = vmatpush1.bf16.msra.mxu0 %v652
  %903 = vmatprep.subr.bf16.mxu0 %v661
  %904 = vmatpush1.bf16.msra.mxu0 %v660
  %905 = vmatprep.subr.bf16.mxu0 %v669
  %906 = vmatpush1.bf16.msra.mxu0 %v668
  %907 = vmatprep.subr.bf16.mxu0 %v677
  %908 = vmatpush1.bf16.msra.mxu0 %v676
  %909 = vmatprep.subr.bf16.mxu0 %v685
  %910 = vmatpush1.bf16.msra.mxu0 %v684
  %911 = vmatprep.subr.bf16.mxu0 %v693
  %912 = vmatpush1.bf16.msra.mxu0 %v692
  %913 = vmatprep.subr.bf16.mxu0 %v701
  %914 = vmatpush1.bf16.msra.mxu0 %v700
  %915 = vmatprep.subr.bf16.mxu0 %v709
  %916 = vmatpush1.bf16.msra.mxu0 %v708
  %917 = vmatprep.mubr.bf16.mxu0 %v73
  %918 = vmatmul.mubr.bf16.gmra.mrb[0].mxu0 %v72
  %v919 = vpop.f32.mrb[0].mxu0
  %v920 = vadd.f32 0.0, %v919
  %v921 = vpop.f32.mrb[0].mxu0
  %v922 = vadd.f32 0.0, %v921
  %v923 = vpop.f32.mrb[0].mxu0
  %v924 = vadd.f32 0.0, %v923
  %v925 = vpop.f32.mrb[0].mxu0
  %v926 = vadd.f32 0.0, %v925
  %927 = vdwg.mxu0
  %928 = vmatprep.subr.bf16.mxu0 %v591
  %929 = vmatpush1.bf16.msra.mxu0 %v590
  %930 = vmatprep.subr.bf16.mxu0 %v599
  %931 = vmatpush1.bf16.msra.mxu0 %v598
  %932 = vmatprep.subr.bf16.mxu0 %v607
  %933 = vmatpush1.bf16.msra.mxu0 %v606
  %934 = vmatprep.subr.bf16.mxu0 %v615
  %935 = vmatpush1.bf16.msra.mxu0 %v614
  %936 = vmatprep.subr.bf16.mxu0 %v623
  %937 = vmatpush1.bf16.msra.mxu0 %v622
  %938 = vmatprep.subr.bf16.mxu0 %v631
  %939 = vmatpush1.bf16.msra.mxu0 %v630
  %940 = vmatprep.subr.bf16.mxu0 %v639
  %941 = vmatpush1.bf16.msra.mxu0 %v638
  %942 = vmatprep.subr.bf16.mxu0 %v647
  %943 = vmatpush1.bf16.msra.mxu0 %v646
  %944 = vmatprep.subr.bf16.mxu0 %v655
  %945 = vmatpush1.bf16.msra.mxu0 %v654
  %946 = vmatprep.subr.bf16.mxu0 %v663
  %947 = vmatpush1.bf16.msra.mxu0 %v662
  %948 = vmatprep.subr.bf16.mxu0 %v671
  %949 = vmatpush1.bf16.msra.mxu0 %v670
  %950 = vmatprep.subr.bf16.mxu0 %v679
  %951 = vmatpush1.bf16.msra.mxu0 %v678
  %952 = vmatprep.subr.bf16.mxu0 %v687
  %953 = vmatpush1.bf16.msra.mxu0 %v686
  %954 = vmatprep.subr.bf16.mxu0 %v695
  %955 = vmatpush1.bf16.msra.mxu0 %v694
  %956 = vmatprep.subr.bf16.mxu0 %v703
  %957 = vmatpush1.bf16.msra.mxu0 %v702
  %958 = vmatprep.subr.bf16.mxu0 %v711
  %959 = vmatpush1.bf16.msra.mxu0 %v710
  %960 = vmatprep.mubr.bf16.mxu0 %v73
  %961 = vmatmul.mubr.bf16.gmra.mrb[0].mxu0 %v72
  %v962 = vpop.f32.mrb[0].mxu0
  %v963 = vadd.f32 0.0, %v962
  %v964 = vpop.f32.mrb[0].mxu0
  %v965 = vadd.f32 0.0, %v964
  %v966 = vpop.f32.mrb[0].mxu0
  %v967 = vadd.f32 0.0, %v966
  %v968 = vpop.f32.mrb[0].mxu0
  %v969 = vadd.f32 0.0, %v968
  %970 = vdwg.mxu0
  %971 = vmatprep.subr.bf16.mxu0 %v593
  %972 = vmatpush1.bf16.msra.mxu0 %v592
  %973 = vmatprep.subr.bf16.mxu0 %v601
  %974 = vmatpush1.bf16.msra.mxu0 %v600
  %975 = vmatprep.subr.bf16.mxu0 %v609
  %976 = vmatpush1.bf16.msra.mxu0 %v608
  %977 = vmatprep.subr.bf16.mxu0 %v617
  %978 = vmatpush1.bf16.msra.mxu0 %v616
  %979 = vmatprep.subr.bf16.mxu0 %v625
  %980 = vmatpush1.bf16.msra.mxu0 %v624
  %981 = vmatprep.subr.bf16.mxu0 %v633
  %982 = vmatpush1.bf16.msra.mxu0 %v632
  %983 = vmatprep.subr.bf16.mxu0 %v641
  %984 = vmatpush1.bf16.msra.mxu0 %v640
  %985 = vmatprep.subr.bf16.mxu0 %v649
  %986 = vmatpush1.bf16.msra.mxu0 %v648
  %987 = vmatprep.subr.bf16.mxu0 %v657
  %988 = vmatpush1.bf16.msra.mxu0 %v656
  %989 = vmatprep.subr.bf16.mxu0 %v665
  %990 = vmatpush1.bf16.msra.mxu0 %v664
  %991 = vmatprep.subr.bf16.mxu0 %v673
  %992 = vmatpush1.bf16.msra.mxu0 %v672
  %993 = vmatprep.subr.bf16.mxu0 %v681
  %994 = vmatpush1.bf16.msra.mxu0 %v680
  %995 = vmatprep.subr.bf16.mxu0 %v689
  %996 = vmatpush1.bf16.msra.mxu0 %v688
  %997 = vmatprep.subr.bf16.mxu0 %v697
  %998 = vmatpush1.bf16.msra.mxu0 %v696
  %999 = vmatprep.subr.bf16.mxu0 %v705
  %1000 = vmatpush1.bf16.msra.mxu0 %v704
  %1001 = vmatprep.subr.bf16.mxu0 %v713
  %1002 = vmatpush1.bf16.msra.mxu0 %v712
  %1003 = vmatprep.mubr.bf16.mxu0 %v73
  %1004 = vmatmul.mubr.bf16.gmra.mrb[0].mxu0 %v72
  %v1005 = vpop.f32.mrb[0].mxu0
  %v1006 = vadd.f32 0.0, %v1005
  %v1007 = vpop.f32.mrb[0].mxu0
  %v1008 = vadd.f32 0.0, %v1007
  %v1009 = vpop.f32.mrb[0].mxu0
  %v1010 = vadd.f32 0.0, %v1009
  %v1011 = vpop.f32.mrb[0].mxu0
  %v1012 = vadd.f32 0.0, %v1011
  %1013 = vdwg.mxu0
  %v1014 = vadd.f32 %v56, %v877
  %v1015 = vadd.f32 %v57, %v879
  %v1016 = vadd.f32 %v58, %v920
  %v1017 = vadd.f32 %v59, %v922
  %v1018 = vadd.f32 %v60, %v963
  %v1019 = vadd.f32 %v61, %v965
  %v1020 = vadd.f32 %v62, %v1006
  %v1021 = vadd.f32 %v63, %v1008
  %v1022 = vadd.f32 %v64, %v881
  %v1023 = vadd.f32 %v65, %v883
  %v1024 = vadd.f32 %v66, %v924
  %v1025 = vadd.f32 %v67, %v926
  %v1026 = vadd.f32 %v68, %v967
  %v1027 = vadd.f32 %v69, %v969
  %v1028 = vadd.f32 %v70, %v1010
  %v1029 = vadd.f32 %v71, %v1012
  %v1030 = vxor.u32 %v1014, 2147483648
  %v1031 = vxor.u32 %v1015, 2147483648
  %v1032 = vxor.u32 %v1016, 2147483648
  %v1033 = vxor.u32 %v1017, 2147483648
  %v1034 = vxor.u32 %v1018, 2147483648
  %v1035 = vxor.u32 %v1019, 2147483648
  %v1036 = vxor.u32 %v1022, 2147483648
  %v1037 = vxor.u32 %v1023, 2147483648
  %v1038 = vxor.u32 %v1024, 2147483648
  %v1039 = vxor.u32 %v1025, 2147483648
  %v1040 = vxor.u32 %v1026, 2147483648
  %v1041 = vxor.u32 %v1027, 2147483648
  %v1042 = vmul.f32 %v1030, 1.442695
  %v1043 = vpow.pop %v1042
  %v1044 = vmul.f32 %v1031, 1.442695
  %v1045 = vpow.pop %v1044
  %v1046 = vmul.f32 %v1032, 1.442695
  %v1047 = vpow.pop %v1046
  %v1048 = vmul.f32 %v1033, 1.442695
  %v1049 = vpow.pop %v1048
  %v1050 = vmul.f32 %v1034, 1.442695
  %v1051 = vpow.pop %v1050
  %v1052 = vmul.f32 %v1035, 1.442695
  %v1053 = vpow.pop %v1052
  %v1054 = vmul.f32 %v1036, 1.442695
  %v1055 = vpow.pop %v1054
  %v1056 = vmul.f32 %v1037, 1.442695
  %v1057 = vpow.pop %v1056
  %v1058 = vmul.f32 %v1038, 1.442695
  %v1059 = vpow.pop %v1058
  %v1060 = vmul.f32 %v1039, 1.442695
  %v1061 = vpow.pop %v1060
  %v1062 = vmul.f32 %v1040, 1.442695
  %v1063 = vpow.pop %v1062
  %v1064 = vmul.f32 %v1041, 1.442695
  %v1065 = vpow.pop %v1064
  %v1066 = vadd.f32 %v1043, 1.0
  %v1067 = vadd.f32 %v1045, 1.0
  %v1068 = vadd.f32 %v1047, 1.0
  %v1069 = vadd.f32 %v1049, 1.0
  %v1070 = vadd.f32 %v1051, 1.0
  %v1071 = vadd.f32 %v1053, 1.0
  %v1072 = vadd.f32 %v1055, 1.0
  %v1073 = vadd.f32 %v1057, 1.0
  %v1074 = vadd.f32 %v1059, 1.0
  %v1075 = vadd.f32 %v1061, 1.0
  %v1076 = vadd.f32 %v1063, 1.0
  %v1077 = vadd.f32 %v1065, 1.0
  %v1078 = vrcp.pop %v1066
  %v1079 = vmul.f32 1.0, %v1078
  %v1080 = vrcp.pop %v1067
  %v1081 = vmul.f32 1.0, %v1080
  %v1082 = vrcp.pop %v1068
  %v1083 = vmul.f32 1.0, %v1082
  %v1084 = vrcp.pop %v1069
  %v1085 = vmul.f32 1.0, %v1084
  %v1086 = vrcp.pop %v1070
  %v1087 = vmul.f32 1.0, %v1086
  %v1088 = vrcp.pop %v1071
  %v1089 = vmul.f32 1.0, %v1088
  %v1090 = vrcp.pop %v1072
  %v1091 = vmul.f32 1.0, %v1090
  %v1092 = vrcp.pop %v1073
  %v1093 = vmul.f32 1.0, %v1092
  %v1094 = vrcp.pop %v1074
  %v1095 = vmul.f32 1.0, %v1094
  %v1096 = vrcp.pop %v1075
  %v1097 = vmul.f32 1.0, %v1096
  %v1098 = vrcp.pop %v1076
  %v1099 = vmul.f32 1.0, %v1098
  %v1100 = vrcp.pop %v1077
  %v1101 = vmul.f32 1.0, %v1100
  %v1102 = vtanh.pop %v1020
  %v1103 = vtanh.pop %v1021
  %v1104 = vtanh.pop %v1028
  %v1105 = vtanh.pop %v1029
  %v1106 = vmul.f32 %v1083, %v44
  %v1107 = vmul.f32 %v1085, %v45
  %v1108 = vmul.f32 %v1095, %v46
  %v1109 = vmul.f32 %v1097, %v47
  %v1110 = vmul.f32 %v1079, %v1102
  %v1111 = vmul.f32 %v1081, %v1103
  %v1112 = vmul.f32 %v1091, %v1104
  %v1113 = vmul.f32 %v1093, %v1105
  %v1114 = vadd.f32 %v1106, %v1110
  %v1115 = vadd.f32 %v1107, %v1111
  %v1116 = vadd.f32 %v1108, %v1112
  %v1117 = vadd.f32 %v1109, %v1113
  %v1118 = vtanh.pop %v1114
  %v1119 = vtanh.pop %v1115
  %v1120 = vtanh.pop %v1116
  %v1121 = vtanh.pop %v1117
  %v1122 = vmul.f32 %v1087, %v1118
  %v1123 = vmul.f32 %v1089, %v1119
  %v1124 = vmul.f32 %v1099, %v1120
  %v1125 = vmul.f32 %v1101, %v1121
  %v1126 = vpack.c.bf16 %v1124, %v1122
  %v1127 = vpack.c.bf16 %v1125, %v1123
  %v1130 = vunpack.c.l.b16 %v1126
  %v1131 = vunpack.c.l.b16 %v1127
  %v1132 = vunpack.c.h.b16 %v1126
  %v1133 = vunpack.c.h.b16 %v1127
  %v1134 = vpack.c.b16 %v1131, %v1130
  %v1135 = vpack.c.b16 %v1133, %v1132
  %1138 = vst [vmem:[%s4] sm:$0xff] %v1134
  %1139 = vst [vmem:[%s4 + $0x8] sm:$0xff] %v1135
  %s1140 = scalar_lea.vmem %s0, 64
  %v1141 = vld [vmem:[%s1140] sm:$0xff]
  %v1142 = vld [vmem:[%s1140 + $0x8] sm:$0xff]
  %v1143 = vld [vmem:[%s1140 + $0x10] sm:$0xff]
  %v1144 = vld [vmem:[%s1140 + $0x18] sm:$0xff]
  %v1145 = vld [vmem:[%s1140 + $0x20] sm:$0xff]
  %v1146 = vld [vmem:[%s1140 + $0x28] sm:$0xff]
  %v1147 = vld [vmem:[%s1140 + $0x30] sm:$0xff]
  %v1148 = vld [vmem:[%s1140 + $0x38] sm:$0xff]
  %v1149 = vunpack.c.l.bf16 %v1141
  %v1150 = vunpack.c.h.bf16 %v1141
  %v1151 = vunpack.c.l.bf16 %v1142
  %v1152 = vunpack.c.h.bf16 %v1142
  %v1153 = vunpack.c.l.bf16 %v1143
  %v1154 = vunpack.c.h.bf16 %v1143
  %v1155 = vunpack.c.l.bf16 %v1144
  %v1156 = vunpack.c.h.bf16 %v1144
  %v1157 = vunpack.c.l.bf16 %v1145
  %v1158 = vunpack.c.h.bf16 %v1145
  %v1159 = vunpack.c.l.bf16 %v1146
  %v1160 = vunpack.c.h.bf16 %v1146
  %v1161 = vunpack.c.l.bf16 %v1147
  %v1162 = vunpack.c.h.bf16 %v1147
  %v1163 = vunpack.c.l.bf16 %v1148
  %v1164 = vunpack.c.h.bf16 %v1148
  %v1165 = vld [vmem:[%s1] sm:$0xff]
  %v1166 = vld [vmem:[%s1 + $0x8] sm:$0xff]
  %v1167 = vld [vmem:[%s1 + $0x10] sm:$0xff]
  %v1168 = vld [vmem:[%s1 + $0x18] sm:$0xff]
  %v1169 = vld [vmem:[%s1 + $0x20] sm:$0xff]
  %v1170 = vld [vmem:[%s1 + $0x28] sm:$0xff]
  %v1171 = vld [vmem:[%s1 + $0x30] sm:$0xff]
  %v1172 = vld [vmem:[%s1 + $0x38] sm:$0xff]
  %v1173 = vld [vmem:[%s1 + $0x40] sm:$0xff]
  %v1174 = vld [vmem:[%s1 + $0x48] sm:$0xff]
  %v1175 = vld [vmem:[%s1 + $0x50] sm:$0xff]
  %v1176 = vld [vmem:[%s1 + $0x58] sm:$0xff]
  %v1177 = vld [vmem:[%s1 + $0x60] sm:$0xff]
  %v1178 = vld [vmem:[%s1 + $0x68] sm:$0xff]
  %v1179 = vld [vmem:[%s1 + $0x70] sm:$0xff]
  %v1180 = vld [vmem:[%s1 + $0x78] sm:$0xff]
  %v1181 = vld [vmem:[%s1 + $0x80] sm:$0xff]
  %v1182 = vld [vmem:[%s1 + $0x88] sm:$0xff]
  %v1183 = vld [vmem:[%s1 + $0x90] sm:$0xff]
  %v1184 = vld [vmem:[%s1 + $0x98] sm:$0xff]
  %v1185 = vld [vmem:[%s1 + $0xa0] sm:$0xff]
  %v1186 = vld [vmem:[%s1 + $0xa8] sm:$0xff]
  %v1187 = vld [vmem:[%s1 + $0xb0] sm:$0xff]
  %v1188 = vld [vmem:[%s1 + $0xb8] sm:$0xff]
  %v1189 = vld [vmem:[%s1 + $0xc0] sm:$0xff]
  %v1190 = vld [vmem:[%s1 + $0xc8] sm:$0xff]
  %v1191 = vld [vmem:[%s1 + $0xd0] sm:$0xff]
  %v1192 = vld [vmem:[%s1 + $0xd8] sm:$0xff]
  %v1193 = vld [vmem:[%s1 + $0xe0] sm:$0xff]
  %v1194 = vld [vmem:[%s1 + $0xe8] sm:$0xff]
  %v1195 = vld [vmem:[%s1 + $0xf0] sm:$0xff]
  %v1196 = vld [vmem:[%s1 + $0xf8] sm:$0xff]
  %v1197 = vld [vmem:[%s1 + $0x100] sm:$0xff]
  %v1198 = vld [vmem:[%s1 + $0x108] sm:$0xff]
  %v1199 = vld [vmem:[%s1 + $0x110] sm:$0xff]
  %v1200 = vld [vmem:[%s1 + $0x118] sm:$0xff]
  %v1201 = vld [vmem:[%s1 + $0x120] sm:$0xff]
  %v1202 = vld [vmem:[%s1 + $0x128] sm:$0xff]
  %v1203 = vld [vmem:[%s1 + $0x130] sm:$0xff]
  %v1204 = vld [vmem:[%s1 + $0x138] sm:$0xff]
  %v1205 = vld [vmem:[%s1 + $0x140] sm:$0xff]
  %v1206 = vld [vmem:[%s1 + $0x148] sm:$0xff]
  %v1207 = vld [vmem:[%s1 + $0x150] sm:$0xff]
  %v1208 = vld [vmem:[%s1 + $0x158] sm:$0xff]
  %v1209 = vld [vmem:[%s1 + $0x160] sm:$0xff]
  %v1210 = vld [vmem:[%s1 + $0x168] sm:$0xff]
  %v1211 = vld [vmem:[%s1 + $0x170] sm:$0xff]
  %v1212 = vld [vmem:[%s1 + $0x178] sm:$0xff]
  %v1213 = vld [vmem:[%s1 + $0x180] sm:$0xff]
  %v1214 = vld [vmem:[%s1 + $0x188] sm:$0xff]
  %v1215 = vld [vmem:[%s1 + $0x190] sm:$0xff]
  %v1216 = vld [vmem:[%s1 + $0x198] sm:$0xff]
  %v1217 = vld [vmem:[%s1 + $0x1a0] sm:$0xff]
  %v1218 = vld [vmem:[%s1 + $0x1a8] sm:$0xff]
  %v1219 = vld [vmem:[%s1 + $0x1b0] sm:$0xff]
  %v1220 = vld [vmem:[%s1 + $0x1b8] sm:$0xff]
  %v1221 = vld [vmem:[%s1 + $0x1c0] sm:$0xff]
  %v1222 = vld [vmem:[%s1 + $0x1c8] sm:$0xff]
  %v1223 = vld [vmem:[%s1 + $0x1d0] sm:$0xff]
  %v1224 = vld [vmem:[%s1 + $0x1d8] sm:$0xff]
  %v1225 = vld [vmem:[%s1 + $0x1e0] sm:$0xff]
  %v1226 = vld [vmem:[%s1 + $0x1e8] sm:$0xff]
  %v1227 = vld [vmem:[%s1 + $0x1f0] sm:$0xff]
  %v1228 = vld [vmem:[%s1 + $0x1f8] sm:$0xff]
  %v1229 = vld [vmem:[%s1 + $0x200] sm:$0xff]
  %v1230 = vld [vmem:[%s1 + $0x208] sm:$0xff]
  %v1231 = vld [vmem:[%s1 + $0x210] sm:$0xff]
  %v1232 = vld [vmem:[%s1 + $0x218] sm:$0xff]
  %v1233 = vld [vmem:[%s1 + $0x220] sm:$0xff]
  %v1234 = vld [vmem:[%s1 + $0x228] sm:$0xff]
  %v1235 = vld [vmem:[%s1 + $0x230] sm:$0xff]
  %v1236 = vld [vmem:[%s1 + $0x238] sm:$0xff]
  %v1237 = vld [vmem:[%s1 + $0x240] sm:$0xff]
  %v1238 = vld [vmem:[%s1 + $0x248] sm:$0xff]
  %v1239 = vld [vmem:[%s1 + $0x250] sm:$0xff]
  %v1240 = vld [vmem:[%s1 + $0x258] sm:$0xff]
  %v1241 = vld [vmem:[%s1 + $0x260] sm:$0xff]
  %v1242 = vld [vmem:[%s1 + $0x268] sm:$0xff]
  %v1243 = vld [vmem:[%s1 + $0x270] sm:$0xff]
  %v1244 = vld [vmem:[%s1 + $0x278] sm:$0xff]
  %v1245 = vld [vmem:[%s1 + $0x280] sm:$0xff]
  %v1246 = vld [vmem:[%s1 + $0x288] sm:$0xff]
  %v1247 = vld [vmem:[%s1 + $0x290] sm:$0xff]
  %v1248 = vld [vmem:[%s1 + $0x298] sm:$0xff]
  %v1249 = vld [vmem:[%s1 + $0x2a0] sm:$0xff]
  %v1250 = vld [vmem:[%s1 + $0x2a8] sm:$0xff]
  %v1251 = vld [vmem:[%s1 + $0x2b0] sm:$0xff]
  %v1252 = vld [vmem:[%s1 + $0x2b8] sm:$0xff]
  %v1253 = vld [vmem:[%s1 + $0x2c0] sm:$0xff]
  %v1254 = vld [vmem:[%s1 + $0x2c8] sm:$0xff]
  %v1255 = vld [vmem:[%s1 + $0x2d0] sm:$0xff]
  %v1256 = vld [vmem:[%s1 + $0x2d8] sm:$0xff]
  %v1257 = vld [vmem:[%s1 + $0x2e0] sm:$0xff]
  %v1258 = vld [vmem:[%s1 + $0x2e8] sm:$0xff]
  %v1259 = vld [vmem:[%s1 + $0x2f0] sm:$0xff]
  %v1260 = vld [vmem:[%s1 + $0x2f8] sm:$0xff]
  %v1261 = vld [vmem:[%s1 + $0x300] sm:$0xff]
  %v1262 = vld [vmem:[%s1 + $0x308] sm:$0xff]
  %v1263 = vld [vmem:[%s1 + $0x310] sm:$0xff]
  %v1264 = vld [vmem:[%s1 + $0x318] sm:$0xff]
  %v1265 = vld [vmem:[%s1 + $0x320] sm:$0xff]
  %v1266 = vld [vmem:[%s1 + $0x328] sm:$0xff]
  %v1267 = vld [vmem:[%s1 + $0x330] sm:$0xff]
  %v1268 = vld [vmem:[%s1 + $0x338] sm:$0xff]
  %v1269 = vld [vmem:[%s1 + $0x340] sm:$0xff]
  %v1270 = vld [vmem:[%s1 + $0x348] sm:$0xff]
  %v1271 = vld [vmem:[%s1 + $0x350] sm:$0xff]
  %v1272 = vld [vmem:[%s1 + $0x358] sm:$0xff]
  %v1273 = vld [vmem:[%s1 + $0x360] sm:$0xff]
  %v1274 = vld [vmem:[%s1 + $0x368] sm:$0xff]
  %v1275 = vld [vmem:[%s1 + $0x370] sm:$0xff]
  %v1276 = vld [vmem:[%s1 + $0x378] sm:$0xff]
  %v1277 = vld [vmem:[%s1 + $0x380] sm:$0xff]
  %v1278 = vld [vmem:[%s1 + $0x388] sm:$0xff]
  %v1279 = vld [vmem:[%s1 + $0x390] sm:$0xff]
  %v1280 = vld [vmem:[%s1 + $0x398] sm:$0xff]
  %v1281 = vld [vmem:[%s1 + $0x3a0] sm:$0xff]
  %v1282 = vld [vmem:[%s1 + $0x3a8] sm:$0xff]
  %v1283 = vld [vmem:[%s1 + $0x3b0] sm:$0xff]
  %v1284 = vld [vmem:[%s1 + $0x3b8] sm:$0xff]
  %v1285 = vld [vmem:[%s1 + $0x3c0] sm:$0xff]
  %v1286 = vld [vmem:[%s1 + $0x3c8] sm:$0xff]
  %v1287 = vld [vmem:[%s1 + $0x3d0] sm:$0xff]
  %v1288 = vld [vmem:[%s1 + $0x3d8] sm:$0xff]
  %v1289 = vld [vmem:[%s1 + $0x3e0] sm:$0xff]
  %v1290 = vld [vmem:[%s1 + $0x3e8] sm:$0xff]
  %v1291 = vld [vmem:[%s1 + $0x3f0] sm:$0xff]
  %v1292 = vld [vmem:[%s1 + $0x3f8] sm:$0xff]
  %v1421 = vunpack.c.l.b16 %v1165
  %v1422 = vunpack.c.h.b16 %v1165
  %v1423 = vunpack.c.l.b16 %v1166
  %v1424 = vunpack.c.h.b16 %v1166
  %v1425 = vunpack.c.l.b16 %v1167
  %v1426 = vunpack.c.h.b16 %v1167
  %v1427 = vunpack.c.l.b16 %v1168
  %v1428 = vunpack.c.h.b16 %v1168
  %v1429 = vunpack.c.l.b16 %v1169
  %v1430 = vunpack.c.h.b16 %v1169
  %v1431 = vunpack.c.l.b16 %v1170
  %v1432 = vunpack.c.h.b16 %v1170
  %v1433 = vunpack.c.l.b16 %v1171
  %v1434 = vunpack.c.h.b16 %v1171
  %v1435 = vunpack.c.l.b16 %v1172
  %v1436 = vunpack.c.h.b16 %v1172
  %v1437 = vunpack.c.l.b16 %v1173
  %v1438 = vunpack.c.h.b16 %v1173
  %v1439 = vunpack.c.l.b16 %v1174
  %v1440 = vunpack.c.h.b16 %v1174
  %v1441 = vunpack.c.l.b16 %v1175
  %v1442 = vunpack.c.h.b16 %v1175
  %v1443 = vunpack.c.l.b16 %v1176
  %v1444 = vunpack.c.h.b16 %v1176
  %v1445 = vunpack.c.l.b16 %v1177
  %v1446 = vunpack.c.h.b16 %v1177
  %v1447 = vunpack.c.l.b16 %v1178
  %v1448 = vunpack.c.h.b16 %v1178
  %v1449 = vunpack.c.l.b16 %v1179
  %v1450 = vunpack.c.h.b16 %v1179
  %v1451 = vunpack.c.l.b16 %v1180
  %v1452 = vunpack.c.h.b16 %v1180
  %v1453 = vunpack.c.l.b16 %v1181
  %v1454 = vunpack.c.h.b16 %v1181
  %v1455 = vunpack.c.l.b16 %v1182
  %v1456 = vunpack.c.h.b16 %v1182
  %v1457 = vunpack.c.l.b16 %v1183
  %v1458 = vunpack.c.h.b16 %v1183
  %v1459 = vunpack.c.l.b16 %v1184
  %v1460 = vunpack.c.h.b16 %v1184
  %v1461 = vunpack.c.l.b16 %v1185
  %v1462 = vunpack.c.h.b16 %v1185
  %v1463 = vunpack.c.l.b16 %v1186
  %v1464 = vunpack.c.h.b16 %v1186
  %v1465 = vunpack.c.l.b16 %v1187
  %v1466 = vunpack.c.h.b16 %v1187
  %v1467 = vunpack.c.l.b16 %v1188
  %v1468 = vunpack.c.h.b16 %v1188
  %v1469 = vunpack.c.l.b16 %v1189
  %v1470 = vunpack.c.h.b16 %v1189
  %v1471 = vunpack.c.l.b16 %v1190
  %v1472 = vunpack.c.h.b16 %v1190
  %v1473 = vunpack.c.l.b16 %v1191
  %v1474 = vunpack.c.h.b16 %v1191
  %v1475 = vunpack.c.l.b16 %v1192
  %v1476 = vunpack.c.h.b16 %v1192
  %v1477 = vunpack.c.l.b16 %v1193
  %v1478 = vunpack.c.h.b16 %v1193
  %v1479 = vunpack.c.l.b16 %v1194
  %v1480 = vunpack.c.h.b16 %v1194
  %v1481 = vunpack.c.l.b16 %v1195
  %v1482 = vunpack.c.h.b16 %v1195
  %v1483 = vunpack.c.l.b16 %v1196
  %v1484 = vunpack.c.h.b16 %v1196
  %v1485 = vunpack.c.l.b16 %v1197
  %v1486 = vunpack.c.h.b16 %v1197
  %v1487 = vunpack.c.l.b16 %v1198
  %v1488 = vunpack.c.h.b16 %v1198
  %v1489 = vunpack.c.l.b16 %v1199
  %v1490 = vunpack.c.h.b16 %v1199
  %v1491 = vunpack.c.l.b16 %v1200
  %v1492 = vunpack.c.h.b16 %v1200
  %v1493 = vunpack.c.l.b16 %v1201
  %v1494 = vunpack.c.h.b16 %v1201
  %v1495 = vunpack.c.l.b16 %v1202
  %v1496 = vunpack.c.h.b16 %v1202
  %v1497 = vunpack.c.l.b16 %v1203
  %v1498 = vunpack.c.h.b16 %v1203
  %v1499 = vunpack.c.l.b16 %v1204
  %v1500 = vunpack.c.h.b16 %v1204
  %v1501 = vunpack.c.l.b16 %v1205
  %v1502 = vunpack.c.h.b16 %v1205
  %v1503 = vunpack.c.l.b16 %v1206
  %v1504 = vunpack.c.h.b16 %v1206
  %v1505 = vunpack.c.l.b16 %v1207
  %v1506 = vunpack.c.h.b16 %v1207
  %v1507 = vunpack.c.l.b16 %v1208
  %v1508 = vunpack.c.h.b16 %v1208
  %v1509 = vunpack.c.l.b16 %v1209
  %v1510 = vunpack.c.h.b16 %v1209
  %v1511 = vunpack.c.l.b16 %v1210
  %v1512 = vunpack.c.h.b16 %v1210
  %v1513 = vunpack.c.l.b16 %v1211
  %v1514 = vunpack.c.h.b16 %v1211
  %v1515 = vunpack.c.l.b16 %v1212
  %v1516 = vunpack.c.h.b16 %v1212
  %v1517 = vunpack.c.l.b16 %v1213
  %v1518 = vunpack.c.h.b16 %v1213
  %v1519 = vunpack.c.l.b16 %v1214
  %v1520 = vunpack.c.h.b16 %v1214
  %v1521 = vunpack.c.l.b16 %v1215
  %v1522 = vunpack.c.h.b16 %v1215
  %v1523 = vunpack.c.l.b16 %v1216
  %v1524 = vunpack.c.h.b16 %v1216
  %v1525 = vunpack.c.l.b16 %v1217
  %v1526 = vunpack.c.h.b16 %v1217
  %v1527 = vunpack.c.l.b16 %v1218
  %v1528 = vunpack.c.h.b16 %v1218
  %v1529 = vunpack.c.l.b16 %v1219
  %v1530 = vunpack.c.h.b16 %v1219
  %v1531 = vunpack.c.l.b16 %v1220
  %v1532 = vunpack.c.h.b16 %v1220
  %v1533 = vunpack.c.l.b16 %v1221
  %v1534 = vunpack.c.h.b16 %v1221
  %v1535 = vunpack.c.l.b16 %v1222
  %v1536 = vunpack.c.h.b16 %v1222
  %v1537 = vunpack.c.l.b16 %v1223
  %v1538 = vunpack.c.h.b16 %v1223
  %v1539 = vunpack.c.l.b16 %v1224
  %v1540 = vunpack.c.h.b16 %v1224
  %v1541 = vunpack.c.l.b16 %v1225
  %v1542 = vunpack.c.h.b16 %v1225
  %v1543 = vunpack.c.l.b16 %v1226
  %v1544 = vunpack.c.h.b16 %v1226
  %v1545 = vunpack.c.l.b16 %v1227
  %v1546 = vunpack.c.h.b16 %v1227
  %v1547 = vunpack.c.l.b16 %v1228
  %v1548 = vunpack.c.h.b16 %v1228
  %v1549 = vunpack.c.l.b16 %v1229
  %v1550 = vunpack.c.h.b16 %v1229
  %v1551 = vunpack.c.l.b16 %v1230
  %v1552 = vunpack.c.h.b16 %v1230
  %v1553 = vunpack.c.l.b16 %v1231
  %v1554 = vunpack.c.h.b16 %v1231
  %v1555 = vunpack.c.l.b16 %v1232
  %v1556 = vunpack.c.h.b16 %v1232
  %v1557 = vunpack.c.l.b16 %v1233
  %v1558 = vunpack.c.h.b16 %v1233
  %v1559 = vunpack.c.l.b16 %v1234
  %v1560 = vunpack.c.h.b16 %v1234
  %v1561 = vunpack.c.l.b16 %v1235
  %v1562 = vunpack.c.h.b16 %v1235
  %v1563 = vunpack.c.l.b16 %v1236
  %v1564 = vunpack.c.h.b16 %v1236
  %v1565 = vunpack.c.l.b16 %v1237
  %v1566 = vunpack.c.h.b16 %v1237
  %v1567 = vunpack.c.l.b16 %v1238
  %v1568 = vunpack.c.h.b16 %v1238
  %v1569 = vunpack.c.l.b16 %v1239
  %v1570 = vunpack.c.h.b16 %v1239
  %v1571 = vunpack.c.l.b16 %v1240
  %v1572 = vunpack.c.h.b16 %v1240
  %v1573 = vunpack.c.l.b16 %v1241
  %v1574 = vunpack.c.h.b16 %v1241
  %v1575 = vunpack.c.l.b16 %v1242
  %v1576 = vunpack.c.h.b16 %v1242
  %v1577 = vunpack.c.l.b16 %v1243
  %v1578 = vunpack.c.h.b16 %v1243
  %v1579 = vunpack.c.l.b16 %v1244
  %v1580 = vunpack.c.h.b16 %v1244
  %v1581 = vunpack.c.l.b16 %v1245
  %v1582 = vunpack.c.h.b16 %v1245
  %v1583 = vunpack.c.l.b16 %v1246
  %v1584 = vunpack.c.h.b16 %v1246
  %v1585 = vunpack.c.l.b16 %v1247
  %v1586 = vunpack.c.h.b16 %v1247
  %v1587 = vunpack.c.l.b16 %v1248
  %v1588 = vunpack.c.h.b16 %v1248
  %v1589 = vunpack.c.l.b16 %v1249
  %v1590 = vunpack.c.h.b16 %v1249
  %v1591 = vunpack.c.l.b16 %v1250
  %v1592 = vunpack.c.h.b16 %v1250
  %v1593 = vunpack.c.l.b16 %v1251
  %v1594 = vunpack.c.h.b16 %v1251
  %v1595 = vunpack.c.l.b16 %v1252
  %v1596 = vunpack.c.h.b16 %v1252
  %v1597 = vunpack.c.l.b16 %v1253
  %v1598 = vunpack.c.h.b16 %v1253
  %v1599 = vunpack.c.l.b16 %v1254
  %v1600 = vunpack.c.h.b16 %v1254
  %v1601 = vunpack.c.l.b16 %v1255
  %v1602 = vunpack.c.h.b16 %v1255
  %v1603 = vunpack.c.l.b16 %v1256
  %v1604 = vunpack.c.h.b16 %v1256
  %v1605 = vunpack.c.l.b16 %v1257
  %v1606 = vunpack.c.h.b16 %v1257
  %v1607 = vunpack.c.l.b16 %v1258
  %v1608 = vunpack.c.h.b16 %v1258
  %v1609 = vunpack.c.l.b16 %v1259
  %v1610 = vunpack.c.h.b16 %v1259
  %v1611 = vunpack.c.l.b16 %v1260
  %v1612 = vunpack.c.h.b16 %v1260
  %v1613 = vunpack.c.l.b16 %v1261
  %v1614 = vunpack.c.h.b16 %v1261
  %v1615 = vunpack.c.l.b16 %v1262
  %v1616 = vunpack.c.h.b16 %v1262
  %v1617 = vunpack.c.l.b16 %v1263
  %v1618 = vunpack.c.h.b16 %v1263
  %v1619 = vunpack.c.l.b16 %v1264
  %v1620 = vunpack.c.h.b16 %v1264
  %v1621 = vunpack.c.l.b16 %v1265
  %v1622 = vunpack.c.h.b16 %v1265
  %v1623 = vunpack.c.l.b16 %v1266
  %v1624 = vunpack.c.h.b16 %v1266
  %v1625 = vunpack.c.l.b16 %v1267
  %v1626 = vunpack.c.h.b16 %v1267
  %v1627 = vunpack.c.l.b16 %v1268
  %v1628 = vunpack.c.h.b16 %v1268
  %v1629 = vunpack.c.l.b16 %v1269
  %v1630 = vunpack.c.h.b16 %v1269
  %v1631 = vunpack.c.l.b16 %v1270
  %v1632 = vunpack.c.h.b16 %v1270
  %v1633 = vunpack.c.l.b16 %v1271
  %v1634 = vunpack.c.h.b16 %v1271
  %v1635 = vunpack.c.l.b16 %v1272
  %v1636 = vunpack.c.h.b16 %v1272
  %v1637 = vunpack.c.l.b16 %v1273
  %v1638 = vunpack.c.h.b16 %v1273
  %v1639 = vunpack.c.l.b16 %v1274
  %v1640 = vunpack.c.h.b16 %v1274
  %v1641 = vunpack.c.l.b16 %v1275
  %v1642 = vunpack.c.h.b16 %v1275
  %v1643 = vunpack.c.l.b16 %v1276
  %v1644 = vunpack.c.h.b16 %v1276
  %v1645 = vunpack.c.l.b16 %v1277
  %v1646 = vunpack.c.h.b16 %v1277
  %v1647 = vunpack.c.l.b16 %v1278
  %v1648 = vunpack.c.h.b16 %v1278
  %v1649 = vunpack.c.l.b16 %v1279
  %v1650 = vunpack.c.h.b16 %v1279
  %v1651 = vunpack.c.l.b16 %v1280
  %v1652 = vunpack.c.h.b16 %v1280
  %v1653 = vunpack.c.l.b16 %v1281
  %v1654 = vunpack.c.h.b16 %v1281
  %v1655 = vunpack.c.l.b16 %v1282
  %v1656 = vunpack.c.h.b16 %v1282
  %v1657 = vunpack.c.l.b16 %v1283
  %v1658 = vunpack.c.h.b16 %v1283
  %v1659 = vunpack.c.l.b16 %v1284
  %v1660 = vunpack.c.h.b16 %v1284
  %v1661 = vunpack.c.l.b16 %v1285
  %v1662 = vunpack.c.h.b16 %v1285
  %v1663 = vunpack.c.l.b16 %v1286
  %v1664 = vunpack.c.h.b16 %v1286
  %v1665 = vunpack.c.l.b16 %v1287
  %v1666 = vunpack.c.h.b16 %v1287
  %v1667 = vunpack.c.l.b16 %v1288
  %v1668 = vunpack.c.h.b16 %v1288
  %v1669 = vunpack.c.l.b16 %v1289
  %v1670 = vunpack.c.h.b16 %v1289
  %v1671 = vunpack.c.l.b16 %v1290
  %v1672 = vunpack.c.h.b16 %v1290
  %v1673 = vunpack.c.l.b16 %v1291
  %v1674 = vunpack.c.h.b16 %v1291
  %v1675 = vunpack.c.l.b16 %v1292
  %v1676 = vunpack.c.h.b16 %v1292
  %v1677 = vpack.c.b16 %v1429, %v1421
  %v1678 = vpack.c.b16 %v1430, %v1422
  %v1679 = vpack.c.b16 %v1431, %v1423
  %v1680 = vpack.c.b16 %v1432, %v1424
  %v1681 = vpack.c.b16 %v1433, %v1425
  %v1682 = vpack.c.b16 %v1434, %v1426
  %v1683 = vpack.c.b16 %v1435, %v1427
  %v1684 = vpack.c.b16 %v1436, %v1428
  %v1685 = vpack.c.b16 %v1445, %v1437
  %v1686 = vpack.c.b16 %v1446, %v1438
  %v1687 = vpack.c.b16 %v1447, %v1439
  %v1688 = vpack.c.b16 %v1448, %v1440
  %v1689 = vpack.c.b16 %v1449, %v1441
  %v1690 = vpack.c.b16 %v1450, %v1442
  %v1691 = vpack.c.b16 %v1451, %v1443
  %v1692 = vpack.c.b16 %v1452, %v1444
  %v1693 = vpack.c.b16 %v1461, %v1453
  %v1694 = vpack.c.b16 %v1462, %v1454
  %v1695 = vpack.c.b16 %v1463, %v1455
  %v1696 = vpack.c.b16 %v1464, %v1456
  %v1697 = vpack.c.b16 %v1465, %v1457
  %v1698 = vpack.c.b16 %v1466, %v1458
  %v1699 = vpack.c.b16 %v1467, %v1459
  %v1700 = vpack.c.b16 %v1468, %v1460
  %v1701 = vpack.c.b16 %v1477, %v1469
  %v1702 = vpack.c.b16 %v1478, %v1470
  %v1703 = vpack.c.b16 %v1479, %v1471
  %v1704 = vpack.c.b16 %v1480, %v1472
  %v1705 = vpack.c.b16 %v1481, %v1473
  %v1706 = vpack.c.b16 %v1482, %v1474
  %v1707 = vpack.c.b16 %v1483, %v1475
  %v1708 = vpack.c.b16 %v1484, %v1476
  %v1709 = vpack.c.b16 %v1493, %v1485
  %v1710 = vpack.c.b16 %v1494, %v1486
  %v1711 = vpack.c.b16 %v1495, %v1487
  %v1712 = vpack.c.b16 %v1496, %v1488
  %v1713 = vpack.c.b16 %v1497, %v1489
  %v1714 = vpack.c.b16 %v1498, %v1490
  %v1715 = vpack.c.b16 %v1499, %v1491
  %v1716 = vpack.c.b16 %v1500, %v1492
  %v1717 = vpack.c.b16 %v1509, %v1501
  %v1718 = vpack.c.b16 %v1510, %v1502
  %v1719 = vpack.c.b16 %v1511, %v1503
  %v1720 = vpack.c.b16 %v1512, %v1504
  %v1721 = vpack.c.b16 %v1513, %v1505
  %v1722 = vpack.c.b16 %v1514, %v1506
  %v1723 = vpack.c.b16 %v1515, %v1507
  %v1724 = vpack.c.b16 %v1516, %v1508
  %v1725 = vpack.c.b16 %v1525, %v1517
  %v1726 = vpack.c.b16 %v1526, %v1518
  %v1727 = vpack.c.b16 %v1527, %v1519
  %v1728 = vpack.c.b16 %v1528, %v1520
  %v1729 = vpack.c.b16 %v1529, %v1521
  %v1730 = vpack.c.b16 %v1530, %v1522
  %v1731 = vpack.c.b16 %v1531, %v1523
  %v1732 = vpack.c.b16 %v1532, %v1524
  %v1733 = vpack.c.b16 %v1541, %v1533
  %v1734 = vpack.c.b16 %v1542, %v1534
  %v1735 = vpack.c.b16 %v1543, %v1535
  %v1736 = vpack.c.b16 %v1544, %v1536
  %v1737 = vpack.c.b16 %v1545, %v1537
  %v1738 = vpack.c.b16 %v1546, %v1538
  %v1739 = vpack.c.b16 %v1547, %v1539
  %v1740 = vpack.c.b16 %v1548, %v1540
  %v1741 = vpack.c.b16 %v1557, %v1549
  %v1742 = vpack.c.b16 %v1558, %v1550
  %v1743 = vpack.c.b16 %v1559, %v1551
  %v1744 = vpack.c.b16 %v1560, %v1552
  %v1745 = vpack.c.b16 %v1561, %v1553
  %v1746 = vpack.c.b16 %v1562, %v1554
  %v1747 = vpack.c.b16 %v1563, %v1555
  %v1748 = vpack.c.b16 %v1564, %v1556
  %v1749 = vpack.c.b16 %v1573, %v1565
  %v1750 = vpack.c.b16 %v1574, %v1566
  %v1751 = vpack.c.b16 %v1575, %v1567
  %v1752 = vpack.c.b16 %v1576, %v1568
  %v1753 = vpack.c.b16 %v1577, %v1569
  %v1754 = vpack.c.b16 %v1578, %v1570
  %v1755 = vpack.c.b16 %v1579, %v1571
  %v1756 = vpack.c.b16 %v1580, %v1572
  %v1757 = vpack.c.b16 %v1589, %v1581
  %v1758 = vpack.c.b16 %v1590, %v1582
  %v1759 = vpack.c.b16 %v1591, %v1583
  %v1760 = vpack.c.b16 %v1592, %v1584
  %v1761 = vpack.c.b16 %v1593, %v1585
  %v1762 = vpack.c.b16 %v1594, %v1586
  %v1763 = vpack.c.b16 %v1595, %v1587
  %v1764 = vpack.c.b16 %v1596, %v1588
  %v1765 = vpack.c.b16 %v1605, %v1597
  %v1766 = vpack.c.b16 %v1606, %v1598
  %v1767 = vpack.c.b16 %v1607, %v1599
  %v1768 = vpack.c.b16 %v1608, %v1600
  %v1769 = vpack.c.b16 %v1609, %v1601
  %v1770 = vpack.c.b16 %v1610, %v1602
  %v1771 = vpack.c.b16 %v1611, %v1603
  %v1772 = vpack.c.b16 %v1612, %v1604
  %v1773 = vpack.c.b16 %v1621, %v1613
  %v1774 = vpack.c.b16 %v1622, %v1614
  %v1775 = vpack.c.b16 %v1623, %v1615
  %v1776 = vpack.c.b16 %v1624, %v1616
  %v1777 = vpack.c.b16 %v1625, %v1617
  %v1778 = vpack.c.b16 %v1626, %v1618
  %v1779 = vpack.c.b16 %v1627, %v1619
  %v1780 = vpack.c.b16 %v1628, %v1620
  %v1781 = vpack.c.b16 %v1637, %v1629
  %v1782 = vpack.c.b16 %v1638, %v1630
  %v1783 = vpack.c.b16 %v1639, %v1631
  %v1784 = vpack.c.b16 %v1640, %v1632
  %v1785 = vpack.c.b16 %v1641, %v1633
  %v1786 = vpack.c.b16 %v1642, %v1634
  %v1787 = vpack.c.b16 %v1643, %v1635
  %v1788 = vpack.c.b16 %v1644, %v1636
  %v1789 = vpack.c.b16 %v1653, %v1645
  %v1790 = vpack.c.b16 %v1654, %v1646
  %v1791 = vpack.c.b16 %v1655, %v1647
  %v1792 = vpack.c.b16 %v1656, %v1648
  %v1793 = vpack.c.b16 %v1657, %v1649
  %v1794 = vpack.c.b16 %v1658, %v1650
  %v1795 = vpack.c.b16 %v1659, %v1651
  %v1796 = vpack.c.b16 %v1660, %v1652
  %v1797 = vpack.c.b16 %v1669, %v1661
  %v1798 = vpack.c.b16 %v1670, %v1662
  %v1799 = vpack.c.b16 %v1671, %v1663
  %v1800 = vpack.c.b16 %v1672, %v1664
  %v1801 = vpack.c.b16 %v1673, %v1665
  %v1802 = vpack.c.b16 %v1674, %v1666
  %v1803 = vpack.c.b16 %v1675, %v1667
  %v1804 = vpack.c.b16 %v1676, %v1668
  %1933 = vmatprep.subr.bf16.mxu0 %v1678
  %1934 = vmatpush1.bf16.msra.mxu0 %v1677
  %1935 = vmatprep.subr.bf16.mxu0 %v1686
  %1936 = vmatpush1.bf16.msra.mxu0 %v1685
  %1937 = vmatprep.subr.bf16.mxu0 %v1694
  %1938 = vmatpush1.bf16.msra.mxu0 %v1693
  %1939 = vmatprep.subr.bf16.mxu0 %v1702
  %1940 = vmatpush1.bf16.msra.mxu0 %v1701
  %1941 = vmatprep.subr.bf16.mxu0 %v1710
  %1942 = vmatpush1.bf16.msra.mxu0 %v1709
  %1943 = vmatprep.subr.bf16.mxu0 %v1718
  %1944 = vmatpush1.bf16.msra.mxu0 %v1717
  %1945 = vmatprep.subr.bf16.mxu0 %v1726
  %1946 = vmatpush1.bf16.msra.mxu0 %v1725
  %1947 = vmatprep.subr.bf16.mxu0 %v1734
  %1948 = vmatpush1.bf16.msra.mxu0 %v1733
  %1949 = vmatprep.subr.bf16.mxu0 %v1742
  %1950 = vmatpush1.bf16.msra.mxu0 %v1741
  %1951 = vmatprep.subr.bf16.mxu0 %v1750
  %1952 = vmatpush1.bf16.msra.mxu0 %v1749
  %1953 = vmatprep.subr.bf16.mxu0 %v1758
  %1954 = vmatpush1.bf16.msra.mxu0 %v1757
  %1955 = vmatprep.subr.bf16.mxu0 %v1766
  %1956 = vmatpush1.bf16.msra.mxu0 %v1765
  %1957 = vmatprep.subr.bf16.mxu0 %v1774
  %1958 = vmatpush1.bf16.msra.mxu0 %v1773
  %1959 = vmatprep.subr.bf16.mxu0 %v1782
  %1960 = vmatpush1.bf16.msra.mxu0 %v1781
  %1961 = vmatprep.subr.bf16.mxu0 %v1790
  %1962 = vmatpush1.bf16.msra.mxu0 %v1789
  %1963 = vmatprep.subr.bf16.mxu0 %v1798
  %1964 = vmatpush1.bf16.msra.mxu0 %v1797
  %1965 = vmatprep.mubr.bf16.mxu0 %v1127
  %1966 = vmatmul.mubr.bf16.gmra.mrb[0].mxu0 %v1126
  %v1967 = vpop.f32.mrb[0].mxu0
  %v1968 = vadd.f32 0.0, %v1967
  %v1969 = vpop.f32.mrb[0].mxu0
  %v1970 = vadd.f32 0.0, %v1969
  %v1971 = vpop.f32.mrb[0].mxu0
  %v1972 = vadd.f32 0.0, %v1971
  %v1973 = vpop.f32.mrb[0].mxu0
  %v1974 = vadd.f32 0.0, %v1973
  %1975 = vdwg.mxu0
  %1976 = vmatprep.subr.bf16.mxu0 %v1680
  %1977 = vmatpush1.bf16.msra.mxu0 %v1679
  %1978 = vmatprep.subr.bf16.mxu0 %v1688
  %1979 = vmatpush1.bf16.msra.mxu0 %v1687
  %1980 = vmatprep.subr.bf16.mxu0 %v1696
  %1981 = vmatpush1.bf16.msra.mxu0 %v1695
  %1982 = vmatprep.subr.bf16.mxu0 %v1704
  %1983 = vmatpush1.bf16.msra.mxu0 %v1703
  %1984 = vmatprep.subr.bf16.mxu0 %v1712
  %1985 = vmatpush1.bf16.msra.mxu0 %v1711
  %1986 = vmatprep.subr.bf16.mxu0 %v1720
  %1987 = vmatpush1.bf16.msra.mxu0 %v1719
  %1988 = vmatprep.subr.bf16.mxu0 %v1728
  %1989 = vmatpush1.bf16.msra.mxu0 %v1727
  %1990 = vmatprep.subr.bf16.mxu0 %v1736
  %1991 = vmatpush1.bf16.msra.mxu0 %v1735
  %1992 = vmatprep.subr.bf16.mxu0 %v1744
  %1993 = vmatpush1.bf16.msra.mxu0 %v1743
  %1994 = vmatprep.subr.bf16.mxu0 %v1752
  %1995 = vmatpush1.bf16.msra.mxu0 %v1751
  %1996 = vmatprep.subr.bf16.mxu0 %v1760
  %1997 = vmatpush1.bf16.msra.mxu0 %v1759
  %1998 = vmatprep.subr.bf16.mxu0 %v1768
  %1999 = vmatpush1.bf16.msra.mxu0 %v1767
  %2000 = vmatprep.subr.bf16.mxu0 %v1776
  %2001 = vmatpush1.bf16.msra.mxu0 %v1775
  %2002 = vmatprep.subr.bf16.mxu0 %v1784
  %2003 = vmatpush1.bf16.msra.mxu0 %v1783
  %2004 = vmatprep.subr.bf16.mxu0 %v1792
  %2005 = vmatpush1.bf16.msra.mxu0 %v1791
  %2006 = vmatprep.subr.bf16.mxu0 %v1800
  %2007 = vmatpush1.bf16.msra.mxu0 %v1799
  %2008 = vmatprep.mubr.bf16.mxu0 %v1127
  %2009 = vmatmul.mubr.bf16.gmra.mrb[0].mxu0 %v1126
  %v2010 = vpop.f32.mrb[0].mxu0
  %v2011 = vadd.f32 0.0, %v2010
  %v2012 = vpop.f32.mrb[0].mxu0
  %v2013 = vadd.f32 0.0, %v2012
  %v2014 = vpop.f32.mrb[0].mxu0
  %v2015 = vadd.f32 0.0, %v2014
  %v2016 = vpop.f32.mrb[0].mxu0
  %v2017 = vadd.f32 0.0, %v2016
  %2018 = vdwg.mxu0
  %2019 = vmatprep.subr.bf16.mxu0 %v1682
  %2020 = vmatpush1.bf16.msra.mxu0 %v1681
  %2021 = vmatprep.subr.bf16.mxu0 %v1690
  %2022 = vmatpush1.bf16.msra.mxu0 %v1689
  %2023 = vmatprep.subr.bf16.mxu0 %v1698
  %2024 = vmatpush1.bf16.msra.mxu0 %v1697
  %2025 = vmatprep.subr.bf16.mxu0 %v1706
  %2026 = vmatpush1.bf16.msra.mxu0 %v1705
  %2027 = vmatprep.subr.bf16.mxu0 %v1714
  %2028 = vmatpush1.bf16.msra.mxu0 %v1713
  %2029 = vmatprep.subr.bf16.mxu0 %v1722
  %2030 = vmatpush1.bf16.msra.mxu0 %v1721
  %2031 = vmatprep.subr.bf16.mxu0 %v1730
  %2032 = vmatpush1.bf16.msra.mxu0 %v1729
  %2033 = vmatprep.subr.bf16.mxu0 %v1738
  %2034 = vmatpush1.bf16.msra.mxu0 %v1737
  %2035 = vmatprep.subr.bf16.mxu0 %v1746
  %2036 = vmatpush1.bf16.msra.mxu0 %v1745
  %2037 = vmatprep.subr.bf16.mxu0 %v1754
  %2038 = vmatpush1.bf16.msra.mxu0 %v1753
  %2039 = vmatprep.subr.bf16.mxu0 %v1762
  %2040 = vmatpush1.bf16.msra.mxu0 %v1761
  %2041 = vmatprep.subr.bf16.mxu0 %v1770
  %2042 = vmatpush1.bf16.msra.mxu0 %v1769
  %2043 = vmatprep.subr.bf16.mxu0 %v1778
  %2044 = vmatpush1.bf16.msra.mxu0 %v1777
  %2045 = vmatprep.subr.bf16.mxu0 %v1786
  %2046 = vmatpush1.bf16.msra.mxu0 %v1785
  %2047 = vmatprep.subr.bf16.mxu0 %v1794
  %2048 = vmatpush1.bf16.msra.mxu0 %v1793
  %2049 = vmatprep.subr.bf16.mxu0 %v1802
  %2050 = vmatpush1.bf16.msra.mxu0 %v1801
  %2051 = vmatprep.mubr.bf16.mxu0 %v1127
  %2052 = vmatmul.mubr.bf16.gmra.mrb[0].mxu0 %v1126
  %v2053 = vpop.f32.mrb[0].mxu0
  %v2054 = vadd.f32 0.0, %v2053
  %v2055 = vpop.f32.mrb[0].mxu0
  %v2056 = vadd.f32 0.0, %v2055
  %v2057 = vpop.f32.mrb[0].mxu0
  %v2058 = vadd.f32 0.0, %v2057
  %v2059 = vpop.f32.mrb[0].mxu0
  %v2060 = vadd.f32 0.0, %v2059
  %2061 = vdwg.mxu0
  %2062 = vmatprep.subr.bf16.mxu0 %v1684
  %2063 = vmatpush1.bf16.msra.mxu0 %v1683
  %2064 = vmatprep.subr.bf16.mxu0 %v1692
  %2065 = vmatpush1.bf16.msra.mxu0 %v1691
  %2066 = vmatprep.subr.bf16.mxu0 %v1700
  %2067 = vmatpush1.bf16.msra.mxu0 %v1699
  %2068 = vmatprep.subr.bf16.mxu0 %v1708
  %2069 = vmatpush1.bf16.msra.mxu0 %v1707
  %2070 = vmatprep.subr.bf16.mxu0 %v1716
  %2071 = vmatpush1.bf16.msra.mxu0 %v1715
  %2072 = vmatprep.subr.bf16.mxu0 %v1724
  %2073 = vmatpush1.bf16.msra.mxu0 %v1723
  %2074 = vmatprep.subr.bf16.mxu0 %v1732
  %2075 = vmatpush1.bf16.msra.mxu0 %v1731
  %2076 = vmatprep.subr.bf16.mxu0 %v1740
  %2077 = vmatpush1.bf16.msra.mxu0 %v1739
  %2078 = vmatprep.subr.bf16.mxu0 %v1748
  %2079 = vmatpush1.bf16.msra.mxu0 %v1747
  %2080 = vmatprep.subr.bf16.mxu0 %v1756
  %2081 = vmatpush1.bf16.msra.mxu0 %v1755
  %2082 = vmatprep.subr.bf16.mxu0 %v1764
  %2083 = vmatpush1.bf16.msra.mxu0 %v1763
  %2084 = vmatprep.subr.bf16.mxu0 %v1772
  %2085 = vmatpush1.bf16.msra.mxu0 %v1771
  %2086 = vmatprep.subr.bf16.mxu0 %v1780
  %2087 = vmatpush1.bf16.msra.mxu0 %v1779
  %2088 = vmatprep.subr.bf16.mxu0 %v1788
  %2089 = vmatpush1.bf16.msra.mxu0 %v1787
  %2090 = vmatprep.subr.bf16.mxu0 %v1796
  %2091 = vmatpush1.bf16.msra.mxu0 %v1795
  %2092 = vmatprep.subr.bf16.mxu0 %v1804
  %2093 = vmatpush1.bf16.msra.mxu0 %v1803
  %2094 = vmatprep.mubr.bf16.mxu0 %v1127
  %2095 = vmatmul.mubr.bf16.gmra.mrb[0].mxu0 %v1126
  %v2096 = vpop.f32.mrb[0].mxu0
  %v2097 = vadd.f32 0.0, %v2096
  %v2098 = vpop.f32.mrb[0].mxu0
  %v2099 = vadd.f32 0.0, %v2098
  %v2100 = vpop.f32.mrb[0].mxu0
  %v2101 = vadd.f32 0.0, %v2100
  %v2102 = vpop.f32.mrb[0].mxu0
  %v2103 = vadd.f32 0.0, %v2102
  %2104 = vdwg.mxu0
  %v2105 = vadd.f32 %v1149, %v1968
  %v2106 = vadd.f32 %v1150, %v1970
  %v2107 = vadd.f32 %v1151, %v2011
  %v2108 = vadd.f32 %v1152, %v2013
  %v2109 = vadd.f32 %v1153, %v2054
  %v2110 = vadd.f32 %v1154, %v2056
  %v2111 = vadd.f32 %v1155, %v2097
  %v2112 = vadd.f32 %v1156, %v2099
  %v2113 = vadd.f32 %v1157, %v1972
  %v2114 = vadd.f32 %v1158, %v1974
  %v2115 = vadd.f32 %v1159, %v2015
  %v2116 = vadd.f32 %v1160, %v2017
  %v2117 = vadd.f32 %v1161, %v2058
  %v2118 = vadd.f32 %v1162, %v2060
  %v2119 = vadd.f32 %v1163, %v2101
  %v2120 = vadd.f32 %v1164, %v2103
  %v2121 = vxor.u32 %v2105, 2147483648
  %v2122 = vxor.u32 %v2106, 2147483648
  %v2123 = vxor.u32 %v2107, 2147483648
  %v2124 = vxor.u32 %v2108, 2147483648
  %v2125 = vxor.u32 %v2109, 2147483648
  %v2126 = vxor.u32 %v2110, 2147483648
  %v2127 = vxor.u32 %v2113, 2147483648
  %v2128 = vxor.u32 %v2114, 2147483648
  %v2129 = vxor.u32 %v2115, 2147483648
  %v2130 = vxor.u32 %v2116, 2147483648
  %v2131 = vxor.u32 %v2117, 2147483648
  %v2132 = vxor.u32 %v2118, 2147483648
  %v2133 = vmul.f32 %v2121, 1.442695
  %v2134 = vpow.pop %v2133
  %v2135 = vmul.f32 %v2122, 1.442695
  %v2136 = vpow.pop %v2135
  %v2137 = vmul.f32 %v2123, 1.442695
  %v2138 = vpow.pop %v2137
  %v2139 = vmul.f32 %v2124, 1.442695
  %v2140 = vpow.pop %v2139
  %v2141 = vmul.f32 %v2125, 1.442695
  %v2142 = vpow.pop %v2141
  %v2143 = vmul.f32 %v2126, 1.442695
  %v2144 = vpow.pop %v2143
  %v2145 = vmul.f32 %v2127, 1.442695
  %v2146 = vpow.pop %v2145
  %v2147 = vmul.f32 %v2128, 1.442695
  %v2148 = vpow.pop %v2147
  %v2149 = vmul.f32 %v2129, 1.442695
  %v2150 = vpow.pop %v2149
  %v2151 = vmul.f32 %v2130, 1.442695
  %v2152 = vpow.pop %v2151
  %v2153 = vmul.f32 %v2131, 1.442695
  %v2154 = vpow.pop %v2153
  %v2155 = vmul.f32 %v2132, 1.442695
  %v2156 = vpow.pop %v2155
  %v2157 = vadd.f32 %v2134, 1.0
  %v2158 = vadd.f32 %v2136, 1.0
  %v2159 = vadd.f32 %v2138, 1.0
  %v2160 = vadd.f32 %v2140, 1.0
  %v2161 = vadd.f32 %v2142, 1.0
  %v2162 = vadd.f32 %v2144, 1.0
  %v2163 = vadd.f32 %v2146, 1.0
  %v2164 = vadd.f32 %v2148, 1.0
  %v2165 = vadd.f32 %v2150, 1.0
  %v2166 = vadd.f32 %v2152, 1.0
  %v2167 = vadd.f32 %v2154, 1.0
  %v2168 = vadd.f32 %v2156, 1.0
  %v2169 = vrcp.pop %v2157
  %v2170 = vmul.f32 1.0, %v2169
  %v2171 = vrcp.pop %v2158
  %v2172 = vmul.f32 1.0, %v2171
  %v2173 = vrcp.pop %v2159
  %v2174 = vmul.f32 1.0, %v2173
  %v2175 = vrcp.pop %v2160
  %v2176 = vmul.f32 1.0, %v2175
  %v2177 = vrcp.pop %v2161
  %v2178 = vmul.f32 1.0, %v2177
  %v2179 = vrcp.pop %v2162
  %v2180 = vmul.f32 1.0, %v2179
  %v2181 = vrcp.pop %v2163
  %v2182 = vmul.f32 1.0, %v2181
  %v2183 = vrcp.pop %v2164
  %v2184 = vmul.f32 1.0, %v2183
  %v2185 = vrcp.pop %v2165
  %v2186 = vmul.f32 1.0, %v2185
  %v2187 = vrcp.pop %v2166
  %v2188 = vmul.f32 1.0, %v2187
  %v2189 = vrcp.pop %v2167
  %v2190 = vmul.f32 1.0, %v2189
  %v2191 = vrcp.pop %v2168
  %v2192 = vmul.f32 1.0, %v2191
  %v2193 = vtanh.pop %v2111
  %v2194 = vtanh.pop %v2112
  %v2195 = vtanh.pop %v2119
  %v2196 = vtanh.pop %v2120
  %v2197 = vmul.f32 %v2174, %v1114
  %v2198 = vmul.f32 %v2176, %v1115
  %v2199 = vmul.f32 %v2186, %v1116
  %v2200 = vmul.f32 %v2188, %v1117
  %v2201 = vmul.f32 %v2170, %v2193
  %v2202 = vmul.f32 %v2172, %v2194
  %v2203 = vmul.f32 %v2182, %v2195
  %v2204 = vmul.f32 %v2184, %v2196
  %v2205 = vadd.f32 %v2197, %v2201
  %v2206 = vadd.f32 %v2198, %v2202
  %v2207 = vadd.f32 %v2199, %v2203
  %v2208 = vadd.f32 %v2200, %v2204
  %v2209 = vtanh.pop %v2205
  %v2210 = vtanh.pop %v2206
  %v2211 = vtanh.pop %v2207
  %v2212 = vtanh.pop %v2208
  %v2213 = vmul.f32 %v2178, %v2209
  %v2214 = vmul.f32 %v2180, %v2210
  %v2215 = vmul.f32 %v2190, %v2211
  %v2216 = vmul.f32 %v2192, %v2212
  %v2217 = vpack.c.bf16 %v2215, %v2213
  %v2218 = vpack.c.bf16 %v2216, %v2214
  %v2221 = vunpack.c.l.b16 %v2217
  %v2222 = vunpack.c.l.b16 %v2218
  %v2223 = vunpack.c.h.b16 %v2217
  %v2224 = vunpack.c.h.b16 %v2218
  %v2225 = vpack.c.b16 %v2222, %v2221
  %v2226 = vpack.c.b16 %v2224, %v2223
  %s2229 = scalar_lea.vmem %s4, 16
  %2230 = vst [vmem:[%s2229] sm:$0xff] %v2225
  %2231 = vst [vmem:[%s2229 + $0x8] sm:$0xff] %v2226
  %s2232 = scalar_lea.vmem %s0, 128
  %v2233 = vld [vmem:[%s2232] sm:$0xff]
  %v2234 = vld [vmem:[%s2232 + $0x8] sm:$0xff]
  %v2235 = vld [vmem:[%s2232 + $0x10] sm:$0xff]
  %v2236 = vld [vmem:[%s2232 + $0x18] sm:$0xff]
  %v2237 = vld [vmem:[%s2232 + $0x20] sm:$0xff]
  %v2238 = vld [vmem:[%s2232 + $0x28] sm:$0xff]
  %v2239 = vld [vmem:[%s2232 + $0x30] sm:$0xff]
  %v2240 = vld [vmem:[%s2232 + $0x38] sm:$0xff]
  %v2241 = vunpack.c.l.bf16 %v2233
  %v2242 = vunpack.c.h.bf16 %v2233
  %v2243 = vunpack.c.l.bf16 %v2234
  %v2244 = vunpack.c.h.bf16 %v2234
  %v2245 = vunpack.c.l.bf16 %v2235
  %v2246 = vunpack.c.h.bf16 %v2235
  %v2247 = vunpack.c.l.bf16 %v2236
  %v2248 = vunpack.c.h.bf16 %v2236
  %v2249 = vunpack.c.l.bf16 %v2237
  %v2250 = vunpack.c.h.bf16 %v2237
  %v2251 = vunpack.c.l.bf16 %v2238
  %v2252 = vunpack.c.h.bf16 %v2238
  %v2253 = vunpack.c.l.bf16 %v2239
  %v2254 = vunpack.c.h.bf16 %v2239
  %v2255 = vunpack.c.l.bf16 %v2240
  %v2256 = vunpack.c.h.bf16 %v2240
  %v2257 = vld [vmem:[%s1] sm:$0xff]
  %v2258 = vld [vmem:[%s1 + $0x8] sm:$0xff]
  %v2259 = vld [vmem:[%s1 + $0x10] sm:$0xff]
  %v2260 = vld [vmem:[%s1 + $0x18] sm:$0xff]
  %v2261 = vld [vmem:[%s1 + $0x20] sm:$0xff]
  %v2262 = vld [vmem:[%s1 + $0x28] sm:$0xff]
  %v2263 = vld [vmem:[%s1 + $0x30] sm:$0xff]
  %v2264 = vld [vmem:[%s1 + $0x38] sm:$0xff]
  %v2265 = vld [vmem:[%s1 + $0x40] sm:$0xff]
  %v2266 = vld [vmem:[%s1 + $0x48] sm:$0xff]
  %v2267 = vld [vmem:[%s1 + $0x50] sm:$0xff]
  %v2268 = vld [vmem:[%s1 + $0x58] sm:$0xff]
  %v2269 = vld [vmem:[%s1 + $0x60] sm:$0xff]
  %v2270 = vld [vmem:[%s1 + $0x68] sm:$0xff]
  %v2271 = vld [vmem:[%s1 + $0x70] sm:$0xff]
  %v2272 = vld [vmem:[%s1 + $0x78] sm:$0xff]
  %v2273 = vld [vmem:[%s1 + $0x80] sm:$0xff]
  %v2274 = vld [vmem:[%s1 + $0x88] sm:$0xff]
  %v2275 = vld [vmem:[%s1 + $0x90] sm:$0xff]
  %v2276 = vld [vmem:[%s1 + $0x98] sm:$0xff]
  %v2277 = vld [vmem:[%s1 + $0xa0] sm:$0xff]
  %v2278 = vld [vmem:[%s1 + $0xa8] sm:$0xff]
  %v2279 = vld [vmem:[%s1 + $0xb0] sm:$0xff]
  %v2280 = vld [vmem:[%s1 + $0xb8] sm:$0xff]
  %v2281 = vld [vmem:[%s1 + $0xc0] sm:$0xff]
  %v2282 = vld [vmem:[%s1 + $0xc8] sm:$0xff]
  %v2283 = vld [vmem:[%s1 + $0xd0] sm:$0xff]
  %v2284 = vld [vmem:[%s1 + $0xd8] sm:$0xff]
  %v2285 = vld [vmem:[%s1 + $0xe0] sm:$0xff]
  %v2286 = vld [vmem:[%s1 + $0xe8] sm:$0xff]
  %v2287 = vld [vmem:[%s1 + $0xf0] sm:$0xff]
  %v2288 = vld [vmem:[%s1 + $0xf8] sm:$0xff]
  %v2289 = vld [vmem:[%s1 + $0x100] sm:$0xff]
  %v2290 = vld [vmem:[%s1 + $0x108] sm:$0xff]
  %v2291 = vld [vmem:[%s1 + $0x110] sm:$0xff]
  %v2292 = vld [vmem:[%s1 + $0x118] sm:$0xff]
  %v2293 = vld [vmem:[%s1 + $0x120] sm:$0xff]
  %v2294 = vld [vmem:[%s1 + $0x128] sm:$0xff]
  %v2295 = vld [vmem:[%s1 + $0x130] sm:$0xff]
  %v2296 = vld [vmem:[%s1 + $0x138] sm:$0xff]
  %v2297 = vld [vmem:[%s1 + $0x140] sm:$0xff]
  %v2298 = vld [vmem:[%s1 + $0x148] sm:$0xff]
  %v2299 = vld [vmem:[%s1 + $0x150] sm:$0xff]
  %v2300 = vld [vmem:[%s1 + $0x158] sm:$0xff]
  %v2301 = vld [vmem:[%s1 + $0x160] sm:$0xff]
  %v2302 = vld [vmem:[%s1 + $0x168] sm:$0xff]
  %v2303 = vld [vmem:[%s1 + $0x170] sm:$0xff]
  %v2304 = vld [vmem:[%s1 + $0x178] sm:$0xff]
  %v2305 = vld [vmem:[%s1 + $0x180] sm:$0xff]
  %v2306 = vld [vmem:[%s1 + $0x188] sm:$0xff]
  %v2307 = vld [vmem:[%s1 + $0x190] sm:$0xff]
  %v2308 = vld [vmem:[%s1 + $0x198] sm:$0xff]
  %v2309 = vld [vmem:[%s1 + $0x1a0] sm:$0xff]
  %v2310 = vld [vmem:[%s1 + $0x1a8] sm:$0xff]
  %v2311 = vld [vmem:[%s1 + $0x1b0] sm:$0xff]
  %v2312 = vld [vmem:[%s1 + $0x1b8] sm:$0xff]
  %v2313 = vld [vmem:[%s1 + $0x1c0] sm:$0xff]
  %v2314 = vld [vmem:[%s1 + $0x1c8] sm:$0xff]
  %v2315 = vld [vmem:[%s1 + $0x1d0] sm:$0xff]
  %v2316 = vld [vmem:[%s1 + $0x1d8] sm:$0xff]
  %v2317 = vld [vmem:[%s1 + $0x1e0] sm:$0xff]
  %v2318 = vld [vmem:[%s1 + $0x1e8] sm:$0xff]
  %v2319 = vld [vmem:[%s1 + $0x1f0] sm:$0xff]
  %v2320 = vld [vmem:[%s1 + $0x1f8] sm:$0xff]
  %v2321 = vld [vmem:[%s1 + $0x200] sm:$0xff]
  %v2322 = vld [vmem:[%s1 + $0x208] sm:$0xff]
  %v2323 = vld [vmem:[%s1 + $0x210] sm:$0xff]
  %v2324 = vld [vmem:[%s1 + $0x218] sm:$0xff]
  %v2325 = vld [vmem:[%s1 + $0x220] sm:$0xff]
  %v2326 = vld [vmem:[%s1 + $0x228] sm:$0xff]
  %v2327 = vld [vmem:[%s1 + $0x230] sm:$0xff]
  %v2328 = vld [vmem:[%s1 + $0x238] sm:$0xff]
  %v2329 = vld [vmem:[%s1 + $0x240] sm:$0xff]
  %v2330 = vld [vmem:[%s1 + $0x248] sm:$0xff]
  %v2331 = vld [vmem:[%s1 + $0x250] sm:$0xff]
  %v2332 = vld [vmem:[%s1 + $0x258] sm:$0xff]
  %v2333 = vld [vmem:[%s1 + $0x260] sm:$0xff]
  %v2334 = vld [vmem:[%s1 + $0x268] sm:$0xff]
  %v2335 = vld [vmem:[%s1 + $0x270] sm:$0xff]
  %v2336 = vld [vmem:[%s1 + $0x278] sm:$0xff]
  %v2337 = vld [vmem:[%s1 + $0x280] sm:$0xff]
  %v2338 = vld [vmem:[%s1 + $0x288] sm:$0xff]
  %v2339 = vld [vmem:[%s1 + $0x290] sm:$0xff]
  %v2340 = vld [vmem:[%s1 + $0x298] sm:$0xff]
  %v2341 = vld [vmem:[%s1 + $0x2a0] sm:$0xff]
  %v2342 = vld [vmem:[%s1 + $0x2a8] sm:$0xff]
  %v2343 = vld [vmem:[%s1 + $0x2b0] sm:$0xff]
  %v2344 = vld [vmem:[%s1 + $0x2b8] sm:$0xff]
  %v2345 = vld [vmem:[%s1 + $0x2c0] sm:$0xff]
  %v2346 = vld [vmem:[%s1 + $0x2c8] sm:$0xff]
  %v2347 = vld [vmem:[%s1 + $0x2d0] sm:$0xff]
  %v2348 = vld [vmem:[%s1 + $0x2d8] sm:$0xff]
  %v2349 = vld [vmem:[%s1 + $0x2e0] sm:$0xff]
  %v2350 = vld [vmem:[%s1 + $0x2e8] sm:$0xff]
  %v2351 = vld [vmem:[%s1 + $0x2f0] sm:$0xff]
  %v2352 = vld [vmem:[%s1 + $0x2f8] sm:$0xff]
  %v2353 = vld [vmem:[%s1 + $0x300] sm:$0xff]
  %v2354 = vld [vmem:[%s1 + $0x308] sm:$0xff]
  %v2355 = vld [vmem:[%s1 + $0x310] sm:$0xff]
  %v2356 = vld [vmem:[%s1 + $0x318] sm:$0xff]
  %v2357 = vld [vmem:[%s1 + $0x320] sm:$0xff]
  %v2358 = vld [vmem:[%s1 + $0x328] sm:$0xff]
  %v2359 = vld [vmem:[%s1 + $0x330] sm:$0xff]
  %v2360 = vld [vmem:[%s1 + $0x338] sm:$0xff]
  %v2361 = vld [vmem:[%s1 + $0x340] sm:$0xff]
  %v2362 = vld [vmem:[%s1 + $0x348] sm:$0xff]
  %v2363 = vld [vmem:[%s1 + $0x350] sm:$0xff]
  %v2364 = vld [vmem:[%s1 + $0x358] sm:$0xff]
  %v2365 = vld [vmem:[%s1 + $0x360] sm:$0xff]
  %v2366 = vld [vmem:[%s1 + $0x368] sm:$0xff]
  %v2367 = vld [vmem:[%s1 + $0x370] sm:$0xff]
  %v2368 = vld [vmem:[%s1 + $0x378] sm:$0xff]
  %v2369 = vld [vmem:[%s1 + $0x380] sm:$0xff]
  %v2370 = vld [vmem:[%s1 + $0x388] sm:$0xff]
  %v2371 = vld [vmem:[%s1 + $0x390] sm:$0xff]
  %v2372 = vld [vmem:[%s1 + $0x398] sm:$0xff]
  %v2373 = vld [vmem:[%s1 + $0x3a0] sm:$0xff]
  %v2374 = vld [vmem:[%s1 + $0x3a8] sm:$0xff]
  %v2375 = vld [vmem:[%s1 + $0x3b0] sm:$0xff]
  %v2376 = vld [vmem:[%s1 + $0x3b8] sm:$0xff]
  %v2377 = vld [vmem:[%s1 + $0x3c0] sm:$0xff]
  %v2378 = vld [vmem:[%s1 + $0x3c8] sm:$0xff]
  %v2379 = vld [vmem:[%s1 + $0x3d0] sm:$0xff]
  %v2380 = vld [vmem:[%s1 + $0x3d8] sm:$0xff]
  %v2381 = vld [vmem:[%s1 + $0x3e0] sm:$0xff]
  %v2382 = vld [vmem:[%s1 + $0x3e8] sm:$0xff]
  %v2383 = vld [vmem:[%s1 + $0x3f0] sm:$0xff]
  %v2384 = vld [vmem:[%s1 + $0x3f8] sm:$0xff]
  %v2513 = vunpack.c.l.b16 %v2257
  %v2514 = vunpack.c.h.b16 %v2257
  %v2515 = vunpack.c.l.b16 %v2258
  %v2516 = vunpack.c.h.b16 %v2258
  %v2517 = vunpack.c.l.b16 %v2259
  %v2518 = vunpack.c.h.b16 %v2259
  %v2519 = vunpack.c.l.b16 %v2260
  %v2520 = vunpack.c.h.b16 %v2260
  %v2521 = vunpack.c.l.b16 %v2261
  %v2522 = vunpack.c.h.b16 %v2261
  %v2523 = vunpack.c.l.b16 %v2262
  %v2524 = vunpack.c.h.b16 %v2262
  %v2525 = vunpack.c.l.b16 %v2263
  %v2526 = vunpack.c.h.b16 %v2263
  %v2527 = vunpack.c.l.b16 %v2264
  %v2528 = vunpack.c.h.b16 %v2264
  %v2529 = vunpack.c.l.b16 %v2265
  %v2530 = vunpack.c.h.b16 %v2265
  %v2531 = vunpack.c.l.b16 %v2266
  %v2532 = vunpack.c.h.b16 %v2266
  %v2533 = vunpack.c.l.b16 %v2267
  %v2534 = vunpack.c.h.b16 %v2267
  %v2535 = vunpack.c.l.b16 %v2268
  %v2536 = vunpack.c.h.b16 %v2268
  %v2537 = vunpack.c.l.b16 %v2269
  %v2538 = vunpack.c.h.b16 %v2269
  %v2539 = vunpack.c.l.b16 %v2270
  %v2540 = vunpack.c.h.b16 %v2270
  %v2541 = vunpack.c.l.b16 %v2271
  %v2542 = vunpack.c.h.b16 %v2271
  %v2543 = vunpack.c.l.b16 %v2272
  %v2544 = vunpack.c.h.b16 %v2272
  %v2545 = vunpack.c.l.b16 %v2273
  %v2546 = vunpack.c.h.b16 %v2273
  %v2547 = vunpack.c.l.b16 %v2274
  %v2548 = vunpack.c.h.b16 %v2274
  %v2549 = vunpack.c.l.b16 %v2275
  %v2550 = vunpack.c.h.b16 %v2275
  %v2551 = vunpack.c.l.b16 %v2276
  %v2552 = vunpack.c.h.b16 %v2276
  %v2553 = vunpack.c.l.b16 %v2277
  %v2554 = vunpack.c.h.b16 %v2277
  %v2555 = vunpack.c.l.b16 %v2278
  %v2556 = vunpack.c.h.b16 %v2278
  %v2557 = vunpack.c.l.b16 %v2279
  %v2558 = vunpack.c.h.b16 %v2279
  %v2559 = vunpack.c.l.b16 %v2280
  %v2560 = vunpack.c.h.b16 %v2280
  %v2561 = vunpack.c.l.b16 %v2281
  %v2562 = vunpack.c.h.b16 %v2281
  %v2563 = vunpack.c.l.b16 %v2282
  %v2564 = vunpack.c.h.b16 %v2282
  %v2565 = vunpack.c.l.b16 %v2283
  %v2566 = vunpack.c.h.b16 %v2283
  %v2567 = vunpack.c.l.b16 %v2284
  %v2568 = vunpack.c.h.b16 %v2284
  %v2569 = vunpack.c.l.b16 %v2285
  %v2570 = vunpack.c.h.b16 %v2285
  %v2571 = vunpack.c.l.b16 %v2286
  %v2572 = vunpack.c.h.b16 %v2286
  %v2573 = vunpack.c.l.b16 %v2287
  %v2574 = vunpack.c.h.b16 %v2287
  %v2575 = vunpack.c.l.b16 %v2288
  %v2576 = vunpack.c.h.b16 %v2288
  %v2577 = vunpack.c.l.b16 %v2289
  %v2578 = vunpack.c.h.b16 %v2289
  %v2579 = vunpack.c.l.b16 %v2290
  %v2580 = vunpack.c.h.b16 %v2290
  %v2581 = vunpack.c.l.b16 %v2291
  %v2582 = vunpack.c.h.b16 %v2291
  %v2583 = vunpack.c.l.b16 %v2292
  %v2584 = vunpack.c.h.b16 %v2292
  %v2585 = vunpack.c.l.b16 %v2293
  %v2586 = vunpack.c.h.b16 %v2293
  %v2587 = vunpack.c.l.b16 %v2294
  %v2588 = vunpack.c.h.b16 %v2294
  %v2589 = vunpack.c.l.b16 %v2295
  %v2590 = vunpack.c.h.b16 %v2295
  %v2591 = vunpack.c.l.b16 %v2296
  %v2592 = vunpack.c.h.b16 %v2296
  %v2593 = vunpack.c.l.b16 %v2297
  %v2594 = vunpack.c.h.b16 %v2297
  %v2595 = vunpack.c.l.b16 %v2298
  %v2596 = vunpack.c.h.b16 %v2298
  %v2597 = vunpack.c.l.b16 %v2299
  %v2598 = vunpack.c.h.b16 %v2299
  %v2599 = vunpack.c.l.b16 %v2300
  %v2600 = vunpack.c.h.b16 %v2300
  %v2601 = vunpack.c.l.b16 %v2301
  %v2602 = vunpack.c.h.b16 %v2301
  %v2603 = vunpack.c.l.b16 %v2302
  %v2604 = vunpack.c.h.b16 %v2302
  %v2605 = vunpack.c.l.b16 %v2303
  %v2606 = vunpack.c.h.b16 %v2303
  %v2607 = vunpack.c.l.b16 %v2304
  %v2608 = vunpack.c.h.b16 %v2304
  %v2609 = vunpack.c.l.b16 %v2305
  %v2610 = vunpack.c.h.b16 %v2305
  %v2611 = vunpack.c.l.b16 %v2306
  %v2612 = vunpack.c.h.b16 %v2306
  %v2613 = vunpack.c.l.b16 %v2307
  %v2614 = vunpack.c.h.b16 %v2307
  %v2615 = vunpack.c.l.b16 %v2308
  %v2616 = vunpack.c.h.b16 %v2308
  %v2617 = vunpack.c.l.b16 %v2309
  %v2618 = vunpack.c.h.b16 %v2309
  %v2619 = vunpack.c.l.b16 %v2310
  %v2620 = vunpack.c.h.b16 %v2310
  %v2621 = vunpack.c.l.b16 %v2311
  %v2622 = vunpack.c.h.b16 %v2311
  %v2623 = vunpack.c.l.b16 %v2312
  %v2624 = vunpack.c.h.b16 %v2312
  %v2625 = vunpack.c.l.b16 %v2313
  %v2626 = vunpack.c.h.b16 %v2313
  %v2627 = vunpack.c.l.b16 %v2314
  %v2628 = vunpack.c.h.b16 %v2314
  %v2629 = vunpack.c.l.b16 %v2315
  %v2630 = vunpack.c.h.b16 %v2315
  %v2631 = vunpack.c.l.b16 %v2316
  %v2632 = vunpack.c.h.b16 %v2316
  %v2633 = vunpack.c.l.b16 %v2317
  %v2634 = vunpack.c.h.b16 %v2317
  %v2635 = vunpack.c.l.b16 %v2318
  %v2636 = vunpack.c.h.b16 %v2318
  %v2637 = vunpack.c.l.b16 %v2319
  %v2638 = vunpack.c.h.b16 %v2319
  %v2639 = vunpack.c.l.b16 %v2320
  %v2640 = vunpack.c.h.b16 %v2320
  %v2641 = vunpack.c.l.b16 %v2321
  %v2642 = vunpack.c.h.b16 %v2321
  %v2643 = vunpack.c.l.b16 %v2322
  %v2644 = vunpack.c.h.b16 %v2322
  %v2645 = vunpack.c.l.b16 %v2323
  %v2646 = vunpack.c.h.b16 %v2323
  %v2647 = vunpack.c.l.b16 %v2324
  %v2648 = vunpack.c.h.b16 %v2324
  %v2649 = vunpack.c.l.b16 %v2325
  %v2650 = vunpack.c.h.b16 %v2325
  %v2651 = vunpack.c.l.b16 %v2326
  %v2652 = vunpack.c.h.b16 %v2326
  %v2653 = vunpack.c.l.b16 %v2327
  %v2654 = vunpack.c.h.b16 %v2327
  %v2655 = vunpack.c.l.b16 %v2328
  %v2656 = vunpack.c.h.b16 %v2328
  %v2657 = vunpack.c.l.b16 %v2329
  %v2658 = vunpack.c.h.b16 %v2329
  %v2659 = vunpack.c.l.b16 %v2330
  %v2660 = vunpack.c.h.b16 %v2330
  %v2661 = vunpack.c.l.b16 %v2331
  %v2662 = vunpack.c.h.b16 %v2331
  %v2663 = vunpack.c.l.b16 %v2332
  %v2664 = vunpack.c.h.b16 %v2332
  %v2665 = vunpack.c.l.b16 %v2333
  %v2666 = vunpack.c.h.b16 %v2333
  %v2667 = vunpack.c.l.b16 %v2334
  %v2668 = vunpack.c.h.b16 %v2334
  %v2669 = vunpack.c.l.b16 %v2335
  %v2670 = vunpack.c.h.b16 %v2335
  %v2671 = vunpack.c.l.b16 %v2336
  %v2672 = vunpack.c.h.b16 %v2336
  %v2673 = vunpack.c.l.b16 %v2337
  %v2674 = vunpack.c.h.b16 %v2337
  %v2675 = vunpack.c.l.b16 %v2338
  %v2676 = vunpack.c.h.b16 %v2338
  %v2677 = vunpack.c.l.b16 %v2339
  %v2678 = vunpack.c.h.b16 %v2339
  %v2679 = vunpack.c.l.b16 %v2340
  %v2680 = vunpack.c.h.b16 %v2340
  %v2681 = vunpack.c.l.b16 %v2341
  %v2682 = vunpack.c.h.b16 %v2341
  %v2683 = vunpack.c.l.b16 %v2342
  %v2684 = vunpack.c.h.b16 %v2342
  %v2685 = vunpack.c.l.b16 %v2343
  %v2686 = vunpack.c.h.b16 %v2343
  %v2687 = vunpack.c.l.b16 %v2344
  %v2688 = vunpack.c.h.b16 %v2344
  %v2689 = vunpack.c.l.b16 %v2345
  %v2690 = vunpack.c.h.b16 %v2345
  %v2691 = vunpack.c.l.b16 %v2346
  %v2692 = vunpack.c.h.b16 %v2346
  %v2693 = vunpack.c.l.b16 %v2347
  %v2694 = vunpack.c.h.b16 %v2347
  %v2695 = vunpack.c.l.b16 %v2348
  %v2696 = vunpack.c.h.b16 %v2348
  %v2697 = vunpack.c.l.b16 %v2349
  %v2698 = vunpack.c.h.b16 %v2349
  %v2699 = vunpack.c.l.b16 %v2350
  %v2700 = vunpack.c.h.b16 %v2350
  %v2701 = vunpack.c.l.b16 %v2351
  %v2702 = vunpack.c.h.b16 %v2351
  %v2703 = vunpack.c.l.b16 %v2352
  %v2704 = vunpack.c.h.b16 %v2352
  %v2705 = vunpack.c.l.b16 %v2353
  %v2706 = vunpack.c.h.b16 %v2353
  %v2707 = vunpack.c.l.b16 %v2354
  %v2708 = vunpack.c.h.b16 %v2354
  %v2709 = vunpack.c.l.b16 %v2355
  %v2710 = vunpack.c.h.b16 %v2355
  %v2711 = vunpack.c.l.b16 %v2356
  %v2712 = vunpack.c.h.b16 %v2356
  %v2713 = vunpack.c.l.b16 %v2357
  %v2714 = vunpack.c.h.b16 %v2357
  %v2715 = vunpack.c.l.b16 %v2358
  %v2716 = vunpack.c.h.b16 %v2358
  %v2717 = vunpack.c.l.b16 %v2359
  %v2718 = vunpack.c.h.b16 %v2359
  %v2719 = vunpack.c.l.b16 %v2360
  %v2720 = vunpack.c.h.b16 %v2360
  %v2721 = vunpack.c.l.b16 %v2361
  %v2722 = vunpack.c.h.b16 %v2361
  %v2723 = vunpack.c.l.b16 %v2362
  %v2724 = vunpack.c.h.b16 %v2362
  %v2725 = vunpack.c.l.b16 %v2363
  %v2726 = vunpack.c.h.b16 %v2363
  %v2727 = vunpack.c.l.b16 %v2364
  %v2728 = vunpack.c.h.b16 %v2364
  %v2729 = vunpack.c.l.b16 %v2365
  %v2730 = vunpack.c.h.b16 %v2365
  %v2731 = vunpack.c.l.b16 %v2366
  %v2732 = vunpack.c.h.b16 %v2366
  %v2733 = vunpack.c.l.b16 %v2367
  %v2734 = vunpack.c.h.b16 %v2367
  %v2735 = vunpack.c.l.b16 %v2368
  %v2736 = vunpack.c.h.b16 %v2368
  %v2737 = vunpack.c.l.b16 %v2369
  %v2738 = vunpack.c.h.b16 %v2369
  %v2739 = vunpack.c.l.b16 %v2370
  %v2740 = vunpack.c.h.b16 %v2370
  %v2741 = vunpack.c.l.b16 %v2371
  %v2742 = vunpack.c.h.b16 %v2371
  %v2743 = vunpack.c.l.b16 %v2372
  %v2744 = vunpack.c.h.b16 %v2372
  %v2745 = vunpack.c.l.b16 %v2373
  %v2746 = vunpack.c.h.b16 %v2373
  %v2747 = vunpack.c.l.b16 %v2374
  %v2748 = vunpack.c.h.b16 %v2374
  %v2749 = vunpack.c.l.b16 %v2375
  %v2750 = vunpack.c.h.b16 %v2375
  %v2751 = vunpack.c.l.b16 %v2376
  %v2752 = vunpack.c.h.b16 %v2376
  %v2753 = vunpack.c.l.b16 %v2377
  %v2754 = vunpack.c.h.b16 %v2377
  %v2755 = vunpack.c.l.b16 %v2378
  %v2756 = vunpack.c.h.b16 %v2378
  %v2757 = vunpack.c.l.b16 %v2379
  %v2758 = vunpack.c.h.b16 %v2379
  %v2759 = vunpack.c.l.b16 %v2380
  %v2760 = vunpack.c.h.b16 %v2380
  %v2761 = vunpack.c.l.b16 %v2381
  %v2762 = vunpack.c.h.b16 %v2381
  %v2763 = vunpack.c.l.b16 %v2382
  %v2764 = vunpack.c.h.b16 %v2382
  %v2765 = vunpack.c.l.b16 %v2383
  %v2766 = vunpack.c.h.b16 %v2383
  %v2767 = vunpack.c.l.b16 %v2384
  %v2768 = vunpack.c.h.b16 %v2384
  %v2769 = vpack.c.b16 %v2521, %v2513
  %v2770 = vpack.c.b16 %v2522, %v2514
  %v2771 = vpack.c.b16 %v2523, %v2515
  %v2772 = vpack.c.b16 %v2524, %v2516
  %v2773 = vpack.c.b16 %v2525, %v2517
  %v2774 = vpack.c.b16 %v2526, %v2518
  %v2775 = vpack.c.b16 %v2527, %v2519
  %v2776 = vpack.c.b16 %v2528, %v2520
  %v2777 = vpack.c.b16 %v2537, %v2529
  %v2778 = vpack.c.b16 %v2538, %v2530
  %v2779 = vpack.c.b16 %v2539, %v2531
  %v2780 = vpack.c.b16 %v2540, %v2532
  %v2781 = vpack.c.b16 %v2541, %v2533
  %v2782 = vpack.c.b16 %v2542, %v2534
  %v2783 = vpack.c.b16 %v2543, %v2535
  %v2784 = vpack.c.b16 %v2544, %v2536
  %v2785 = vpack.c.b16 %v2553, %v2545
  %v2786 = vpack.c.b16 %v2554, %v2546
  %v2787 = vpack.c.b16 %v2555, %v2547
  %v2788 = vpack.c.b16 %v2556, %v2548
  %v2789 = vpack.c.b16 %v2557, %v2549
  %v2790 = vpack.c.b16 %v2558, %v2550
  %v2791 = vpack.c.b16 %v2559, %v2551
  %v2792 = vpack.c.b16 %v2560, %v2552
  %v2793 = vpack.c.b16 %v2569, %v2561
  %v2794 = vpack.c.b16 %v2570, %v2562
  %v2795 = vpack.c.b16 %v2571, %v2563
  %v2796 = vpack.c.b16 %v2572, %v2564
  %v2797 = vpack.c.b16 %v2573, %v2565
  %v2798 = vpack.c.b16 %v2574, %v2566
  %v2799 = vpack.c.b16 %v2575, %v2567
  %v2800 = vpack.c.b16 %v2576, %v2568
  %v2801 = vpack.c.b16 %v2585, %v2577
  %v2802 = vpack.c.b16 %v2586, %v2578
  %v2803 = vpack.c.b16 %v2587, %v2579
  %v2804 = vpack.c.b16 %v2588, %v2580
  %v2805 = vpack.c.b16 %v2589, %v2581
  %v2806 = vpack.c.b16 %v2590, %v2582
  %v2807 = vpack.c.b16 %v2591, %v2583
  %v2808 = vpack.c.b16 %v2592, %v2584
  %v2809 = vpack.c.b16 %v2601, %v2593
  %v2810 = vpack.c.b16 %v2602, %v2594
  %v2811 = vpack.c.b16 %v2603, %v2595
  %v2812 = vpack.c.b16 %v2604, %v2596
  %v2813 = vpack.c.b16 %v2605, %v2597
  %v2814 = vpack.c.b16 %v2606, %v2598
  %v2815 = vpack.c.b16 %v2607, %v2599
  %v2816 = vpack.c.b16 %v2608, %v2600
  %v2817 = vpack.c.b16 %v2617, %v2609
  %v2818 = vpack.c.b16 %v2618, %v2610
  %v2819 = vpack.c.b16 %v2619, %v2611
  %v2820 = vpack.c.b16 %v2620, %v2612
  %v2821 = vpack.c.b16 %v2621, %v2613
  %v2822 = vpack.c.b16 %v2622, %v2614
  %v2823 = vpack.c.b16 %v2623, %v2615
  %v2824 = vpack.c.b16 %v2624, %v2616
  %v2825 = vpack.c.b16 %v2633, %v2625
  %v2826 = vpack.c.b16 %v2634, %v2626
  %v2827 = vpack.c.b16 %v2635, %v2627
  %v2828 = vpack.c.b16 %v2636, %v2628
  %v2829 = vpack.c.b16 %v2637, %v2629
  %v2830 = vpack.c.b16 %v2638, %v2630
  %v2831 = vpack.c.b16 %v2639, %v2631
  %v2832 = vpack.c.b16 %v2640, %v2632
  %v2833 = vpack.c.b16 %v2649, %v2641
  %v2834 = vpack.c.b16 %v2650, %v2642
  %v2835 = vpack.c.b16 %v2651, %v2643
  %v2836 = vpack.c.b16 %v2652, %v2644
  %v2837 = vpack.c.b16 %v2653, %v2645
  %v2838 = vpack.c.b16 %v2654, %v2646
  %v2839 = vpack.c.b16 %v2655, %v2647
  %v2840 = vpack.c.b16 %v2656, %v2648
  %v2841 = vpack.c.b16 %v2665, %v2657
  %v2842 = vpack.c.b16 %v2666, %v2658
  %v2843 = vpack.c.b16 %v2667, %v2659
  %v2844 = vpack.c.b16 %v2668, %v2660
  %v2845 = vpack.c.b16 %v2669, %v2661
  %v2846 = vpack.c.b16 %v2670, %v2662
  %v2847 = vpack.c.b16 %v2671, %v2663
  %v2848 = vpack.c.b16 %v2672, %v2664
  %v2849 = vpack.c.b16 %v2681, %v2673
  %v2850 = vpack.c.b16 %v2682, %v2674
  %v2851 = vpack.c.b16 %v2683, %v2675
  %v2852 = vpack.c.b16 %v2684, %v2676
  %v2853 = vpack.c.b16 %v2685, %v2677
  %v2854 = vpack.c.b16 %v2686, %v2678
  %v2855 = vpack.c.b16 %v2687, %v2679
  %v2856 = vpack.c.b16 %v2688, %v2680
  %v2857 = vpack.c.b16 %v2697, %v2689
  %v2858 = vpack.c.b16 %v2698, %v2690
  %v2859 = vpack.c.b16 %v2699, %v2691
  %v2860 = vpack.c.b16 %v2700, %v2692
  %v2861 = vpack.c.b16 %v2701, %v2693
  %v2862 = vpack.c.b16 %v2702, %v2694
  %v2863 = vpack.c.b16 %v2703, %v2695
  %v2864 = vpack.c.b16 %v2704, %v2696
  %v2865 = vpack.c.b16 %v2713, %v2705
  %v2866 = vpack.c.b16 %v2714, %v2706
  %v2867 = vpack.c.b16 %v2715, %v2707
  %v2868 = vpack.c.b16 %v2716, %v2708
  %v2869 = vpack.c.b16 %v2717, %v2709
  %v2870 = vpack.c.b16 %v2718, %v2710
  %v2871 = vpack.c.b16 %v2719, %v2711
  %v2872 = vpack.c.b16 %v2720, %v2712
  %v2873 = vpack.c.b16 %v2729, %v2721
  %v2874 = vpack.c.b16 %v2730, %v2722
  %v2875 = vpack.c.b16 %v2731, %v2723
  %v2876 = vpack.c.b16 %v2732, %v2724
  %v2877 = vpack.c.b16 %v2733, %v2725
  %v2878 = vpack.c.b16 %v2734, %v2726
  %v2879 = vpack.c.b16 %v2735, %v2727
  %v2880 = vpack.c.b16 %v2736, %v2728
  %v2881 = vpack.c.b16 %v2745, %v2737
  %v2882 = vpack.c.b16 %v2746, %v2738
  %v2883 = vpack.c.b16 %v2747, %v2739
  %v2884 = vpack.c.b16 %v2748, %v2740
  %v2885 = vpack.c.b16 %v2749, %v2741
  %v2886 = vpack.c.b16 %v2750, %v2742
  %v2887 = vpack.c.b16 %v2751, %v2743
  %v2888 = vpack.c.b16 %v2752, %v2744
  %v2889 = vpack.c.b16 %v2761, %v2753
  %v2890 = vpack.c.b16 %v2762, %v2754
  %v2891 = vpack.c.b16 %v2763, %v2755
  %v2892 = vpack.c.b16 %v2764, %v2756
  %v2893 = vpack.c.b16 %v2765, %v2757
  %v2894 = vpack.c.b16 %v2766, %v2758
  %v2895 = vpack.c.b16 %v2767, %v2759
  %v2896 = vpack.c.b16 %v2768, %v2760
  %3025 = vmatprep.subr.bf16.mxu0 %v2770
  %3026 = vmatpush1.bf16.msra.mxu0 %v2769
  %3027 = vmatprep.subr.bf16.mxu0 %v2778
  %3028 = vmatpush1.bf16.msra.mxu0 %v2777
  %3029 = vmatprep.subr.bf16.mxu0 %v2786
  %3030 = vmatpush1.bf16.msra.mxu0 %v2785
  %3031 = vmatprep.subr.bf16.mxu0 %v2794
  %3032 = vmatpush1.bf16.msra.mxu0 %v2793
  %3033 = vmatprep.subr.bf16.mxu0 %v2802
  %3034 = vmatpush1.bf16.msra.mxu0 %v2801
  %3035 = vmatprep.subr.bf16.mxu0 %v2810
  %3036 = vmatpush1.bf16.msra.mxu0 %v2809
  %3037 = vmatprep.subr.bf16.mxu0 %v2818
  %3038 = vmatpush1.bf16.msra.mxu0 %v2817
  %3039 = vmatprep.subr.bf16.mxu0 %v2826
  %3040 = vmatpush1.bf16.msra.mxu0 %v2825
  %3041 = vmatprep.subr.bf16.mxu0 %v2834
  %3042 = vmatpush1.bf16.msra.mxu0 %v2833
  %3043 = vmatprep.subr.bf16.mxu0 %v2842
  %3044 = vmatpush1.bf16.msra.mxu0 %v2841
  %3045 = vmatprep.subr.bf16.mxu0 %v2850
  %3046 = vmatpush1.bf16.msra.mxu0 %v2849
  %3047 = vmatprep.subr.bf16.mxu0 %v2858
  %3048 = vmatpush1.bf16.msra.mxu0 %v2857
  %3049 = vmatprep.subr.bf16.mxu0 %v2866
  %3050 = vmatpush1.bf16.msra.mxu0 %v2865
  %3051 = vmatprep.subr.bf16.mxu0 %v2874
  %3052 = vmatpush1.bf16.msra.mxu0 %v2873
  %3053 = vmatprep.subr.bf16.mxu0 %v2882
  %3054 = vmatpush1.bf16.msra.mxu0 %v2881
  %3055 = vmatprep.subr.bf16.mxu0 %v2890
  %3056 = vmatpush1.bf16.msra.mxu0 %v2889
  %3057 = vmatprep.mubr.bf16.mxu0 %v2218
  %3058 = vmatmul.mubr.bf16.gmra.mrb[0].mxu0 %v2217
  %v3059 = vpop.f32.mrb[0].mxu0
  %v3060 = vadd.f32 0.0, %v3059
  %v3061 = vpop.f32.mrb[0].mxu0
  %v3062 = vadd.f32 0.0, %v3061
  %v3063 = vpop.f32.mrb[0].mxu0
  %v3064 = vadd.f32 0.0, %v3063
  %v3065 = vpop.f32.mrb[0].mxu0
  %v3066 = vadd.f32 0.0, %v3065
  %3067 = vdwg.mxu0
  %3068 = vmatprep.subr.bf16.mxu0 %v2772
  %3069 = vmatpush1.bf16.msra.mxu0 %v2771
  %3070 = vmatprep.subr.bf16.mxu0 %v2780
  %3071 = vmatpush1.bf16.msra.mxu0 %v2779
  %3072 = vmatprep.subr.bf16.mxu0 %v2788
  %3073 = vmatpush1.bf16.msra.mxu0 %v2787
  %3074 = vmatprep.subr.bf16.mxu0 %v2796
  %3075 = vmatpush1.bf16.msra.mxu0 %v2795
  %3076 = vmatprep.subr.bf16.mxu0 %v2804
  %3077 = vmatpush1.bf16.msra.mxu0 %v2803
  %3078 = vmatprep.subr.bf16.mxu0 %v2812
  %3079 = vmatpush1.bf16.msra.mxu0 %v2811
  %3080 = vmatprep.subr.bf16.mxu0 %v2820
  %3081 = vmatpush1.bf16.msra.mxu0 %v2819
  %3082 = vmatprep.subr.bf16.mxu0 %v2828
  %3083 = vmatpush1.bf16.msra.mxu0 %v2827
  %3084 = vmatprep.subr.bf16.mxu0 %v2836
  %3085 = vmatpush1.bf16.msra.mxu0 %v2835
  %3086 = vmatprep.subr.bf16.mxu0 %v2844
  %3087 = vmatpush1.bf16.msra.mxu0 %v2843
  %3088 = vmatprep.subr.bf16.mxu0 %v2852
  %3089 = vmatpush1.bf16.msra.mxu0 %v2851
  %3090 = vmatprep.subr.bf16.mxu0 %v2860
  %3091 = vmatpush1.bf16.msra.mxu0 %v2859
  %3092 = vmatprep.subr.bf16.mxu0 %v2868
  %3093 = vmatpush1.bf16.msra.mxu0 %v2867
  %3094 = vmatprep.subr.bf16.mxu0 %v2876
  %3095 = vmatpush1.bf16.msra.mxu0 %v2875
  %3096 = vmatprep.subr.bf16.mxu0 %v2884
  %3097 = vmatpush1.bf16.msra.mxu0 %v2883
  %3098 = vmatprep.subr.bf16.mxu0 %v2892
  %3099 = vmatpush1.bf16.msra.mxu0 %v2891
  %3100 = vmatprep.mubr.bf16.mxu0 %v2218
  %3101 = vmatmul.mubr.bf16.gmra.mrb[0].mxu0 %v2217
  %v3102 = vpop.f32.mrb[0].mxu0
  %v3103 = vadd.f32 0.0, %v3102
  %v3104 = vpop.f32.mrb[0].mxu0
  %v3105 = vadd.f32 0.0, %v3104
  %v3106 = vpop.f32.mrb[0].mxu0
  %v3107 = vadd.f32 0.0, %v3106
  %v3108 = vpop.f32.mrb[0].mxu0
  %v3109 = vadd.f32 0.0, %v3108
  %3110 = vdwg.mxu0
  %3111 = vmatprep.subr.bf16.mxu0 %v2774
  %3112 = vmatpush1.bf16.msra.mxu0 %v2773
  %3113 = vmatprep.subr.bf16.mxu0 %v2782
  %3114 = vmatpush1.bf16.msra.mxu0 %v2781
  %3115 = vmatprep.subr.bf16.mxu0 %v2790
  %3116 = vmatpush1.bf16.msra.mxu0 %v2789
  %3117 = vmatprep.subr.bf16.mxu0 %v2798
  %3118 = vmatpush1.bf16.msra.mxu0 %v2797
  %3119 = vmatprep.subr.bf16.mxu0 %v2806
  %3120 = vmatpush1.bf16.msra.mxu0 %v2805
  %3121 = vmatprep.subr.bf16.mxu0 %v2814
  %3122 = vmatpush1.bf16.msra.mxu0 %v2813
  %3123 = vmatprep.subr.bf16.mxu0 %v2822
  %3124 = vmatpush1.bf16.msra.mxu0 %v2821
  %3125 = vmatprep.subr.bf16.mxu0 %v2830
  %3126 = vmatpush1.bf16.msra.mxu0 %v2829
  %3127 = vmatprep.subr.bf16.mxu0 %v2838
  %3128 = vmatpush1.bf16.msra.mxu0 %v2837
  %3129 = vmatprep.subr.bf16.mxu0 %v2846
  %3130 = vmatpush1.bf16.msra.mxu0 %v2845
  %3131 = vmatprep.subr.bf16.mxu0 %v2854
  %3132 = vmatpush1.bf16.msra.mxu0 %v2853
  %3133 = vmatprep.subr.bf16.mxu0 %v2862
  %3134 = vmatpush1.bf16.msra.mxu0 %v2861
  %3135 = vmatprep.subr.bf16.mxu0 %v2870
  %3136 = vmatpush1.bf16.msra.mxu0 %v2869
  %3137 = vmatprep.subr.bf16.mxu0 %v2878
  %3138 = vmatpush1.bf16.msra.mxu0 %v2877
  %3139 = vmatprep.subr.bf16.mxu0 %v2886
  %3140 = vmatpush1.bf16.msra.mxu0 %v2885
  %3141 = vmatprep.subr.bf16.mxu0 %v2894
  %3142 = vmatpush1.bf16.msra.mxu0 %v2893
  %3143 = vmatprep.mubr.bf16.mxu0 %v2218
  %3144 = vmatmul.mubr.bf16.gmra.mrb[0].mxu0 %v2217
  %v3145 = vpop.f32.mrb[0].mxu0
  %v3146 = vadd.f32 0.0, %v3145
  %v3147 = vpop.f32.mrb[0].mxu0
  %v3148 = vadd.f32 0.0, %v3147
  %v3149 = vpop.f32.mrb[0].mxu0
  %v3150 = vadd.f32 0.0, %v3149
  %v3151 = vpop.f32.mrb[0].mxu0
  %v3152 = vadd.f32 0.0, %v3151
  %3153 = vdwg.mxu0
  %3154 = vmatprep.subr.bf16.mxu0 %v2776
  %3155 = vmatpush1.bf16.msra.mxu0 %v2775
  %3156 = vmatprep.subr.bf16.mxu0 %v2784
  %3157 = vmatpush1.bf16.msra.mxu0 %v2783
  %3158 = vmatprep.subr.bf16.mxu0 %v2792
  %3159 = vmatpush1.bf16.msra.mxu0 %v2791
  %3160 = vmatprep.subr.bf16.mxu0 %v2800
  %3161 = vmatpush1.bf16.msra.mxu0 %v2799
  %3162 = vmatprep.subr.bf16.mxu0 %v2808
  %3163 = vmatpush1.bf16.msra.mxu0 %v2807
  %3164 = vmatprep.subr.bf16.mxu0 %v2816
  %3165 = vmatpush1.bf16.msra.mxu0 %v2815
  %3166 = vmatprep.subr.bf16.mxu0 %v2824
  %3167 = vmatpush1.bf16.msra.mxu0 %v2823
  %3168 = vmatprep.subr.bf16.mxu0 %v2832
  %3169 = vmatpush1.bf16.msra.mxu0 %v2831
  %3170 = vmatprep.subr.bf16.mxu0 %v2840
  %3171 = vmatpush1.bf16.msra.mxu0 %v2839
  %3172 = vmatprep.subr.bf16.mxu0 %v2848
  %3173 = vmatpush1.bf16.msra.mxu0 %v2847
  %3174 = vmatprep.subr.bf16.mxu0 %v2856
  %3175 = vmatpush1.bf16.msra.mxu0 %v2855
  %3176 = vmatprep.subr.bf16.mxu0 %v2864
  %3177 = vmatpush1.bf16.msra.mxu0 %v2863
  %3178 = vmatprep.subr.bf16.mxu0 %v2872
  %3179 = vmatpush1.bf16.msra.mxu0 %v2871
  %3180 = vmatprep.subr.bf16.mxu0 %v2880
  %3181 = vmatpush1.bf16.msra.mxu0 %v2879
  %3182 = vmatprep.subr.bf16.mxu0 %v2888
  %3183 = vmatpush1.bf16.msra.mxu0 %v2887
  %3184 = vmatprep.subr.bf16.mxu0 %v2896
  %3185 = vmatpush1.bf16.msra.mxu0 %v2895
  %3186 = vmatprep.mubr.bf16.mxu0 %v2218
  %3187 = vmatmul.mubr.bf16.gmra.mrb[0].mxu0 %v2217
  %v3188 = vpop.f32.mrb[0].mxu0
  %v3189 = vadd.f32 0.0, %v3188
  %v3190 = vpop.f32.mrb[0].mxu0
  %v3191 = vadd.f32 0.0, %v3190
  %v3192 = vpop.f32.mrb[0].mxu0
  %v3193 = vadd.f32 0.0, %v3192
  %v3194 = vpop.f32.mrb[0].mxu0
  %v3195 = vadd.f32 0.0, %v3194
  %3196 = vdwg.mxu0
  %v3197 = vadd.f32 %v2241, %v3060
  %v3198 = vadd.f32 %v2242, %v3062
  %v3199 = vadd.f32 %v2243, %v3103
  %v3200 = vadd.f32 %v2244, %v3105
  %v3201 = vadd.f32 %v2245, %v3146
  %v3202 = vadd.f32 %v2246, %v3148
  %v3203 = vadd.f32 %v2247, %v3189
  %v3204 = vadd.f32 %v2248, %v3191
  %v3205 = vadd.f32 %v2249, %v3064
  %v3206 = vadd.f32 %v2250, %v3066
  %v3207 = vadd.f32 %v2251, %v3107
  %v3208 = vadd.f32 %v2252, %v3109
  %v3209 = vadd.f32 %v2253, %v3150
  %v3210 = vadd.f32 %v2254, %v3152
  %v3211 = vadd.f32 %v2255, %v3193
  %v3212 = vadd.f32 %v2256, %v3195
  %v3213 = vxor.u32 %v3197, 2147483648
  %v3214 = vxor.u32 %v3198, 2147483648
  %v3215 = vxor.u32 %v3199, 2147483648
  %v3216 = vxor.u32 %v3200, 2147483648
  %v3217 = vxor.u32 %v3201, 2147483648
  %v3218 = vxor.u32 %v3202, 2147483648
  %v3219 = vxor.u32 %v3205, 2147483648
  %v3220 = vxor.u32 %v3206, 2147483648
  %v3221 = vxor.u32 %v3207, 2147483648
  %v3222 = vxor.u32 %v3208, 2147483648
  %v3223 = vxor.u32 %v3209, 2147483648
  %v3224 = vxor.u32 %v3210, 2147483648
  %v3225 = vmul.f32 %v3213, 1.442695
  %v3226 = vpow.pop %v3225
  %v3227 = vmul.f32 %v3214, 1.442695
  %v3228 = vpow.pop %v3227
  %v3229 = vmul.f32 %v3215, 1.442695
  %v3230 = vpow.pop %v3229
  %v3231 = vmul.f32 %v3216, 1.442695
  %v3232 = vpow.pop %v3231
  %v3233 = vmul.f32 %v3217, 1.442695
  %v3234 = vpow.pop %v3233
  %v3235 = vmul.f32 %v3218, 1.442695
  %v3236 = vpow.pop %v3235
  %v3237 = vmul.f32 %v3219, 1.442695
  %v3238 = vpow.pop %v3237
  %v3239 = vmul.f32 %v3220, 1.442695
  %v3240 = vpow.pop %v3239
  %v3241 = vmul.f32 %v3221, 1.442695
  %v3242 = vpow.pop %v3241
  %v3243 = vmul.f32 %v3222, 1.442695
  %v3244 = vpow.pop %v3243
  %v3245 = vmul.f32 %v3223, 1.442695
  %v3246 = vpow.pop %v3245
  %v3247 = vmul.f32 %v3224, 1.442695
  %v3248 = vpow.pop %v3247
  %v3249 = vadd.f32 %v3226, 1.0
  %v3250 = vadd.f32 %v3228, 1.0
  %v3251 = vadd.f32 %v3230, 1.0
  %v3252 = vadd.f32 %v3232, 1.0
  %v3253 = vadd.f32 %v3234, 1.0
  %v3254 = vadd.f32 %v3236, 1.0
  %v3255 = vadd.f32 %v3238, 1.0
  %v3256 = vadd.f32 %v3240, 1.0
  %v3257 = vadd.f32 %v3242, 1.0
  %v3258 = vadd.f32 %v3244, 1.0
  %v3259 = vadd.f32 %v3246, 1.0
  %v3260 = vadd.f32 %v3248, 1.0
  %v3261 = vrcp.pop %v3249
  %v3262 = vmul.f32 1.0, %v3261
  %v3263 = vrcp.pop %v3250
  %v3264 = vmul.f32 1.0, %v3263
  %v3265 = vrcp.pop %v3251
  %v3266 = vmul.f32 1.0, %v3265
  %v3267 = vrcp.pop %v3252
  %v3268 = vmul.f32 1.0, %v3267
  %v3269 = vrcp.pop %v3253
  %v3270 = vmul.f32 1.0, %v3269
  %v3271 = vrcp.pop %v3254
  %v3272 = vmul.f32 1.0, %v3271
  %v3273 = vrcp.pop %v3255
  %v3274 = vmul.f32 1.0, %v3273
  %v3275 = vrcp.pop %v3256
  %v3276 = vmul.f32 1.0, %v3275
  %v3277 = vrcp.pop %v3257
  %v3278 = vmul.f32 1.0, %v3277
  %v3279 = vrcp.pop %v3258
  %v3280 = vmul.f32 1.0, %v3279
  %v3281 = vrcp.pop %v3259
  %v3282 = vmul.f32 1.0, %v3281
  %v3283 = vrcp.pop %v3260
  %v3284 = vmul.f32 1.0, %v3283
  %v3285 = vtanh.pop %v3203
  %v3286 = vtanh.pop %v3204
  %v3287 = vtanh.pop %v3211
  %v3288 = vtanh.pop %v3212
  %v3289 = vmul.f32 %v3266, %v2205
  %v3290 = vmul.f32 %v3268, %v2206
  %v3291 = vmul.f32 %v3278, %v2207
  %v3292 = vmul.f32 %v3280, %v2208
  %v3293 = vmul.f32 %v3262, %v3285
  %v3294 = vmul.f32 %v3264, %v3286
  %v3295 = vmul.f32 %v3274, %v3287
  %v3296 = vmul.f32 %v3276, %v3288
  %v3297 = vadd.f32 %v3289, %v3293
  %v3298 = vadd.f32 %v3290, %v3294
  %v3299 = vadd.f32 %v3291, %v3295
  %v3300 = vadd.f32 %v3292, %v3296
  %v3301 = vtanh.pop %v3297
  %v3302 = vtanh.pop %v3298
  %v3303 = vtanh.pop %v3299
  %v3304 = vtanh.pop %v3300
  %v3305 = vmul.f32 %v3270, %v3301
  %v3306 = vmul.f32 %v3272, %v3302
  %v3307 = vmul.f32 %v3282, %v3303
  %v3308 = vmul.f32 %v3284, %v3304
  %v3309 = vpack.c.bf16 %v3307, %v3305
  %v3310 = vpack.c.bf16 %v3308, %v3306
  %v3313 = vunpack.c.l.b16 %v3309
  %v3314 = vunpack.c.l.b16 %v3310
  %v3315 = vunpack.c.h.b16 %v3309
  %v3316 = vunpack.c.h.b16 %v3310
  %v3317 = vpack.c.b16 %v3314, %v3313
  %v3318 = vpack.c.b16 %v3316, %v3315
  %s3321 = scalar_lea.vmem %s4, 32
  %3322 = vst [vmem:[%s3321] sm:$0xff] %v3317
  %3323 = vst [vmem:[%s3321 + $0x8] sm:$0xff] %v3318
  %s3324 = scalar_lea.vmem %s0, 192
  %v3325 = vld [vmem:[%s3324] sm:$0xff]
  %v3326 = vld [vmem:[%s3324 + $0x8] sm:$0xff]
  %v3327 = vld [vmem:[%s3324 + $0x10] sm:$0xff]
  %v3328 = vld [vmem:[%s3324 + $0x18] sm:$0xff]
  %v3329 = vld [vmem:[%s3324 + $0x20] sm:$0xff]
  %v3330 = vld [vmem:[%s3324 + $0x28] sm:$0xff]
  %v3331 = vld [vmem:[%s3324 + $0x30] sm:$0xff]
  %v3332 = vld [vmem:[%s3324 + $0x38] sm:$0xff]
  %v3333 = vunpack.c.l.bf16 %v3325
  %v3334 = vunpack.c.h.bf16 %v3325
  %v3335 = vunpack.c.l.bf16 %v3326
  %v3336 = vunpack.c.h.bf16 %v3326
  %v3337 = vunpack.c.l.bf16 %v3327
  %v3338 = vunpack.c.h.bf16 %v3327
  %v3339 = vunpack.c.l.bf16 %v3328
  %v3340 = vunpack.c.h.bf16 %v3328
  %v3341 = vunpack.c.l.bf16 %v3329
  %v3342 = vunpack.c.h.bf16 %v3329
  %v3343 = vunpack.c.l.bf16 %v3330
  %v3344 = vunpack.c.h.bf16 %v3330
  %v3345 = vunpack.c.l.bf16 %v3331
  %v3346 = vunpack.c.h.bf16 %v3331
  %v3347 = vunpack.c.l.bf16 %v3332
  %v3348 = vunpack.c.h.bf16 %v3332
  %v3349 = vld [vmem:[%s1] sm:$0xff]
  %v3350 = vld [vmem:[%s1 + $0x8] sm:$0xff]
  %v3351 = vld [vmem:[%s1 + $0x10] sm:$0xff]
  %v3352 = vld [vmem:[%s1 + $0x18] sm:$0xff]
  %v3353 = vld [vmem:[%s1 + $0x20] sm:$0xff]
  %v3354 = vld [vmem:[%s1 + $0x28] sm:$0xff]
  %v3355 = vld [vmem:[%s1 + $0x30] sm:$0xff]
  %v3356 = vld [vmem:[%s1 + $0x38] sm:$0xff]
  %v3357 = vld [vmem:[%s1 + $0x40] sm:$0xff]
  %v3358 = vld [vmem:[%s1 + $0x48] sm:$0xff]
  %v3359 = vld [vmem:[%s1 + $0x50] sm:$0xff]
  %v3360 = vld [vmem:[%s1 + $0x58] sm:$0xff]
  %v3361 = vld [vmem:[%s1 + $0x60] sm:$0xff]
  %v3362 = vld [vmem:[%s1 + $0x68] sm:$0xff]
  %v3363 = vld [vmem:[%s1 + $0x70] sm:$0xff]
  %v3364 = vld [vmem:[%s1 + $0x78] sm:$0xff]
  %v3365 = vld [vmem:[%s1 + $0x80] sm:$0xff]
  %v3366 = vld [vmem:[%s1 + $0x88] sm:$0xff]
  %v3367 = vld [vmem:[%s1 + $0x90] sm:$0xff]
  %v3368 = vld [vmem:[%s1 + $0x98] sm:$0xff]
  %v3369 = vld [vmem:[%s1 + $0xa0] sm:$0xff]
  %v3370 = vld [vmem:[%s1 + $0xa8] sm:$0xff]
  %v3371 = vld [vmem:[%s1 + $0xb0] sm:$0xff]
  %v3372 = vld [vmem:[%s1 + $0xb8] sm:$0xff]
  %v3373 = vld [vmem:[%s1 + $0xc0] sm:$0xff]
  %v3374 = vld [vmem:[%s1 + $0xc8] sm:$0xff]
  %v3375 = vld [vmem:[%s1 + $0xd0] sm:$0xff]
  %v3376 = vld [vmem:[%s1 + $0xd8] sm:$0xff]
  %v3377 = vld [vmem:[%s1 + $0xe0] sm:$0xff]
  %v3378 = vld [vmem:[%s1 + $0xe8] sm:$0xff]
  %v3379 = vld [vmem:[%s1 + $0xf0] sm:$0xff]
  %v3380 = vld [vmem:[%s1 + $0xf8] sm:$0xff]
  %v3381 = vld [vmem:[%s1 + $0x100] sm:$0xff]
  %v3382 = vld [vmem:[%s1 + $0x108] sm:$0xff]
  %v3383 = vld [vmem:[%s1 + $0x110] sm:$0xff]
  %v3384 = vld [vmem:[%s1 + $0x118] sm:$0xff]
  %v3385 = vld [vmem:[%s1 + $0x120] sm:$0xff]
  %v3386 = vld [vmem:[%s1 + $0x128] sm:$0xff]
  %v3387 = vld [vmem:[%s1 + $0x130] sm:$0xff]
  %v3388 = vld [vmem:[%s1 + $0x138] sm:$0xff]
  %v3389 = vld [vmem:[%s1 + $0x140] sm:$0xff]
  %v3390 = vld [vmem:[%s1 + $0x148] sm:$0xff]
  %v3391 = vld [vmem:[%s1 + $0x150] sm:$0xff]
  %v3392 = vld [vmem:[%s1 + $0x158] sm:$0xff]
  %v3393 = vld [vmem:[%s1 + $0x160] sm:$0xff]
  %v3394 = vld [vmem:[%s1 + $0x168] sm:$0xff]
  %v3395 = vld [vmem:[%s1 + $0x170] sm:$0xff]
  %v3396 = vld [vmem:[%s1 + $0x178] sm:$0xff]
  %v3397 = vld [vmem:[%s1 + $0x180] sm:$0xff]
  %v3398 = vld [vmem:[%s1 + $0x188] sm:$0xff]
  %v3399 = vld [vmem:[%s1 + $0x190] sm:$0xff]
  %v3400 = vld [vmem:[%s1 + $0x198] sm:$0xff]
  %v3401 = vld [vmem:[%s1 + $0x1a0] sm:$0xff]
  %v3402 = vld [vmem:[%s1 + $0x1a8] sm:$0xff]
  %v3403 = vld [vmem:[%s1 + $0x1b0] sm:$0xff]
  %v3404 = vld [vmem:[%s1 + $0x1b8] sm:$0xff]
  %v3405 = vld [vmem:[%s1 + $0x1c0] sm:$0xff]
  %v3406 = vld [vmem:[%s1 + $0x1c8] sm:$0xff]
  %v3407 = vld [vmem:[%s1 + $0x1d0] sm:$0xff]
  %v3408 = vld [vmem:[%s1 + $0x1d8] sm:$0xff]
  %v3409 = vld [vmem:[%s1 + $0x1e0] sm:$0xff]
  %v3410 = vld [vmem:[%s1 + $0x1e8] sm:$0xff]
  %v3411 = vld [vmem:[%s1 + $0x1f0] sm:$0xff]
  %v3412 = vld [vmem:[%s1 + $0x1f8] sm:$0xff]
  %v3413 = vld [vmem:[%s1 + $0x200] sm:$0xff]
  %v3414 = vld [vmem:[%s1 + $0x208] sm:$0xff]
  %v3415 = vld [vmem:[%s1 + $0x210] sm:$0xff]
  %v3416 = vld [vmem:[%s1 + $0x218] sm:$0xff]
  %v3417 = vld [vmem:[%s1 + $0x220] sm:$0xff]
  %v3418 = vld [vmem:[%s1 + $0x228] sm:$0xff]
  %v3419 = vld [vmem:[%s1 + $0x230] sm:$0xff]
  %v3420 = vld [vmem:[%s1 + $0x238] sm:$0xff]
  %v3421 = vld [vmem:[%s1 + $0x240] sm:$0xff]
  %v3422 = vld [vmem:[%s1 + $0x248] sm:$0xff]
  %v3423 = vld [vmem:[%s1 + $0x250] sm:$0xff]
  %v3424 = vld [vmem:[%s1 + $0x258] sm:$0xff]
  %v3425 = vld [vmem:[%s1 + $0x260] sm:$0xff]
  %v3426 = vld [vmem:[%s1 + $0x268] sm:$0xff]
  %v3427 = vld [vmem:[%s1 + $0x270] sm:$0xff]
  %v3428 = vld [vmem:[%s1 + $0x278] sm:$0xff]
  %v3429 = vld [vmem:[%s1 + $0x280] sm:$0xff]
  %v3430 = vld [vmem:[%s1 + $0x288] sm:$0xff]
  %v3431 = vld [vmem:[%s1 + $0x290] sm:$0xff]
  %v3432 = vld [vmem:[%s1 + $0x298] sm:$0xff]
  %v3433 = vld [vmem:[%s1 + $0x2a0] sm:$0xff]
  %v3434 = vld [vmem:[%s1 + $0x2a8] sm:$0xff]
  %v3435 = vld [vmem:[%s1 + $0x2b0] sm:$0xff]
  %v3436 = vld [vmem:[%s1 + $0x2b8] sm:$0xff]
  %v3437 = vld [vmem:[%s1 + $0x2c0] sm:$0xff]
  %v3438 = vld [vmem:[%s1 + $0x2c8] sm:$0xff]
  %v3439 = vld [vmem:[%s1 + $0x2d0] sm:$0xff]
  %v3440 = vld [vmem:[%s1 + $0x2d8] sm:$0xff]
  %v3441 = vld [vmem:[%s1 + $0x2e0] sm:$0xff]
  %v3442 = vld [vmem:[%s1 + $0x2e8] sm:$0xff]
  %v3443 = vld [vmem:[%s1 + $0x2f0] sm:$0xff]
  %v3444 = vld [vmem:[%s1 + $0x2f8] sm:$0xff]
  %v3445 = vld [vmem:[%s1 + $0x300] sm:$0xff]
  %v3446 = vld [vmem:[%s1 + $0x308] sm:$0xff]
  %v3447 = vld [vmem:[%s1 + $0x310] sm:$0xff]
  %v3448 = vld [vmem:[%s1 + $0x318] sm:$0xff]
  %v3449 = vld [vmem:[%s1 + $0x320] sm:$0xff]
  %v3450 = vld [vmem:[%s1 + $0x328] sm:$0xff]
  %v3451 = vld [vmem:[%s1 + $0x330] sm:$0xff]
  %v3452 = vld [vmem:[%s1 + $0x338] sm:$0xff]
  %v3453 = vld [vmem:[%s1 + $0x340] sm:$0xff]
  %v3454 = vld [vmem:[%s1 + $0x348] sm:$0xff]
  %v3455 = vld [vmem:[%s1 + $0x350] sm:$0xff]
  %v3456 = vld [vmem:[%s1 + $0x358] sm:$0xff]
  %v3457 = vld [vmem:[%s1 + $0x360] sm:$0xff]
  %v3458 = vld [vmem:[%s1 + $0x368] sm:$0xff]
  %v3459 = vld [vmem:[%s1 + $0x370] sm:$0xff]
  %v3460 = vld [vmem:[%s1 + $0x378] sm:$0xff]
  %v3461 = vld [vmem:[%s1 + $0x380] sm:$0xff]
  %v3462 = vld [vmem:[%s1 + $0x388] sm:$0xff]
  %v3463 = vld [vmem:[%s1 + $0x390] sm:$0xff]
  %v3464 = vld [vmem:[%s1 + $0x398] sm:$0xff]
  %v3465 = vld [vmem:[%s1 + $0x3a0] sm:$0xff]
  %v3466 = vld [vmem:[%s1 + $0x3a8] sm:$0xff]
  %v3467 = vld [vmem:[%s1 + $0x3b0] sm:$0xff]
  %v3468 = vld [vmem:[%s1 + $0x3b8] sm:$0xff]
  %v3469 = vld [vmem:[%s1 + $0x3c0] sm:$0xff]
  %v3470 = vld [vmem:[%s1 + $0x3c8] sm:$0xff]
  %v3471 = vld [vmem:[%s1 + $0x3d0] sm:$0xff]
  %v3472 = vld [vmem:[%s1 + $0x3d8] sm:$0xff]
  %v3473 = vld [vmem:[%s1 + $0x3e0] sm:$0xff]
  %v3474 = vld [vmem:[%s1 + $0x3e8] sm:$0xff]
  %v3475 = vld [vmem:[%s1 + $0x3f0] sm:$0xff]
  %v3476 = vld [vmem:[%s1 + $0x3f8] sm:$0xff]
  %v3605 = vunpack.c.l.b16 %v3349
  %v3606 = vunpack.c.h.b16 %v3349
  %v3607 = vunpack.c.l.b16 %v3350
  %v3608 = vunpack.c.h.b16 %v3350
  %v3609 = vunpack.c.l.b16 %v3351
  %v3610 = vunpack.c.h.b16 %v3351
  %v3611 = vunpack.c.l.b16 %v3352
  %v3612 = vunpack.c.h.b16 %v3352
  %v3613 = vunpack.c.l.b16 %v3353
  %v3614 = vunpack.c.h.b16 %v3353
  %v3615 = vunpack.c.l.b16 %v3354
  %v3616 = vunpack.c.h.b16 %v3354
  %v3617 = vunpack.c.l.b16 %v3355
  %v3618 = vunpack.c.h.b16 %v3355
  %v3619 = vunpack.c.l.b16 %v3356
  %v3620 = vunpack.c.h.b16 %v3356
  %v3621 = vunpack.c.l.b16 %v3357
  %v3622 = vunpack.c.h.b16 %v3357
  %v3623 = vunpack.c.l.b16 %v3358
  %v3624 = vunpack.c.h.b16 %v3358
  %v3625 = vunpack.c.l.b16 %v3359
  %v3626 = vunpack.c.h.b16 %v3359
  %v3627 = vunpack.c.l.b16 %v3360
  %v3628 = vunpack.c.h.b16 %v3360
  %v3629 = vunpack.c.l.b16 %v3361
  %v3630 = vunpack.c.h.b16 %v3361
  %v3631 = vunpack.c.l.b16 %v3362
  %v3632 = vunpack.c.h.b16 %v3362
  %v3633 = vunpack.c.l.b16 %v3363
  %v3634 = vunpack.c.h.b16 %v3363
  %v3635 = vunpack.c.l.b16 %v3364
  %v3636 = vunpack.c.h.b16 %v3364
  %v3637 = vunpack.c.l.b16 %v3365
  %v3638 = vunpack.c.h.b16 %v3365
  %v3639 = vunpack.c.l.b16 %v3366
  %v3640 = vunpack.c.h.b16 %v3366
  %v3641 = vunpack.c.l.b16 %v3367
  %v3642 = vunpack.c.h.b16 %v3367
  %v3643 = vunpack.c.l.b16 %v3368
  %v3644 = vunpack.c.h.b16 %v3368
  %v3645 = vunpack.c.l.b16 %v3369
  %v3646 = vunpack.c.h.b16 %v3369
  %v3647 = vunpack.c.l.b16 %v3370
  %v3648 = vunpack.c.h.b16 %v3370
  %v3649 = vunpack.c.l.b16 %v3371
  %v3650 = vunpack.c.h.b16 %v3371
  %v3651 = vunpack.c.l.b16 %v3372
  %v3652 = vunpack.c.h.b16 %v3372
  %v3653 = vunpack.c.l.b16 %v3373
  %v3654 = vunpack.c.h.b16 %v3373
  %v3655 = vunpack.c.l.b16 %v3374
  %v3656 = vunpack.c.h.b16 %v3374
  %v3657 = vunpack.c.l.b16 %v3375
  %v3658 = vunpack.c.h.b16 %v3375
  %v3659 = vunpack.c.l.b16 %v3376
  %v3660 = vunpack.c.h.b16 %v3376
  %v3661 = vunpack.c.l.b16 %v3377
  %v3662 = vunpack.c.h.b16 %v3377
  %v3663 = vunpack.c.l.b16 %v3378
  %v3664 = vunpack.c.h.b16 %v3378
  %v3665 = vunpack.c.l.b16 %v3379
  %v3666 = vunpack.c.h.b16 %v3379
  %v3667 = vunpack.c.l.b16 %v3380
  %v3668 = vunpack.c.h.b16 %v3380
  %v3669 = vunpack.c.l.b16 %v3381
  %v3670 = vunpack.c.h.b16 %v3381
  %v3671 = vunpack.c.l.b16 %v3382
  %v3672 = vunpack.c.h.b16 %v3382
  %v3673 = vunpack.c.l.b16 %v3383
  %v3674 = vunpack.c.h.b16 %v3383
  %v3675 = vunpack.c.l.b16 %v3384
  %v3676 = vunpack.c.h.b16 %v3384
  %v3677 = vunpack.c.l.b16 %v3385
  %v3678 = vunpack.c.h.b16 %v3385
  %v3679 = vunpack.c.l.b16 %v3386
  %v3680 = vunpack.c.h.b16 %v3386
  %v3681 = vunpack.c.l.b16 %v3387
  %v3682 = vunpack.c.h.b16 %v3387
  %v3683 = vunpack.c.l.b16 %v3388
  %v3684 = vunpack.c.h.b16 %v3388
  %v3685 = vunpack.c.l.b16 %v3389
  %v3686 = vunpack.c.h.b16 %v3389
  %v3687 = vunpack.c.l.b16 %v3390
  %v3688 = vunpack.c.h.b16 %v3390
  %v3689 = vunpack.c.l.b16 %v3391
  %v3690 = vunpack.c.h.b16 %v3391
  %v3691 = vunpack.c.l.b16 %v3392
  %v3692 = vunpack.c.h.b16 %v3392
  %v3693 = vunpack.c.l.b16 %v3393
  %v3694 = vunpack.c.h.b16 %v3393
  %v3695 = vunpack.c.l.b16 %v3394
  %v3696 = vunpack.c.h.b16 %v3394
  %v3697 = vunpack.c.l.b16 %v3395
  %v3698 = vunpack.c.h.b16 %v3395
  %v3699 = vunpack.c.l.b16 %v3396
  %v3700 = vunpack.c.h.b16 %v3396
  %v3701 = vunpack.c.l.b16 %v3397
  %v3702 = vunpack.c.h.b16 %v3397
  %v3703 = vunpack.c.l.b16 %v3398
  %v3704 = vunpack.c.h.b16 %v3398
  %v3705 = vunpack.c.l.b16 %v3399
  %v3706 = vunpack.c.h.b16 %v3399
  %v3707 = vunpack.c.l.b16 %v3400
  %v3708 = vunpack.c.h.b16 %v3400
  %v3709 = vunpack.c.l.b16 %v3401
  %v3710 = vunpack.c.h.b16 %v3401
  %v3711 = vunpack.c.l.b16 %v3402
  %v3712 = vunpack.c.h.b16 %v3402
  %v3713 = vunpack.c.l.b16 %v3403
  %v3714 = vunpack.c.h.b16 %v3403
  %v3715 = vunpack.c.l.b16 %v3404
  %v3716 = vunpack.c.h.b16 %v3404
  %v3717 = vunpack.c.l.b16 %v3405
  %v3718 = vunpack.c.h.b16 %v3405
  %v3719 = vunpack.c.l.b16 %v3406
  %v3720 = vunpack.c.h.b16 %v3406
  %v3721 = vunpack.c.l.b16 %v3407
  %v3722 = vunpack.c.h.b16 %v3407
  %v3723 = vunpack.c.l.b16 %v3408
  %v3724 = vunpack.c.h.b16 %v3408
  %v3725 = vunpack.c.l.b16 %v3409
  %v3726 = vunpack.c.h.b16 %v3409
  %v3727 = vunpack.c.l.b16 %v3410
  %v3728 = vunpack.c.h.b16 %v3410
  %v3729 = vunpack.c.l.b16 %v3411
  %v3730 = vunpack.c.h.b16 %v3411
  %v3731 = vunpack.c.l.b16 %v3412
  %v3732 = vunpack.c.h.b16 %v3412
  %v3733 = vunpack.c.l.b16 %v3413
  %v3734 = vunpack.c.h.b16 %v3413
  %v3735 = vunpack.c.l.b16 %v3414
  %v3736 = vunpack.c.h.b16 %v3414
  %v3737 = vunpack.c.l.b16 %v3415
  %v3738 = vunpack.c.h.b16 %v3415
  %v3739 = vunpack.c.l.b16 %v3416
  %v3740 = vunpack.c.h.b16 %v3416
  %v3741 = vunpack.c.l.b16 %v3417
  %v3742 = vunpack.c.h.b16 %v3417
  %v3743 = vunpack.c.l.b16 %v3418
  %v3744 = vunpack.c.h.b16 %v3418
  %v3745 = vunpack.c.l.b16 %v3419
  %v3746 = vunpack.c.h.b16 %v3419
  %v3747 = vunpack.c.l.b16 %v3420
  %v3748 = vunpack.c.h.b16 %v3420
  %v3749 = vunpack.c.l.b16 %v3421
  %v3750 = vunpack.c.h.b16 %v3421
  %v3751 = vunpack.c.l.b16 %v3422
  %v3752 = vunpack.c.h.b16 %v3422
  %v3753 = vunpack.c.l.b16 %v3423
  %v3754 = vunpack.c.h.b16 %v3423
  %v3755 = vunpack.c.l.b16 %v3424
  %v3756 = vunpack.c.h.b16 %v3424
  %v3757 = vunpack.c.l.b16 %v3425
  %v3758 = vunpack.c.h.b16 %v3425
  %v3759 = vunpack.c.l.b16 %v3426
  %v3760 = vunpack.c.h.b16 %v3426
  %v3761 = vunpack.c.l.b16 %v3427
  %v3762 = vunpack.c.h.b16 %v3427
  %v3763 = vunpack.c.l.b16 %v3428
  %v3764 = vunpack.c.h.b16 %v3428
  %v3765 = vunpack.c.l.b16 %v3429
  %v3766 = vunpack.c.h.b16 %v3429
  %v3767 = vunpack.c.l.b16 %v3430
  %v3768 = vunpack.c.h.b16 %v3430
  %v3769 = vunpack.c.l.b16 %v3431
  %v3770 = vunpack.c.h.b16 %v3431
  %v3771 = vunpack.c.l.b16 %v3432
  %v3772 = vunpack.c.h.b16 %v3432
  %v3773 = vunpack.c.l.b16 %v3433
  %v3774 = vunpack.c.h.b16 %v3433
  %v3775 = vunpack.c.l.b16 %v3434
  %v3776 = vunpack.c.h.b16 %v3434
  %v3777 = vunpack.c.l.b16 %v3435
  %v3778 = vunpack.c.h.b16 %v3435
  %v3779 = vunpack.c.l.b16 %v3436
  %v3780 = vunpack.c.h.b16 %v3436
  %v3781 = vunpack.c.l.b16 %v3437
  %v3782 = vunpack.c.h.b16 %v3437
  %v3783 = vunpack.c.l.b16 %v3438
  %v3784 = vunpack.c.h.b16 %v3438
  %v3785 = vunpack.c.l.b16 %v3439
  %v3786 = vunpack.c.h.b16 %v3439
  %v3787 = vunpack.c.l.b16 %v3440
  %v3788 = vunpack.c.h.b16 %v3440
  %v3789 = vunpack.c.l.b16 %v3441
  %v3790 = vunpack.c.h.b16 %v3441
  %v3791 = vunpack.c.l.b16 %v3442
  %v3792 = vunpack.c.h.b16 %v3442
  %v3793 = vunpack.c.l.b16 %v3443
  %v3794 = vunpack.c.h.b16 %v3443
  %v3795 = vunpack.c.l.b16 %v3444
  %v3796 = vunpack.c.h.b16 %v3444
  %v3797 = vunpack.c.l.b16 %v3445
  %v3798 = vunpack.c.h.b16 %v3445
  %v3799 = vunpack.c.l.b16 %v3446
  %v3800 = vunpack.c.h.b16 %v3446
  %v3801 = vunpack.c.l.b16 %v3447
  %v3802 = vunpack.c.h.b16 %v3447
  %v3803 = vunpack.c.l.b16 %v3448
  %v3804 = vunpack.c.h.b16 %v3448
  %v3805 = vunpack.c.l.b16 %v3449
  %v3806 = vunpack.c.h.b16 %v3449
  %v3807 = vunpack.c.l.b16 %v3450
  %v3808 = vunpack.c.h.b16 %v3450
  %v3809 = vunpack.c.l.b16 %v3451
  %v3810 = vunpack.c.h.b16 %v3451
  %v3811 = vunpack.c.l.b16 %v3452
  %v3812 = vunpack.c.h.b16 %v3452
  %v3813 = vunpack.c.l.b16 %v3453
  %v3814 = vunpack.c.h.b16 %v3453
  %v3815 = vunpack.c.l.b16 %v3454
  %v3816 = vunpack.c.h.b16 %v3454
  %v3817 = vunpack.c.l.b16 %v3455
  %v3818 = vunpack.c.h.b16 %v3455
  %v3819 = vunpack.c.l.b16 %v3456
  %v3820 = vunpack.c.h.b16 %v3456
  %v3821 = vunpack.c.l.b16 %v3457
  %v3822 = vunpack.c.h.b16 %v3457
  %v3823 = vunpack.c.l.b16 %v3458
  %v3824 = vunpack.c.h.b16 %v3458
  %v3825 = vunpack.c.l.b16 %v3459
  %v3826 = vunpack.c.h.b16 %v3459
  %v3827 = vunpack.c.l.b16 %v3460
  %v3828 = vunpack.c.h.b16 %v3460
  %v3829 = vunpack.c.l.b16 %v3461
  %v3830 = vunpack.c.h.b16 %v3461
  %v3831 = vunpack.c.l.b16 %v3462
  %v3832 = vunpack.c.h.b16 %v3462
  %v3833 = vunpack.c.l.b16 %v3463
  %v3834 = vunpack.c.h.b16 %v3463
  %v3835 = vunpack.c.l.b16 %v3464
  %v3836 = vunpack.c.h.b16 %v3464
  %v3837 = vunpack.c.l.b16 %v3465
  %v3838 = vunpack.c.h.b16 %v3465
  %v3839 = vunpack.c.l.b16 %v3466
  %v3840 = vunpack.c.h.b16 %v3466
  %v3841 = vunpack.c.l.b16 %v3467
  %v3842 = vunpack.c.h.b16 %v3467
  %v3843 = vunpack.c.l.b16 %v3468
  %v3844 = vunpack.c.h.b16 %v3468
  %v3845 = vunpack.c.l.b16 %v3469
  %v3846 = vunpack.c.h.b16 %v3469
  %v3847 = vunpack.c.l.b16 %v3470
  %v3848 = vunpack.c.h.b16 %v3470
  %v3849 = vunpack.c.l.b16 %v3471
  %v3850 = vunpack.c.h.b16 %v3471
  %v3851 = vunpack.c.l.b16 %v3472
  %v3852 = vunpack.c.h.b16 %v3472
  %v3853 = vunpack.c.l.b16 %v3473
  %v3854 = vunpack.c.h.b16 %v3473
  %v3855 = vunpack.c.l.b16 %v3474
  %v3856 = vunpack.c.h.b16 %v3474
  %v3857 = vunpack.c.l.b16 %v3475
  %v3858 = vunpack.c.h.b16 %v3475
  %v3859 = vunpack.c.l.b16 %v3476
  %v3860 = vunpack.c.h.b16 %v3476
  %v3861 = vpack.c.b16 %v3613, %v3605
  %v3862 = vpack.c.b16 %v3614, %v3606
  %v3863 = vpack.c.b16 %v3615, %v3607
  %v3864 = vpack.c.b16 %v3616, %v3608
  %v3865 = vpack.c.b16 %v3617, %v3609
  %v3866 = vpack.c.b16 %v3618, %v3610
  %v3867 = vpack.c.b16 %v3619, %v3611
  %v3868 = vpack.c.b16 %v3620, %v3612
  %v3869 = vpack.c.b16 %v3629, %v3621
  %v3870 = vpack.c.b16 %v3630, %v3622
  %v3871 = vpack.c.b16 %v3631, %v3623
  %v3872 = vpack.c.b16 %v3632, %v3624
  %v3873 = vpack.c.b16 %v3633, %v3625
  %v3874 = vpack.c.b16 %v3634, %v3626
  %v3875 = vpack.c.b16 %v3635, %v3627
  %v3876 = vpack.c.b16 %v3636, %v3628
  %v3877 = vpack.c.b16 %v3645, %v3637
  %v3878 = vpack.c.b16 %v3646, %v3638
  %v3879 = vpack.c.b16 %v3647, %v3639
  %v3880 = vpack.c.b16 %v3648, %v3640
  %v3881 = vpack.c.b16 %v3649, %v3641
  %v3882 = vpack.c.b16 %v3650, %v3642
  %v3883 = vpack.c.b16 %v3651, %v3643
  %v3884 = vpack.c.b16 %v3652, %v3644
  %v3885 = vpack.c.b16 %v3661, %v3653
  %v3886 = vpack.c.b16 %v3662, %v3654
  %v3887 = vpack.c.b16 %v3663, %v3655
  %v3888 = vpack.c.b16 %v3664, %v3656
  %v3889 = vpack.c.b16 %v3665, %v3657
  %v3890 = vpack.c.b16 %v3666, %v3658
  %v3891 = vpack.c.b16 %v3667, %v3659
  %v3892 = vpack.c.b16 %v3668, %v3660
  %v3893 = vpack.c.b16 %v3677, %v3669
  %v3894 = vpack.c.b16 %v3678, %v3670
  %v3895 = vpack.c.b16 %v3679, %v3671
  %v3896 = vpack.c.b16 %v3680, %v3672
  %v3897 = vpack.c.b16 %v3681, %v3673
  %v3898 = vpack.c.b16 %v3682, %v3674
  %v3899 = vpack.c.b16 %v3683, %v3675
  %v3900 = vpack.c.b16 %v3684, %v3676
  %v3901 = vpack.c.b16 %v3693, %v3685
  %v3902 = vpack.c.b16 %v3694, %v3686
  %v3903 = vpack.c.b16 %v3695, %v3687
  %v3904 = vpack.c.b16 %v3696, %v3688
  %v3905 = vpack.c.b16 %v3697, %v3689
  %v3906 = vpack.c.b16 %v3698, %v3690
  %v3907 = vpack.c.b16 %v3699, %v3691
  %v3908 = vpack.c.b16 %v3700, %v3692
  %v3909 = vpack.c.b16 %v3709, %v3701
  %v3910 = vpack.c.b16 %v3710, %v3702
  %v3911 = vpack.c.b16 %v3711, %v3703
  %v3912 = vpack.c.b16 %v3712, %v3704
  %v3913 = vpack.c.b16 %v3713, %v3705
  %v3914 = vpack.c.b16 %v3714, %v3706
  %v3915 = vpack.c.b16 %v3715, %v3707
  %v3916 = vpack.c.b16 %v3716, %v3708
  %v3917 = vpack.c.b16 %v3725, %v3717
  %v3918 = vpack.c.b16 %v3726, %v3718
  %v3919 = vpack.c.b16 %v3727, %v3719
  %v3920 = vpack.c.b16 %v3728, %v3720
  %v3921 = vpack.c.b16 %v3729, %v3721
  %v3922 = vpack.c.b16 %v3730, %v3722
  %v3923 = vpack.c.b16 %v3731, %v3723
  %v3924 = vpack.c.b16 %v3732, %v3724
  %v3925 = vpack.c.b16 %v3741, %v3733
  %v3926 = vpack.c.b16 %v3742, %v3734
  %v3927 = vpack.c.b16 %v3743, %v3735
  %v3928 = vpack.c.b16 %v3744, %v3736
  %v3929 = vpack.c.b16 %v3745, %v3737
  %v3930 = vpack.c.b16 %v3746, %v3738
  %v3931 = vpack.c.b16 %v3747, %v3739
  %v3932 = vpack.c.b16 %v3748, %v3740
  %v3933 = vpack.c.b16 %v3757, %v3749
  %v3934 = vpack.c.b16 %v3758, %v3750
  %v3935 = vpack.c.b16 %v3759, %v3751
  %v3936 = vpack.c.b16 %v3760, %v3752
  %v3937 = vpack.c.b16 %v3761, %v3753
  %v3938 = vpack.c.b16 %v3762, %v3754
  %v3939 = vpack.c.b16 %v3763, %v3755
  %v3940 = vpack.c.b16 %v3764, %v3756
  %v3941 = vpack.c.b16 %v3773, %v3765
  %v3942 = vpack.c.b16 %v3774, %v3766
  %v3943 = vpack.c.b16 %v3775, %v3767
  %v3944 = vpack.c.b16 %v3776, %v3768
  %v3945 = vpack.c.b16 %v3777, %v3769
  %v3946 = vpack.c.b16 %v3778, %v3770
  %v3947 = vpack.c.b16 %v3779, %v3771
  %v3948 = vpack.c.b16 %v3780, %v3772
  %v3949 = vpack.c.b16 %v3789, %v3781
  %v3950 = vpack.c.b16 %v3790, %v3782
  %v3951 = vpack.c.b16 %v3791, %v3783
  %v3952 = vpack.c.b16 %v3792, %v3784
  %v3953 = vpack.c.b16 %v3793, %v3785
  %v3954 = vpack.c.b16 %v3794, %v3786
  %v3955 = vpack.c.b16 %v3795, %v3787
  %v3956 = vpack.c.b16 %v3796, %v3788
  %v3957 = vpack.c.b16 %v3805, %v3797
  %v3958 = vpack.c.b16 %v3806, %v3798
  %v3959 = vpack.c.b16 %v3807, %v3799
  %v3960 = vpack.c.b16 %v3808, %v3800
  %v3961 = vpack.c.b16 %v3809, %v3801
  %v3962 = vpack.c.b16 %v3810, %v3802
  %v3963 = vpack.c.b16 %v3811, %v3803
  %v3964 = vpack.c.b16 %v3812, %v3804
  %v3965 = vpack.c.b16 %v3821, %v3813
  %v3966 = vpack.c.b16 %v3822, %v3814
  %v3967 = vpack.c.b16 %v3823, %v3815
  %v3968 = vpack.c.b16 %v3824, %v3816
  %v3969 = vpack.c.b16 %v3825, %v3817
  %v3970 = vpack.c.b16 %v3826, %v3818
  %v3971 = vpack.c.b16 %v3827, %v3819
  %v3972 = vpack.c.b16 %v3828, %v3820
  %v3973 = vpack.c.b16 %v3837, %v3829
  %v3974 = vpack.c.b16 %v3838, %v3830
  %v3975 = vpack.c.b16 %v3839, %v3831
  %v3976 = vpack.c.b16 %v3840, %v3832
  %v3977 = vpack.c.b16 %v3841, %v3833
  %v3978 = vpack.c.b16 %v3842, %v3834
  %v3979 = vpack.c.b16 %v3843, %v3835
  %v3980 = vpack.c.b16 %v3844, %v3836
  %v3981 = vpack.c.b16 %v3853, %v3845
  %v3982 = vpack.c.b16 %v3854, %v3846
  %v3983 = vpack.c.b16 %v3855, %v3847
  %v3984 = vpack.c.b16 %v3856, %v3848
  %v3985 = vpack.c.b16 %v3857, %v3849
  %v3986 = vpack.c.b16 %v3858, %v3850
  %v3987 = vpack.c.b16 %v3859, %v3851
  %v3988 = vpack.c.b16 %v3860, %v3852
  %4117 = vmatprep.subr.bf16.mxu0 %v3862
  %4118 = vmatpush1.bf16.msra.mxu0 %v3861
  %4119 = vmatprep.subr.bf16.mxu0 %v3870
  %4120 = vmatpush1.bf16.msra.mxu0 %v3869
  %4121 = vmatprep.subr.bf16.mxu0 %v3878
  %4122 = vmatpush1.bf16.msra.mxu0 %v3877
  %4123 = vmatprep.subr.bf16.mxu0 %v3886
  %4124 = vmatpush1.bf16.msra.mxu0 %v3885
  %4125 = vmatprep.subr.bf16.mxu0 %v3894
  %4126 = vmatpush1.bf16.msra.mxu0 %v3893
  %4127 = vmatprep.subr.bf16.mxu0 %v3902
  %4128 = vmatpush1.bf16.msra.mxu0 %v3901
  %4129 = vmatprep.subr.bf16.mxu0 %v3910
  %4130 = vmatpush1.bf16.msra.mxu0 %v3909
  %4131 = vmatprep.subr.bf16.mxu0 %v3918
  %4132 = vmatpush1.bf16.msra.mxu0 %v3917
  %4133 = vmatprep.subr.bf16.mxu0 %v3926
  %4134 = vmatpush1.bf16.msra.mxu0 %v3925
  %4135 = vmatprep.subr.bf16.mxu0 %v3934
  %4136 = vmatpush1.bf16.msra.mxu0 %v3933
  %4137 = vmatprep.subr.bf16.mxu0 %v3942
  %4138 = vmatpush1.bf16.msra.mxu0 %v3941
  %4139 = vmatprep.subr.bf16.mxu0 %v3950
  %4140 = vmatpush1.bf16.msra.mxu0 %v3949
  %4141 = vmatprep.subr.bf16.mxu0 %v3958
  %4142 = vmatpush1.bf16.msra.mxu0 %v3957
  %4143 = vmatprep.subr.bf16.mxu0 %v3966
  %4144 = vmatpush1.bf16.msra.mxu0 %v3965
  %4145 = vmatprep.subr.bf16.mxu0 %v3974
  %4146 = vmatpush1.bf16.msra.mxu0 %v3973
  %4147 = vmatprep.subr.bf16.mxu0 %v3982
  %4148 = vmatpush1.bf16.msra.mxu0 %v3981
  %4149 = vmatprep.mubr.bf16.mxu0 %v3310
  %4150 = vmatmul.mubr.bf16.gmra.mrb[0].mxu0 %v3309
  %v4151 = vpop.f32.mrb[0].mxu0
  %v4152 = vadd.f32 0.0, %v4151
  %v4153 = vpop.f32.mrb[0].mxu0
  %v4154 = vadd.f32 0.0, %v4153
  %v4155 = vpop.f32.mrb[0].mxu0
  %v4156 = vadd.f32 0.0, %v4155
  %v4157 = vpop.f32.mrb[0].mxu0
  %v4158 = vadd.f32 0.0, %v4157
  %4159 = vdwg.mxu0
  %4160 = vmatprep.subr.bf16.mxu0 %v3864
  %4161 = vmatpush1.bf16.msra.mxu0 %v3863
  %4162 = vmatprep.subr.bf16.mxu0 %v3872
  %4163 = vmatpush1.bf16.msra.mxu0 %v3871
  %4164 = vmatprep.subr.bf16.mxu0 %v3880
  %4165 = vmatpush1.bf16.msra.mxu0 %v3879
  %4166 = vmatprep.subr.bf16.mxu0 %v3888
  %4167 = vmatpush1.bf16.msra.mxu0 %v3887
  %4168 = vmatprep.subr.bf16.mxu0 %v3896
  %4169 = vmatpush1.bf16.msra.mxu0 %v3895
  %4170 = vmatprep.subr.bf16.mxu0 %v3904
  %4171 = vmatpush1.bf16.msra.mxu0 %v3903
  %4172 = vmatprep.subr.bf16.mxu0 %v3912
  %4173 = vmatpush1.bf16.msra.mxu0 %v3911
  %4174 = vmatprep.subr.bf16.mxu0 %v3920
  %4175 = vmatpush1.bf16.msra.mxu0 %v3919
  %4176 = vmatprep.subr.bf16.mxu0 %v3928
  %4177 = vmatpush1.bf16.msra.mxu0 %v3927
  %4178 = vmatprep.subr.bf16.mxu0 %v3936
  %4179 = vmatpush1.bf16.msra.mxu0 %v3935
  %4180 = vmatprep.subr.bf16.mxu0 %v3944
  %4181 = vmatpush1.bf16.msra.mxu0 %v3943
  %4182 = vmatprep.subr.bf16.mxu0 %v3952
  %4183 = vmatpush1.bf16.msra.mxu0 %v3951
  %4184 = vmatprep.subr.bf16.mxu0 %v3960
  %4185 = vmatpush1.bf16.msra.mxu0 %v3959
  %4186 = vmatprep.subr.bf16.mxu0 %v3968
  %4187 = vmatpush1.bf16.msra.mxu0 %v3967
  %4188 = vmatprep.subr.bf16.mxu0 %v3976
  %4189 = vmatpush1.bf16.msra.mxu0 %v3975
  %4190 = vmatprep.subr.bf16.mxu0 %v3984
  %4191 = vmatpush1.bf16.msra.mxu0 %v3983
  %4192 = vmatprep.mubr.bf16.mxu0 %v3310
  %4193 = vmatmul.mubr.bf16.gmra.mrb[0].mxu0 %v3309
  %v4194 = vpop.f32.mrb[0].mxu0
  %v4195 = vadd.f32 0.0, %v4194
  %v4196 = vpop.f32.mrb[0].mxu0
  %v4197 = vadd.f32 0.0, %v4196
  %v4198 = vpop.f32.mrb[0].mxu0
  %v4199 = vadd.f32 0.0, %v4198
  %v4200 = vpop.f32.mrb[0].mxu0
  %v4201 = vadd.f32 0.0, %v4200
  %4202 = vdwg.mxu0
  %4203 = vmatprep.subr.bf16.mxu0 %v3866
  %4204 = vmatpush1.bf16.msra.mxu0 %v3865
  %4205 = vmatprep.subr.bf16.mxu0 %v3874
  %4206 = vmatpush1.bf16.msra.mxu0 %v3873
  %4207 = vmatprep.subr.bf16.mxu0 %v3882
  %4208 = vmatpush1.bf16.msra.mxu0 %v3881
  %4209 = vmatprep.subr.bf16.mxu0 %v3890
  %4210 = vmatpush1.bf16.msra.mxu0 %v3889
  %4211 = vmatprep.subr.bf16.mxu0 %v3898
  %4212 = vmatpush1.bf16.msra.mxu0 %v3897
  %4213 = vmatprep.subr.bf16.mxu0 %v3906
  %4214 = vmatpush1.bf16.msra.mxu0 %v3905
  %4215 = vmatprep.subr.bf16.mxu0 %v3914
  %4216 = vmatpush1.bf16.msra.mxu0 %v3913
  %4217 = vmatprep.subr.bf16.mxu0 %v3922
  %4218 = vmatpush1.bf16.msra.mxu0 %v3921
  %4219 = vmatprep.subr.bf16.mxu0 %v3930
  %4220 = vmatpush1.bf16.msra.mxu0 %v3929
  %4221 = vmatprep.subr.bf16.mxu0 %v3938
  %4222 = vmatpush1.bf16.msra.mxu0 %v3937
  %4223 = vmatprep.subr.bf16.mxu0 %v3946
  %4224 = vmatpush1.bf16.msra.mxu0 %v3945
  %4225 = vmatprep.subr.bf16.mxu0 %v3954
  %4226 = vmatpush1.bf16.msra.mxu0 %v3953
  %4227 = vmatprep.subr.bf16.mxu0 %v3962
  %4228 = vmatpush1.bf16.msra.mxu0 %v3961
  %4229 = vmatprep.subr.bf16.mxu0 %v3970
  %4230 = vmatpush1.bf16.msra.mxu0 %v3969
  %4231 = vmatprep.subr.bf16.mxu0 %v3978
  %4232 = vmatpush1.bf16.msra.mxu0 %v3977
  %4233 = vmatprep.subr.bf16.mxu0 %v3986
  %4234 = vmatpush1.bf16.msra.mxu0 %v3985
  %4235 = vmatprep.mubr.bf16.mxu0 %v3310
  %4236 = vmatmul.mubr.bf16.gmra.mrb[0].mxu0 %v3309
  %v4237 = vpop.f32.mrb[0].mxu0
  %v4238 = vadd.f32 0.0, %v4237
  %v4239 = vpop.f32.mrb[0].mxu0
  %v4240 = vadd.f32 0.0, %v4239
  %v4241 = vpop.f32.mrb[0].mxu0
  %v4242 = vadd.f32 0.0, %v4241
  %v4243 = vpop.f32.mrb[0].mxu0
  %v4244 = vadd.f32 0.0, %v4243
  %4245 = vdwg.mxu0
  %4246 = vmatprep.subr.bf16.mxu0 %v3868
  %4247 = vmatpush1.bf16.msra.mxu0 %v3867
  %4248 = vmatprep.subr.bf16.mxu0 %v3876
  %4249 = vmatpush1.bf16.msra.mxu0 %v3875
  %4250 = vmatprep.subr.bf16.mxu0 %v3884
  %4251 = vmatpush1.bf16.msra.mxu0 %v3883
  %4252 = vmatprep.subr.bf16.mxu0 %v3892
  %4253 = vmatpush1.bf16.msra.mxu0 %v3891
  %4254 = vmatprep.subr.bf16.mxu0 %v3900
  %4255 = vmatpush1.bf16.msra.mxu0 %v3899
  %4256 = vmatprep.subr.bf16.mxu0 %v3908
  %4257 = vmatpush1.bf16.msra.mxu0 %v3907
  %4258 = vmatprep.subr.bf16.mxu0 %v3916
  %4259 = vmatpush1.bf16.msra.mxu0 %v3915
  %4260 = vmatprep.subr.bf16.mxu0 %v3924
  %4261 = vmatpush1.bf16.msra.mxu0 %v3923
  %4262 = vmatprep.subr.bf16.mxu0 %v3932
  %4263 = vmatpush1.bf16.msra.mxu0 %v3931
  %4264 = vmatprep.subr.bf16.mxu0 %v3940
  %4265 = vmatpush1.bf16.msra.mxu0 %v3939
  %4266 = vmatprep.subr.bf16.mxu0 %v3948
  %4267 = vmatpush1.bf16.msra.mxu0 %v3947
  %4268 = vmatprep.subr.bf16.mxu0 %v3956
  %4269 = vmatpush1.bf16.msra.mxu0 %v3955
  %4270 = vmatprep.subr.bf16.mxu0 %v3964
  %4271 = vmatpush1.bf16.msra.mxu0 %v3963
  %4272 = vmatprep.subr.bf16.mxu0 %v3972
  %4273 = vmatpush1.bf16.msra.mxu0 %v3971
  %4274 = vmatprep.subr.bf16.mxu0 %v3980
  %4275 = vmatpush1.bf16.msra.mxu0 %v3979
  %4276 = vmatprep.subr.bf16.mxu0 %v3988
  %4277 = vmatpush1.bf16.msra.mxu0 %v3987
  %4278 = vmatprep.mubr.bf16.mxu0 %v3310
  %4279 = vmatmul.mubr.bf16.gmra.mrb[0].mxu0 %v3309
  %v4280 = vpop.f32.mrb[0].mxu0
  %v4281 = vadd.f32 0.0, %v4280
  %v4282 = vpop.f32.mrb[0].mxu0
  %v4283 = vadd.f32 0.0, %v4282
  %v4284 = vpop.f32.mrb[0].mxu0
  %v4285 = vadd.f32 0.0, %v4284
  %v4286 = vpop.f32.mrb[0].mxu0
  %v4287 = vadd.f32 0.0, %v4286
  %4288 = vdwg.mxu0
  %v4289 = vadd.f32 %v3333, %v4152
  %v4290 = vadd.f32 %v3334, %v4154
  %v4291 = vadd.f32 %v3335, %v4195
  %v4292 = vadd.f32 %v3336, %v4197
  %v4293 = vadd.f32 %v3337, %v4238
  %v4294 = vadd.f32 %v3338, %v4240
  %v4295 = vadd.f32 %v3339, %v4281
  %v4296 = vadd.f32 %v3340, %v4283
  %v4297 = vadd.f32 %v3341, %v4156
  %v4298 = vadd.f32 %v3342, %v4158
  %v4299 = vadd.f32 %v3343, %v4199
  %v4300 = vadd.f32 %v3344, %v4201
  %v4301 = vadd.f32 %v3345, %v4242
  %v4302 = vadd.f32 %v3346, %v4244
  %v4303 = vadd.f32 %v3347, %v4285
  %v4304 = vadd.f32 %v3348, %v4287
  %v4305 = vxor.u32 %v4289, 2147483648
  %v4306 = vxor.u32 %v4290, 2147483648
  %v4307 = vxor.u32 %v4291, 2147483648
  %v4308 = vxor.u32 %v4292, 2147483648
  %v4309 = vxor.u32 %v4293, 2147483648
  %v4310 = vxor.u32 %v4294, 2147483648
  %v4311 = vxor.u32 %v4297, 2147483648
  %v4312 = vxor.u32 %v4298, 2147483648
  %v4313 = vxor.u32 %v4299, 2147483648
  %v4314 = vxor.u32 %v4300, 2147483648
  %v4315 = vxor.u32 %v4301, 2147483648
  %v4316 = vxor.u32 %v4302, 2147483648
  %v4317 = vmul.f32 %v4305, 1.442695
  %v4318 = vpow.pop %v4317
  %v4319 = vmul.f32 %v4306, 1.442695
  %v4320 = vpow.pop %v4319
  %v4321 = vmul.f32 %v4307, 1.442695
  %v4322 = vpow.pop %v4321
  %v4323 = vmul.f32 %v4308, 1.442695
  %v4324 = vpow.pop %v4323
  %v4325 = vmul.f32 %v4309, 1.442695
  %v4326 = vpow.pop %v4325
  %v4327 = vmul.f32 %v4310, 1.442695
  %v4328 = vpow.pop %v4327
  %v4329 = vmul.f32 %v4311, 1.442695
  %v4330 = vpow.pop %v4329
  %v4331 = vmul.f32 %v4312, 1.442695
  %v4332 = vpow.pop %v4331
  %v4333 = vmul.f32 %v4313, 1.442695
  %v4334 = vpow.pop %v4333
  %v4335 = vmul.f32 %v4314, 1.442695
  %v4336 = vpow.pop %v4335
  %v4337 = vmul.f32 %v4315, 1.442695
  %v4338 = vpow.pop %v4337
  %v4339 = vmul.f32 %v4316, 1.442695
  %v4340 = vpow.pop %v4339
  %v4341 = vadd.f32 %v4318, 1.0
  %v4342 = vadd.f32 %v4320, 1.0
  %v4343 = vadd.f32 %v4322, 1.0
  %v4344 = vadd.f32 %v4324, 1.0
  %v4345 = vadd.f32 %v4326, 1.0
  %v4346 = vadd.f32 %v4328, 1.0
  %v4347 = vadd.f32 %v4330, 1.0
  %v4348 = vadd.f32 %v4332, 1.0
  %v4349 = vadd.f32 %v4334, 1.0
  %v4350 = vadd.f32 %v4336, 1.0
  %v4351 = vadd.f32 %v4338, 1.0
  %v4352 = vadd.f32 %v4340, 1.0
  %v4353 = vrcp.pop %v4341
  %v4354 = vmul.f32 1.0, %v4353
  %v4355 = vrcp.pop %v4342
  %v4356 = vmul.f32 1.0, %v4355
  %v4357 = vrcp.pop %v4343
  %v4358 = vmul.f32 1.0, %v4357
  %v4359 = vrcp.pop %v4344
  %v4360 = vmul.f32 1.0, %v4359
  %v4361 = vrcp.pop %v4345
  %v4362 = vmul.f32 1.0, %v4361
  %v4363 = vrcp.pop %v4346
  %v4364 = vmul.f32 1.0, %v4363
  %v4365 = vrcp.pop %v4347
  %v4366 = vmul.f32 1.0, %v4365
  %v4367 = vrcp.pop %v4348
  %v4368 = vmul.f32 1.0, %v4367
  %v4369 = vrcp.pop %v4349
  %v4370 = vmul.f32 1.0, %v4369
  %v4371 = vrcp.pop %v4350
  %v4372 = vmul.f32 1.0, %v4371
  %v4373 = vrcp.pop %v4351
  %v4374 = vmul.f32 1.0, %v4373
  %v4375 = vrcp.pop %v4352
  %v4376 = vmul.f32 1.0, %v4375
  %v4377 = vtanh.pop %v4295
  %v4378 = vtanh.pop %v4296
  %v4379 = vtanh.pop %v4303
  %v4380 = vtanh.pop %v4304
  %v4381 = vmul.f32 %v4358, %v3297
  %v4382 = vmul.f32 %v4360, %v3298
  %v4383 = vmul.f32 %v4370, %v3299
  %v4384 = vmul.f32 %v4372, %v3300
  %v4385 = vmul.f32 %v4354, %v4377
  %v4386 = vmul.f32 %v4356, %v4378
  %v4387 = vmul.f32 %v4366, %v4379
  %v4388 = vmul.f32 %v4368, %v4380
  %v4389 = vadd.f32 %v4381, %v4385
  %v4390 = vadd.f32 %v4382, %v4386
  %v4391 = vadd.f32 %v4383, %v4387
  %v4392 = vadd.f32 %v4384, %v4388
  %v4393 = vtanh.pop %v4389
  %v4394 = vtanh.pop %v4390
  %v4395 = vtanh.pop %v4391
  %v4396 = vtanh.pop %v4392
  %v4397 = vmul.f32 %v4362, %v4393
  %v4398 = vmul.f32 %v4364, %v4394
  %v4399 = vmul.f32 %v4374, %v4395
  %v4400 = vmul.f32 %v4376, %v4396
  %v4401 = vpack.c.bf16 %v4399, %v4397
  %v4402 = vpack.c.bf16 %v4400, %v4398
  %v4405 = vunpack.c.l.b16 %v4401
  %v4406 = vunpack.c.l.b16 %v4402
  %v4407 = vunpack.c.h.b16 %v4401
  %v4408 = vunpack.c.h.b16 %v4402
  %v4409 = vpack.c.b16 %v4406, %v4405
  %v4410 = vpack.c.b16 %v4408, %v4407
  %s4413 = scalar_lea.vmem %s4, 48
  %4414 = vst [vmem:[%s4413] sm:$0xff] %v4409
  %4415 = vst [vmem:[%s4413 + $0x8] sm:$0xff] %v4410
  %s4416 = scalar_lea.vmem %s0, 256
  %v4417 = vld [vmem:[%s4416] sm:$0xff]
  %v4418 = vld [vmem:[%s4416 + $0x8] sm:$0xff]
  %v4419 = vld [vmem:[%s4416 + $0x10] sm:$0xff]
  %v4420 = vld [vmem:[%s4416 + $0x18] sm:$0xff]
  %v4421 = vld [vmem:[%s4416 + $0x20] sm:$0xff]
  %v4422 = vld [vmem:[%s4416 + $0x28] sm:$0xff]
  %v4423 = vld [vmem:[%s4416 + $0x30] sm:$0xff]
  %v4424 = vld [vmem:[%s4416 + $0x38] sm:$0xff]
  %v4425 = vunpack.c.l.bf16 %v4417
  %v4426 = vunpack.c.h.bf16 %v4417
  %v4427 = vunpack.c.l.bf16 %v4418
  %v4428 = vunpack.c.h.bf16 %v4418
  %v4429 = vunpack.c.l.bf16 %v4419
  %v4430 = vunpack.c.h.bf16 %v4419
  %v4431 = vunpack.c.l.bf16 %v4420
  %v4432 = vunpack.c.h.bf16 %v4420
  %v4433 = vunpack.c.l.bf16 %v4421
  %v4434 = vunpack.c.h.bf16 %v4421
  %v4435 = vunpack.c.l.bf16 %v4422
  %v4436 = vunpack.c.h.bf16 %v4422
  %v4437 = vunpack.c.l.bf16 %v4423
  %v4438 = vunpack.c.h.bf16 %v4423
  %v4439 = vunpack.c.l.bf16 %v4424
  %v4440 = vunpack.c.h.bf16 %v4424
  %v4441 = vld [vmem:[%s1] sm:$0xff]
  %v4442 = vld [vmem:[%s1 + $0x8] sm:$0xff]
  %v4443 = vld [vmem:[%s1 + $0x10] sm:$0xff]
  %v4444 = vld [vmem:[%s1 + $0x18] sm:$0xff]
  %v4445 = vld [vmem:[%s1 + $0x20] sm:$0xff]
  %v4446 = vld [vmem:[%s1 + $0x28] sm:$0xff]
  %v4447 = vld [vmem:[%s1 + $0x30] sm:$0xff]
  %v4448 = vld [vmem:[%s1 + $0x38] sm:$0xff]
  %v4449 = vld [vmem:[%s1 + $0x40] sm:$0xff]
  %v4450 = vld [vmem:[%s1 + $0x48] sm:$0xff]
  %v4451 = vld [vmem:[%s1 + $0x50] sm:$0xff]
  %v4452 = vld [vmem:[%s1 + $0x58] sm:$0xff]
  %v4453 = vld [vmem:[%s1 + $0x60] sm:$0xff]
  %v4454 = vld [vmem:[%s1 + $0x68] sm:$0xff]
  %v4455 = vld [vmem:[%s1 + $0x70] sm:$0xff]
  %v4456 = vld [vmem:[%s1 + $0x78] sm:$0xff]
  %v4457 = vld [vmem:[%s1 + $0x80] sm:$0xff]
  %v4458 = vld [vmem:[%s1 + $0x88] sm:$0xff]
  %v4459 = vld [vmem:[%s1 + $0x90] sm:$0xff]
  %v4460 = vld [vmem:[%s1 + $0x98] sm:$0xff]
  %v4461 = vld [vmem:[%s1 + $0xa0] sm:$0xff]
  %v4462 = vld [vmem:[%s1 + $0xa8] sm:$0xff]
  %v4463 = vld [vmem:[%s1 + $0xb0] sm:$0xff]
  %v4464 = vld [vmem:[%s1 + $0xb8] sm:$0xff]
  %v4465 = vld [vmem:[%s1 + $0xc0] sm:$0xff]
  %v4466 = vld [vmem:[%s1 + $0xc8] sm:$0xff]
  %v4467 = vld [vmem:[%s1 + $0xd0] sm:$0xff]
  %v4468 = vld [vmem:[%s1 + $0xd8] sm:$0xff]
  %v4469 = vld [vmem:[%s1 + $0xe0] sm:$0xff]
  %v4470 = vld [vmem:[%s1 + $0xe8] sm:$0xff]
  %v4471 = vld [vmem:[%s1 + $0xf0] sm:$0xff]
  %v4472 = vld [vmem:[%s1 + $0xf8] sm:$0xff]
  %v4473 = vld [vmem:[%s1 + $0x100] sm:$0xff]
  %v4474 = vld [vmem:[%s1 + $0x108] sm:$0xff]
  %v4475 = vld [vmem:[%s1 + $0x110] sm:$0xff]
  %v4476 = vld [vmem:[%s1 + $0x118] sm:$0xff]
  %v4477 = vld [vmem:[%s1 + $0x120] sm:$0xff]
  %v4478 = vld [vmem:[%s1 + $0x128] sm:$0xff]
  %v4479 = vld [vmem:[%s1 + $0x130] sm:$0xff]
  %v4480 = vld [vmem:[%s1 + $0x138] sm:$0xff]
  %v4481 = vld [vmem:[%s1 + $0x140] sm:$0xff]
  %v4482 = vld [vmem:[%s1 + $0x148] sm:$0xff]
  %v4483 = vld [vmem:[%s1 + $0x150] sm:$0xff]
  %v4484 = vld [vmem:[%s1 + $0x158] sm:$0xff]
  %v4485 = vld [vmem:[%s1 + $0x160] sm:$0xff]
  %v4486 = vld [vmem:[%s1 + $0x168] sm:$0xff]
  %v4487 = vld [vmem:[%s1 + $0x170] sm:$0xff]
  %v4488 = vld [vmem:[%s1 + $0x178] sm:$0xff]
  %v4489 = vld [vmem:[%s1 + $0x180] sm:$0xff]
  %v4490 = vld [vmem:[%s1 + $0x188] sm:$0xff]
  %v4491 = vld [vmem:[%s1 + $0x190] sm:$0xff]
  %v4492 = vld [vmem:[%s1 + $0x198] sm:$0xff]
  %v4493 = vld [vmem:[%s1 + $0x1a0] sm:$0xff]
  %v4494 = vld [vmem:[%s1 + $0x1a8] sm:$0xff]
  %v4495 = vld [vmem:[%s1 + $0x1b0] sm:$0xff]
  %v4496 = vld [vmem:[%s1 + $0x1b8] sm:$0xff]
  %v4497 = vld [vmem:[%s1 + $0x1c0] sm:$0xff]
  %v4498 = vld [vmem:[%s1 + $0x1c8] sm:$0xff]
  %v4499 = vld [vmem:[%s1 + $0x1d0] sm:$0xff]
  %v4500 = vld [vmem:[%s1 + $0x1d8] sm:$0xff]
  %v4501 = vld [vmem:[%s1 + $0x1e0] sm:$0xff]
  %v4502 = vld [vmem:[%s1 + $0x1e8] sm:$0xff]
  %v4503 = vld [vmem:[%s1 + $0x1f0] sm:$0xff]
  %v4504 = vld [vmem:[%s1 + $0x1f8] sm:$0xff]
  %v4505 = vld [vmem:[%s1 + $0x200] sm:$0xff]
  %v4506 = vld [vmem:[%s1 + $0x208] sm:$0xff]
  %v4507 = vld [vmem:[%s1 + $0x210] sm:$0xff]
  %v4508 = vld [vmem:[%s1 + $0x218] sm:$0xff]
  %v4509 = vld [vmem:[%s1 + $0x220] sm:$0xff]
  %v4510 = vld [vmem:[%s1 + $0x228] sm:$0xff]
  %v4511 = vld [vmem:[%s1 + $0x230] sm:$0xff]
  %v4512 = vld [vmem:[%s1 + $0x238] sm:$0xff]
  %v4513 = vld [vmem:[%s1 + $0x240] sm:$0xff]
  %v4514 = vld [vmem:[%s1 + $0x248] sm:$0xff]
  %v4515 = vld [vmem:[%s1 + $0x250] sm:$0xff]
  %v4516 = vld [vmem:[%s1 + $0x258] sm:$0xff]
  %v4517 = vld [vmem:[%s1 + $0x260] sm:$0xff]
  %v4518 = vld [vmem:[%s1 + $0x268] sm:$0xff]
  %v4519 = vld [vmem:[%s1 + $0x270] sm:$0xff]
  %v4520 = vld [vmem:[%s1 + $0x278] sm:$0xff]
  %v4521 = vld [vmem:[%s1 + $0x280] sm:$0xff]
  %v4522 = vld [vmem:[%s1 + $0x288] sm:$0xff]
  %v4523 = vld [vmem:[%s1 + $0x290] sm:$0xff]
  %v4524 = vld [vmem:[%s1 + $0x298] sm:$0xff]
  %v4525 = vld [vmem:[%s1 + $0x2a0] sm:$0xff]
  %v4526 = vld [vmem:[%s1 + $0x2a8] sm:$0xff]
  %v4527 = vld [vmem:[%s1 + $0x2b0] sm:$0xff]
  %v4528 = vld [vmem:[%s1 + $0x2b8] sm:$0xff]
  %v4529 = vld [vmem:[%s1 + $0x2c0] sm:$0xff]
  %v4530 = vld [vmem:[%s1 + $0x2c8] sm:$0xff]
  %v4531 = vld [vmem:[%s1 + $0x2d0] sm:$0xff]
  %v4532 = vld [vmem:[%s1 + $0x2d8] sm:$0xff]
  %v4533 = vld [vmem:[%s1 + $0x2e0] sm:$0xff]
  %v4534 = vld [vmem:[%s1 + $0x2e8] sm:$0xff]
  %v4535 = vld [vmem:[%s1 + $0x2f0] sm:$0xff]
  %v4536 = vld [vmem:[%s1 + $0x2f8] sm:$0xff]
  %v4537 = vld [vmem:[%s1 + $0x300] sm:$0xff]
  %v4538 = vld [vmem:[%s1 + $0x308] sm:$0xff]
  %v4539 = vld [vmem:[%s1 + $0x310] sm:$0xff]
  %v4540 = vld [vmem:[%s1 + $0x318] sm:$0xff]
  %v4541 = vld [vmem:[%s1 + $0x320] sm:$0xff]
  %v4542 = vld [vmem:[%s1 + $0x328] sm:$0xff]
  %v4543 = vld [vmem:[%s1 + $0x330] sm:$0xff]
  %v4544 = vld [vmem:[%s1 + $0x338] sm:$0xff]
  %v4545 = vld [vmem:[%s1 + $0x340] sm:$0xff]
  %v4546 = vld [vmem:[%s1 + $0x348] sm:$0xff]
  %v4547 = vld [vmem:[%s1 + $0x350] sm:$0xff]
  %v4548 = vld [vmem:[%s1 + $0x358] sm:$0xff]
  %v4549 = vld [vmem:[%s1 + $0x360] sm:$0xff]
  %v4550 = vld [vmem:[%s1 + $0x368] sm:$0xff]
  %v4551 = vld [vmem:[%s1 + $0x370] sm:$0xff]
  %v4552 = vld [vmem:[%s1 + $0x378] sm:$0xff]
  %v4553 = vld [vmem:[%s1 + $0x380] sm:$0xff]
  %v4554 = vld [vmem:[%s1 + $0x388] sm:$0xff]
  %v4555 = vld [vmem:[%s1 + $0x390] sm:$0xff]
  %v4556 = vld [vmem:[%s1 + $0x398] sm:$0xff]
  %v4557 = vld [vmem:[%s1 + $0x3a0] sm:$0xff]
  %v4558 = vld [vmem:[%s1 + $0x3a8] sm:$0xff]
  %v4559 = vld [vmem:[%s1 + $0x3b0] sm:$0xff]
  %v4560 = vld [vmem:[%s1 + $0x3b8] sm:$0xff]
  %v4561 = vld [vmem:[%s1 + $0x3c0] sm:$0xff]
  %v4562 = vld [vmem:[%s1 + $0x3c8] sm:$0xff]
  %v4563 = vld [vmem:[%s1 + $0x3d0] sm:$0xff]
  %v4564 = vld [vmem:[%s1 + $0x3d8] sm:$0xff]
  %v4565 = vld [vmem:[%s1 + $0x3e0] sm:$0xff]
  %v4566 = vld [vmem:[%s1 + $0x3e8] sm:$0xff]
  %v4567 = vld [vmem:[%s1 + $0x3f0] sm:$0xff]
  %v4568 = vld [vmem:[%s1 + $0x3f8] sm:$0xff]
  %v4697 = vunpack.c.l.b16 %v4441
  %v4698 = vunpack.c.h.b16 %v4441
  %v4699 = vunpack.c.l.b16 %v4442
  %v4700 = vunpack.c.h.b16 %v4442
  %v4701 = vunpack.c.l.b16 %v4443
  %v4702 = vunpack.c.h.b16 %v4443
  %v4703 = vunpack.c.l.b16 %v4444
  %v4704 = vunpack.c.h.b16 %v4444
  %v4705 = vunpack.c.l.b16 %v4445
  %v4706 = vunpack.c.h.b16 %v4445
  %v4707 = vunpack.c.l.b16 %v4446
  %v4708 = vunpack.c.h.b16 %v4446
  %v4709 = vunpack.c.l.b16 %v4447
  %v4710 = vunpack.c.h.b16 %v4447
  %v4711 = vunpack.c.l.b16 %v4448
  %v4712 = vunpack.c.h.b16 %v4448
  %v4713 = vunpack.c.l.b16 %v4449
  %v4714 = vunpack.c.h.b16 %v4449
  %v4715 = vunpack.c.l.b16 %v4450
  %v4716 = vunpack.c.h.b16 %v4450
  %v4717 = vunpack.c.l.b16 %v4451
  %v4718 = vunpack.c.h.b16 %v4451
  %v4719 = vunpack.c.l.b16 %v4452
  %v4720 = vunpack.c.h.b16 %v4452
  %v4721 = vunpack.c.l.b16 %v4453
  %v4722 = vunpack.c.h.b16 %v4453
  %v4723 = vunpack.c.l.b16 %v4454
  %v4724 = vunpack.c.h.b16 %v4454
  %v4725 = vunpack.c.l.b16 %v4455
  %v4726 = vunpack.c.h.b16 %v4455
  %v4727 = vunpack.c.l.b16 %v4456
  %v4728 = vunpack.c.h.b16 %v4456
  %v4729 = vunpack.c.l.b16 %v4457
  %v4730 = vunpack.c.h.b16 %v4457
  %v4731 = vunpack.c.l.b16 %v4458
  %v4732 = vunpack.c.h.b16 %v4458
  %v4733 = vunpack.c.l.b16 %v4459
  %v4734 = vunpack.c.h.b16 %v4459
  %v4735 = vunpack.c.l.b16 %v4460
  %v4736 = vunpack.c.h.b16 %v4460
  %v4737 = vunpack.c.l.b16 %v4461
  %v4738 = vunpack.c.h.b16 %v4461
  %v4739 = vunpack.c.l.b16 %v4462
  %v4740 = vunpack.c.h.b16 %v4462
  %v4741 = vunpack.c.l.b16 %v4463
  %v4742 = vunpack.c.h.b16 %v4463
  %v4743 = vunpack.c.l.b16 %v4464
  %v4744 = vunpack.c.h.b16 %v4464
  %v4745 = vunpack.c.l.b16 %v4465
  %v4746 = vunpack.c.h.b16 %v4465
  %v4747 = vunpack.c.l.b16 %v4466
  %v4748 = vunpack.c.h.b16 %v4466
  %v4749 = vunpack.c.l.b16 %v4467
  %v4750 = vunpack.c.h.b16 %v4467
  %v4751 = vunpack.c.l.b16 %v4468
  %v4752 = vunpack.c.h.b16 %v4468
  %v4753 = vunpack.c.l.b16 %v4469
  %v4754 = vunpack.c.h.b16 %v4469
  %v4755 = vunpack.c.l.b16 %v4470
  %v4756 = vunpack.c.h.b16 %v4470
  %v4757 = vunpack.c.l.b16 %v4471
  %v4758 = vunpack.c.h.b16 %v4471
  %v4759 = vunpack.c.l.b16 %v4472
  %v4760 = vunpack.c.h.b16 %v4472
  %v4761 = vunpack.c.l.b16 %v4473
  %v4762 = vunpack.c.h.b16 %v4473
  %v4763 = vunpack.c.l.b16 %v4474
  %v4764 = vunpack.c.h.b16 %v4474
  %v4765 = vunpack.c.l.b16 %v4475
  %v4766 = vunpack.c.h.b16 %v4475
  %v4767 = vunpack.c.l.b16 %v4476
  %v4768 = vunpack.c.h.b16 %v4476
  %v4769 = vunpack.c.l.b16 %v4477
  %v4770 = vunpack.c.h.b16 %v4477
  %v4771 = vunpack.c.l.b16 %v4478
  %v4772 = vunpack.c.h.b16 %v4478
  %v4773 = vunpack.c.l.b16 %v4479
  %v4774 = vunpack.c.h.b16 %v4479
  %v4775 = vunpack.c.l.b16 %v4480
  %v4776 = vunpack.c.h.b16 %v4480
  %v4777 = vunpack.c.l.b16 %v4481
  %v4778 = vunpack.c.h.b16 %v4481
  %v4779 = vunpack.c.l.b16 %v4482
  %v4780 = vunpack.c.h.b16 %v4482
  %v4781 = vunpack.c.l.b16 %v4483
  %v4782 = vunpack.c.h.b16 %v4483
  %v4783 = vunpack.c.l.b16 %v4484
  %v4784 = vunpack.c.h.b16 %v4484
  %v4785 = vunpack.c.l.b16 %v4485
  %v4786 = vunpack.c.h.b16 %v4485
  %v4787 = vunpack.c.l.b16 %v4486
  %v4788 = vunpack.c.h.b16 %v4486
  %v4789 = vunpack.c.l.b16 %v4487
  %v4790 = vunpack.c.h.b16 %v4487
  %v4791 = vunpack.c.l.b16 %v4488
  %v4792 = vunpack.c.h.b16 %v4488
  %v4793 = vunpack.c.l.b16 %v4489
  %v4794 = vunpack.c.h.b16 %v4489
  %v4795 = vunpack.c.l.b16 %v4490
  %v4796 = vunpack.c.h.b16 %v4490
  %v4797 = vunpack.c.l.b16 %v4491
  %v4798 = vunpack.c.h.b16 %v4491
  %v4799 = vunpack.c.l.b16 %v4492
  %v4800 = vunpack.c.h.b16 %v4492
  %v4801 = vunpack.c.l.b16 %v4493
  %v4802 = vunpack.c.h.b16 %v4493
  %v4803 = vunpack.c.l.b16 %v4494
  %v4804 = vunpack.c.h.b16 %v4494
  %v4805 = vunpack.c.l.b16 %v4495
  %v4806 = vunpack.c.h.b16 %v4495
  %v4807 = vunpack.c.l.b16 %v4496
  %v4808 = vunpack.c.h.b16 %v4496
  %v4809 = vunpack.c.l.b16 %v4497
  %v4810 = vunpack.c.h.b16 %v4497
  %v4811 = vunpack.c.l.b16 %v4498
  %v4812 = vunpack.c.h.b16 %v4498
  %v4813 = vunpack.c.l.b16 %v4499
  %v4814 = vunpack.c.h.b16 %v4499
  %v4815 = vunpack.c.l.b16 %v4500
  %v4816 = vunpack.c.h.b16 %v4500
  %v4817 = vunpack.c.l.b16 %v4501
  %v4818 = vunpack.c.h.b16 %v4501
  %v4819 = vunpack.c.l.b16 %v4502
  %v4820 = vunpack.c.h.b16 %v4502
  %v4821 = vunpack.c.l.b16 %v4503
  %v4822 = vunpack.c.h.b16 %v4503
  %v4823 = vunpack.c.l.b16 %v4504
  %v4824 = vunpack.c.h.b16 %v4504
  %v4825 = vunpack.c.l.b16 %v4505
  %v4826 = vunpack.c.h.b16 %v4505
  %v4827 = vunpack.c.l.b16 %v4506
  %v4828 = vunpack.c.h.b16 %v4506
  %v4829 = vunpack.c.l.b16 %v4507
  %v4830 = vunpack.c.h.b16 %v4507
  %v4831 = vunpack.c.l.b16 %v4508
  %v4832 = vunpack.c.h.b16 %v4508
  %v4833 = vunpack.c.l.b16 %v4509
  %v4834 = vunpack.c.h.b16 %v4509
  %v4835 = vunpack.c.l.b16 %v4510
  %v4836 = vunpack.c.h.b16 %v4510
  %v4837 = vunpack.c.l.b16 %v4511
  %v4838 = vunpack.c.h.b16 %v4511
  %v4839 = vunpack.c.l.b16 %v4512
  %v4840 = vunpack.c.h.b16 %v4512
  %v4841 = vunpack.c.l.b16 %v4513
  %v4842 = vunpack.c.h.b16 %v4513
  %v4843 = vunpack.c.l.b16 %v4514
  %v4844 = vunpack.c.h.b16 %v4514
  %v4845 = vunpack.c.l.b16 %v4515
  %v4846 = vunpack.c.h.b16 %v4515
  %v4847 = vunpack.c.l.b16 %v4516
  %v4848 = vunpack.c.h.b16 %v4516
  %v4849 = vunpack.c.l.b16 %v4517
  %v4850 = vunpack.c.h.b16 %v4517
  %v4851 = vunpack.c.l.b16 %v4518
  %v4852 = vunpack.c.h.b16 %v4518
  %v4853 = vunpack.c.l.b16 %v4519
  %v4854 = vunpack.c.h.b16 %v4519
  %v4855 = vunpack.c.l.b16 %v4520
  %v4856 = vunpack.c.h.b16 %v4520
  %v4857 = vunpack.c.l.b16 %v4521
  %v4858 = vunpack.c.h.b16 %v4521
  %v4859 = vunpack.c.l.b16 %v4522
  %v4860 = vunpack.c.h.b16 %v4522
  %v4861 = vunpack.c.l.b16 %v4523
  %v4862 = vunpack.c.h.b16 %v4523
  %v4863 = vunpack.c.l.b16 %v4524
  %v4864 = vunpack.c.h.b16 %v4524
  %v4865 = vunpack.c.l.b16 %v4525
  %v4866 = vunpack.c.h.b16 %v4525
  %v4867 = vunpack.c.l.b16 %v4526
  %v4868 = vunpack.c.h.b16 %v4526
  %v4869 = vunpack.c.l.b16 %v4527
  %v4870 = vunpack.c.h.b16 %v4527
  %v4871 = vunpack.c.l.b16 %v4528
  %v4872 = vunpack.c.h.b16 %v4528
  %v4873 = vunpack.c.l.b16 %v4529
  %v4874 = vunpack.c.h.b16 %v4529
  %v4875 = vunpack.c.l.b16 %v4530
  %v4876 = vunpack.c.h.b16 %v4530
  %v4877 = vunpack.c.l.b16 %v4531
  %v4878 = vunpack.c.h.b16 %v4531
  %v4879 = vunpack.c.l.b16 %v4532
  %v4880 = vunpack.c.h.b16 %v4532
  %v4881 = vunpack.c.l.b16 %v4533
  %v4882 = vunpack.c.h.b16 %v4533
  %v4883 = vunpack.c.l.b16 %v4534
  %v4884 = vunpack.c.h.b16 %v4534
  %v4885 = vunpack.c.l.b16 %v4535
  %v4886 = vunpack.c.h.b16 %v4535
  %v4887 = vunpack.c.l.b16 %v4536
  %v4888 = vunpack.c.h.b16 %v4536
  %v4889 = vunpack.c.l.b16 %v4537
  %v4890 = vunpack.c.h.b16 %v4537
  %v4891 = vunpack.c.l.b16 %v4538
  %v4892 = vunpack.c.h.b16 %v4538
  %v4893 = vunpack.c.l.b16 %v4539
  %v4894 = vunpack.c.h.b16 %v4539
  %v4895 = vunpack.c.l.b16 %v4540
  %v4896 = vunpack.c.h.b16 %v4540
  %v4897 = vunpack.c.l.b16 %v4541
  %v4898 = vunpack.c.h.b16 %v4541
  %v4899 = vunpack.c.l.b16 %v4542
  %v4900 = vunpack.c.h.b16 %v4542
  %v4901 = vunpack.c.l.b16 %v4543
  %v4902 = vunpack.c.h.b16 %v4543
  %v4903 = vunpack.c.l.b16 %v4544
  %v4904 = vunpack.c.h.b16 %v4544
  %v4905 = vunpack.c.l.b16 %v4545
  %v4906 = vunpack.c.h.b16 %v4545
  %v4907 = vunpack.c.l.b16 %v4546
  %v4908 = vunpack.c.h.b16 %v4546
  %v4909 = vunpack.c.l.b16 %v4547
  %v4910 = vunpack.c.h.b16 %v4547
  %v4911 = vunpack.c.l.b16 %v4548
  %v4912 = vunpack.c.h.b16 %v4548
  %v4913 = vunpack.c.l.b16 %v4549
  %v4914 = vunpack.c.h.b16 %v4549
  %v4915 = vunpack.c.l.b16 %v4550
  %v4916 = vunpack.c.h.b16 %v4550
  %v4917 = vunpack.c.l.b16 %v4551
  %v4918 = vunpack.c.h.b16 %v4551
  %v4919 = vunpack.c.l.b16 %v4552
  %v4920 = vunpack.c.h.b16 %v4552
  %v4921 = vunpack.c.l.b16 %v4553
  %v4922 = vunpack.c.h.b16 %v4553
  %v4923 = vunpack.c.l.b16 %v4554
  %v4924 = vunpack.c.h.b16 %v4554
  %v4925 = vunpack.c.l.b16 %v4555
  %v4926 = vunpack.c.h.b16 %v4555
  %v4927 = vunpack.c.l.b16 %v4556
  %v4928 = vunpack.c.h.b16 %v4556
  %v4929 = vunpack.c.l.b16 %v4557
  %v4930 = vunpack.c.h.b16 %v4557
  %v4931 = vunpack.c.l.b16 %v4558
  %v4932 = vunpack.c.h.b16 %v4558
  %v4933 = vunpack.c.l.b16 %v4559
  %v4934 = vunpack.c.h.b16 %v4559
  %v4935 = vunpack.c.l.b16 %v4560
  %v4936 = vunpack.c.h.b16 %v4560
  %v4937 = vunpack.c.l.b16 %v4561
  %v4938 = vunpack.c.h.b16 %v4561
  %v4939 = vunpack.c.l.b16 %v4562
  %v4940 = vunpack.c.h.b16 %v4562
  %v4941 = vunpack.c.l.b16 %v4563
  %v4942 = vunpack.c.h.b16 %v4563
  %v4943 = vunpack.c.l.b16 %v4564
  %v4944 = vunpack.c.h.b16 %v4564
  %v4945 = vunpack.c.l.b16 %v4565
  %v4946 = vunpack.c.h.b16 %v4565
  %v4947 = vunpack.c.l.b16 %v4566
  %v4948 = vunpack.c.h.b16 %v4566
  %v4949 = vunpack.c.l.b16 %v4567
  %v4950 = vunpack.c.h.b16 %v4567
  %v4951 = vunpack.c.l.b16 %v4568
  %v4952 = vunpack.c.h.b16 %v4568
  %v4953 = vpack.c.b16 %v4705, %v4697
  %v4954 = vpack.c.b16 %v4706, %v4698
  %v4955 = vpack.c.b16 %v4707, %v4699
  %v4956 = vpack.c.b16 %v4708, %v4700
  %v4957 = vpack.c.b16 %v4709, %v4701
  %v4958 = vpack.c.b16 %v4710, %v4702
  %v4959 = vpack.c.b16 %v4711, %v4703
  %v4960 = vpack.c.b16 %v4712, %v4704
  %v4961 = vpack.c.b16 %v4721, %v4713
  %v4962 = vpack.c.b16 %v4722, %v4714
  %v4963 = vpack.c.b16 %v4723, %v4715
  %v4964 = vpack.c.b16 %v4724, %v4716
  %v4965 = vpack.c.b16 %v4725, %v4717
  %v4966 = vpack.c.b16 %v4726, %v4718
  %v4967 = vpack.c.b16 %v4727, %v4719
  %v4968 = vpack.c.b16 %v4728, %v4720
  %v4969 = vpack.c.b16 %v4737, %v4729
  %v4970 = vpack.c.b16 %v4738, %v4730
  %v4971 = vpack.c.b16 %v4739, %v4731
  %v4972 = vpack.c.b16 %v4740, %v4732
  %v4973 = vpack.c.b16 %v4741, %v4733
  %v4974 = vpack.c.b16 %v4742, %v4734
  %v4975 = vpack.c.b16 %v4743, %v4735
  %v4976 = vpack.c.b16 %v4744, %v4736
  %v4977 = vpack.c.b16 %v4753, %v4745
  %v4978 = vpack.c.b16 %v4754, %v4746
  %v4979 = vpack.c.b16 %v4755, %v4747
  %v4980 = vpack.c.b16 %v4756, %v4748
  %v4981 = vpack.c.b16 %v4757, %v4749
  %v4982 = vpack.c.b16 %v4758, %v4750
  %v4983 = vpack.c.b16 %v4759, %v4751
  %v4984 = vpack.c.b16 %v4760, %v4752
  %v4985 = vpack.c.b16 %v4769, %v4761
  %v4986 = vpack.c.b16 %v4770, %v4762
  %v4987 = vpack.c.b16 %v4771, %v4763
  %v4988 = vpack.c.b16 %v4772, %v4764
  %v4989 = vpack.c.b16 %v4773, %v4765
  %v4990 = vpack.c.b16 %v4774, %v4766
  %v4991 = vpack.c.b16 %v4775, %v4767
  %v4992 = vpack.c.b16 %v4776, %v4768
  %v4993 = vpack.c.b16 %v4785, %v4777
  %v4994 = vpack.c.b16 %v4786, %v4778
  %v4995 = vpack.c.b16 %v4787, %v4779
  %v4996 = vpack.c.b16 %v4788, %v4780
  %v4997 = vpack.c.b16 %v4789, %v4781
  %v4998 = vpack.c.b16 %v4790, %v4782
  %v4999 = vpack.c.b16 %v4791, %v4783
  %v5000 = vpack.c.b16 %v4792, %v4784
  %v5001 = vpack.c.b16 %v4801, %v4793
  %v5002 = vpack.c.b16 %v4802, %v4794
  %v5003 = vpack.c.b16 %v4803, %v4795
  %v5004 = vpack.c.b16 %v4804, %v4796
  %v5005 = vpack.c.b16 %v4805, %v4797
  %v5006 = vpack.c.b16 %v4806, %v4798
  %v5007 = vpack.c.b16 %v4807, %v4799
  %v5008 = vpack.c.b16 %v4808, %v4800
  %v5009 = vpack.c.b16 %v4817, %v4809
  %v5010 = vpack.c.b16 %v4818, %v4810
  %v5011 = vpack.c.b16 %v4819, %v4811
  %v5012 = vpack.c.b16 %v4820, %v4812
  %v5013 = vpack.c.b16 %v4821, %v4813
  %v5014 = vpack.c.b16 %v4822, %v4814
  %v5015 = vpack.c.b16 %v4823, %v4815
  %v5016 = vpack.c.b16 %v4824, %v4816
  %v5017 = vpack.c.b16 %v4833, %v4825
  %v5018 = vpack.c.b16 %v4834, %v4826
  %v5019 = vpack.c.b16 %v4835, %v4827
  %v5020 = vpack.c.b16 %v4836, %v4828
  %v5021 = vpack.c.b16 %v4837, %v4829
  %v5022 = vpack.c.b16 %v4838, %v4830
  %v5023 = vpack.c.b16 %v4839, %v4831
  %v5024 = vpack.c.b16 %v4840, %v4832
  %v5025 = vpack.c.b16 %v4849, %v4841
  %v5026 = vpack.c.b16 %v4850, %v4842
  %v5027 = vpack.c.b16 %v4851, %v4843
  %v5028 = vpack.c.b16 %v4852, %v4844
  %v5029 = vpack.c.b16 %v4853, %v4845
  %v5030 = vpack.c.b16 %v4854, %v4846
  %v5031 = vpack.c.b16 %v4855, %v4847
  %v5032 = vpack.c.b16 %v4856, %v4848
  %v5033 = vpack.c.b16 %v4865, %v4857
  %v5034 = vpack.c.b16 %v4866, %v4858
  %v5035 = vpack.c.b16 %v4867, %v4859
  %v5036 = vpack.c.b16 %v4868, %v4860
  %v5037 = vpack.c.b16 %v4869, %v4861
  %v5038 = vpack.c.b16 %v4870, %v4862
  %v5039 = vpack.c.b16 %v4871, %v4863
  %v5040 = vpack.c.b16 %v4872, %v4864
  %v5041 = vpack.c.b16 %v4881, %v4873
  %v5042 = vpack.c.b16 %v4882, %v4874
  %v5043 = vpack.c.b16 %v4883, %v4875
  %v5044 = vpack.c.b16 %v4884, %v4876
  %v5045 = vpack.c.b16 %v4885, %v4877
  %v5046 = vpack.c.b16 %v4886, %v4878
  %v5047 = vpack.c.b16 %v4887, %v4879
  %v5048 = vpack.c.b16 %v4888, %v4880
  %v5049 = vpack.c.b16 %v4897, %v4889
  %v5050 = vpack.c.b16 %v4898, %v4890
  %v5051 = vpack.c.b16 %v4899, %v4891
  %v5052 = vpack.c.b16 %v4900, %v4892
  %v5053 = vpack.c.b16 %v4901, %v4893
  %v5054 = vpack.c.b16 %v4902, %v4894
  %v5055 = vpack.c.b16 %v4903, %v4895
  %v5056 = vpack.c.b16 %v4904, %v4896
  %v5057 = vpack.c.b16 %v4913, %v4905
  %v5058 = vpack.c.b16 %v4914, %v4906
  %v5059 = vpack.c.b16 %v4915, %v4907
  %v5060 = vpack.c.b16 %v4916, %v4908
  %v5061 = vpack.c.b16 %v4917, %v4909
  %v5062 = vpack.c.b16 %v4918, %v4910
  %v5063 = vpack.c.b16 %v4919, %v4911
  %v5064 = vpack.c.b16 %v4920, %v4912
  %v5065 = vpack.c.b16 %v4929, %v4921
  %v5066 = vpack.c.b16 %v4930, %v4922
  %v5067 = vpack.c.b16 %v4931, %v4923
  %v5068 = vpack.c.b16 %v4932, %v4924
  %v5069 = vpack.c.b16 %v4933, %v4925
  %v5070 = vpack.c.b16 %v4934, %v4926
  %v5071 = vpack.c.b16 %v4935, %v4927
  %v5072 = vpack.c.b16 %v4936, %v4928
  %v5073 = vpack.c.b16 %v4945, %v4937
  %v5074 = vpack.c.b16 %v4946, %v4938
  %v5075 = vpack.c.b16 %v4947, %v4939
  %v5076 = vpack.c.b16 %v4948, %v4940
  %v5077 = vpack.c.b16 %v4949, %v4941
  %v5078 = vpack.c.b16 %v4950, %v4942
  %v5079 = vpack.c.b16 %v4951, %v4943
  %v5080 = vpack.c.b16 %v4952, %v4944
  %5209 = vmatprep.subr.bf16.mxu0 %v4954
  %5210 = vmatpush1.bf16.msra.mxu0 %v4953
  %5211 = vmatprep.subr.bf16.mxu0 %v4962
  %5212 = vmatpush1.bf16.msra.mxu0 %v4961
  %5213 = vmatprep.subr.bf16.mxu0 %v4970
  %5214 = vmatpush1.bf16.msra.mxu0 %v4969
  %5215 = vmatprep.subr.bf16.mxu0 %v4978
  %5216 = vmatpush1.bf16.msra.mxu0 %v4977
  %5217 = vmatprep.subr.bf16.mxu0 %v4986
  %5218 = vmatpush1.bf16.msra.mxu0 %v4985
  %5219 = vmatprep.subr.bf16.mxu0 %v4994
  %5220 = vmatpush1.bf16.msra.mxu0 %v4993
  %5221 = vmatprep.subr.bf16.mxu0 %v5002
  %5222 = vmatpush1.bf16.msra.mxu0 %v5001
  %5223 = vmatprep.subr.bf16.mxu0 %v5010
  %5224 = vmatpush1.bf16.msra.mxu0 %v5009
  %5225 = vmatprep.subr.bf16.mxu0 %v5018
  %5226 = vmatpush1.bf16.msra.mxu0 %v5017
  %5227 = vmatprep.subr.bf16.mxu0 %v5026
  %5228 = vmatpush1.bf16.msra.mxu0 %v5025
  %5229 = vmatprep.subr.bf16.mxu0 %v5034
  %5230 = vmatpush1.bf16.msra.mxu0 %v5033
  %5231 = vmatprep.subr.bf16.mxu0 %v5042
  %5232 = vmatpush1.bf16.msra.mxu0 %v5041
  %5233 = vmatprep.subr.bf16.mxu0 %v5050
  %5234 = vmatpush1.bf16.msra.mxu0 %v5049
  %5235 = vmatprep.subr.bf16.mxu0 %v5058
  %5236 = vmatpush1.bf16.msra.mxu0 %v5057
  %5237 = vmatprep.subr.bf16.mxu0 %v5066
  %5238 = vmatpush1.bf16.msra.mxu0 %v5065
  %5239 = vmatprep.subr.bf16.mxu0 %v5074
  %5240 = vmatpush1.bf16.msra.mxu0 %v5073
  %5241 = vmatprep.mubr.bf16.mxu0 %v4402
  %5242 = vmatmul.mubr.bf16.gmra.mrb[0].mxu0 %v4401
  %v5243 = vpop.f32.mrb[0].mxu0
  %v5244 = vadd.f32 0.0, %v5243
  %v5245 = vpop.f32.mrb[0].mxu0
  %v5246 = vadd.f32 0.0, %v5245
  %v5247 = vpop.f32.mrb[0].mxu0
  %v5248 = vadd.f32 0.0, %v5247
  %v5249 = vpop.f32.mrb[0].mxu0
  %v5250 = vadd.f32 0.0, %v5249
  %5251 = vdwg.mxu0
  %5252 = vmatprep.subr.bf16.mxu0 %v4956
  %5253 = vmatpush1.bf16.msra.mxu0 %v4955
  %5254 = vmatprep.subr.bf16.mxu0 %v4964
  %5255 = vmatpush1.bf16.msra.mxu0 %v4963
  %5256 = vmatprep.subr.bf16.mxu0 %v4972
  %5257 = vmatpush1.bf16.msra.mxu0 %v4971
  %5258 = vmatprep.subr.bf16.mxu0 %v4980
  %5259 = vmatpush1.bf16.msra.mxu0 %v4979
  %5260 = vmatprep.subr.bf16.mxu0 %v4988
  %5261 = vmatpush1.bf16.msra.mxu0 %v4987
  %5262 = vmatprep.subr.bf16.mxu0 %v4996
  %5263 = vmatpush1.bf16.msra.mxu0 %v4995
  %5264 = vmatprep.subr.bf16.mxu0 %v5004
  %5265 = vmatpush1.bf16.msra.mxu0 %v5003
  %5266 = vmatprep.subr.bf16.mxu0 %v5012
  %5267 = vmatpush1.bf16.msra.mxu0 %v5011
  %5268 = vmatprep.subr.bf16.mxu0 %v5020
  %5269 = vmatpush1.bf16.msra.mxu0 %v5019
  %5270 = vmatprep.subr.bf16.mxu0 %v5028
  %5271 = vmatpush1.bf16.msra.mxu0 %v5027
  %5272 = vmatprep.subr.bf16.mxu0 %v5036
  %5273 = vmatpush1.bf16.msra.mxu0 %v5035
  %5274 = vmatprep.subr.bf16.mxu0 %v5044
  %5275 = vmatpush1.bf16.msra.mxu0 %v5043
  %5276 = vmatprep.subr.bf16.mxu0 %v5052
  %5277 = vmatpush1.bf16.msra.mxu0 %v5051
  %5278 = vmatprep.subr.bf16.mxu0 %v5060
  %5279 = vmatpush1.bf16.msra.mxu0 %v5059
  %5280 = vmatprep.subr.bf16.mxu0 %v5068
  %5281 = vmatpush1.bf16.msra.mxu0 %v5067
  %5282 = vmatprep.subr.bf16.mxu0 %v5076
  %5283 = vmatpush1.bf16.msra.mxu0 %v5075
  %5284 = vmatprep.mubr.bf16.mxu0 %v4402
  %5285 = vmatmul.mubr.bf16.gmra.mrb[0].mxu0 %v4401
  %v5286 = vpop.f32.mrb[0].mxu0
  %v5287 = vadd.f32 0.0, %v5286
  %v5288 = vpop.f32.mrb[0].mxu0
  %v5289 = vadd.f32 0.0, %v5288
  %v5290 = vpop.f32.mrb[0].mxu0
  %v5291 = vadd.f32 0.0, %v5290
  %v5292 = vpop.f32.mrb[0].mxu0
  %v5293 = vadd.f32 0.0, %v5292
  %5294 = vdwg.mxu0
  %5295 = vmatprep.subr.bf16.mxu0 %v4958
  %5296 = vmatpush1.bf16.msra.mxu0 %v4957
  %5297 = vmatprep.subr.bf16.mxu0 %v4966
  %5298 = vmatpush1.bf16.msra.mxu0 %v4965
  %5299 = vmatprep.subr.bf16.mxu0 %v4974
  %5300 = vmatpush1.bf16.msra.mxu0 %v4973
  %5301 = vmatprep.subr.bf16.mxu0 %v4982
  %5302 = vmatpush1.bf16.msra.mxu0 %v4981
  %5303 = vmatprep.subr.bf16.mxu0 %v4990
  %5304 = vmatpush1.bf16.msra.mxu0 %v4989
  %5305 = vmatprep.subr.bf16.mxu0 %v4998
  %5306 = vmatpush1.bf16.msra.mxu0 %v4997
  %5307 = vmatprep.subr.bf16.mxu0 %v5006
  %5308 = vmatpush1.bf16.msra.mxu0 %v5005
  %5309 = vmatprep.subr.bf16.mxu0 %v5014
  %5310 = vmatpush1.bf16.msra.mxu0 %v5013
  %5311 = vmatprep.subr.bf16.mxu0 %v5022
  %5312 = vmatpush1.bf16.msra.mxu0 %v5021
  %5313 = vmatprep.subr.bf16.mxu0 %v5030
  %5314 = vmatpush1.bf16.msra.mxu0 %v5029
  %5315 = vmatprep.subr.bf16.mxu0 %v5038
  %5316 = vmatpush1.bf16.msra.mxu0 %v5037
  %5317 = vmatprep.subr.bf16.mxu0 %v5046
  %5318 = vmatpush1.bf16.msra.mxu0 %v5045
  %5319 = vmatprep.subr.bf16.mxu0 %v5054
  %5320 = vmatpush1.bf16.msra.mxu0 %v5053
  %5321 = vmatprep.subr.bf16.mxu0 %v5062
  %5322 = vmatpush1.bf16.msra.mxu0 %v5061
  %5323 = vmatprep.subr.bf16.mxu0 %v5070
  %5324 = vmatpush1.bf16.msra.mxu0 %v5069
  %5325 = vmatprep.subr.bf16.mxu0 %v5078
  %5326 = vmatpush1.bf16.msra.mxu0 %v5077
  %5327 = vmatprep.mubr.bf16.mxu0 %v4402
  %5328 = vmatmul.mubr.bf16.gmra.mrb[0].mxu0 %v4401
  %v5329 = vpop.f32.mrb[0].mxu0
  %v5330 = vadd.f32 0.0, %v5329
  %v5331 = vpop.f32.mrb[0].mxu0
  %v5332 = vadd.f32 0.0, %v5331
  %v5333 = vpop.f32.mrb[0].mxu0
  %v5334 = vadd.f32 0.0, %v5333
  %v5335 = vpop.f32.mrb[0].mxu0
  %v5336 = vadd.f32 0.0, %v5335
  %5337 = vdwg.mxu0
  %5338 = vmatprep.subr.bf16.mxu0 %v4960
  %5339 = vmatpush1.bf16.msra.mxu0 %v4959
  %5340 = vmatprep.subr.bf16.mxu0 %v4968
  %5341 = vmatpush1.bf16.msra.mxu0 %v4967
  %5342 = vmatprep.subr.bf16.mxu0 %v4976
  %5343 = vmatpush1.bf16.msra.mxu0 %v4975
  %5344 = vmatprep.subr.bf16.mxu0 %v4984
  %5345 = vmatpush1.bf16.msra.mxu0 %v4983
  %5346 = vmatprep.subr.bf16.mxu0 %v4992
  %5347 = vmatpush1.bf16.msra.mxu0 %v4991
  %5348 = vmatprep.subr.bf16.mxu0 %v5000
  %5349 = vmatpush1.bf16.msra.mxu0 %v4999
  %5350 = vmatprep.subr.bf16.mxu0 %v5008
  %5351 = vmatpush1.bf16.msra.mxu0 %v5007
  %5352 = vmatprep.subr.bf16.mxu0 %v5016
  %5353 = vmatpush1.bf16.msra.mxu0 %v5015
  %5354 = vmatprep.subr.bf16.mxu0 %v5024
  %5355 = vmatpush1.bf16.msra.mxu0 %v5023
  %5356 = vmatprep.subr.bf16.mxu0 %v5032
  %5357 = vmatpush1.bf16.msra.mxu0 %v5031
  %5358 = vmatprep.subr.bf16.mxu0 %v5040
  %5359 = vmatpush1.bf16.msra.mxu0 %v5039
  %5360 = vmatprep.subr.bf16.mxu0 %v5048
  %5361 = vmatpush1.bf16.msra.mxu0 %v5047
  %5362 = vmatprep.subr.bf16.mxu0 %v5056
  %5363 = vmatpush1.bf16.msra.mxu0 %v5055
  %5364 = vmatprep.subr.bf16.mxu0 %v5064
  %5365 = vmatpush1.bf16.msra.mxu0 %v5063
  %5366 = vmatprep.subr.bf16.mxu0 %v5072
  %5367 = vmatpush1.bf16.msra.mxu0 %v5071
  %5368 = vmatprep.subr.bf16.mxu0 %v5080
  %5369 = vmatpush1.bf16.msra.mxu0 %v5079
  %5370 = vmatprep.mubr.bf16.mxu0 %v4402
  %5371 = vmatmul.mubr.bf16.gmra.mrb[0].mxu0 %v4401
  %v5372 = vpop.f32.mrb[0].mxu0
  %v5373 = vadd.f32 0.0, %v5372
  %v5374 = vpop.f32.mrb[0].mxu0
  %v5375 = vadd.f32 0.0, %v5374
  %v5376 = vpop.f32.mrb[0].mxu0
  %v5377 = vadd.f32 0.0, %v5376
  %v5378 = vpop.f32.mrb[0].mxu0
  %v5379 = vadd.f32 0.0, %v5378
  %5380 = vdwg.mxu0
  %v5381 = vadd.f32 %v4425, %v5244
  %v5382 = vadd.f32 %v4426, %v5246
  %v5383 = vadd.f32 %v4427, %v5287
  %v5384 = vadd.f32 %v4428, %v5289
  %v5385 = vadd.f32 %v4429, %v5330
  %v5386 = vadd.f32 %v4430, %v5332
  %v5387 = vadd.f32 %v4431, %v5373
  %v5388 = vadd.f32 %v4432, %v5375
  %v5389 = vadd.f32 %v4433, %v5248
  %v5390 = vadd.f32 %v4434, %v5250
  %v5391 = vadd.f32 %v4435, %v5291
  %v5392 = vadd.f32 %v4436, %v5293
  %v5393 = vadd.f32 %v4437, %v5334
  %v5394 = vadd.f32 %v4438, %v5336
  %v5395 = vadd.f32 %v4439, %v5377
  %v5396 = vadd.f32 %v4440, %v5379
  %v5397 = vxor.u32 %v5381, 2147483648
  %v5398 = vxor.u32 %v5382, 2147483648
  %v5399 = vxor.u32 %v5383, 2147483648
  %v5400 = vxor.u32 %v5384, 2147483648
  %v5401 = vxor.u32 %v5385, 2147483648
  %v5402 = vxor.u32 %v5386, 2147483648
  %v5403 = vxor.u32 %v5389, 2147483648
  %v5404 = vxor.u32 %v5390, 2147483648
  %v5405 = vxor.u32 %v5391, 2147483648
  %v5406 = vxor.u32 %v5392, 2147483648
  %v5407 = vxor.u32 %v5393, 2147483648
  %v5408 = vxor.u32 %v5394, 2147483648
  %v5409 = vmul.f32 %v5397, 1.442695
  %v5410 = vpow.pop %v5409
  %v5411 = vmul.f32 %v5398, 1.442695
  %v5412 = vpow.pop %v5411
  %v5413 = vmul.f32 %v5399, 1.442695
  %v5414 = vpow.pop %v5413
  %v5415 = vmul.f32 %v5400, 1.442695
  %v5416 = vpow.pop %v5415
  %v5417 = vmul.f32 %v5401, 1.442695
  %v5418 = vpow.pop %v5417
  %v5419 = vmul.f32 %v5402, 1.442695
  %v5420 = vpow.pop %v5419
  %v5421 = vmul.f32 %v5403, 1.442695
  %v5422 = vpow.pop %v5421
  %v5423 = vmul.f32 %v5404, 1.442695
  %v5424 = vpow.pop %v5423
  %v5425 = vmul.f32 %v5405, 1.442695
  %v5426 = vpow.pop %v5425
  %v5427 = vmul.f32 %v5406, 1.442695
  %v5428 = vpow.pop %v5427
  %v5429 = vmul.f32 %v5407, 1.442695
  %v5430 = vpow.pop %v5429
  %v5431 = vmul.f32 %v5408, 1.442695
  %v5432 = vpow.pop %v5431
  %v5433 = vadd.f32 %v5410, 1.0
  %v5434 = vadd.f32 %v5412, 1.0
  %v5435 = vadd.f32 %v5414, 1.0
  %v5436 = vadd.f32 %v5416, 1.0
  %v5437 = vadd.f32 %v5418, 1.0
  %v5438 = vadd.f32 %v5420, 1.0
  %v5439 = vadd.f32 %v5422, 1.0
  %v5440 = vadd.f32 %v5424, 1.0
  %v5441 = vadd.f32 %v5426, 1.0
  %v5442 = vadd.f32 %v5428, 1.0
  %v5443 = vadd.f32 %v5430, 1.0
  %v5444 = vadd.f32 %v5432, 1.0
  %v5445 = vrcp.pop %v5433
  %v5446 = vmul.f32 1.0, %v5445
  %v5447 = vrcp.pop %v5434
  %v5448 = vmul.f32 1.0, %v5447
  %v5449 = vrcp.pop %v5435
  %v5450 = vmul.f32 1.0, %v5449
  %v5451 = vrcp.pop %v5436
  %v5452 = vmul.f32 1.0, %v5451
  %v5453 = vrcp.pop %v5437
  %v5454 = vmul.f32 1.0, %v5453
  %v5455 = vrcp.pop %v5438
  %v5456 = vmul.f32 1.0, %v5455
  %v5457 = vrcp.pop %v5439
  %v5458 = vmul.f32 1.0, %v5457
  %v5459 = vrcp.pop %v5440
  %v5460 = vmul.f32 1.0, %v5459
  %v5461 = vrcp.pop %v5441
  %v5462 = vmul.f32 1.0, %v5461
  %v5463 = vrcp.pop %v5442
  %v5464 = vmul.f32 1.0, %v5463
  %v5465 = vrcp.pop %v5443
  %v5466 = vmul.f32 1.0, %v5465
  %v5467 = vrcp.pop %v5444
  %v5468 = vmul.f32 1.0, %v5467
  %v5469 = vtanh.pop %v5387
  %v5470 = vtanh.pop %v5388
  %v5471 = vtanh.pop %v5395
  %v5472 = vtanh.pop %v5396
  %v5473 = vmul.f32 %v5450, %v4389
  %v5474 = vmul.f32 %v5452, %v4390
  %v5475 = vmul.f32 %v5462, %v4391
  %v5476 = vmul.f32 %v5464, %v4392
  %v5477 = vmul.f32 %v5446, %v5469
  %v5478 = vmul.f32 %v5448, %v5470
  %v5479 = vmul.f32 %v5458, %v5471
  %v5480 = vmul.f32 %v5460, %v5472
  %v5481 = vadd.f32 %v5473, %v5477
  %v5482 = vadd.f32 %v5474, %v5478
  %v5483 = vadd.f32 %v5475, %v5479
  %v5484 = vadd.f32 %v5476, %v5480
  %v5485 = vtanh.pop %v5481
  %v5486 = vtanh.pop %v5482
  %v5487 = vtanh.pop %v5483
  %v5488 = vtanh.pop %v5484
  %v5489 = vmul.f32 %v5454, %v5485
  %v5490 = vmul.f32 %v5456, %v5486
  %v5491 = vmul.f32 %v5466, %v5487
  %v5492 = vmul.f32 %v5468, %v5488
  %v5493 = vpack.c.bf16 %v5491, %v5489
  %v5494 = vpack.c.bf16 %v5492, %v5490
  %v5497 = vunpack.c.l.b16 %v5493
  %v5498 = vunpack.c.l.b16 %v5494
  %v5499 = vunpack.c.h.b16 %v5493
  %v5500 = vunpack.c.h.b16 %v5494
  %v5501 = vpack.c.b16 %v5498, %v5497
  %v5502 = vpack.c.b16 %v5500, %v5499
  %s5505 = scalar_lea.vmem %s4, 64
  %5506 = vst [vmem:[%s5505] sm:$0xff] %v5501
  %5507 = vst [vmem:[%s5505 + $0x8] sm:$0xff] %v5502
  %s5508 = scalar_lea.vmem %s0, 320
  %v5509 = vld [vmem:[%s5508] sm:$0xff]
  %v5510 = vld [vmem:[%s5508 + $0x8] sm:$0xff]
  %v5511 = vld [vmem:[%s5508 + $0x10] sm:$0xff]
  %v5512 = vld [vmem:[%s5508 + $0x18] sm:$0xff]
  %v5513 = vld [vmem:[%s5508 + $0x20] sm:$0xff]
  %v5514 = vld [vmem:[%s5508 + $0x28] sm:$0xff]
  %v5515 = vld [vmem:[%s5508 + $0x30] sm:$0xff]
  %v5516 = vld [vmem:[%s5508 + $0x38] sm:$0xff]
  %v5517 = vunpack.c.l.bf16 %v5509
  %v5518 = vunpack.c.h.bf16 %v5509
  %v5519 = vunpack.c.l.bf16 %v5510
  %v5520 = vunpack.c.h.bf16 %v5510
  %v5521 = vunpack.c.l.bf16 %v5511
  %v5522 = vunpack.c.h.bf16 %v5511
  %v5523 = vunpack.c.l.bf16 %v5512
  %v5524 = vunpack.c.h.bf16 %v5512
  %v5525 = vunpack.c.l.bf16 %v5513
  %v5526 = vunpack.c.h.bf16 %v5513
  %v5527 = vunpack.c.l.bf16 %v5514
  %v5528 = vunpack.c.h.bf16 %v5514
  %v5529 = vunpack.c.l.bf16 %v5515
  %v5530 = vunpack.c.h.bf16 %v5515
  %v5531 = vunpack.c.l.bf16 %v5516
  %v5532 = vunpack.c.h.bf16 %v5516
  %v5533 = vld [vmem:[%s1] sm:$0xff]
  %v5534 = vld [vmem:[%s1 + $0x8] sm:$0xff]
  %v5535 = vld [vmem:[%s1 + $0x10] sm:$0xff]
  %v5536 = vld [vmem:[%s1 + $0x18] sm:$0xff]
  %v5537 = vld [vmem:[%s1 + $0x20] sm:$0xff]
  %v5538 = vld [vmem:[%s1 + $0x28] sm:$0xff]
  %v5539 = vld [vmem:[%s1 + $0x30] sm:$0xff]
  %v5540 = vld [vmem:[%s1 + $0x38] sm:$0xff]
  %v5541 = vld [vmem:[%s1 + $0x40] sm:$0xff]
  %v5542 = vld [vmem:[%s1 + $0x48] sm:$0xff]
  %v5543 = vld [vmem:[%s1 + $0x50] sm:$0xff]
  %v5544 = vld [vmem:[%s1 + $0x58] sm:$0xff]
  %v5545 = vld [vmem:[%s1 + $0x60] sm:$0xff]
  %v5546 = vld [vmem:[%s1 + $0x68] sm:$0xff]
  %v5547 = vld [vmem:[%s1 + $0x70] sm:$0xff]
  %v5548 = vld [vmem:[%s1 + $0x78] sm:$0xff]
  %v5549 = vld [vmem:[%s1 + $0x80] sm:$0xff]
  %v5550 = vld [vmem:[%s1 + $0x88] sm:$0xff]
  %v5551 = vld [vmem:[%s1 + $0x90] sm:$0xff]
  %v5552 = vld [vmem:[%s1 + $0x98] sm:$0xff]
  %v5553 = vld [vmem:[%s1 + $0xa0] sm:$0xff]
  %v5554 = vld [vmem:[%s1 + $0xa8] sm:$0xff]
  %v5555 = vld [vmem:[%s1 + $0xb0] sm:$0xff]
  %v5556 = vld [vmem:[%s1 + $0xb8] sm:$0xff]
  %v5557 = vld [vmem:[%s1 + $0xc0] sm:$0xff]
  %v5558 = vld [vmem:[%s1 + $0xc8] sm:$0xff]
  %v5559 = vld [vmem:[%s1 + $0xd0] sm:$0xff]
  %v5560 = vld [vmem:[%s1 + $0xd8] sm:$0xff]
  %v5561 = vld [vmem:[%s1 + $0xe0] sm:$0xff]
  %v5562 = vld [vmem:[%s1 + $0xe8] sm:$0xff]
  %v5563 = vld [vmem:[%s1 + $0xf0] sm:$0xff]
  %v5564 = vld [vmem:[%s1 + $0xf8] sm:$0xff]
  %v5565 = vld [vmem:[%s1 + $0x100] sm:$0xff]
  %v5566 = vld [vmem:[%s1 + $0x108] sm:$0xff]
  %v5567 = vld [vmem:[%s1 + $0x110] sm:$0xff]
  %v5568 = vld [vmem:[%s1 + $0x118] sm:$0xff]
  %v5569 = vld [vmem:[%s1 + $0x120] sm:$0xff]
  %v5570 = vld [vmem:[%s1 + $0x128] sm:$0xff]
  %v5571 = vld [vmem:[%s1 + $0x130] sm:$0xff]
  %v5572 = vld [vmem:[%s1 + $0x138] sm:$0xff]
  %v5573 = vld [vmem:[%s1 + $0x140] sm:$0xff]
  %v5574 = vld [vmem:[%s1 + $0x148] sm:$0xff]
  %v5575 = vld [vmem:[%s1 + $0x150] sm:$0xff]
  %v5576 = vld [vmem:[%s1 + $0x158] sm:$0xff]
  %v5577 = vld [vmem:[%s1 + $0x160] sm:$0xff]
  %v5578 = vld [vmem:[%s1 + $0x168] sm:$0xff]
  %v5579 = vld [vmem:[%s1 + $0x170] sm:$0xff]
  %v5580 = vld [vmem:[%s1 + $0x178] sm:$0xff]
  %v5581 = vld [vmem:[%s1 + $0x180] sm:$0xff]
  %v5582 = vld [vmem:[%s1 + $0x188] sm:$0xff]
  %v5583 = vld [vmem:[%s1 + $0x190] sm:$0xff]
  %v5584 = vld [vmem:[%s1 + $0x198] sm:$0xff]
  %v5585 = vld [vmem:[%s1 + $0x1a0] sm:$0xff]
  %v5586 = vld [vmem:[%s1 + $0x1a8] sm:$0xff]
  %v5587 = vld [vmem:[%s1 + $0x1b0] sm:$0xff]
  %v5588 = vld [vmem:[%s1 + $0x1b8] sm:$0xff]
  %v5589 = vld [vmem:[%s1 + $0x1c0] sm:$0xff]
  %v5590 = vld [vmem:[%s1 + $0x1c8] sm:$0xff]
  %v5591 = vld [vmem:[%s1 + $0x1d0] sm:$0xff]
  %v5592 = vld [vmem:[%s1 + $0x1d8] sm:$0xff]
  %v5593 = vld [vmem:[%s1 + $0x1e0] sm:$0xff]
  %v5594 = vld [vmem:[%s1 + $0x1e8] sm:$0xff]
  %v5595 = vld [vmem:[%s1 + $0x1f0] sm:$0xff]
  %v5596 = vld [vmem:[%s1 + $0x1f8] sm:$0xff]
  %v5597 = vld [vmem:[%s1 + $0x200] sm:$0xff]
  %v5598 = vld [vmem:[%s1 + $0x208] sm:$0xff]
  %v5599 = vld [vmem:[%s1 + $0x210] sm:$0xff]
  %v5600 = vld [vmem:[%s1 + $0x218] sm:$0xff]
  %v5601 = vld [vmem:[%s1 + $0x220] sm:$0xff]
  %v5602 = vld [vmem:[%s1 + $0x228] sm:$0xff]
  %v5603 = vld [vmem:[%s1 + $0x230] sm:$0xff]
  %v5604 = vld [vmem:[%s1 + $0x238] sm:$0xff]
  %v5605 = vld [vmem:[%s1 + $0x240] sm:$0xff]
  %v5606 = vld [vmem:[%s1 + $0x248] sm:$0xff]
  %v5607 = vld [vmem:[%s1 + $0x250] sm:$0xff]
  %v5608 = vld [vmem:[%s1 + $0x258] sm:$0xff]
  %v5609 = vld [vmem:[%s1 + $0x260] sm:$0xff]
  %v5610 = vld [vmem:[%s1 + $0x268] sm:$0xff]
  %v5611 = vld [vmem:[%s1 + $0x270] sm:$0xff]
  %v5612 = vld [vmem:[%s1 + $0x278] sm:$0xff]
  %v5613 = vld [vmem:[%s1 + $0x280] sm:$0xff]
  %v5614 = vld [vmem:[%s1 + $0x288] sm:$0xff]
  %v5615 = vld [vmem:[%s1 + $0x290] sm:$0xff]
  %v5616 = vld [vmem:[%s1 + $0x298] sm:$0xff]
  %v5617 = vld [vmem:[%s1 + $0x2a0] sm:$0xff]
  %v5618 = vld [vmem:[%s1 + $0x2a8] sm:$0xff]
  %v5619 = vld [vmem:[%s1 + $0x2b0] sm:$0xff]
  %v5620 = vld [vmem:[%s1 + $0x2b8] sm:$0xff]
  %v5621 = vld [vmem:[%s1 + $0x2c0] sm:$0xff]
  %v5622 = vld [vmem:[%s1 + $0x2c8] sm:$0xff]
  %v5623 = vld [vmem:[%s1 + $0x2d0] sm:$0xff]
  %v5624 = vld [vmem:[%s1 + $0x2d8] sm:$0xff]
  %v5625 = vld [vmem:[%s1 + $0x2e0] sm:$0xff]
  %v5626 = vld [vmem:[%s1 + $0x2e8] sm:$0xff]
  %v5627 = vld [vmem:[%s1 + $0x2f0] sm:$0xff]
  %v5628 = vld [vmem:[%s1 + $0x2f8] sm:$0xff]
  %v5629 = vld [vmem:[%s1 + $0x300] sm:$0xff]
  %v5630 = vld [vmem:[%s1 + $0x308] sm:$0xff]
  %v5631 = vld [vmem:[%s1 + $0x310] sm:$0xff]
  %v5632 = vld [vmem:[%s1 + $0x318] sm:$0xff]
  %v5633 = vld [vmem:[%s1 + $0x320] sm:$0xff]
  %v5634 = vld [vmem:[%s1 + $0x328] sm:$0xff]
  %v5635 = vld [vmem:[%s1 + $0x330] sm:$0xff]
  %v5636 = vld [vmem:[%s1 + $0x338] sm:$0xff]
  %v5637 = vld [vmem:[%s1 + $0x340] sm:$0xff]
  %v5638 = vld [vmem:[%s1 + $0x348] sm:$0xff]
  %v5639 = vld [vmem:[%s1 + $0x350] sm:$0xff]
  %v5640 = vld [vmem:[%s1 + $0x358] sm:$0xff]
  %v5641 = vld [vmem:[%s1 + $0x360] sm:$0xff]
  %v5642 = vld [vmem:[%s1 + $0x368] sm:$0xff]
  %v5643 = vld [vmem:[%s1 + $0x370] sm:$0xff]
  %v5644 = vld [vmem:[%s1 + $0x378] sm:$0xff]
  %v5645 = vld [vmem:[%s1 + $0x380] sm:$0xff]
  %v5646 = vld [vmem:[%s1 + $0x388] sm:$0xff]
  %v5647 = vld [vmem:[%s1 + $0x390] sm:$0xff]
  %v5648 = vld [vmem:[%s1 + $0x398] sm:$0xff]
  %v5649 = vld [vmem:[%s1 + $0x3a0] sm:$0xff]
  %v5650 = vld [vmem:[%s1 + $0x3a8] sm:$0xff]
  %v5651 = vld [vmem:[%s1 + $0x3b0] sm:$0xff]
  %v5652 = vld [vmem:[%s1 + $0x3b8] sm:$0xff]
  %v5653 = vld [vmem:[%s1 + $0x3c0] sm:$0xff]
  %v5654 = vld [vmem:[%s1 + $0x3c8] sm:$0xff]
  %v5655 = vld [vmem:[%s1 + $0x3d0] sm:$0xff]
  %v5656 = vld [vmem:[%s1 + $0x3d8] sm:$0xff]
  %v5657 = vld [vmem:[%s1 + $0x3e0] sm:$0xff]
  %v5658 = vld [vmem:[%s1 + $0x3e8] sm:$0xff]
  %v5659 = vld [vmem:[%s1 + $0x3f0] sm:$0xff]
  %v5660 = vld [vmem:[%s1 + $0x3f8] sm:$0xff]
  %v5789 = vunpack.c.l.b16 %v5533
  %v5790 = vunpack.c.h.b16 %v5533
  %v5791 = vunpack.c.l.b16 %v5534
  %v5792 = vunpack.c.h.b16 %v5534
  %v5793 = vunpack.c.l.b16 %v5535
  %v5794 = vunpack.c.h.b16 %v5535
  %v5795 = vunpack.c.l.b16 %v5536
  %v5796 = vunpack.c.h.b16 %v5536
  %v5797 = vunpack.c.l.b16 %v5537
  %v5798 = vunpack.c.h.b16 %v5537
  %v5799 = vunpack.c.l.b16 %v5538
  %v5800 = vunpack.c.h.b16 %v5538
  %v5801 = vunpack.c.l.b16 %v5539
  %v5802 = vunpack.c.h.b16 %v5539
  %v5803 = vunpack.c.l.b16 %v5540
  %v5804 = vunpack.c.h.b16 %v5540
  %v5805 = vunpack.c.l.b16 %v5541
  %v5806 = vunpack.c.h.b16 %v5541
  %v5807 = vunpack.c.l.b16 %v5542
  %v5808 = vunpack.c.h.b16 %v5542
  %v5809 = vunpack.c.l.b16 %v5543
  %v5810 = vunpack.c.h.b16 %v5543
  %v5811 = vunpack.c.l.b16 %v5544
  %v5812 = vunpack.c.h.b16 %v5544
  %v5813 = vunpack.c.l.b16 %v5545
  %v5814 = vunpack.c.h.b16 %v5545
  %v5815 = vunpack.c.l.b16 %v5546
  %v5816 = vunpack.c.h.b16 %v5546
  %v5817 = vunpack.c.l.b16 %v5547
  %v5818 = vunpack.c.h.b16 %v5547
  %v5819 = vunpack.c.l.b16 %v5548
  %v5820 = vunpack.c.h.b16 %v5548
  %v5821 = vunpack.c.l.b16 %v5549
  %v5822 = vunpack.c.h.b16 %v5549
  %v5823 = vunpack.c.l.b16 %v5550
  %v5824 = vunpack.c.h.b16 %v5550
  %v5825 = vunpack.c.l.b16 %v5551
  %v5826 = vunpack.c.h.b16 %v5551
  %v5827 = vunpack.c.l.b16 %v5552
  %v5828 = vunpack.c.h.b16 %v5552
  %v5829 = vunpack.c.l.b16 %v5553
  %v5830 = vunpack.c.h.b16 %v5553
  %v5831 = vunpack.c.l.b16 %v5554
  %v5832 = vunpack.c.h.b16 %v5554
  %v5833 = vunpack.c.l.b16 %v5555
  %v5834 = vunpack.c.h.b16 %v5555
  %v5835 = vunpack.c.l.b16 %v5556
  %v5836 = vunpack.c.h.b16 %v5556
  %v5837 = vunpack.c.l.b16 %v5557
  %v5838 = vunpack.c.h.b16 %v5557
  %v5839 = vunpack.c.l.b16 %v5558
  %v5840 = vunpack.c.h.b16 %v5558
  %v5841 = vunpack.c.l.b16 %v5559
  %v5842 = vunpack.c.h.b16 %v5559
  %v5843 = vunpack.c.l.b16 %v5560
  %v5844 = vunpack.c.h.b16 %v5560
  %v5845 = vunpack.c.l.b16 %v5561
  %v5846 = vunpack.c.h.b16 %v5561
  %v5847 = vunpack.c.l.b16 %v5562
  %v5848 = vunpack.c.h.b16 %v5562
  %v5849 = vunpack.c.l.b16 %v5563
  %v5850 = vunpack.c.h.b16 %v5563
  %v5851 = vunpack.c.l.b16 %v5564
  %v5852 = vunpack.c.h.b16 %v5564
  %v5853 = vunpack.c.l.b16 %v5565
  %v5854 = vunpack.c.h.b16 %v5565
  %v5855 = vunpack.c.l.b16 %v5566
  %v5856 = vunpack.c.h.b16 %v5566
  %v5857 = vunpack.c.l.b16 %v5567
  %v5858 = vunpack.c.h.b16 %v5567
  %v5859 = vunpack.c.l.b16 %v5568
  %v5860 = vunpack.c.h.b16 %v5568
  %v5861 = vunpack.c.l.b16 %v5569
  %v5862 = vunpack.c.h.b16 %v5569
  %v5863 = vunpack.c.l.b16 %v5570
  %v5864 = vunpack.c.h.b16 %v5570
  %v5865 = vunpack.c.l.b16 %v5571
  %v5866 = vunpack.c.h.b16 %v5571
  %v5867 = vunpack.c.l.b16 %v5572
  %v5868 = vunpack.c.h.b16 %v5572
  %v5869 = vunpack.c.l.b16 %v5573
  %v5870 = vunpack.c.h.b16 %v5573
  %v5871 = vunpack.c.l.b16 %v5574
  %v5872 = vunpack.c.h.b16 %v5574
  %v5873 = vunpack.c.l.b16 %v5575
  %v5874 = vunpack.c.h.b16 %v5575
  %v5875 = vunpack.c.l.b16 %v5576
  %v5876 = vunpack.c.h.b16 %v5576
  %v5877 = vunpack.c.l.b16 %v5577
  %v5878 = vunpack.c.h.b16 %v5577
  %v5879 = vunpack.c.l.b16 %v5578
  %v5880 = vunpack.c.h.b16 %v5578
  %v5881 = vunpack.c.l.b16 %v5579
  %v5882 = vunpack.c.h.b16 %v5579
  %v5883 = vunpack.c.l.b16 %v5580
  %v5884 = vunpack.c.h.b16 %v5580
  %v5885 = vunpack.c.l.b16 %v5581
  %v5886 = vunpack.c.h.b16 %v5581
  %v5887 = vunpack.c.l.b16 %v5582
  %v5888 = vunpack.c.h.b16 %v5582
  %v5889 = vunpack.c.l.b16 %v5583
  %v5890 = vunpack.c.h.b16 %v5583
  %v5891 = vunpack.c.l.b16 %v5584
  %v5892 = vunpack.c.h.b16 %v5584
  %v5893 = vunpack.c.l.b16 %v5585
  %v5894 = vunpack.c.h.b16 %v5585
  %v5895 = vunpack.c.l.b16 %v5586
  %v5896 = vunpack.c.h.b16 %v5586
  %v5897 = vunpack.c.l.b16 %v5587
  %v5898 = vunpack.c.h.b16 %v5587
  %v5899 = vunpack.c.l.b16 %v5588
  %v5900 = vunpack.c.h.b16 %v5588
  %v5901 = vunpack.c.l.b16 %v5589
  %v5902 = vunpack.c.h.b16 %v5589
  %v5903 = vunpack.c.l.b16 %v5590
  %v5904 = vunpack.c.h.b16 %v5590
  %v5905 = vunpack.c.l.b16 %v5591
  %v5906 = vunpack.c.h.b16 %v5591
  %v5907 = vunpack.c.l.b16 %v5592
  %v5908 = vunpack.c.h.b16 %v5592
  %v5909 = vunpack.c.l.b16 %v5593
  %v5910 = vunpack.c.h.b16 %v5593
  %v5911 = vunpack.c.l.b16 %v5594
  %v5912 = vunpack.c.h.b16 %v5594
  %v5913 = vunpack.c.l.b16 %v5595
  %v5914 = vunpack.c.h.b16 %v5595
  %v5915 = vunpack.c.l.b16 %v5596
  %v5916 = vunpack.c.h.b16 %v5596
  %v5917 = vunpack.c.l.b16 %v5597
  %v5918 = vunpack.c.h.b16 %v5597
  %v5919 = vunpack.c.l.b16 %v5598
  %v5920 = vunpack.c.h.b16 %v5598
  %v5921 = vunpack.c.l.b16 %v5599
  %v5922 = vunpack.c.h.b16 %v5599
  %v5923 = vunpack.c.l.b16 %v5600
  %v5924 = vunpack.c.h.b16 %v5600
  %v5925 = vunpack.c.l.b16 %v5601
  %v5926 = vunpack.c.h.b16 %v5601
  %v5927 = vunpack.c.l.b16 %v5602
  %v5928 = vunpack.c.h.b16 %v5602
  %v5929 = vunpack.c.l.b16 %v5603
  %v5930 = vunpack.c.h.b16 %v5603
  %v5931 = vunpack.c.l.b16 %v5604
  %v5932 = vunpack.c.h.b16 %v5604
  %v5933 = vunpack.c.l.b16 %v5605
  %v5934 = vunpack.c.h.b16 %v5605
  %v5935 = vunpack.c.l.b16 %v5606
  %v5936 = vunpack.c.h.b16 %v5606
  %v5937 = vunpack.c.l.b16 %v5607
  %v5938 = vunpack.c.h.b16 %v5607
  %v5939 = vunpack.c.l.b16 %v5608
  %v5940 = vunpack.c.h.b16 %v5608
  %v5941 = vunpack.c.l.b16 %v5609
  %v5942 = vunpack.c.h.b16 %v5609
  %v5943 = vunpack.c.l.b16 %v5610
  %v5944 = vunpack.c.h.b16 %v5610
  %v5945 = vunpack.c.l.b16 %v5611
  %v5946 = vunpack.c.h.b16 %v5611
  %v5947 = vunpack.c.l.b16 %v5612
  %v5948 = vunpack.c.h.b16 %v5612
  %v5949 = vunpack.c.l.b16 %v5613
  %v5950 = vunpack.c.h.b16 %v5613
  %v5951 = vunpack.c.l.b16 %v5614
  %v5952 = vunpack.c.h.b16 %v5614
  %v5953 = vunpack.c.l.b16 %v5615
  %v5954 = vunpack.c.h.b16 %v5615
  %v5955 = vunpack.c.l.b16 %v5616
  %v5956 = vunpack.c.h.b16 %v5616
  %v5957 = vunpack.c.l.b16 %v5617
  %v5958 = vunpack.c.h.b16 %v5617
  %v5959 = vunpack.c.l.b16 %v5618
  %v5960 = vunpack.c.h.b16 %v5618
  %v5961 = vunpack.c.l.b16 %v5619
  %v5962 = vunpack.c.h.b16 %v5619
  %v5963 = vunpack.c.l.b16 %v5620
  %v5964 = vunpack.c.h.b16 %v5620
  %v5965 = vunpack.c.l.b16 %v5621
  %v5966 = vunpack.c.h.b16 %v5621
  %v5967 = vunpack.c.l.b16 %v5622
  %v5968 = vunpack.c.h.b16 %v5622
  %v5969 = vunpack.c.l.b16 %v5623
  %v5970 = vunpack.c.h.b16 %v5623
  %v5971 = vunpack.c.l.b16 %v5624
  %v5972 = vunpack.c.h.b16 %v5624
  %v5973 = vunpack.c.l.b16 %v5625
  %v5974 = vunpack.c.h.b16 %v5625
  %v5975 = vunpack.c.l.b16 %v5626
  %v5976 = vunpack.c.h.b16 %v5626
  %v5977 = vunpack.c.l.b16 %v5627
  %v5978 = vunpack.c.h.b16 %v5627
  %v5979 = vunpack.c.l.b16 %v5628
  %v5980 = vunpack.c.h.b16 %v5628
  %v5981 = vunpack.c.l.b16 %v5629
  %v5982 = vunpack.c.h.b16 %v5629
  %v5983 = vunpack.c.l.b16 %v5630
  %v5984 = vunpack.c.h.b16 %v5630
  %v5985 = vunpack.c.l.b16 %v5631
  %v5986 = vunpack.c.h.b16 %v5631
  %v5987 = vunpack.c.l.b16 %v5632
  %v5988 = vunpack.c.h.b16 %v5632
  %v5989 = vunpack.c.l.b16 %v5633
  %v5990 = vunpack.c.h.b16 %v5633
  %v5991 = vunpack.c.l.b16 %v5634
  %v5992 = vunpack.c.h.b16 %v5634
  %v5993 = vunpack.c.l.b16 %v5635
  %v5994 = vunpack.c.h.b16 %v5635
  %v5995 = vunpack.c.l.b16 %v5636
  %v5996 = vunpack.c.h.b16 %v5636
  %v5997 = vunpack.c.l.b16 %v5637
  %v5998 = vunpack.c.h.b16 %v5637
  %v5999 = vunpack.c.l.b16 %v5638
  %v6000 = vunpack.c.h.b16 %v5638
  %v6001 = vunpack.c.l.b16 %v5639
  %v6002 = vunpack.c.h.b16 %v5639
  %v6003 = vunpack.c.l.b16 %v5640
  %v6004 = vunpack.c.h.b16 %v5640
  %v6005 = vunpack.c.l.b16 %v5641
  %v6006 = vunpack.c.h.b16 %v5641
  %v6007 = vunpack.c.l.b16 %v5642
  %v6008 = vunpack.c.h.b16 %v5642
  %v6009 = vunpack.c.l.b16 %v5643
  %v6010 = vunpack.c.h.b16 %v5643
  %v6011 = vunpack.c.l.b16 %v5644
  %v6012 = vunpack.c.h.b16 %v5644
  %v6013 = vunpack.c.l.b16 %v5645
  %v6014 = vunpack.c.h.b16 %v5645
  %v6015 = vunpack.c.l.b16 %v5646
  %v6016 = vunpack.c.h.b16 %v5646
  %v6017 = vunpack.c.l.b16 %v5647
  %v6018 = vunpack.c.h.b16 %v5647
  %v6019 = vunpack.c.l.b16 %v5648
  %v6020 = vunpack.c.h.b16 %v5648
  %v6021 = vunpack.c.l.b16 %v5649
  %v6022 = vunpack.c.h.b16 %v5649
  %v6023 = vunpack.c.l.b16 %v5650
  %v6024 = vunpack.c.h.b16 %v5650
  %v6025 = vunpack.c.l.b16 %v5651
  %v6026 = vunpack.c.h.b16 %v5651
  %v6027 = vunpack.c.l.b16 %v5652
  %v6028 = vunpack.c.h.b16 %v5652
  %v6029 = vunpack.c.l.b16 %v5653
  %v6030 = vunpack.c.h.b16 %v5653
  %v6031 = vunpack.c.l.b16 %v5654
  %v6032 = vunpack.c.h.b16 %v5654
  %v6033 = vunpack.c.l.b16 %v5655
  %v6034 = vunpack.c.h.b16 %v5655
  %v6035 = vunpack.c.l.b16 %v5656
  %v6036 = vunpack.c.h.b16 %v5656
  %v6037 = vunpack.c.l.b16 %v5657
  %v6038 = vunpack.c.h.b16 %v5657
  %v6039 = vunpack.c.l.b16 %v5658
  %v6040 = vunpack.c.h.b16 %v5658
  %v6041 = vunpack.c.l.b16 %v5659
  %v6042 = vunpack.c.h.b16 %v5659
  %v6043 = vunpack.c.l.b16 %v5660
  %v6044 = vunpack.c.h.b16 %v5660
  %v6045 = vpack.c.b16 %v5797, %v5789
  %v6046 = vpack.c.b16 %v5798, %v5790
  %v6047 = vpack.c.b16 %v5799, %v5791
  %v6048 = vpack.c.b16 %v5800, %v5792
  %v6049 = vpack.c.b16 %v5801, %v5793
  %v6050 = vpack.c.b16 %v5802, %v5794
  %v6051 = vpack.c.b16 %v5803, %v5795
  %v6052 = vpack.c.b16 %v5804, %v5796
  %v6053 = vpack.c.b16 %v5813, %v5805
  %v6054 = vpack.c.b16 %v5814, %v5806
  %v6055 = vpack.c.b16 %v5815, %v5807
  %v6056 = vpack.c.b16 %v5816, %v5808
  %v6057 = vpack.c.b16 %v5817, %v5809
  %v6058 = vpack.c.b16 %v5818, %v5810
  %v6059 = vpack.c.b16 %v5819, %v5811
  %v6060 = vpack.c.b16 %v5820, %v5812
  %v6061 = vpack.c.b16 %v5829, %v5821
  %v6062 = vpack.c.b16 %v5830, %v5822
  %v6063 = vpack.c.b16 %v5831, %v5823
  %v6064 = vpack.c.b16 %v5832, %v5824
  %v6065 = vpack.c.b16 %v5833, %v5825
  %v6066 = vpack.c.b16 %v5834, %v5826
  %v6067 = vpack.c.b16 %v5835, %v5827
  %v6068 = vpack.c.b16 %v5836, %v5828
  %v6069 = vpack.c.b16 %v5845, %v5837
  %v6070 = vpack.c.b16 %v5846, %v5838
  %v6071 = vpack.c.b16 %v5847, %v5839
  %v6072 = vpack.c.b16 %v5848, %v5840
  %v6073 = vpack.c.b16 %v5849, %v5841
  %v6074 = vpack.c.b16 %v5850, %v5842
  %v6075 = vpack.c.b16 %v5851, %v5843
  %v6076 = vpack.c.b16 %v5852, %v5844
  %v6077 = vpack.c.b16 %v5861, %v5853
  %v6078 = vpack.c.b16 %v5862, %v5854
  %v6079 = vpack.c.b16 %v5863, %v5855
  %v6080 = vpack.c.b16 %v5864, %v5856
  %v6081 = vpack.c.b16 %v5865, %v5857
  %v6082 = vpack.c.b16 %v5866, %v5858
  %v6083 = vpack.c.b16 %v5867, %v5859
  %v6084 = vpack.c.b16 %v5868, %v5860
  %v6085 = vpack.c.b16 %v5877, %v5869
  %v6086 = vpack.c.b16 %v5878, %v5870
  %v6087 = vpack.c.b16 %v5879, %v5871
  %v6088 = vpack.c.b16 %v5880, %v5872
  %v6089 = vpack.c.b16 %v5881, %v5873
  %v6090 = vpack.c.b16 %v5882, %v5874
  %v6091 = vpack.c.b16 %v5883, %v5875
  %v6092 = vpack.c.b16 %v5884, %v5876
  %v6093 = vpack.c.b16 %v5893, %v5885
  %v6094 = vpack.c.b16 %v5894, %v5886
  %v6095 = vpack.c.b16 %v5895, %v5887
  %v6096 = vpack.c.b16 %v5896, %v5888
  %v6097 = vpack.c.b16 %v5897, %v5889
  %v6098 = vpack.c.b16 %v5898, %v5890
  %v6099 = vpack.c.b16 %v5899, %v5891
  %v6100 = vpack.c.b16 %v5900, %v5892
  %v6101 = vpack.c.b16 %v5909, %v5901
  %v6102 = vpack.c.b16 %v5910, %v5902
  %v6103 = vpack.c.b16 %v5911, %v5903
  %v6104 = vpack.c.b16 %v5912, %v5904
  %v6105 = vpack.c.b16 %v5913, %v5905
  %v6106 = vpack.c.b16 %v5914, %v5906
  %v6107 = vpack.c.b16 %v5915, %v5907
  %v6108 = vpack.c.b16 %v5916, %v5908
  %v6109 = vpack.c.b16 %v5925, %v5917
  %v6110 = vpack.c.b16 %v5926, %v5918
  %v6111 = vpack.c.b16 %v5927, %v5919
  %v6112 = vpack.c.b16 %v5928, %v5920
  %v6113 = vpack.c.b16 %v5929, %v5921
  %v6114 = vpack.c.b16 %v5930, %v5922
  %v6115 = vpack.c.b16 %v5931, %v5923
  %v6116 = vpack.c.b16 %v5932, %v5924
  %v6117 = vpack.c.b16 %v5941, %v5933
  %v6118 = vpack.c.b16 %v5942, %v5934
  %v6119 = vpack.c.b16 %v5943, %v5935
  %v6120 = vpack.c.b16 %v5944, %v5936
  %v6121 = vpack.c.b16 %v5945, %v5937
  %v6122 = vpack.c.b16 %v5946, %v5938
  %v6123 = vpack.c.b16 %v5947, %v5939
  %v6124 = vpack.c.b16 %v5948, %v5940
  %v6125 = vpack.c.b16 %v5957, %v5949
  %v6126 = vpack.c.b16 %v5958, %v5950
  %v6127 = vpack.c.b16 %v5959, %v5951
  %v6128 = vpack.c.b16 %v5960, %v5952
  %v6129 = vpack.c.b16 %v5961, %v5953
  %v6130 = vpack.c.b16 %v5962, %v5954
  %v6131 = vpack.c.b16 %v5963, %v5955
  %v6132 = vpack.c.b16 %v5964, %v5956
  %v6133 = vpack.c.b16 %v5973, %v5965
  %v6134 = vpack.c.b16 %v5974, %v5966
  %v6135 = vpack.c.b16 %v5975, %v5967
  %v6136 = vpack.c.b16 %v5976, %v5968
  %v6137 = vpack.c.b16 %v5977, %v5969
  %v6138 = vpack.c.b16 %v5978, %v5970
  %v6139 = vpack.c.b16 %v5979, %v5971
  %v6140 = vpack.c.b16 %v5980, %v5972
  %v6141 = vpack.c.b16 %v5989, %v5981
  %v6142 = vpack.c.b16 %v5990, %v5982
  %v6143 = vpack.c.b16 %v5991, %v5983
  %v6144 = vpack.c.b16 %v5992, %v5984
  %v6145 = vpack.c.b16 %v5993, %v5985
  %v6146 = vpack.c.b16 %v5994, %v5986
  %v6147 = vpack.c.b16 %v5995, %v5987
  %v6148 = vpack.c.b16 %v5996, %v5988
  %v6149 = vpack.c.b16 %v6005, %v5997
  %v6150 = vpack.c.b16 %v6006, %v5998
  %v6151 = vpack.c.b16 %v6007, %v5999
  %v6152 = vpack.c.b16 %v6008, %v6000
  %v6153 = vpack.c.b16 %v6009, %v6001
  %v6154 = vpack.c.b16 %v6010, %v6002
  %v6155 = vpack.c.b16 %v6011, %v6003
  %v6156 = vpack.c.b16 %v6012, %v6004
  %v6157 = vpack.c.b16 %v6021, %v6013
  %v6158 = vpack.c.b16 %v6022, %v6014
  %v6159 = vpack.c.b16 %v6023, %v6015
  %v6160 = vpack.c.b16 %v6024, %v6016
  %v6161 = vpack.c.b16 %v6025, %v6017
  %v6162 = vpack.c.b16 %v6026, %v6018
  %v6163 = vpack.c.b16 %v6027, %v6019
  %v6164 = vpack.c.b16 %v6028, %v6020
  %v6165 = vpack.c.b16 %v6037, %v6029
  %v6166 = vpack.c.b16 %v6038, %v6030
  %v6167 = vpack.c.b16 %v6039, %v6031
  %v6168 = vpack.c.b16 %v6040, %v6032
  %v6169 = vpack.c.b16 %v6041, %v6033
  %v6170 = vpack.c.b16 %v6042, %v6034
  %v6171 = vpack.c.b16 %v6043, %v6035
  %v6172 = vpack.c.b16 %v6044, %v6036
  %6301 = vmatprep.subr.bf16.mxu0 %v6046
  %6302 = vmatpush1.bf16.msra.mxu0 %v6045
  %6303 = vmatprep.subr.bf16.mxu0 %v6054
  %6304 = vmatpush1.bf16.msra.mxu0 %v6053
  %6305 = vmatprep.subr.bf16.mxu0 %v6062
  %6306 = vmatpush1.bf16.msra.mxu0 %v6061
  %6307 = vmatprep.subr.bf16.mxu0 %v6070
  %6308 = vmatpush1.bf16.msra.mxu0 %v6069
  %6309 = vmatprep.subr.bf16.mxu0 %v6078
  %6310 = vmatpush1.bf16.msra.mxu0 %v6077
  %6311 = vmatprep.subr.bf16.mxu0 %v6086
  %6312 = vmatpush1.bf16.msra.mxu0 %v6085
  %6313 = vmatprep.subr.bf16.mxu0 %v6094
  %6314 = vmatpush1.bf16.msra.mxu0 %v6093
  %6315 = vmatprep.subr.bf16.mxu0 %v6102
  %6316 = vmatpush1.bf16.msra.mxu0 %v6101
  %6317 = vmatprep.subr.bf16.mxu0 %v6110
  %6318 = vmatpush1.bf16.msra.mxu0 %v6109
  %6319 = vmatprep.subr.bf16.mxu0 %v6118
  %6320 = vmatpush1.bf16.msra.mxu0 %v6117
  %6321 = vmatprep.subr.bf16.mxu0 %v6126
  %6322 = vmatpush1.bf16.msra.mxu0 %v6125
  %6323 = vmatprep.subr.bf16.mxu0 %v6134
  %6324 = vmatpush1.bf16.msra.mxu0 %v6133
  %6325 = vmatprep.subr.bf16.mxu0 %v6142
  %6326 = vmatpush1.bf16.msra.mxu0 %v6141
  %6327 = vmatprep.subr.bf16.mxu0 %v6150
  %6328 = vmatpush1.bf16.msra.mxu0 %v6149
  %6329 = vmatprep.subr.bf16.mxu0 %v6158
  %6330 = vmatpush1.bf16.msra.mxu0 %v6157
  %6331 = vmatprep.subr.bf16.mxu0 %v6166
  %6332 = vmatpush1.bf16.msra.mxu0 %v6165
  %6333 = vmatprep.mubr.bf16.mxu0 %v5494
  %6334 = vmatmul.mubr.bf16.gmra.mrb[0].mxu0 %v5493
  %v6335 = vpop.f32.mrb[0].mxu0
  %v6336 = vadd.f32 0.0, %v6335
  %v6337 = vpop.f32.mrb[0].mxu0
  %v6338 = vadd.f32 0.0, %v6337
  %v6339 = vpop.f32.mrb[0].mxu0
  %v6340 = vadd.f32 0.0, %v6339
  %v6341 = vpop.f32.mrb[0].mxu0
  %v6342 = vadd.f32 0.0, %v6341
  %6343 = vdwg.mxu0
  %6344 = vmatprep.subr.bf16.mxu0 %v6048
  %6345 = vmatpush1.bf16.msra.mxu0 %v6047
  %6346 = vmatprep.subr.bf16.mxu0 %v6056
  %6347 = vmatpush1.bf16.msra.mxu0 %v6055
  %6348 = vmatprep.subr.bf16.mxu0 %v6064
  %6349 = vmatpush1.bf16.msra.mxu0 %v6063
  %6350 = vmatprep.subr.bf16.mxu0 %v6072
  %6351 = vmatpush1.bf16.msra.mxu0 %v6071
  %6352 = vmatprep.subr.bf16.mxu0 %v6080
  %6353 = vmatpush1.bf16.msra.mxu0 %v6079
  %6354 = vmatprep.subr.bf16.mxu0 %v6088
  %6355 = vmatpush1.bf16.msra.mxu0 %v6087
  %6356 = vmatprep.subr.bf16.mxu0 %v6096
  %6357 = vmatpush1.bf16.msra.mxu0 %v6095
  %6358 = vmatprep.subr.bf16.mxu0 %v6104
  %6359 = vmatpush1.bf16.msra.mxu0 %v6103
  %6360 = vmatprep.subr.bf16.mxu0 %v6112
  %6361 = vmatpush1.bf16.msra.mxu0 %v6111
  %6362 = vmatprep.subr.bf16.mxu0 %v6120
  %6363 = vmatpush1.bf16.msra.mxu0 %v6119
  %6364 = vmatprep.subr.bf16.mxu0 %v6128
  %6365 = vmatpush1.bf16.msra.mxu0 %v6127
  %6366 = vmatprep.subr.bf16.mxu0 %v6136
  %6367 = vmatpush1.bf16.msra.mxu0 %v6135
  %6368 = vmatprep.subr.bf16.mxu0 %v6144
  %6369 = vmatpush1.bf16.msra.mxu0 %v6143
  %6370 = vmatprep.subr.bf16.mxu0 %v6152
  %6371 = vmatpush1.bf16.msra.mxu0 %v6151
  %6372 = vmatprep.subr.bf16.mxu0 %v6160
  %6373 = vmatpush1.bf16.msra.mxu0 %v6159
  %6374 = vmatprep.subr.bf16.mxu0 %v6168
  %6375 = vmatpush1.bf16.msra.mxu0 %v6167
  %6376 = vmatprep.mubr.bf16.mxu0 %v5494
  %6377 = vmatmul.mubr.bf16.gmra.mrb[0].mxu0 %v5493
  %v6378 = vpop.f32.mrb[0].mxu0
  %v6379 = vadd.f32 0.0, %v6378
  %v6380 = vpop.f32.mrb[0].mxu0
  %v6381 = vadd.f32 0.0, %v6380
  %v6382 = vpop.f32.mrb[0].mxu0
  %v6383 = vadd.f32 0.0, %v6382
  %v6384 = vpop.f32.mrb[0].mxu0
  %v6385 = vadd.f32 0.0, %v6384
  %6386 = vdwg.mxu0
  %6387 = vmatprep.subr.bf16.mxu0 %v6050
  %6388 = vmatpush1.bf16.msra.mxu0 %v6049
  %6389 = vmatprep.subr.bf16.mxu0 %v6058
  %6390 = vmatpush1.bf16.msra.mxu0 %v6057
  %6391 = vmatprep.subr.bf16.mxu0 %v6066
  %6392 = vmatpush1.bf16.msra.mxu0 %v6065
  %6393 = vmatprep.subr.bf16.mxu0 %v6074
  %6394 = vmatpush1.bf16.msra.mxu0 %v6073
  %6395 = vmatprep.subr.bf16.mxu0 %v6082
  %6396 = vmatpush1.bf16.msra.mxu0 %v6081
  %6397 = vmatprep.subr.bf16.mxu0 %v6090
  %6398 = vmatpush1.bf16.msra.mxu0 %v6089
  %6399 = vmatprep.subr.bf16.mxu0 %v6098
  %6400 = vmatpush1.bf16.msra.mxu0 %v6097
  %6401 = vmatprep.subr.bf16.mxu0 %v6106
  %6402 = vmatpush1.bf16.msra.mxu0 %v6105
  %6403 = vmatprep.subr.bf16.mxu0 %v6114
  %6404 = vmatpush1.bf16.msra.mxu0 %v6113
  %6405 = vmatprep.subr.bf16.mxu0 %v6122
  %6406 = vmatpush1.bf16.msra.mxu0 %v6121
  %6407 = vmatprep.subr.bf16.mxu0 %v6130
  %6408 = vmatpush1.bf16.msra.mxu0 %v6129
  %6409 = vmatprep.subr.bf16.mxu0 %v6138
  %6410 = vmatpush1.bf16.msra.mxu0 %v6137
  %6411 = vmatprep.subr.bf16.mxu0 %v6146
  %6412 = vmatpush1.bf16.msra.mxu0 %v6145
  %6413 = vmatprep.subr.bf16.mxu0 %v6154
  %6414 = vmatpush1.bf16.msra.mxu0 %v6153
  %6415 = vmatprep.subr.bf16.mxu0 %v6162
  %6416 = vmatpush1.bf16.msra.mxu0 %v6161
  %6417 = vmatprep.subr.bf16.mxu0 %v6170
  %6418 = vmatpush1.bf16.msra.mxu0 %v6169
  %6419 = vmatprep.mubr.bf16.mxu0 %v5494
  %6420 = vmatmul.mubr.bf16.gmra.mrb[0].mxu0 %v5493
  %v6421 = vpop.f32.mrb[0].mxu0
  %v6422 = vadd.f32 0.0, %v6421
  %v6423 = vpop.f32.mrb[0].mxu0
  %v6424 = vadd.f32 0.0, %v6423
  %v6425 = vpop.f32.mrb[0].mxu0
  %v6426 = vadd.f32 0.0, %v6425
  %v6427 = vpop.f32.mrb[0].mxu0
  %v6428 = vadd.f32 0.0, %v6427
  %6429 = vdwg.mxu0
  %6430 = vmatprep.subr.bf16.mxu0 %v6052
  %6431 = vmatpush1.bf16.msra.mxu0 %v6051
  %6432 = vmatprep.subr.bf16.mxu0 %v6060
  %6433 = vmatpush1.bf16.msra.mxu0 %v6059
  %6434 = vmatprep.subr.bf16.mxu0 %v6068
  %6435 = vmatpush1.bf16.msra.mxu0 %v6067
  %6436 = vmatprep.subr.bf16.mxu0 %v6076
  %6437 = vmatpush1.bf16.msra.mxu0 %v6075
  %6438 = vmatprep.subr.bf16.mxu0 %v6084
  %6439 = vmatpush1.bf16.msra.mxu0 %v6083
  %6440 = vmatprep.subr.bf16.mxu0 %v6092
  %6441 = vmatpush1.bf16.msra.mxu0 %v6091
  %6442 = vmatprep.subr.bf16.mxu0 %v6100
  %6443 = vmatpush1.bf16.msra.mxu0 %v6099
  %6444 = vmatprep.subr.bf16.mxu0 %v6108
  %6445 = vmatpush1.bf16.msra.mxu0 %v6107
  %6446 = vmatprep.subr.bf16.mxu0 %v6116
  %6447 = vmatpush1.bf16.msra.mxu0 %v6115
  %6448 = vmatprep.subr.bf16.mxu0 %v6124
  %6449 = vmatpush1.bf16.msra.mxu0 %v6123
  %6450 = vmatprep.subr.bf16.mxu0 %v6132
  %6451 = vmatpush1.bf16.msra.mxu0 %v6131
  %6452 = vmatprep.subr.bf16.mxu0 %v6140
  %6453 = vmatpush1.bf16.msra.mxu0 %v6139
  %6454 = vmatprep.subr.bf16.mxu0 %v6148
  %6455 = vmatpush1.bf16.msra.mxu0 %v6147
  %6456 = vmatprep.subr.bf16.mxu0 %v6156
  %6457 = vmatpush1.bf16.msra.mxu0 %v6155
  %6458 = vmatprep.subr.bf16.mxu0 %v6164
  %6459 = vmatpush1.bf16.msra.mxu0 %v6163
  %6460 = vmatprep.subr.bf16.mxu0 %v6172
  %6461 = vmatpush1.bf16.msra.mxu0 %v6171
  %6462 = vmatprep.mubr.bf16.mxu0 %v5494
  %6463 = vmatmul.mubr.bf16.gmra.mrb[0].mxu0 %v5493
  %v6464 = vpop.f32.mrb[0].mxu0
  %v6465 = vadd.f32 0.0, %v6464
  %v6466 = vpop.f32.mrb[0].mxu0
  %v6467 = vadd.f32 0.0, %v6466
  %v6468 = vpop.f32.mrb[0].mxu0
  %v6469 = vadd.f32 0.0, %v6468
  %v6470 = vpop.f32.mrb[0].mxu0
  %v6471 = vadd.f32 0.0, %v6470
  %6472 = vdwg.mxu0
  %v6473 = vadd.f32 %v5517, %v6336
  %v6474 = vadd.f32 %v5518, %v6338
  %v6475 = vadd.f32 %v5519, %v6379
  %v6476 = vadd.f32 %v5520, %v6381
  %v6477 = vadd.f32 %v5521, %v6422
  %v6478 = vadd.f32 %v5522, %v6424
  %v6479 = vadd.f32 %v5523, %v6465
  %v6480 = vadd.f32 %v5524, %v6467
  %v6481 = vadd.f32 %v5525, %v6340
  %v6482 = vadd.f32 %v5526, %v6342
  %v6483 = vadd.f32 %v5527, %v6383
  %v6484 = vadd.f32 %v5528, %v6385
  %v6485 = vadd.f32 %v5529, %v6426
  %v6486 = vadd.f32 %v5530, %v6428
  %v6487 = vadd.f32 %v5531, %v6469
  %v6488 = vadd.f32 %v5532, %v6471
  %v6489 = vxor.u32 %v6473, 2147483648
  %v6490 = vxor.u32 %v6474, 2147483648
  %v6491 = vxor.u32 %v6475, 2147483648
  %v6492 = vxor.u32 %v6476, 2147483648
  %v6493 = vxor.u32 %v6477, 2147483648
  %v6494 = vxor.u32 %v6478, 2147483648
  %v6495 = vxor.u32 %v6481, 2147483648
  %v6496 = vxor.u32 %v6482, 2147483648
  %v6497 = vxor.u32 %v6483, 2147483648
  %v6498 = vxor.u32 %v6484, 2147483648
  %v6499 = vxor.u32 %v6485, 2147483648
  %v6500 = vxor.u32 %v6486, 2147483648
  %v6501 = vmul.f32 %v6489, 1.442695
  %v6502 = vpow.pop %v6501
  %v6503 = vmul.f32 %v6490, 1.442695
  %v6504 = vpow.pop %v6503
  %v6505 = vmul.f32 %v6491, 1.442695
  %v6506 = vpow.pop %v6505
  %v6507 = vmul.f32 %v6492, 1.442695
  %v6508 = vpow.pop %v6507
  %v6509 = vmul.f32 %v6493, 1.442695
  %v6510 = vpow.pop %v6509
  %v6511 = vmul.f32 %v6494, 1.442695
  %v6512 = vpow.pop %v6511
  %v6513 = vmul.f32 %v6495, 1.442695
  %v6514 = vpow.pop %v6513
  %v6515 = vmul.f32 %v6496, 1.442695
  %v6516 = vpow.pop %v6515
  %v6517 = vmul.f32 %v6497, 1.442695
  %v6518 = vpow.pop %v6517
  %v6519 = vmul.f32 %v6498, 1.442695
  %v6520 = vpow.pop %v6519
  %v6521 = vmul.f32 %v6499, 1.442695
  %v6522 = vpow.pop %v6521
  %v6523 = vmul.f32 %v6500, 1.442695
  %v6524 = vpow.pop %v6523
  %v6525 = vadd.f32 %v6502, 1.0
  %v6526 = vadd.f32 %v6504, 1.0
  %v6527 = vadd.f32 %v6506, 1.0
  %v6528 = vadd.f32 %v6508, 1.0
  %v6529 = vadd.f32 %v6510, 1.0
  %v6530 = vadd.f32 %v6512, 1.0
  %v6531 = vadd.f32 %v6514, 1.0
  %v6532 = vadd.f32 %v6516, 1.0
  %v6533 = vadd.f32 %v6518, 1.0
  %v6534 = vadd.f32 %v6520, 1.0
  %v6535 = vadd.f32 %v6522, 1.0
  %v6536 = vadd.f32 %v6524, 1.0
  %v6537 = vrcp.pop %v6525
  %v6538 = vmul.f32 1.0, %v6537
  %v6539 = vrcp.pop %v6526
  %v6540 = vmul.f32 1.0, %v6539
  %v6541 = vrcp.pop %v6527
  %v6542 = vmul.f32 1.0, %v6541
  %v6543 = vrcp.pop %v6528
  %v6544 = vmul.f32 1.0, %v6543
  %v6545 = vrcp.pop %v6529
  %v6546 = vmul.f32 1.0, %v6545
  %v6547 = vrcp.pop %v6530
  %v6548 = vmul.f32 1.0, %v6547
  %v6549 = vrcp.pop %v6531
  %v6550 = vmul.f32 1.0, %v6549
  %v6551 = vrcp.pop %v6532
  %v6552 = vmul.f32 1.0, %v6551
  %v6553 = vrcp.pop %v6533
  %v6554 = vmul.f32 1.0, %v6553
  %v6555 = vrcp.pop %v6534
  %v6556 = vmul.f32 1.0, %v6555
  %v6557 = vrcp.pop %v6535
  %v6558 = vmul.f32 1.0, %v6557
  %v6559 = vrcp.pop %v6536
  %v6560 = vmul.f32 1.0, %v6559
  %v6561 = vtanh.pop %v6479
  %v6562 = vtanh.pop %v6480
  %v6563 = vtanh.pop %v6487
  %v6564 = vtanh.pop %v6488
  %v6565 = vmul.f32 %v6542, %v5481
  %v6566 = vmul.f32 %v6544, %v5482
  %v6567 = vmul.f32 %v6554, %v5483
  %v6568 = vmul.f32 %v6556, %v5484
  %v6569 = vmul.f32 %v6538, %v6561
  %v6570 = vmul.f32 %v6540, %v6562
  %v6571 = vmul.f32 %v6550, %v6563
  %v6572 = vmul.f32 %v6552, %v6564
  %v6573 = vadd.f32 %v6565, %v6569
  %v6574 = vadd.f32 %v6566, %v6570
  %v6575 = vadd.f32 %v6567, %v6571
  %v6576 = vadd.f32 %v6568, %v6572
  %v6577 = vtanh.pop %v6573
  %v6578 = vtanh.pop %v6574
  %v6579 = vtanh.pop %v6575
  %v6580 = vtanh.pop %v6576
  %v6581 = vmul.f32 %v6546, %v6577
  %v6582 = vmul.f32 %v6548, %v6578
  %v6583 = vmul.f32 %v6558, %v6579
  %v6584 = vmul.f32 %v6560, %v6580
  %v6585 = vpack.c.bf16 %v6583, %v6581
  %v6586 = vpack.c.bf16 %v6584, %v6582
  %v6589 = vunpack.c.l.b16 %v6585
  %v6590 = vunpack.c.l.b16 %v6586
  %v6591 = vunpack.c.h.b16 %v6585
  %v6592 = vunpack.c.h.b16 %v6586
  %v6593 = vpack.c.b16 %v6590, %v6589
  %v6594 = vpack.c.b16 %v6592, %v6591
  %s6597 = scalar_lea.vmem %s4, 80
  %6598 = vst [vmem:[%s6597] sm:$0xff] %v6593
  %6599 = vst [vmem:[%s6597 + $0x8] sm:$0xff] %v6594
  %s6600 = scalar_lea.vmem %s0, 384
  %v6601 = vld [vmem:[%s6600] sm:$0xff]
  %v6602 = vld [vmem:[%s6600 + $0x8] sm:$0xff]
  %v6603 = vld [vmem:[%s6600 + $0x10] sm:$0xff]
  %v6604 = vld [vmem:[%s6600 + $0x18] sm:$0xff]
  %v6605 = vld [vmem:[%s6600 + $0x20] sm:$0xff]
  %v6606 = vld [vmem:[%s6600 + $0x28] sm:$0xff]
  %v6607 = vld [vmem:[%s6600 + $0x30] sm:$0xff]
  %v6608 = vld [vmem:[%s6600 + $0x38] sm:$0xff]
  %v6609 = vunpack.c.l.bf16 %v6601
  %v6610 = vunpack.c.h.bf16 %v6601
  %v6611 = vunpack.c.l.bf16 %v6602
  %v6612 = vunpack.c.h.bf16 %v6602
  %v6613 = vunpack.c.l.bf16 %v6603
  %v6614 = vunpack.c.h.bf16 %v6603
  %v6615 = vunpack.c.l.bf16 %v6604
  %v6616 = vunpack.c.h.bf16 %v6604
  %v6617 = vunpack.c.l.bf16 %v6605
  %v6618 = vunpack.c.h.bf16 %v6605
  %v6619 = vunpack.c.l.bf16 %v6606
  %v6620 = vunpack.c.h.bf16 %v6606
  %v6621 = vunpack.c.l.bf16 %v6607
  %v6622 = vunpack.c.h.bf16 %v6607
  %v6623 = vunpack.c.l.bf16 %v6608
  %v6624 = vunpack.c.h.bf16 %v6608
  %v6625 = vld [vmem:[%s1] sm:$0xff]
  %v6626 = vld [vmem:[%s1 + $0x8] sm:$0xff]
  %v6627 = vld [vmem:[%s1 + $0x10] sm:$0xff]
  %v6628 = vld [vmem:[%s1 + $0x18] sm:$0xff]
  %v6629 = vld [vmem:[%s1 + $0x20] sm:$0xff]
  %v6630 = vld [vmem:[%s1 + $0x28] sm:$0xff]
  %v6631 = vld [vmem:[%s1 + $0x30] sm:$0xff]
  %v6632 = vld [vmem:[%s1 + $0x38] sm:$0xff]
  %v6633 = vld [vmem:[%s1 + $0x40] sm:$0xff]
  %v6634 = vld [vmem:[%s1 + $0x48] sm:$0xff]
  %v6635 = vld [vmem:[%s1 + $0x50] sm:$0xff]
  %v6636 = vld [vmem:[%s1 + $0x58] sm:$0xff]
  %v6637 = vld [vmem:[%s1 + $0x60] sm:$0xff]
  %v6638 = vld [vmem:[%s1 + $0x68] sm:$0xff]
  %v6639 = vld [vmem:[%s1 + $0x70] sm:$0xff]
  %v6640 = vld [vmem:[%s1 + $0x78] sm:$0xff]
  %v6641 = vld [vmem:[%s1 + $0x80] sm:$0xff]
  %v6642 = vld [vmem:[%s1 + $0x88] sm:$0xff]
  %v6643 = vld [vmem:[%s1 + $0x90] sm:$0xff]
  %v6644 = vld [vmem:[%s1 + $0x98] sm:$0xff]
  %v6645 = vld [vmem:[%s1 + $0xa0] sm:$0xff]
  %v6646 = vld [vmem:[%s1 + $0xa8] sm:$0xff]
  %v6647 = vld [vmem:[%s1 + $0xb0] sm:$0xff]
  %v6648 = vld [vmem:[%s1 + $0xb8] sm:$0xff]
  %v6649 = vld [vmem:[%s1 + $0xc0] sm:$0xff]
  %v6650 = vld [vmem:[%s1 + $0xc8] sm:$0xff]
  %v6651 = vld [vmem:[%s1 + $0xd0] sm:$0xff]
  %v6652 = vld [vmem:[%s1 + $0xd8] sm:$0xff]
  %v6653 = vld [vmem:[%s1 + $0xe0] sm:$0xff]
  %v6654 = vld [vmem:[%s1 + $0xe8] sm:$0xff]
  %v6655 = vld [vmem:[%s1 + $0xf0] sm:$0xff]
  %v6656 = vld [vmem:[%s1 + $0xf8] sm:$0xff]
  %v6657 = vld [vmem:[%s1 + $0x100] sm:$0xff]
  %v6658 = vld [vmem:[%s1 + $0x108] sm:$0xff]
  %v6659 = vld [vmem:[%s1 + $0x110] sm:$0xff]
  %v6660 = vld [vmem:[%s1 + $0x118] sm:$0xff]
  %v6661 = vld [vmem:[%s1 + $0x120] sm:$0xff]
  %v6662 = vld [vmem:[%s1 + $0x128] sm:$0xff]
  %v6663 = vld [vmem:[%s1 + $0x130] sm:$0xff]
  %v6664 = vld [vmem:[%s1 + $0x138] sm:$0xff]
  %v6665 = vld [vmem:[%s1 + $0x140] sm:$0xff]
  %v6666 = vld [vmem:[%s1 + $0x148] sm:$0xff]
  %v6667 = vld [vmem:[%s1 + $0x150] sm:$0xff]
  %v6668 = vld [vmem:[%s1 + $0x158] sm:$0xff]
  %v6669 = vld [vmem:[%s1 + $0x160] sm:$0xff]
  %v6670 = vld [vmem:[%s1 + $0x168] sm:$0xff]
  %v6671 = vld [vmem:[%s1 + $0x170] sm:$0xff]
  %v6672 = vld [vmem:[%s1 + $0x178] sm:$0xff]
  %v6673 = vld [vmem:[%s1 + $0x180] sm:$0xff]
  %v6674 = vld [vmem:[%s1 + $0x188] sm:$0xff]
  %v6675 = vld [vmem:[%s1 + $0x190] sm:$0xff]
  %v6676 = vld [vmem:[%s1 + $0x198] sm:$0xff]
  %v6677 = vld [vmem:[%s1 + $0x1a0] sm:$0xff]
  %v6678 = vld [vmem:[%s1 + $0x1a8] sm:$0xff]
  %v6679 = vld [vmem:[%s1 + $0x1b0] sm:$0xff]
  %v6680 = vld [vmem:[%s1 + $0x1b8] sm:$0xff]
  %v6681 = vld [vmem:[%s1 + $0x1c0] sm:$0xff]
  %v6682 = vld [vmem:[%s1 + $0x1c8] sm:$0xff]
  %v6683 = vld [vmem:[%s1 + $0x1d0] sm:$0xff]
  %v6684 = vld [vmem:[%s1 + $0x1d8] sm:$0xff]
  %v6685 = vld [vmem:[%s1 + $0x1e0] sm:$0xff]
  %v6686 = vld [vmem:[%s1 + $0x1e8] sm:$0xff]
  %v6687 = vld [vmem:[%s1 + $0x1f0] sm:$0xff]
  %v6688 = vld [vmem:[%s1 + $0x1f8] sm:$0xff]
  %v6689 = vld [vmem:[%s1 + $0x200] sm:$0xff]
  %v6690 = vld [vmem:[%s1 + $0x208] sm:$0xff]
  %v6691 = vld [vmem:[%s1 + $0x210] sm:$0xff]
  %v6692 = vld [vmem:[%s1 + $0x218] sm:$0xff]
  %v6693 = vld [vmem:[%s1 + $0x220] sm:$0xff]
  %v6694 = vld [vmem:[%s1 + $0x228] sm:$0xff]
  %v6695 = vld [vmem:[%s1 + $0x230] sm:$0xff]
  %v6696 = vld [vmem:[%s1 + $0x238] sm:$0xff]
  %v6697 = vld [vmem:[%s1 + $0x240] sm:$0xff]
  %v6698 = vld [vmem:[%s1 + $0x248] sm:$0xff]
  %v6699 = vld [vmem:[%s1 + $0x250] sm:$0xff]
  %v6700 = vld [vmem:[%s1 + $0x258] sm:$0xff]
  %v6701 = vld [vmem:[%s1 + $0x260] sm:$0xff]
  %v6702 = vld [vmem:[%s1 + $0x268] sm:$0xff]
  %v6703 = vld [vmem:[%s1 + $0x270] sm:$0xff]
  %v6704 = vld [vmem:[%s1 + $0x278] sm:$0xff]
  %v6705 = vld [vmem:[%s1 + $0x280] sm:$0xff]
  %v6706 = vld [vmem:[%s1 + $0x288] sm:$0xff]
  %v6707 = vld [vmem:[%s1 + $0x290] sm:$0xff]
  %v6708 = vld [vmem:[%s1 + $0x298] sm:$0xff]
  %v6709 = vld [vmem:[%s1 + $0x2a0] sm:$0xff]
  %v6710 = vld [vmem:[%s1 + $0x2a8] sm:$0xff]
  %v6711 = vld [vmem:[%s1 + $0x2b0] sm:$0xff]
  %v6712 = vld [vmem:[%s1 + $0x2b8] sm:$0xff]
  %v6713 = vld [vmem:[%s1 + $0x2c0] sm:$0xff]
  %v6714 = vld [vmem:[%s1 + $0x2c8] sm:$0xff]
  %v6715 = vld [vmem:[%s1 + $0x2d0] sm:$0xff]
  %v6716 = vld [vmem:[%s1 + $0x2d8] sm:$0xff]
  %v6717 = vld [vmem:[%s1 + $0x2e0] sm:$0xff]
  %v6718 = vld [vmem:[%s1 + $0x2e8] sm:$0xff]
  %v6719 = vld [vmem:[%s1 + $0x2f0] sm:$0xff]
  %v6720 = vld [vmem:[%s1 + $0x2f8] sm:$0xff]
  %v6721 = vld [vmem:[%s1 + $0x300] sm:$0xff]
  %v6722 = vld [vmem:[%s1 + $0x308] sm:$0xff]
  %v6723 = vld [vmem:[%s1 + $0x310] sm:$0xff]
  %v6724 = vld [vmem:[%s1 + $0x318] sm:$0xff]
  %v6725 = vld [vmem:[%s1 + $0x320] sm:$0xff]
  %v6726 = vld [vmem:[%s1 + $0x328] sm:$0xff]
  %v6727 = vld [vmem:[%s1 + $0x330] sm:$0xff]
  %v6728 = vld [vmem:[%s1 + $0x338] sm:$0xff]
  %v6729 = vld [vmem:[%s1 + $0x340] sm:$0xff]
  %v6730 = vld [vmem:[%s1 + $0x348] sm:$0xff]
  %v6731 = vld [vmem:[%s1 + $0x350] sm:$0xff]
  %v6732 = vld [vmem:[%s1 + $0x358] sm:$0xff]
  %v6733 = vld [vmem:[%s1 + $0x360] sm:$0xff]
  %v6734 = vld [vmem:[%s1 + $0x368] sm:$0xff]
  %v6735 = vld [vmem:[%s1 + $0x370] sm:$0xff]
  %v6736 = vld [vmem:[%s1 + $0x378] sm:$0xff]
  %v6737 = vld [vmem:[%s1 + $0x380] sm:$0xff]
  %v6738 = vld [vmem:[%s1 + $0x388] sm:$0xff]
  %v6739 = vld [vmem:[%s1 + $0x390] sm:$0xff]
  %v6740 = vld [vmem:[%s1 + $0x398] sm:$0xff]
  %v6741 = vld [vmem:[%s1 + $0x3a0] sm:$0xff]
  %v6742 = vld [vmem:[%s1 + $0x3a8] sm:$0xff]
  %v6743 = vld [vmem:[%s1 + $0x3b0] sm:$0xff]
  %v6744 = vld [vmem:[%s1 + $0x3b8] sm:$0xff]
  %v6745 = vld [vmem:[%s1 + $0x3c0] sm:$0xff]
  %v6746 = vld [vmem:[%s1 + $0x3c8] sm:$0xff]
  %v6747 = vld [vmem:[%s1 + $0x3d0] sm:$0xff]
  %v6748 = vld [vmem:[%s1 + $0x3d8] sm:$0xff]
  %v6749 = vld [vmem:[%s1 + $0x3e0] sm:$0xff]
  %v6750 = vld [vmem:[%s1 + $0x3e8] sm:$0xff]
  %v6751 = vld [vmem:[%s1 + $0x3f0] sm:$0xff]
  %v6752 = vld [vmem:[%s1 + $0x3f8] sm:$0xff]
  %v6881 = vunpack.c.l.b16 %v6625
  %v6882 = vunpack.c.h.b16 %v6625
  %v6883 = vunpack.c.l.b16 %v6626
  %v6884 = vunpack.c.h.b16 %v6626
  %v6885 = vunpack.c.l.b16 %v6627
  %v6886 = vunpack.c.h.b16 %v6627
  %v6887 = vunpack.c.l.b16 %v6628
  %v6888 = vunpack.c.h.b16 %v6628
  %v6889 = vunpack.c.l.b16 %v6629
  %v6890 = vunpack.c.h.b16 %v6629
  %v6891 = vunpack.c.l.b16 %v6630
  %v6892 = vunpack.c.h.b16 %v6630
  %v6893 = vunpack.c.l.b16 %v6631
  %v6894 = vunpack.c.h.b16 %v6631
  %v6895 = vunpack.c.l.b16 %v6632
  %v6896 = vunpack.c.h.b16 %v6632
  %v6897 = vunpack.c.l.b16 %v6633
  %v6898 = vunpack.c.h.b16 %v6633
  %v6899 = vunpack.c.l.b16 %v6634
  %v6900 = vunpack.c.h.b16 %v6634
  %v6901 = vunpack.c.l.b16 %v6635
  %v6902 = vunpack.c.h.b16 %v6635
  %v6903 = vunpack.c.l.b16 %v6636
  %v6904 = vunpack.c.h.b16 %v6636
  %v6905 = vunpack.c.l.b16 %v6637
  %v6906 = vunpack.c.h.b16 %v6637
  %v6907 = vunpack.c.l.b16 %v6638
  %v6908 = vunpack.c.h.b16 %v6638
  %v6909 = vunpack.c.l.b16 %v6639
  %v6910 = vunpack.c.h.b16 %v6639
  %v6911 = vunpack.c.l.b16 %v6640
  %v6912 = vunpack.c.h.b16 %v6640
  %v6913 = vunpack.c.l.b16 %v6641
  %v6914 = vunpack.c.h.b16 %v6641
  %v6915 = vunpack.c.l.b16 %v6642
  %v6916 = vunpack.c.h.b16 %v6642
  %v6917 = vunpack.c.l.b16 %v6643
  %v6918 = vunpack.c.h.b16 %v6643
  %v6919 = vunpack.c.l.b16 %v6644
  %v6920 = vunpack.c.h.b16 %v6644
  %v6921 = vunpack.c.l.b16 %v6645
  %v6922 = vunpack.c.h.b16 %v6645
  %v6923 = vunpack.c.l.b16 %v6646
  %v6924 = vunpack.c.h.b16 %v6646
  %v6925 = vunpack.c.l.b16 %v6647
  %v6926 = vunpack.c.h.b16 %v6647
  %v6927 = vunpack.c.l.b16 %v6648
  %v6928 = vunpack.c.h.b16 %v6648
  %v6929 = vunpack.c.l.b16 %v6649
  %v6930 = vunpack.c.h.b16 %v6649
  %v6931 = vunpack.c.l.b16 %v6650
  %v6932 = vunpack.c.h.b16 %v6650
  %v6933 = vunpack.c.l.b16 %v6651
  %v6934 = vunpack.c.h.b16 %v6651
  %v6935 = vunpack.c.l.b16 %v6652
  %v6936 = vunpack.c.h.b16 %v6652
  %v6937 = vunpack.c.l.b16 %v6653
  %v6938 = vunpack.c.h.b16 %v6653
  %v6939 = vunpack.c.l.b16 %v6654
  %v6940 = vunpack.c.h.b16 %v6654
  %v6941 = vunpack.c.l.b16 %v6655
  %v6942 = vunpack.c.h.b16 %v6655
  %v6943 = vunpack.c.l.b16 %v6656
  %v6944 = vunpack.c.h.b16 %v6656
  %v6945 = vunpack.c.l.b16 %v6657
  %v6946 = vunpack.c.h.b16 %v6657
  %v6947 = vunpack.c.l.b16 %v6658
  %v6948 = vunpack.c.h.b16 %v6658
  %v6949 = vunpack.c.l.b16 %v6659
  %v6950 = vunpack.c.h.b16 %v6659
  %v6951 = vunpack.c.l.b16 %v6660
  %v6952 = vunpack.c.h.b16 %v6660
  %v6953 = vunpack.c.l.b16 %v6661
  %v6954 = vunpack.c.h.b16 %v6661
  %v6955 = vunpack.c.l.b16 %v6662
  %v6956 = vunpack.c.h.b16 %v6662
  %v6957 = vunpack.c.l.b16 %v6663
  %v6958 = vunpack.c.h.b16 %v6663
  %v6959 = vunpack.c.l.b16 %v6664
  %v6960 = vunpack.c.h.b16 %v6664
  %v6961 = vunpack.c.l.b16 %v6665
  %v6962 = vunpack.c.h.b16 %v6665
  %v6963 = vunpack.c.l.b16 %v6666
  %v6964 = vunpack.c.h.b16 %v6666
  %v6965 = vunpack.c.l.b16 %v6667
  %v6966 = vunpack.c.h.b16 %v6667
  %v6967 = vunpack.c.l.b16 %v6668
  %v6968 = vunpack.c.h.b16 %v6668
  %v6969 = vunpack.c.l.b16 %v6669
  %v6970 = vunpack.c.h.b16 %v6669
  %v6971 = vunpack.c.l.b16 %v6670
  %v6972 = vunpack.c.h.b16 %v6670
  %v6973 = vunpack.c.l.b16 %v6671
  %v6974 = vunpack.c.h.b16 %v6671
  %v6975 = vunpack.c.l.b16 %v6672
  %v6976 = vunpack.c.h.b16 %v6672
  %v6977 = vunpack.c.l.b16 %v6673
  %v6978 = vunpack.c.h.b16 %v6673
  %v6979 = vunpack.c.l.b16 %v6674
  %v6980 = vunpack.c.h.b16 %v6674
  %v6981 = vunpack.c.l.b16 %v6675
  %v6982 = vunpack.c.h.b16 %v6675
  %v6983 = vunpack.c.l.b16 %v6676
  %v6984 = vunpack.c.h.b16 %v6676
  %v6985 = vunpack.c.l.b16 %v6677
  %v6986 = vunpack.c.h.b16 %v6677
  %v6987 = vunpack.c.l.b16 %v6678
  %v6988 = vunpack.c.h.b16 %v6678
  %v6989 = vunpack.c.l.b16 %v6679
  %v6990 = vunpack.c.h.b16 %v6679
  %v6991 = vunpack.c.l.b16 %v6680
  %v6992 = vunpack.c.h.b16 %v6680
  %v6993 = vunpack.c.l.b16 %v6681
  %v6994 = vunpack.c.h.b16 %v6681
  %v6995 = vunpack.c.l.b16 %v6682
  %v6996 = vunpack.c.h.b16 %v6682
  %v6997 = vunpack.c.l.b16 %v6683
  %v6998 = vunpack.c.h.b16 %v6683
  %v6999 = vunpack.c.l.b16 %v6684
  %v7000 = vunpack.c.h.b16 %v6684
  %v7001 = vunpack.c.l.b16 %v6685
  %v7002 = vunpack.c.h.b16 %v6685
  %v7003 = vunpack.c.l.b16 %v6686
  %v7004 = vunpack.c.h.b16 %v6686
  %v7005 = vunpack.c.l.b16 %v6687
  %v7006 = vunpack.c.h.b16 %v6687
  %v7007 = vunpack.c.l.b16 %v6688
  %v7008 = vunpack.c.h.b16 %v6688
  %v7009 = vunpack.c.l.b16 %v6689
  %v7010 = vunpack.c.h.b16 %v6689
  %v7011 = vunpack.c.l.b16 %v6690
  %v7012 = vunpack.c.h.b16 %v6690
  %v7013 = vunpack.c.l.b16 %v6691
  %v7014 = vunpack.c.h.b16 %v6691
  %v7015 = vunpack.c.l.b16 %v6692
  %v7016 = vunpack.c.h.b16 %v6692
  %v7017 = vunpack.c.l.b16 %v6693
  %v7018 = vunpack.c.h.b16 %v6693
  %v7019 = vunpack.c.l.b16 %v6694
  %v7020 = vunpack.c.h.b16 %v6694
  %v7021 = vunpack.c.l.b16 %v6695
  %v7022 = vunpack.c.h.b16 %v6695
  %v7023 = vunpack.c.l.b16 %v6696
  %v7024 = vunpack.c.h.b16 %v6696
  %v7025 = vunpack.c.l.b16 %v6697
  %v7026 = vunpack.c.h.b16 %v6697
  %v7027 = vunpack.c.l.b16 %v6698
  %v7028 = vunpack.c.h.b16 %v6698
  %v7029 = vunpack.c.l.b16 %v6699
  %v7030 = vunpack.c.h.b16 %v6699
  %v7031 = vunpack.c.l.b16 %v6700
  %v7032 = vunpack.c.h.b16 %v6700
  %v7033 = vunpack.c.l.b16 %v6701
  %v7034 = vunpack.c.h.b16 %v6701
  %v7035 = vunpack.c.l.b16 %v6702
  %v7036 = vunpack.c.h.b16 %v6702
  %v7037 = vunpack.c.l.b16 %v6703
  %v7038 = vunpack.c.h.b16 %v6703
  %v7039 = vunpack.c.l.b16 %v6704
  %v7040 = vunpack.c.h.b16 %v6704
  %v7041 = vunpack.c.l.b16 %v6705
  %v7042 = vunpack.c.h.b16 %v6705
  %v7043 = vunpack.c.l.b16 %v6706
  %v7044 = vunpack.c.h.b16 %v6706
  %v7045 = vunpack.c.l.b16 %v6707
  %v7046 = vunpack.c.h.b16 %v6707
  %v7047 = vunpack.c.l.b16 %v6708
  %v7048 = vunpack.c.h.b16 %v6708
  %v7049 = vunpack.c.l.b16 %v6709
  %v7050 = vunpack.c.h.b16 %v6709
  %v7051 = vunpack.c.l.b16 %v6710
  %v7052 = vunpack.c.h.b16 %v6710
  %v7053 = vunpack.c.l.b16 %v6711
  %v7054 = vunpack.c.h.b16 %v6711
  %v7055 = vunpack.c.l.b16 %v6712
  %v7056 = vunpack.c.h.b16 %v6712
  %v7057 = vunpack.c.l.b16 %v6713
  %v7058 = vunpack.c.h.b16 %v6713
  %v7059 = vunpack.c.l.b16 %v6714
  %v7060 = vunpack.c.h.b16 %v6714
  %v7061 = vunpack.c.l.b16 %v6715
  %v7062 = vunpack.c.h.b16 %v6715
  %v7063 = vunpack.c.l.b16 %v6716
  %v7064 = vunpack.c.h.b16 %v6716
  %v7065 = vunpack.c.l.b16 %v6717
  %v7066 = vunpack.c.h.b16 %v6717
  %v7067 = vunpack.c.l.b16 %v6718
  %v7068 = vunpack.c.h.b16 %v6718
  %v7069 = vunpack.c.l.b16 %v6719
  %v7070 = vunpack.c.h.b16 %v6719
  %v7071 = vunpack.c.l.b16 %v6720
  %v7072 = vunpack.c.h.b16 %v6720
  %v7073 = vunpack.c.l.b16 %v6721
  %v7074 = vunpack.c.h.b16 %v6721
  %v7075 = vunpack.c.l.b16 %v6722
  %v7076 = vunpack.c.h.b16 %v6722
  %v7077 = vunpack.c.l.b16 %v6723
  %v7078 = vunpack.c.h.b16 %v6723
  %v7079 = vunpack.c.l.b16 %v6724
  %v7080 = vunpack.c.h.b16 %v6724
  %v7081 = vunpack.c.l.b16 %v6725
  %v7082 = vunpack.c.h.b16 %v6725
  %v7083 = vunpack.c.l.b16 %v6726
  %v7084 = vunpack.c.h.b16 %v6726
  %v7085 = vunpack.c.l.b16 %v6727
  %v7086 = vunpack.c.h.b16 %v6727
  %v7087 = vunpack.c.l.b16 %v6728
  %v7088 = vunpack.c.h.b16 %v6728
  %v7089 = vunpack.c.l.b16 %v6729
  %v7090 = vunpack.c.h.b16 %v6729
  %v7091 = vunpack.c.l.b16 %v6730
  %v7092 = vunpack.c.h.b16 %v6730
  %v7093 = vunpack.c.l.b16 %v6731
  %v7094 = vunpack.c.h.b16 %v6731
  %v7095 = vunpack.c.l.b16 %v6732
  %v7096 = vunpack.c.h.b16 %v6732
  %v7097 = vunpack.c.l.b16 %v6733
  %v7098 = vunpack.c.h.b16 %v6733
  %v7099 = vunpack.c.l.b16 %v6734
  %v7100 = vunpack.c.h.b16 %v6734
  %v7101 = vunpack.c.l.b16 %v6735
  %v7102 = vunpack.c.h.b16 %v6735
  %v7103 = vunpack.c.l.b16 %v6736
  %v7104 = vunpack.c.h.b16 %v6736
  %v7105 = vunpack.c.l.b16 %v6737
  %v7106 = vunpack.c.h.b16 %v6737
  %v7107 = vunpack.c.l.b16 %v6738
  %v7108 = vunpack.c.h.b16 %v6738
  %v7109 = vunpack.c.l.b16 %v6739
  %v7110 = vunpack.c.h.b16 %v6739
  %v7111 = vunpack.c.l.b16 %v6740
  %v7112 = vunpack.c.h.b16 %v6740
  %v7113 = vunpack.c.l.b16 %v6741
  %v7114 = vunpack.c.h.b16 %v6741
  %v7115 = vunpack.c.l.b16 %v6742
  %v7116 = vunpack.c.h.b16 %v6742
  %v7117 = vunpack.c.l.b16 %v6743
  %v7118 = vunpack.c.h.b16 %v6743
  %v7119 = vunpack.c.l.b16 %v6744
  %v7120 = vunpack.c.h.b16 %v6744
  %v7121 = vunpack.c.l.b16 %v6745
  %v7122 = vunpack.c.h.b16 %v6745
  %v7123 = vunpack.c.l.b16 %v6746
  %v7124 = vunpack.c.h.b16 %v6746
  %v7125 = vunpack.c.l.b16 %v6747
  %v7126 = vunpack.c.h.b16 %v6747
  %v7127 = vunpack.c.l.b16 %v6748
  %v7128 = vunpack.c.h.b16 %v6748
  %v7129 = vunpack.c.l.b16 %v6749
  %v7130 = vunpack.c.h.b16 %v6749
  %v7131 = vunpack.c.l.b16 %v6750
  %v7132 = vunpack.c.h.b16 %v6750
  %v7133 = vunpack.c.l.b16 %v6751
  %v7134 = vunpack.c.h.b16 %v6751
  %v7135 = vunpack.c.l.b16 %v6752
  %v7136 = vunpack.c.h.b16 %v6752
  %v7137 = vpack.c.b16 %v6889, %v6881
  %v7138 = vpack.c.b16 %v6890, %v6882
  %v7139 = vpack.c.b16 %v6891, %v6883
  %v7140 = vpack.c.b16 %v6892, %v6884
  %v7141 = vpack.c.b16 %v6893, %v6885
  %v7142 = vpack.c.b16 %v6894, %v6886
  %v7143 = vpack.c.b16 %v6895, %v6887
  %v7144 = vpack.c.b16 %v6896, %v6888
  %v7145 = vpack.c.b16 %v6905, %v6897
  %v7146 = vpack.c.b16 %v6906, %v6898
  %v7147 = vpack.c.b16 %v6907, %v6899
  %v7148 = vpack.c.b16 %v6908, %v6900
  %v7149 = vpack.c.b16 %v6909, %v6901
  %v7150 = vpack.c.b16 %v6910, %v6902
  %v7151 = vpack.c.b16 %v6911, %v6903
  %v7152 = vpack.c.b16 %v6912, %v6904
  %v7153 = vpack.c.b16 %v6921, %v6913
  %v7154 = vpack.c.b16 %v6922, %v6914
  %v7155 = vpack.c.b16 %v6923, %v6915
  %v7156 = vpack.c.b16 %v6924, %v6916
  %v7157 = vpack.c.b16 %v6925, %v6917
  %v7158 = vpack.c.b16 %v6926, %v6918
  %v7159 = vpack.c.b16 %v6927, %v6919
  %v7160 = vpack.c.b16 %v6928, %v6920
  %v7161 = vpack.c.b16 %v6937, %v6929
  %v7162 = vpack.c.b16 %v6938, %v6930
  %v7163 = vpack.c.b16 %v6939, %v6931
  %v7164 = vpack.c.b16 %v6940, %v6932
  %v7165 = vpack.c.b16 %v6941, %v6933
  %v7166 = vpack.c.b16 %v6942, %v6934
  %v7167 = vpack.c.b16 %v6943, %v6935
  %v7168 = vpack.c.b16 %v6944, %v6936
  %v7169 = vpack.c.b16 %v6953, %v6945
  %v7170 = vpack.c.b16 %v6954, %v6946
  %v7171 = vpack.c.b16 %v6955, %v6947
  %v7172 = vpack.c.b16 %v6956, %v6948
  %v7173 = vpack.c.b16 %v6957, %v6949
  %v7174 = vpack.c.b16 %v6958, %v6950
  %v7175 = vpack.c.b16 %v6959, %v6951
  %v7176 = vpack.c.b16 %v6960, %v6952
  %v7177 = vpack.c.b16 %v6969, %v6961
  %v7178 = vpack.c.b16 %v6970, %v6962
  %v7179 = vpack.c.b16 %v6971, %v6963
  %v7180 = vpack.c.b16 %v6972, %v6964
  %v7181 = vpack.c.b16 %v6973, %v6965
  %v7182 = vpack.c.b16 %v6974, %v6966
  %v7183 = vpack.c.b16 %v6975, %v6967
  %v7184 = vpack.c.b16 %v6976, %v6968
  %v7185 = vpack.c.b16 %v6985, %v6977
  %v7186 = vpack.c.b16 %v6986, %v6978
  %v7187 = vpack.c.b16 %v6987, %v6979
  %v7188 = vpack.c.b16 %v6988, %v6980
  %v7189 = vpack.c.b16 %v6989, %v6981
  %v7190 = vpack.c.b16 %v6990, %v6982
  %v7191 = vpack.c.b16 %v6991, %v6983
  %v7192 = vpack.c.b16 %v6992, %v6984
  %v7193 = vpack.c.b16 %v7001, %v6993
  %v7194 = vpack.c.b16 %v7002, %v6994
  %v7195 = vpack.c.b16 %v7003, %v6995
  %v7196 = vpack.c.b16 %v7004, %v6996
  %v7197 = vpack.c.b16 %v7005, %v6997
  %v7198 = vpack.c.b16 %v7006, %v6998
  %v7199 = vpack.c.b16 %v7007, %v6999
  %v7200 = vpack.c.b16 %v7008, %v7000
  %v7201 = vpack.c.b16 %v7017, %v7009
  %v7202 = vpack.c.b16 %v7018, %v7010
  %v7203 = vpack.c.b16 %v7019, %v7011
  %v7204 = vpack.c.b16 %v7020, %v7012
  %v7205 = vpack.c.b16 %v7021, %v7013
  %v7206 = vpack.c.b16 %v7022, %v7014
  %v7207 = vpack.c.b16 %v7023, %v7015
  %v7208 = vpack.c.b16 %v7024, %v7016
  %v7209 = vpack.c.b16 %v7033, %v7025
  %v7210 = vpack.c.b16 %v7034, %v7026
  %v7211 = vpack.c.b16 %v7035, %v7027
  %v7212 = vpack.c.b16 %v7036, %v7028
  %v7213 = vpack.c.b16 %v7037, %v7029
  %v7214 = vpack.c.b16 %v7038, %v7030
  %v7215 = vpack.c.b16 %v7039, %v7031
  %v7216 = vpack.c.b16 %v7040, %v7032
  %v7217 = vpack.c.b16 %v7049, %v7041
  %v7218 = vpack.c.b16 %v7050, %v7042
  %v7219 = vpack.c.b16 %v7051, %v7043
  %v7220 = vpack.c.b16 %v7052, %v7044
  %v7221 = vpack.c.b16 %v7053, %v7045
  %v7222 = vpack.c.b16 %v7054, %v7046
  %v7223 = vpack.c.b16 %v7055, %v7047
  %v7224 = vpack.c.b16 %v7056, %v7048
  %v7225 = vpack.c.b16 %v7065, %v7057
  %v7226 = vpack.c.b16 %v7066, %v7058
  %v7227 = vpack.c.b16 %v7067, %v7059
  %v7228 = vpack.c.b16 %v7068, %v7060
  %v7229 = vpack.c.b16 %v7069, %v7061
  %v7230 = vpack.c.b16 %v7070, %v7062
  %v7231 = vpack.c.b16 %v7071, %v7063
  %v7232 = vpack.c.b16 %v7072, %v7064
  %v7233 = vpack.c.b16 %v7081, %v7073
  %v7234 = vpack.c.b16 %v7082, %v7074
  %v7235 = vpack.c.b16 %v7083, %v7075
  %v7236 = vpack.c.b16 %v7084, %v7076
  %v7237 = vpack.c.b16 %v7085, %v7077
  %v7238 = vpack.c.b16 %v7086, %v7078
  %v7239 = vpack.c.b16 %v7087, %v7079
  %v7240 = vpack.c.b16 %v7088, %v7080
  %v7241 = vpack.c.b16 %v7097, %v7089
  %v7242 = vpack.c.b16 %v7098, %v7090
  %v7243 = vpack.c.b16 %v7099, %v7091
  %v7244 = vpack.c.b16 %v7100, %v7092
  %v7245 = vpack.c.b16 %v7101, %v7093
  %v7246 = vpack.c.b16 %v7102, %v7094
  %v7247 = vpack.c.b16 %v7103, %v7095
  %v7248 = vpack.c.b16 %v7104, %v7096
  %v7249 = vpack.c.b16 %v7113, %v7105
  %v7250 = vpack.c.b16 %v7114, %v7106
  %v7251 = vpack.c.b16 %v7115, %v7107
  %v7252 = vpack.c.b16 %v7116, %v7108
  %v7253 = vpack.c.b16 %v7117, %v7109
  %v7254 = vpack.c.b16 %v7118, %v7110
  %v7255 = vpack.c.b16 %v7119, %v7111
  %v7256 = vpack.c.b16 %v7120, %v7112
  %v7257 = vpack.c.b16 %v7129, %v7121
  %v7258 = vpack.c.b16 %v7130, %v7122
  %v7259 = vpack.c.b16 %v7131, %v7123
  %v7260 = vpack.c.b16 %v7132, %v7124
  %v7261 = vpack.c.b16 %v7133, %v7125
  %v7262 = vpack.c.b16 %v7134, %v7126
  %v7263 = vpack.c.b16 %v7135, %v7127
  %v7264 = vpack.c.b16 %v7136, %v7128
  %7393 = vmatprep.subr.bf16.mxu0 %v7138
  %7394 = vmatpush1.bf16.msra.mxu0 %v7137
  %7395 = vmatprep.subr.bf16.mxu0 %v7146
  %7396 = vmatpush1.bf16.msra.mxu0 %v7145
  %7397 = vmatprep.subr.bf16.mxu0 %v7154
  %7398 = vmatpush1.bf16.msra.mxu0 %v7153
  %7399 = vmatprep.subr.bf16.mxu0 %v7162
  %7400 = vmatpush1.bf16.msra.mxu0 %v7161
  %7401 = vmatprep.subr.bf16.mxu0 %v7170
  %7402 = vmatpush1.bf16.msra.mxu0 %v7169
  %7403 = vmatprep.subr.bf16.mxu0 %v7178
  %7404 = vmatpush1.bf16.msra.mxu0 %v7177
  %7405 = vmatprep.subr.bf16.mxu0 %v7186
  %7406 = vmatpush1.bf16.msra.mxu0 %v7185
  %7407 = vmatprep.subr.bf16.mxu0 %v7194
  %7408 = vmatpush1.bf16.msra.mxu0 %v7193
  %7409 = vmatprep.subr.bf16.mxu0 %v7202
  %7410 = vmatpush1.bf16.msra.mxu0 %v7201
  %7411 = vmatprep.subr.bf16.mxu0 %v7210
  %7412 = vmatpush1.bf16.msra.mxu0 %v7209
  %7413 = vmatprep.subr.bf16.mxu0 %v7218
  %7414 = vmatpush1.bf16.msra.mxu0 %v7217
  %7415 = vmatprep.subr.bf16.mxu0 %v7226
  %7416 = vmatpush1.bf16.msra.mxu0 %v7225
  %7417 = vmatprep.subr.bf16.mxu0 %v7234
  %7418 = vmatpush1.bf16.msra.mxu0 %v7233
  %7419 = vmatprep.subr.bf16.mxu0 %v7242
  %7420 = vmatpush1.bf16.msra.mxu0 %v7241
  %7421 = vmatprep.subr.bf16.mxu0 %v7250
  %7422 = vmatpush1.bf16.msra.mxu0 %v7249
  %7423 = vmatprep.subr.bf16.mxu0 %v7258
  %7424 = vmatpush1.bf16.msra.mxu0 %v7257
  %7425 = vmatprep.mubr.bf16.mxu0 %v6586
  %7426 = vmatmul.mubr.bf16.gmra.mrb[0].mxu0 %v6585
  %v7427 = vpop.f32.mrb[0].mxu0
  %v7428 = vadd.f32 0.0, %v7427
  %v7429 = vpop.f32.mrb[0].mxu0
  %v7430 = vadd.f32 0.0, %v7429
  %v7431 = vpop.f32.mrb[0].mxu0
  %v7432 = vadd.f32 0.0, %v7431
  %v7433 = vpop.f32.mrb[0].mxu0
  %v7434 = vadd.f32 0.0, %v7433
  %7435 = vdwg.mxu0
  %7436 = vmatprep.subr.bf16.mxu0 %v7140
  %7437 = vmatpush1.bf16.msra.mxu0 %v7139
  %7438 = vmatprep.subr.bf16.mxu0 %v7148
  %7439 = vmatpush1.bf16.msra.mxu0 %v7147
  %7440 = vmatprep.subr.bf16.mxu0 %v7156
  %7441 = vmatpush1.bf16.msra.mxu0 %v7155
  %7442 = vmatprep.subr.bf16.mxu0 %v7164
  %7443 = vmatpush1.bf16.msra.mxu0 %v7163
  %7444 = vmatprep.subr.bf16.mxu0 %v7172
  %7445 = vmatpush1.bf16.msra.mxu0 %v7171
  %7446 = vmatprep.subr.bf16.mxu0 %v7180
  %7447 = vmatpush1.bf16.msra.mxu0 %v7179
  %7448 = vmatprep.subr.bf16.mxu0 %v7188
  %7449 = vmatpush1.bf16.msra.mxu0 %v7187
  %7450 = vmatprep.subr.bf16.mxu0 %v7196
  %7451 = vmatpush1.bf16.msra.mxu0 %v7195
  %7452 = vmatprep.subr.bf16.mxu0 %v7204
  %7453 = vmatpush1.bf16.msra.mxu0 %v7203
  %7454 = vmatprep.subr.bf16.mxu0 %v7212
  %7455 = vmatpush1.bf16.msra.mxu0 %v7211
  %7456 = vmatprep.subr.bf16.mxu0 %v7220
  %7457 = vmatpush1.bf16.msra.mxu0 %v7219
  %7458 = vmatprep.subr.bf16.mxu0 %v7228
  %7459 = vmatpush1.bf16.msra.mxu0 %v7227
  %7460 = vmatprep.subr.bf16.mxu0 %v7236
  %7461 = vmatpush1.bf16.msra.mxu0 %v7235
  %7462 = vmatprep.subr.bf16.mxu0 %v7244
  %7463 = vmatpush1.bf16.msra.mxu0 %v7243
  %7464 = vmatprep.subr.bf16.mxu0 %v7252
  %7465 = vmatpush1.bf16.msra.mxu0 %v7251
  %7466 = vmatprep.subr.bf16.mxu0 %v7260
  %7467 = vmatpush1.bf16.msra.mxu0 %v7259
  %7468 = vmatprep.mubr.bf16.mxu0 %v6586
  %7469 = vmatmul.mubr.bf16.gmra.mrb[0].mxu0 %v6585
  %v7470 = vpop.f32.mrb[0].mxu0
  %v7471 = vadd.f32 0.0, %v7470
  %v7472 = vpop.f32.mrb[0].mxu0
  %v7473 = vadd.f32 0.0, %v7472
  %v7474 = vpop.f32.mrb[0].mxu0
  %v7475 = vadd.f32 0.0, %v7474
  %v7476 = vpop.f32.mrb[0].mxu0
  %v7477 = vadd.f32 0.0, %v7476
  %7478 = vdwg.mxu0
  %7479 = vmatprep.subr.bf16.mxu0 %v7142
  %7480 = vmatpush1.bf16.msra.mxu0 %v7141
  %7481 = vmatprep.subr.bf16.mxu0 %v7150
  %7482 = vmatpush1.bf16.msra.mxu0 %v7149
  %7483 = vmatprep.subr.bf16.mxu0 %v7158
  %7484 = vmatpush1.bf16.msra.mxu0 %v7157
  %7485 = vmatprep.subr.bf16.mxu0 %v7166
  %7486 = vmatpush1.bf16.msra.mxu0 %v7165
  %7487 = vmatprep.subr.bf16.mxu0 %v7174
  %7488 = vmatpush1.bf16.msra.mxu0 %v7173
  %7489 = vmatprep.subr.bf16.mxu0 %v7182
  %7490 = vmatpush1.bf16.msra.mxu0 %v7181
  %7491 = vmatprep.subr.bf16.mxu0 %v7190
  %7492 = vmatpush1.bf16.msra.mxu0 %v7189
  %7493 = vmatprep.subr.bf16.mxu0 %v7198
  %7494 = vmatpush1.bf16.msra.mxu0 %v7197
  %7495 = vmatprep.subr.bf16.mxu0 %v7206
  %7496 = vmatpush1.bf16.msra.mxu0 %v7205
  %7497 = vmatprep.subr.bf16.mxu0 %v7214
  %7498 = vmatpush1.bf16.msra.mxu0 %v7213
  %7499 = vmatprep.subr.bf16.mxu0 %v7222
  %7500 = vmatpush1.bf16.msra.mxu0 %v7221
  %7501 = vmatprep.subr.bf16.mxu0 %v7230
  %7502 = vmatpush1.bf16.msra.mxu0 %v7229
  %7503 = vmatprep.subr.bf16.mxu0 %v7238
  %7504 = vmatpush1.bf16.msra.mxu0 %v7237
  %7505 = vmatprep.subr.bf16.mxu0 %v7246
  %7506 = vmatpush1.bf16.msra.mxu0 %v7245
  %7507 = vmatprep.subr.bf16.mxu0 %v7254
  %7508 = vmatpush1.bf16.msra.mxu0 %v7253
  %7509 = vmatprep.subr.bf16.mxu0 %v7262
  %7510 = vmatpush1.bf16.msra.mxu0 %v7261
  %7511 = vmatprep.mubr.bf16.mxu0 %v6586
  %7512 = vmatmul.mubr.bf16.gmra.mrb[0].mxu0 %v6585
  %v7513 = vpop.f32.mrb[0].mxu0
  %v7514 = vadd.f32 0.0, %v7513
  %v7515 = vpop.f32.mrb[0].mxu0
  %v7516 = vadd.f32 0.0, %v7515
  %v7517 = vpop.f32.mrb[0].mxu0
  %v7518 = vadd.f32 0.0, %v7517
  %v7519 = vpop.f32.mrb[0].mxu0
  %v7520 = vadd.f32 0.0, %v7519
  %7521 = vdwg.mxu0
  %7522 = vmatprep.subr.bf16.mxu0 %v7144
  %7523 = vmatpush1.bf16.msra.mxu0 %v7143
  %7524 = vmatprep.subr.bf16.mxu0 %v7152
  %7525 = vmatpush1.bf16.msra.mxu0 %v7151
  %7526 = vmatprep.subr.bf16.mxu0 %v7160
  %7527 = vmatpush1.bf16.msra.mxu0 %v7159
  %7528 = vmatprep.subr.bf16.mxu0 %v7168
  %7529 = vmatpush1.bf16.msra.mxu0 %v7167
  %7530 = vmatprep.subr.bf16.mxu0 %v7176
  %7531 = vmatpush1.bf16.msra.mxu0 %v7175
  %7532 = vmatprep.subr.bf16.mxu0 %v7184
  %7533 = vmatpush1.bf16.msra.mxu0 %v7183
  %7534 = vmatprep.subr.bf16.mxu0 %v7192
  %7535 = vmatpush1.bf16.msra.mxu0 %v7191
  %7536 = vmatprep.subr.bf16.mxu0 %v7200
  %7537 = vmatpush1.bf16.msra.mxu0 %v7199
  %7538 = vmatprep.subr.bf16.mxu0 %v7208
  %7539 = vmatpush1.bf16.msra.mxu0 %v7207
  %7540 = vmatprep.subr.bf16.mxu0 %v7216
  %7541 = vmatpush1.bf16.msra.mxu0 %v7215
  %7542 = vmatprep.subr.bf16.mxu0 %v7224
  %7543 = vmatpush1.bf16.msra.mxu0 %v7223
  %7544 = vmatprep.subr.bf16.mxu0 %v7232
  %7545 = vmatpush1.bf16.msra.mxu0 %v7231
  %7546 = vmatprep.subr.bf16.mxu0 %v7240
  %7547 = vmatpush1.bf16.msra.mxu0 %v7239
  %7548 = vmatprep.subr.bf16.mxu0 %v7248
  %7549 = vmatpush1.bf16.msra.mxu0 %v7247
  %7550 = vmatprep.subr.bf16.mxu0 %v7256
  %7551 = vmatpush1.bf16.msra.mxu0 %v7255
  %7552 = vmatprep.subr.bf16.mxu0 %v7264
  %7553 = vmatpush1.bf16.msra.mxu0 %v7263
  %7554 = vmatprep.mubr.bf16.mxu0 %v6586
  %7555 = vmatmul.mubr.bf16.gmra.mrb[0].mxu0 %v6585
  %v7556 = vpop.f32.mrb[0].mxu0
  %v7557 = vadd.f32 0.0, %v7556
  %v7558 = vpop.f32.mrb[0].mxu0
  %v7559 = vadd.f32 0.0, %v7558
  %v7560 = vpop.f32.mrb[0].mxu0
  %v7561 = vadd.f32 0.0, %v7560
  %v7562 = vpop.f32.mrb[0].mxu0
  %v7563 = vadd.f32 0.0, %v7562
  %7564 = vdwg.mxu0
  %v7565 = vadd.f32 %v6609, %v7428
  %v7566 = vadd.f32 %v6610, %v7430
  %v7567 = vadd.f32 %v6611, %v7471
  %v7568 = vadd.f32 %v6612, %v7473
  %v7569 = vadd.f32 %v6613, %v7514
  %v7570 = vadd.f32 %v6614, %v7516
  %v7571 = vadd.f32 %v6615, %v7557
  %v7572 = vadd.f32 %v6616, %v7559
  %v7573 = vadd.f32 %v6617, %v7432
  %v7574 = vadd.f32 %v6618, %v7434
  %v7575 = vadd.f32 %v6619, %v7475
  %v7576 = vadd.f32 %v6620, %v7477
  %v7577 = vadd.f32 %v6621, %v7518
  %v7578 = vadd.f32 %v6622, %v7520
  %v7579 = vadd.f32 %v6623, %v7561
  %v7580 = vadd.f32 %v6624, %v7563
  %v7581 = vxor.u32 %v7565, 2147483648
  %v7582 = vxor.u32 %v7566, 2147483648
  %v7583 = vxor.u32 %v7567, 2147483648
  %v7584 = vxor.u32 %v7568, 2147483648
  %v7585 = vxor.u32 %v7569, 2147483648
  %v7586 = vxor.u32 %v7570, 2147483648
  %v7587 = vxor.u32 %v7573, 2147483648
  %v7588 = vxor.u32 %v7574, 2147483648
  %v7589 = vxor.u32 %v7575, 2147483648
  %v7590 = vxor.u32 %v7576, 2147483648
  %v7591 = vxor.u32 %v7577, 2147483648
  %v7592 = vxor.u32 %v7578, 2147483648
  %v7593 = vmul.f32 %v7581, 1.442695
  %v7594 = vpow.pop %v7593
  %v7595 = vmul.f32 %v7582, 1.442695
  %v7596 = vpow.pop %v7595
  %v7597 = vmul.f32 %v7583, 1.442695
  %v7598 = vpow.pop %v7597
  %v7599 = vmul.f32 %v7584, 1.442695
  %v7600 = vpow.pop %v7599
  %v7601 = vmul.f32 %v7585, 1.442695
  %v7602 = vpow.pop %v7601
  %v7603 = vmul.f32 %v7586, 1.442695
  %v7604 = vpow.pop %v7603
  %v7605 = vmul.f32 %v7587, 1.442695
  %v7606 = vpow.pop %v7605
  %v7607 = vmul.f32 %v7588, 1.442695
  %v7608 = vpow.pop %v7607
  %v7609 = vmul.f32 %v7589, 1.442695
  %v7610 = vpow.pop %v7609
  %v7611 = vmul.f32 %v7590, 1.442695
  %v7612 = vpow.pop %v7611
  %v7613 = vmul.f32 %v7591, 1.442695
  %v7614 = vpow.pop %v7613
  %v7615 = vmul.f32 %v7592, 1.442695
  %v7616 = vpow.pop %v7615
  %v7617 = vadd.f32 %v7594, 1.0
  %v7618 = vadd.f32 %v7596, 1.0
  %v7619 = vadd.f32 %v7598, 1.0
  %v7620 = vadd.f32 %v7600, 1.0
  %v7621 = vadd.f32 %v7602, 1.0
  %v7622 = vadd.f32 %v7604, 1.0
  %v7623 = vadd.f32 %v7606, 1.0
  %v7624 = vadd.f32 %v7608, 1.0
  %v7625 = vadd.f32 %v7610, 1.0
  %v7626 = vadd.f32 %v7612, 1.0
  %v7627 = vadd.f32 %v7614, 1.0
  %v7628 = vadd.f32 %v7616, 1.0
  %v7629 = vrcp.pop %v7617
  %v7630 = vmul.f32 1.0, %v7629
  %v7631 = vrcp.pop %v7618
  %v7632 = vmul.f32 1.0, %v7631
  %v7633 = vrcp.pop %v7619
  %v7634 = vmul.f32 1.0, %v7633
  %v7635 = vrcp.pop %v7620
  %v7636 = vmul.f32 1.0, %v7635
  %v7637 = vrcp.pop %v7621
  %v7638 = vmul.f32 1.0, %v7637
  %v7639 = vrcp.pop %v7622
  %v7640 = vmul.f32 1.0, %v7639
  %v7641 = vrcp.pop %v7623
  %v7642 = vmul.f32 1.0, %v7641
  %v7643 = vrcp.pop %v7624
  %v7644 = vmul.f32 1.0, %v7643
  %v7645 = vrcp.pop %v7625
  %v7646 = vmul.f32 1.0, %v7645
  %v7647 = vrcp.pop %v7626
  %v7648 = vmul.f32 1.0, %v7647
  %v7649 = vrcp.pop %v7627
  %v7650 = vmul.f32 1.0, %v7649
  %v7651 = vrcp.pop %v7628
  %v7652 = vmul.f32 1.0, %v7651
  %v7653 = vtanh.pop %v7571
  %v7654 = vtanh.pop %v7572
  %v7655 = vtanh.pop %v7579
  %v7656 = vtanh.pop %v7580
  %v7657 = vmul.f32 %v7634, %v6573
  %v7658 = vmul.f32 %v7636, %v6574
  %v7659 = vmul.f32 %v7646, %v6575
  %v7660 = vmul.f32 %v7648, %v6576
  %v7661 = vmul.f32 %v7630, %v7653
  %v7662 = vmul.f32 %v7632, %v7654
  %v7663 = vmul.f32 %v7642, %v7655
  %v7664 = vmul.f32 %v7644, %v7656
  %v7665 = vadd.f32 %v7657, %v7661
  %v7666 = vadd.f32 %v7658, %v7662
  %v7667 = vadd.f32 %v7659, %v7663
  %v7668 = vadd.f32 %v7660, %v7664
  %v7669 = vtanh.pop %v7665
  %v7670 = vtanh.pop %v7666
  %v7671 = vtanh.pop %v7667
  %v7672 = vtanh.pop %v7668
  %v7673 = vmul.f32 %v7638, %v7669
  %v7674 = vmul.f32 %v7640, %v7670
  %v7675 = vmul.f32 %v7650, %v7671
  %v7676 = vmul.f32 %v7652, %v7672
  %v7677 = vpack.c.bf16 %v7675, %v7673
  %v7678 = vpack.c.bf16 %v7676, %v7674
  %v7681 = vunpack.c.l.b16 %v7677
  %v7682 = vunpack.c.l.b16 %v7678
  %v7683 = vunpack.c.h.b16 %v7677
  %v7684 = vunpack.c.h.b16 %v7678
  %v7685 = vpack.c.b16 %v7682, %v7681
  %v7686 = vpack.c.b16 %v7684, %v7683
  %s7689 = scalar_lea.vmem %s4, 96
  %7690 = vst [vmem:[%s7689] sm:$0xff] %v7685
  %7691 = vst [vmem:[%s7689 + $0x8] sm:$0xff] %v7686
  %s7692 = scalar_lea.vmem %s0, 448
  %v7693 = vld [vmem:[%s7692] sm:$0xff]
  %v7694 = vld [vmem:[%s7692 + $0x8] sm:$0xff]
  %v7695 = vld [vmem:[%s7692 + $0x10] sm:$0xff]
  %v7696 = vld [vmem:[%s7692 + $0x18] sm:$0xff]
  %v7697 = vld [vmem:[%s7692 + $0x20] sm:$0xff]
  %v7698 = vld [vmem:[%s7692 + $0x28] sm:$0xff]
  %v7699 = vld [vmem:[%s7692 + $0x30] sm:$0xff]
  %v7700 = vld [vmem:[%s7692 + $0x38] sm:$0xff]
  %v7701 = vunpack.c.l.bf16 %v7693
  %v7702 = vunpack.c.h.bf16 %v7693
  %v7703 = vunpack.c.l.bf16 %v7694
  %v7704 = vunpack.c.h.bf16 %v7694
  %v7705 = vunpack.c.l.bf16 %v7695
  %v7706 = vunpack.c.h.bf16 %v7695
  %v7707 = vunpack.c.l.bf16 %v7696
  %v7708 = vunpack.c.h.bf16 %v7696
  %v7709 = vunpack.c.l.bf16 %v7697
  %v7710 = vunpack.c.h.bf16 %v7697
  %v7711 = vunpack.c.l.bf16 %v7698
  %v7712 = vunpack.c.h.bf16 %v7698
  %v7713 = vunpack.c.l.bf16 %v7699
  %v7714 = vunpack.c.h.bf16 %v7699
  %v7715 = vunpack.c.l.bf16 %v7700
  %v7716 = vunpack.c.h.bf16 %v7700
  %v7717 = vld [vmem:[%s1] sm:$0xff]
  %v7718 = vld [vmem:[%s1 + $0x8] sm:$0xff]
  %v7719 = vld [vmem:[%s1 + $0x10] sm:$0xff]
  %v7720 = vld [vmem:[%s1 + $0x18] sm:$0xff]
  %v7721 = vld [vmem:[%s1 + $0x20] sm:$0xff]
  %v7722 = vld [vmem:[%s1 + $0x28] sm:$0xff]
  %v7723 = vld [vmem:[%s1 + $0x30] sm:$0xff]
  %v7724 = vld [vmem:[%s1 + $0x38] sm:$0xff]
  %v7725 = vld [vmem:[%s1 + $0x40] sm:$0xff]
  %v7726 = vld [vmem:[%s1 + $0x48] sm:$0xff]
  %v7727 = vld [vmem:[%s1 + $0x50] sm:$0xff]
  %v7728 = vld [vmem:[%s1 + $0x58] sm:$0xff]
  %v7729 = vld [vmem:[%s1 + $0x60] sm:$0xff]
  %v7730 = vld [vmem:[%s1 + $0x68] sm:$0xff]
  %v7731 = vld [vmem:[%s1 + $0x70] sm:$0xff]
  %v7732 = vld [vmem:[%s1 + $0x78] sm:$0xff]
  %v7733 = vld [vmem:[%s1 + $0x80] sm:$0xff]
  %v7734 = vld [vmem:[%s1 + $0x88] sm:$0xff]
  %v7735 = vld [vmem:[%s1 + $0x90] sm:$0xff]
  %v7736 = vld [vmem:[%s1 + $0x98] sm:$0xff]
  %v7737 = vld [vmem:[%s1 + $0xa0] sm:$0xff]
  %v7738 = vld [vmem:[%s1 + $0xa8] sm:$0xff]
  %v7739 = vld [vmem:[%s1 + $0xb0] sm:$0xff]
  %v7740 = vld [vmem:[%s1 + $0xb8] sm:$0xff]
  %v7741 = vld [vmem:[%s1 + $0xc0] sm:$0xff]
  %v7742 = vld [vmem:[%s1 + $0xc8] sm:$0xff]
  %v7743 = vld [vmem:[%s1 + $0xd0] sm:$0xff]
  %v7744 = vld [vmem:[%s1 + $0xd8] sm:$0xff]
  %v7745 = vld [vmem:[%s1 + $0xe0] sm:$0xff]
  %v7746 = vld [vmem:[%s1 + $0xe8] sm:$0xff]
  %v7747 = vld [vmem:[%s1 + $0xf0] sm:$0xff]
  %v7748 = vld [vmem:[%s1 + $0xf8] sm:$0xff]
  %v7749 = vld [vmem:[%s1 + $0x100] sm:$0xff]
  %v7750 = vld [vmem:[%s1 + $0x108] sm:$0xff]
  %v7751 = vld [vmem:[%s1 + $0x110] sm:$0xff]
  %v7752 = vld [vmem:[%s1 + $0x118] sm:$0xff]
  %v7753 = vld [vmem:[%s1 + $0x120] sm:$0xff]
  %v7754 = vld [vmem:[%s1 + $0x128] sm:$0xff]
  %v7755 = vld [vmem:[%s1 + $0x130] sm:$0xff]
  %v7756 = vld [vmem:[%s1 + $0x138] sm:$0xff]
  %v7757 = vld [vmem:[%s1 + $0x140] sm:$0xff]
  %v7758 = vld [vmem:[%s1 + $0x148] sm:$0xff]
  %v7759 = vld [vmem:[%s1 + $0x150] sm:$0xff]
  %v7760 = vld [vmem:[%s1 + $0x158] sm:$0xff]
  %v7761 = vld [vmem:[%s1 + $0x160] sm:$0xff]
  %v7762 = vld [vmem:[%s1 + $0x168] sm:$0xff]
  %v7763 = vld [vmem:[%s1 + $0x170] sm:$0xff]
  %v7764 = vld [vmem:[%s1 + $0x178] sm:$0xff]
  %v7765 = vld [vmem:[%s1 + $0x180] sm:$0xff]
  %v7766 = vld [vmem:[%s1 + $0x188] sm:$0xff]
  %v7767 = vld [vmem:[%s1 + $0x190] sm:$0xff]
  %v7768 = vld [vmem:[%s1 + $0x198] sm:$0xff]
  %v7769 = vld [vmem:[%s1 + $0x1a0] sm:$0xff]
  %v7770 = vld [vmem:[%s1 + $0x1a8] sm:$0xff]
  %v7771 = vld [vmem:[%s1 + $0x1b0] sm:$0xff]
  %v7772 = vld [vmem:[%s1 + $0x1b8] sm:$0xff]
  %v7773 = vld [vmem:[%s1 + $0x1c0] sm:$0xff]
  %v7774 = vld [vmem:[%s1 + $0x1c8] sm:$0xff]
  %v7775 = vld [vmem:[%s1 + $0x1d0] sm:$0xff]
  %v7776 = vld [vmem:[%s1 + $0x1d8] sm:$0xff]
  %v7777 = vld [vmem:[%s1 + $0x1e0] sm:$0xff]
  %v7778 = vld [vmem:[%s1 + $0x1e8] sm:$0xff]
  %v7779 = vld [vmem:[%s1 + $0x1f0] sm:$0xff]
  %v7780 = vld [vmem:[%s1 + $0x1f8] sm:$0xff]
  %v7781 = vld [vmem:[%s1 + $0x200] sm:$0xff]
  %v7782 = vld [vmem:[%s1 + $0x208] sm:$0xff]
  %v7783 = vld [vmem:[%s1 + $0x210] sm:$0xff]
  %v7784 = vld [vmem:[%s1 + $0x218] sm:$0xff]
  %v7785 = vld [vmem:[%s1 + $0x220] sm:$0xff]
  %v7786 = vld [vmem:[%s1 + $0x228] sm:$0xff]
  %v7787 = vld [vmem:[%s1 + $0x230] sm:$0xff]
  %v7788 = vld [vmem:[%s1 + $0x238] sm:$0xff]
  %v7789 = vld [vmem:[%s1 + $0x240] sm:$0xff]
  %v7790 = vld [vmem:[%s1 + $0x248] sm:$0xff]
  %v7791 = vld [vmem:[%s1 + $0x250] sm:$0xff]
  %v7792 = vld [vmem:[%s1 + $0x258] sm:$0xff]
  %v7793 = vld [vmem:[%s1 + $0x260] sm:$0xff]
  %v7794 = vld [vmem:[%s1 + $0x268] sm:$0xff]
  %v7795 = vld [vmem:[%s1 + $0x270] sm:$0xff]
  %v7796 = vld [vmem:[%s1 + $0x278] sm:$0xff]
  %v7797 = vld [vmem:[%s1 + $0x280] sm:$0xff]
  %v7798 = vld [vmem:[%s1 + $0x288] sm:$0xff]
  %v7799 = vld [vmem:[%s1 + $0x290] sm:$0xff]
  %v7800 = vld [vmem:[%s1 + $0x298] sm:$0xff]
  %v7801 = vld [vmem:[%s1 + $0x2a0] sm:$0xff]
  %v7802 = vld [vmem:[%s1 + $0x2a8] sm:$0xff]
  %v7803 = vld [vmem:[%s1 + $0x2b0] sm:$0xff]
  %v7804 = vld [vmem:[%s1 + $0x2b8] sm:$0xff]
  %v7805 = vld [vmem:[%s1 + $0x2c0] sm:$0xff]
  %v7806 = vld [vmem:[%s1 + $0x2c8] sm:$0xff]
  %v7807 = vld [vmem:[%s1 + $0x2d0] sm:$0xff]
  %v7808 = vld [vmem:[%s1 + $0x2d8] sm:$0xff]
  %v7809 = vld [vmem:[%s1 + $0x2e0] sm:$0xff]
  %v7810 = vld [vmem:[%s1 + $0x2e8] sm:$0xff]
  %v7811 = vld [vmem:[%s1 + $0x2f0] sm:$0xff]
  %v7812 = vld [vmem:[%s1 + $0x2f8] sm:$0xff]
  %v7813 = vld [vmem:[%s1 + $0x300] sm:$0xff]
  %v7814 = vld [vmem:[%s1 + $0x308] sm:$0xff]
  %v7815 = vld [vmem:[%s1 + $0x310] sm:$0xff]
  %v7816 = vld [vmem:[%s1 + $0x318] sm:$0xff]
  %v7817 = vld [vmem:[%s1 + $0x320] sm:$0xff]
  %v7818 = vld [vmem:[%s1 + $0x328] sm:$0xff]
  %v7819 = vld [vmem:[%s1 + $0x330] sm:$0xff]
  %v7820 = vld [vmem:[%s1 + $0x338] sm:$0xff]
  %v7821 = vld [vmem:[%s1 + $0x340] sm:$0xff]
  %v7822 = vld [vmem:[%s1 + $0x348] sm:$0xff]
  %v7823 = vld [vmem:[%s1 + $0x350] sm:$0xff]
  %v7824 = vld [vmem:[%s1 + $0x358] sm:$0xff]
  %v7825 = vld [vmem:[%s1 + $0x360] sm:$0xff]
  %v7826 = vld [vmem:[%s1 + $0x368] sm:$0xff]
  %v7827 = vld [vmem:[%s1 + $0x370] sm:$0xff]
  %v7828 = vld [vmem:[%s1 + $0x378] sm:$0xff]
  %v7829 = vld [vmem:[%s1 + $0x380] sm:$0xff]
  %v7830 = vld [vmem:[%s1 + $0x388] sm:$0xff]
  %v7831 = vld [vmem:[%s1 + $0x390] sm:$0xff]
  %v7832 = vld [vmem:[%s1 + $0x398] sm:$0xff]
  %v7833 = vld [vmem:[%s1 + $0x3a0] sm:$0xff]
  %v7834 = vld [vmem:[%s1 + $0x3a8] sm:$0xff]
  %v7835 = vld [vmem:[%s1 + $0x3b0] sm:$0xff]
  %v7836 = vld [vmem:[%s1 + $0x3b8] sm:$0xff]
  %v7837 = vld [vmem:[%s1 + $0x3c0] sm:$0xff]
  %v7838 = vld [vmem:[%s1 + $0x3c8] sm:$0xff]
  %v7839 = vld [vmem:[%s1 + $0x3d0] sm:$0xff]
  %v7840 = vld [vmem:[%s1 + $0x3d8] sm:$0xff]
  %v7841 = vld [vmem:[%s1 + $0x3e0] sm:$0xff]
  %v7842 = vld [vmem:[%s1 + $0x3e8] sm:$0xff]
  %v7843 = vld [vmem:[%s1 + $0x3f0] sm:$0xff]
  %v7844 = vld [vmem:[%s1 + $0x3f8] sm:$0xff]
  %v7973 = vunpack.c.l.b16 %v7717
  %v7974 = vunpack.c.h.b16 %v7717
  %v7975 = vunpack.c.l.b16 %v7718
  %v7976 = vunpack.c.h.b16 %v7718
  %v7977 = vunpack.c.l.b16 %v7719
  %v7978 = vunpack.c.h.b16 %v7719
  %v7979 = vunpack.c.l.b16 %v7720
  %v7980 = vunpack.c.h.b16 %v7720
  %v7981 = vunpack.c.l.b16 %v7721
  %v7982 = vunpack.c.h.b16 %v7721
  %v7983 = vunpack.c.l.b16 %v7722
  %v7984 = vunpack.c.h.b16 %v7722
  %v7985 = vunpack.c.l.b16 %v7723
  %v7986 = vunpack.c.h.b16 %v7723
  %v7987 = vunpack.c.l.b16 %v7724
  %v7988 = vunpack.c.h.b16 %v7724
  %v7989 = vunpack.c.l.b16 %v7725
  %v7990 = vunpack.c.h.b16 %v7725
  %v7991 = vunpack.c.l.b16 %v7726
  %v7992 = vunpack.c.h.b16 %v7726
  %v7993 = vunpack.c.l.b16 %v7727
  %v7994 = vunpack.c.h.b16 %v7727
  %v7995 = vunpack.c.l.b16 %v7728
  %v7996 = vunpack.c.h.b16 %v7728
  %v7997 = vunpack.c.l.b16 %v7729
  %v7998 = vunpack.c.h.b16 %v7729
  %v7999 = vunpack.c.l.b16 %v7730
  %v8000 = vunpack.c.h.b16 %v7730
  %v8001 = vunpack.c.l.b16 %v7731
  %v8002 = vunpack.c.h.b16 %v7731
  %v8003 = vunpack.c.l.b16 %v7732
  %v8004 = vunpack.c.h.b16 %v7732
  %v8005 = vunpack.c.l.b16 %v7733
  %v8006 = vunpack.c.h.b16 %v7733
  %v8007 = vunpack.c.l.b16 %v7734
  %v8008 = vunpack.c.h.b16 %v7734
  %v8009 = vunpack.c.l.b16 %v7735
  %v8010 = vunpack.c.h.b16 %v7735
  %v8011 = vunpack.c.l.b16 %v7736
  %v8012 = vunpack.c.h.b16 %v7736
  %v8013 = vunpack.c.l.b16 %v7737
  %v8014 = vunpack.c.h.b16 %v7737
  %v8015 = vunpack.c.l.b16 %v7738
  %v8016 = vunpack.c.h.b16 %v7738
  %v8017 = vunpack.c.l.b16 %v7739
  %v8018 = vunpack.c.h.b16 %v7739
  %v8019 = vunpack.c.l.b16 %v7740
  %v8020 = vunpack.c.h.b16 %v7740
  %v8021 = vunpack.c.l.b16 %v7741
  %v8022 = vunpack.c.h.b16 %v7741
  %v8023 = vunpack.c.l.b16 %v7742
  %v8024 = vunpack.c.h.b16 %v7742
  %v8025 = vunpack.c.l.b16 %v7743
  %v8026 = vunpack.c.h.b16 %v7743
  %v8027 = vunpack.c.l.b16 %v7744
  %v8028 = vunpack.c.h.b16 %v7744
  %v8029 = vunpack.c.l.b16 %v7745
  %v8030 = vunpack.c.h.b16 %v7745
  %v8031 = vunpack.c.l.b16 %v7746
  %v8032 = vunpack.c.h.b16 %v7746
  %v8033 = vunpack.c.l.b16 %v7747
  %v8034 = vunpack.c.h.b16 %v7747
  %v8035 = vunpack.c.l.b16 %v7748
  %v8036 = vunpack.c.h.b16 %v7748
  %v8037 = vunpack.c.l.b16 %v7749
  %v8038 = vunpack.c.h.b16 %v7749
  %v8039 = vunpack.c.l.b16 %v7750
  %v8040 = vunpack.c.h.b16 %v7750
  %v8041 = vunpack.c.l.b16 %v7751
  %v8042 = vunpack.c.h.b16 %v7751
  %v8043 = vunpack.c.l.b16 %v7752
  %v8044 = vunpack.c.h.b16 %v7752
  %v8045 = vunpack.c.l.b16 %v7753
  %v8046 = vunpack.c.h.b16 %v7753
  %v8047 = vunpack.c.l.b16 %v7754
  %v8048 = vunpack.c.h.b16 %v7754
  %v8049 = vunpack.c.l.b16 %v7755
  %v8050 = vunpack.c.h.b16 %v7755
  %v8051 = vunpack.c.l.b16 %v7756
  %v8052 = vunpack.c.h.b16 %v7756
  %v8053 = vunpack.c.l.b16 %v7757
  %v8054 = vunpack.c.h.b16 %v7757
  %v8055 = vunpack.c.l.b16 %v7758
  %v8056 = vunpack.c.h.b16 %v7758
  %v8057 = vunpack.c.l.b16 %v7759
  %v8058 = vunpack.c.h.b16 %v7759
  %v8059 = vunpack.c.l.b16 %v7760
  %v8060 = vunpack.c.h.b16 %v7760
  %v8061 = vunpack.c.l.b16 %v7761
  %v8062 = vunpack.c.h.b16 %v7761
  %v8063 = vunpack.c.l.b16 %v7762
  %v8064 = vunpack.c.h.b16 %v7762
  %v8065 = vunpack.c.l.b16 %v7763
  %v8066 = vunpack.c.h.b16 %v7763
  %v8067 = vunpack.c.l.b16 %v7764
  %v8068 = vunpack.c.h.b16 %v7764
  %v8069 = vunpack.c.l.b16 %v7765
  %v8070 = vunpack.c.h.b16 %v7765
  %v8071 = vunpack.c.l.b16 %v7766
  %v8072 = vunpack.c.h.b16 %v7766
  %v8073 = vunpack.c.l.b16 %v7767
  %v8074 = vunpack.c.h.b16 %v7767
  %v8075 = vunpack.c.l.b16 %v7768
  %v8076 = vunpack.c.h.b16 %v7768
  %v8077 = vunpack.c.l.b16 %v7769
  %v8078 = vunpack.c.h.b16 %v7769
  %v8079 = vunpack.c.l.b16 %v7770
  %v8080 = vunpack.c.h.b16 %v7770
  %v8081 = vunpack.c.l.b16 %v7771
  %v8082 = vunpack.c.h.b16 %v7771
  %v8083 = vunpack.c.l.b16 %v7772
  %v8084 = vunpack.c.h.b16 %v7772
  %v8085 = vunpack.c.l.b16 %v7773
  %v8086 = vunpack.c.h.b16 %v7773
  %v8087 = vunpack.c.l.b16 %v7774
  %v8088 = vunpack.c.h.b16 %v7774
  %v8089 = vunpack.c.l.b16 %v7775
  %v8090 = vunpack.c.h.b16 %v7775
  %v8091 = vunpack.c.l.b16 %v7776
  %v8092 = vunpack.c.h.b16 %v7776
  %v8093 = vunpack.c.l.b16 %v7777
  %v8094 = vunpack.c.h.b16 %v7777
  %v8095 = vunpack.c.l.b16 %v7778
  %v8096 = vunpack.c.h.b16 %v7778
  %v8097 = vunpack.c.l.b16 %v7779
  %v8098 = vunpack.c.h.b16 %v7779
  %v8099 = vunpack.c.l.b16 %v7780
  %v8100 = vunpack.c.h.b16 %v7780
  %v8101 = vunpack.c.l.b16 %v7781
  %v8102 = vunpack.c.h.b16 %v7781
  %v8103 = vunpack.c.l.b16 %v7782
  %v8104 = vunpack.c.h.b16 %v7782
  %v8105 = vunpack.c.l.b16 %v7783
  %v8106 = vunpack.c.h.b16 %v7783
  %v8107 = vunpack.c.l.b16 %v7784
  %v8108 = vunpack.c.h.b16 %v7784
  %v8109 = vunpack.c.l.b16 %v7785
  %v8110 = vunpack.c.h.b16 %v7785
  %v8111 = vunpack.c.l.b16 %v7786
  %v8112 = vunpack.c.h.b16 %v7786
  %v8113 = vunpack.c.l.b16 %v7787
  %v8114 = vunpack.c.h.b16 %v7787
  %v8115 = vunpack.c.l.b16 %v7788
  %v8116 = vunpack.c.h.b16 %v7788
  %v8117 = vunpack.c.l.b16 %v7789
  %v8118 = vunpack.c.h.b16 %v7789
  %v8119 = vunpack.c.l.b16 %v7790
  %v8120 = vunpack.c.h.b16 %v7790
  %v8121 = vunpack.c.l.b16 %v7791
  %v8122 = vunpack.c.h.b16 %v7791
  %v8123 = vunpack.c.l.b16 %v7792
  %v8124 = vunpack.c.h.b16 %v7792
  %v8125 = vunpack.c.l.b16 %v7793
  %v8126 = vunpack.c.h.b16 %v7793
  %v8127 = vunpack.c.l.b16 %v7794
  %v8128 = vunpack.c.h.b16 %v7794
  %v8129 = vunpack.c.l.b16 %v7795
  %v8130 = vunpack.c.h.b16 %v7795
  %v8131 = vunpack.c.l.b16 %v7796
  %v8132 = vunpack.c.h.b16 %v7796
  %v8133 = vunpack.c.l.b16 %v7797
  %v8134 = vunpack.c.h.b16 %v7797
  %v8135 = vunpack.c.l.b16 %v7798
  %v8136 = vunpack.c.h.b16 %v7798
  %v8137 = vunpack.c.l.b16 %v7799
  %v8138 = vunpack.c.h.b16 %v7799
  %v8139 = vunpack.c.l.b16 %v7800
  %v8140 = vunpack.c.h.b16 %v7800
  %v8141 = vunpack.c.l.b16 %v7801
  %v8142 = vunpack.c.h.b16 %v7801
  %v8143 = vunpack.c.l.b16 %v7802
  %v8144 = vunpack.c.h.b16 %v7802
  %v8145 = vunpack.c.l.b16 %v7803
  %v8146 = vunpack.c.h.b16 %v7803
  %v8147 = vunpack.c.l.b16 %v7804
  %v8148 = vunpack.c.h.b16 %v7804
  %v8149 = vunpack.c.l.b16 %v7805
  %v8150 = vunpack.c.h.b16 %v7805
  %v8151 = vunpack.c.l.b16 %v7806
  %v8152 = vunpack.c.h.b16 %v7806
  %v8153 = vunpack.c.l.b16 %v7807
  %v8154 = vunpack.c.h.b16 %v7807
  %v8155 = vunpack.c.l.b16 %v7808
  %v8156 = vunpack.c.h.b16 %v7808
  %v8157 = vunpack.c.l.b16 %v7809
  %v8158 = vunpack.c.h.b16 %v7809
  %v8159 = vunpack.c.l.b16 %v7810
  %v8160 = vunpack.c.h.b16 %v7810
  %v8161 = vunpack.c.l.b16 %v7811
  %v8162 = vunpack.c.h.b16 %v7811
  %v8163 = vunpack.c.l.b16 %v7812
  %v8164 = vunpack.c.h.b16 %v7812
  %v8165 = vunpack.c.l.b16 %v7813
  %v8166 = vunpack.c.h.b16 %v7813
  %v8167 = vunpack.c.l.b16 %v7814
  %v8168 = vunpack.c.h.b16 %v7814
  %v8169 = vunpack.c.l.b16 %v7815
  %v8170 = vunpack.c.h.b16 %v7815
  %v8171 = vunpack.c.l.b16 %v7816
  %v8172 = vunpack.c.h.b16 %v7816
  %v8173 = vunpack.c.l.b16 %v7817
  %v8174 = vunpack.c.h.b16 %v7817
  %v8175 = vunpack.c.l.b16 %v7818
  %v8176 = vunpack.c.h.b16 %v7818
  %v8177 = vunpack.c.l.b16 %v7819
  %v8178 = vunpack.c.h.b16 %v7819
  %v8179 = vunpack.c.l.b16 %v7820
  %v8180 = vunpack.c.h.b16 %v7820
  %v8181 = vunpack.c.l.b16 %v7821
  %v8182 = vunpack.c.h.b16 %v7821
  %v8183 = vunpack.c.l.b16 %v7822
  %v8184 = vunpack.c.h.b16 %v7822
  %v8185 = vunpack.c.l.b16 %v7823
  %v8186 = vunpack.c.h.b16 %v7823
  %v8187 = vunpack.c.l.b16 %v7824
  %v8188 = vunpack.c.h.b16 %v7824
  %v8189 = vunpack.c.l.b16 %v7825
  %v8190 = vunpack.c.h.b16 %v7825
  %v8191 = vunpack.c.l.b16 %v7826
  %v8192 = vunpack.c.h.b16 %v7826
  %v8193 = vunpack.c.l.b16 %v7827
  %v8194 = vunpack.c.h.b16 %v7827
  %v8195 = vunpack.c.l.b16 %v7828
  %v8196 = vunpack.c.h.b16 %v7828
  %v8197 = vunpack.c.l.b16 %v7829
  %v8198 = vunpack.c.h.b16 %v7829
  %v8199 = vunpack.c.l.b16 %v7830
  %v8200 = vunpack.c.h.b16 %v7830
  %v8201 = vunpack.c.l.b16 %v7831
  %v8202 = vunpack.c.h.b16 %v7831
  %v8203 = vunpack.c.l.b16 %v7832
  %v8204 = vunpack.c.h.b16 %v7832
  %v8205 = vunpack.c.l.b16 %v7833
  %v8206 = vunpack.c.h.b16 %v7833
  %v8207 = vunpack.c.l.b16 %v7834
  %v8208 = vunpack.c.h.b16 %v7834
  %v8209 = vunpack.c.l.b16 %v7835
  %v8210 = vunpack.c.h.b16 %v7835
  %v8211 = vunpack.c.l.b16 %v7836
  %v8212 = vunpack.c.h.b16 %v7836
  %v8213 = vunpack.c.l.b16 %v7837
  %v8214 = vunpack.c.h.b16 %v7837
  %v8215 = vunpack.c.l.b16 %v7838
  %v8216 = vunpack.c.h.b16 %v7838
  %v8217 = vunpack.c.l.b16 %v7839
  %v8218 = vunpack.c.h.b16 %v7839
  %v8219 = vunpack.c.l.b16 %v7840
  %v8220 = vunpack.c.h.b16 %v7840
  %v8221 = vunpack.c.l.b16 %v7841
  %v8222 = vunpack.c.h.b16 %v7841
  %v8223 = vunpack.c.l.b16 %v7842
  %v8224 = vunpack.c.h.b16 %v7842
  %v8225 = vunpack.c.l.b16 %v7843
  %v8226 = vunpack.c.h.b16 %v7843
  %v8227 = vunpack.c.l.b16 %v7844
  %v8228 = vunpack.c.h.b16 %v7844
  %v8229 = vpack.c.b16 %v7981, %v7973
  %v8230 = vpack.c.b16 %v7982, %v7974
  %v8231 = vpack.c.b16 %v7983, %v7975
  %v8232 = vpack.c.b16 %v7984, %v7976
  %v8233 = vpack.c.b16 %v7985, %v7977
  %v8234 = vpack.c.b16 %v7986, %v7978
  %v8235 = vpack.c.b16 %v7987, %v7979
  %v8236 = vpack.c.b16 %v7988, %v7980
  %v8237 = vpack.c.b16 %v7997, %v7989
  %v8238 = vpack.c.b16 %v7998, %v7990
  %v8239 = vpack.c.b16 %v7999, %v7991
  %v8240 = vpack.c.b16 %v8000, %v7992
  %v8241 = vpack.c.b16 %v8001, %v7993
  %v8242 = vpack.c.b16 %v8002, %v7994
  %v8243 = vpack.c.b16 %v8003, %v7995
  %v8244 = vpack.c.b16 %v8004, %v7996
  %v8245 = vpack.c.b16 %v8013, %v8005
  %v8246 = vpack.c.b16 %v8014, %v8006
  %v8247 = vpack.c.b16 %v8015, %v8007
  %v8248 = vpack.c.b16 %v8016, %v8008
  %v8249 = vpack.c.b16 %v8017, %v8009
  %v8250 = vpack.c.b16 %v8018, %v8010
  %v8251 = vpack.c.b16 %v8019, %v8011
  %v8252 = vpack.c.b16 %v8020, %v8012
  %v8253 = vpack.c.b16 %v8029, %v8021
  %v8254 = vpack.c.b16 %v8030, %v8022
  %v8255 = vpack.c.b16 %v8031, %v8023
  %v8256 = vpack.c.b16 %v8032, %v8024
  %v8257 = vpack.c.b16 %v8033, %v8025
  %v8258 = vpack.c.b16 %v8034, %v8026
  %v8259 = vpack.c.b16 %v8035, %v8027
  %v8260 = vpack.c.b16 %v8036, %v8028
  %v8261 = vpack.c.b16 %v8045, %v8037
  %v8262 = vpack.c.b16 %v8046, %v8038
  %v8263 = vpack.c.b16 %v8047, %v8039
  %v8264 = vpack.c.b16 %v8048, %v8040
  %v8265 = vpack.c.b16 %v8049, %v8041
  %v8266 = vpack.c.b16 %v8050, %v8042
  %v8267 = vpack.c.b16 %v8051, %v8043
  %v8268 = vpack.c.b16 %v8052, %v8044
  %v8269 = vpack.c.b16 %v8061, %v8053
  %v8270 = vpack.c.b16 %v8062, %v8054
  %v8271 = vpack.c.b16 %v8063, %v8055
  %v8272 = vpack.c.b16 %v8064, %v8056
  %v8273 = vpack.c.b16 %v8065, %v8057
  %v8274 = vpack.c.b16 %v8066, %v8058
  %v8275 = vpack.c.b16 %v8067, %v8059
  %v8276 = vpack.c.b16 %v8068, %v8060
  %v8277 = vpack.c.b16 %v8077, %v8069
  %v8278 = vpack.c.b16 %v8078, %v8070
  %v8279 = vpack.c.b16 %v8079, %v8071
  %v8280 = vpack.c.b16 %v8080, %v8072
  %v8281 = vpack.c.b16 %v8081, %v8073
  %v8282 = vpack.c.b16 %v8082, %v8074
  %v8283 = vpack.c.b16 %v8083, %v8075
  %v8284 = vpack.c.b16 %v8084, %v8076
  %v8285 = vpack.c.b16 %v8093, %v8085
  %v8286 = vpack.c.b16 %v8094, %v8086
  %v8287 = vpack.c.b16 %v8095, %v8087
  %v8288 = vpack.c.b16 %v8096, %v8088
  %v8289 = vpack.c.b16 %v8097, %v8089
  %v8290 = vpack.c.b16 %v8098, %v8090
  %v8291 = vpack.c.b16 %v8099, %v8091
  %v8292 = vpack.c.b16 %v8100, %v8092
  %v8293 = vpack.c.b16 %v8109, %v8101
  %v8294 = vpack.c.b16 %v8110, %v8102
  %v8295 = vpack.c.b16 %v8111, %v8103
  %v8296 = vpack.c.b16 %v8112, %v8104
  %v8297 = vpack.c.b16 %v8113, %v8105
  %v8298 = vpack.c.b16 %v8114, %v8106
  %v8299 = vpack.c.b16 %v8115, %v8107
  %v8300 = vpack.c.b16 %v8116, %v8108
  %v8301 = vpack.c.b16 %v8125, %v8117
  %v8302 = vpack.c.b16 %v8126, %v8118
  %v8303 = vpack.c.b16 %v8127, %v8119
  %v8304 = vpack.c.b16 %v8128, %v8120
  %v8305 = vpack.c.b16 %v8129, %v8121
  %v8306 = vpack.c.b16 %v8130, %v8122
  %v8307 = vpack.c.b16 %v8131, %v8123
  %v8308 = vpack.c.b16 %v8132, %v8124
  %v8309 = vpack.c.b16 %v8141, %v8133
  %v8310 = vpack.c.b16 %v8142, %v8134
  %v8311 = vpack.c.b16 %v8143, %v8135
  %v8312 = vpack.c.b16 %v8144, %v8136
  %v8313 = vpack.c.b16 %v8145, %v8137
  %v8314 = vpack.c.b16 %v8146, %v8138
  %v8315 = vpack.c.b16 %v8147, %v8139
  %v8316 = vpack.c.b16 %v8148, %v8140
  %v8317 = vpack.c.b16 %v8157, %v8149
  %v8318 = vpack.c.b16 %v8158, %v8150
  %v8319 = vpack.c.b16 %v8159, %v8151
  %v8320 = vpack.c.b16 %v8160, %v8152
  %v8321 = vpack.c.b16 %v8161, %v8153
  %v8322 = vpack.c.b16 %v8162, %v8154
  %v8323 = vpack.c.b16 %v8163, %v8155
  %v8324 = vpack.c.b16 %v8164, %v8156
  %v8325 = vpack.c.b16 %v8173, %v8165
  %v8326 = vpack.c.b16 %v8174, %v8166
  %v8327 = vpack.c.b16 %v8175, %v8167
  %v8328 = vpack.c.b16 %v8176, %v8168
  %v8329 = vpack.c.b16 %v8177, %v8169
  %v8330 = vpack.c.b16 %v8178, %v8170
  %v8331 = vpack.c.b16 %v8179, %v8171
  %v8332 = vpack.c.b16 %v8180, %v8172
  %v8333 = vpack.c.b16 %v8189, %v8181
  %v8334 = vpack.c.b16 %v8190, %v8182
  %v8335 = vpack.c.b16 %v8191, %v8183
  %v8336 = vpack.c.b16 %v8192, %v8184
  %v8337 = vpack.c.b16 %v8193, %v8185
  %v8338 = vpack.c.b16 %v8194, %v8186
  %v8339 = vpack.c.b16 %v8195, %v8187
  %v8340 = vpack.c.b16 %v8196, %v8188
  %v8341 = vpack.c.b16 %v8205, %v8197
  %v8342 = vpack.c.b16 %v8206, %v8198
  %v8343 = vpack.c.b16 %v8207, %v8199
  %v8344 = vpack.c.b16 %v8208, %v8200
  %v8345 = vpack.c.b16 %v8209, %v8201
  %v8346 = vpack.c.b16 %v8210, %v8202
  %v8347 = vpack.c.b16 %v8211, %v8203
  %v8348 = vpack.c.b16 %v8212, %v8204
  %v8349 = vpack.c.b16 %v8221, %v8213
  %v8350 = vpack.c.b16 %v8222, %v8214
  %v8351 = vpack.c.b16 %v8223, %v8215
  %v8352 = vpack.c.b16 %v8224, %v8216
  %v8353 = vpack.c.b16 %v8225, %v8217
  %v8354 = vpack.c.b16 %v8226, %v8218
  %v8355 = vpack.c.b16 %v8227, %v8219
  %v8356 = vpack.c.b16 %v8228, %v8220
  %8485 = vmatprep.subr.bf16.mxu0 %v8230
  %8486 = vmatpush1.bf16.msra.mxu0 %v8229
  %8487 = vmatprep.subr.bf16.mxu0 %v8238
  %8488 = vmatpush1.bf16.msra.mxu0 %v8237
  %8489 = vmatprep.subr.bf16.mxu0 %v8246
  %8490 = vmatpush1.bf16.msra.mxu0 %v8245
  %8491 = vmatprep.subr.bf16.mxu0 %v8254
  %8492 = vmatpush1.bf16.msra.mxu0 %v8253
  %8493 = vmatprep.subr.bf16.mxu0 %v8262
  %8494 = vmatpush1.bf16.msra.mxu0 %v8261
  %8495 = vmatprep.subr.bf16.mxu0 %v8270
  %8496 = vmatpush1.bf16.msra.mxu0 %v8269
  %8497 = vmatprep.subr.bf16.mxu0 %v8278
  %8498 = vmatpush1.bf16.msra.mxu0 %v8277
  %8499 = vmatprep.subr.bf16.mxu0 %v8286
  %8500 = vmatpush1.bf16.msra.mxu0 %v8285
  %8501 = vmatprep.subr.bf16.mxu0 %v8294
  %8502 = vmatpush1.bf16.msra.mxu0 %v8293
  %8503 = vmatprep.subr.bf16.mxu0 %v8302
  %8504 = vmatpush1.bf16.msra.mxu0 %v8301
  %8505 = vmatprep.subr.bf16.mxu0 %v8310
  %8506 = vmatpush1.bf16.msra.mxu0 %v8309
  %8507 = vmatprep.subr.bf16.mxu0 %v8318
  %8508 = vmatpush1.bf16.msra.mxu0 %v8317
  %8509 = vmatprep.subr.bf16.mxu0 %v8326
  %8510 = vmatpush1.bf16.msra.mxu0 %v8325
  %8511 = vmatprep.subr.bf16.mxu0 %v8334
  %8512 = vmatpush1.bf16.msra.mxu0 %v8333
  %8513 = vmatprep.subr.bf16.mxu0 %v8342
  %8514 = vmatpush1.bf16.msra.mxu0 %v8341
  %8515 = vmatprep.subr.bf16.mxu0 %v8350
  %8516 = vmatpush1.bf16.msra.mxu0 %v8349
  %8517 = vmatprep.mubr.bf16.mxu0 %v7678
  %8518 = vmatmul.mubr.bf16.gmra.mrb[0].mxu0 %v7677
  %v8519 = vpop.f32.mrb[0].mxu0
  %v8520 = vadd.f32 0.0, %v8519
  %v8521 = vpop.f32.mrb[0].mxu0
  %v8522 = vadd.f32 0.0, %v8521
  %v8523 = vpop.f32.mrb[0].mxu0
  %v8524 = vadd.f32 0.0, %v8523
  %v8525 = vpop.f32.mrb[0].mxu0
  %v8526 = vadd.f32 0.0, %v8525
  %8527 = vdwg.mxu0
  %8528 = vmatprep.subr.bf16.mxu0 %v8232
  %8529 = vmatpush1.bf16.msra.mxu0 %v8231
  %8530 = vmatprep.subr.bf16.mxu0 %v8240
  %8531 = vmatpush1.bf16.msra.mxu0 %v8239
  %8532 = vmatprep.subr.bf16.mxu0 %v8248
  %8533 = vmatpush1.bf16.msra.mxu0 %v8247
  %8534 = vmatprep.subr.bf16.mxu0 %v8256
  %8535 = vmatpush1.bf16.msra.mxu0 %v8255
  %8536 = vmatprep.subr.bf16.mxu0 %v8264
  %8537 = vmatpush1.bf16.msra.mxu0 %v8263
  %8538 = vmatprep.subr.bf16.mxu0 %v8272
  %8539 = vmatpush1.bf16.msra.mxu0 %v8271
  %8540 = vmatprep.subr.bf16.mxu0 %v8280
  %8541 = vmatpush1.bf16.msra.mxu0 %v8279
  %8542 = vmatprep.subr.bf16.mxu0 %v8288
  %8543 = vmatpush1.bf16.msra.mxu0 %v8287
  %8544 = vmatprep.subr.bf16.mxu0 %v8296
  %8545 = vmatpush1.bf16.msra.mxu0 %v8295
  %8546 = vmatprep.subr.bf16.mxu0 %v8304
  %8547 = vmatpush1.bf16.msra.mxu0 %v8303
  %8548 = vmatprep.subr.bf16.mxu0 %v8312
  %8549 = vmatpush1.bf16.msra.mxu0 %v8311
  %8550 = vmatprep.subr.bf16.mxu0 %v8320
  %8551 = vmatpush1.bf16.msra.mxu0 %v8319
  %8552 = vmatprep.subr.bf16.mxu0 %v8328
  %8553 = vmatpush1.bf16.msra.mxu0 %v8327
  %8554 = vmatprep.subr.bf16.mxu0 %v8336
  %8555 = vmatpush1.bf16.msra.mxu0 %v8335
  %8556 = vmatprep.subr.bf16.mxu0 %v8344
  %8557 = vmatpush1.bf16.msra.mxu0 %v8343
  %8558 = vmatprep.subr.bf16.mxu0 %v8352
  %8559 = vmatpush1.bf16.msra.mxu0 %v8351
  %8560 = vmatprep.mubr.bf16.mxu0 %v7678
  %8561 = vmatmul.mubr.bf16.gmra.mrb[0].mxu0 %v7677
  %v8562 = vpop.f32.mrb[0].mxu0
  %v8563 = vadd.f32 0.0, %v8562
  %v8564 = vpop.f32.mrb[0].mxu0
  %v8565 = vadd.f32 0.0, %v8564
  %v8566 = vpop.f32.mrb[0].mxu0
  %v8567 = vadd.f32 0.0, %v8566
  %v8568 = vpop.f32.mrb[0].mxu0
  %v8569 = vadd.f32 0.0, %v8568
  %8570 = vdwg.mxu0
  %8571 = vmatprep.subr.bf16.mxu0 %v8234
  %8572 = vmatpush1.bf16.msra.mxu0 %v8233
  %8573 = vmatprep.subr.bf16.mxu0 %v8242
  %8574 = vmatpush1.bf16.msra.mxu0 %v8241
  %8575 = vmatprep.subr.bf16.mxu0 %v8250
  %8576 = vmatpush1.bf16.msra.mxu0 %v8249
  %8577 = vmatprep.subr.bf16.mxu0 %v8258
  %8578 = vmatpush1.bf16.msra.mxu0 %v8257
  %8579 = vmatprep.subr.bf16.mxu0 %v8266
  %8580 = vmatpush1.bf16.msra.mxu0 %v8265
  %8581 = vmatprep.subr.bf16.mxu0 %v8274
  %8582 = vmatpush1.bf16.msra.mxu0 %v8273
  %8583 = vmatprep.subr.bf16.mxu0 %v8282
  %8584 = vmatpush1.bf16.msra.mxu0 %v8281
  %8585 = vmatprep.subr.bf16.mxu0 %v8290
  %8586 = vmatpush1.bf16.msra.mxu0 %v8289
  %8587 = vmatprep.subr.bf16.mxu0 %v8298
  %8588 = vmatpush1.bf16.msra.mxu0 %v8297
  %8589 = vmatprep.subr.bf16.mxu0 %v8306
  %8590 = vmatpush1.bf16.msra.mxu0 %v8305
  %8591 = vmatprep.subr.bf16.mxu0 %v8314
  %8592 = vmatpush1.bf16.msra.mxu0 %v8313
  %8593 = vmatprep.subr.bf16.mxu0 %v8322
  %8594 = vmatpush1.bf16.msra.mxu0 %v8321
  %8595 = vmatprep.subr.bf16.mxu0 %v8330
  %8596 = vmatpush1.bf16.msra.mxu0 %v8329
  %8597 = vmatprep.subr.bf16.mxu0 %v8338
  %8598 = vmatpush1.bf16.msra.mxu0 %v8337
  %8599 = vmatprep.subr.bf16.mxu0 %v8346
  %8600 = vmatpush1.bf16.msra.mxu0 %v8345
  %8601 = vmatprep.subr.bf16.mxu0 %v8354
  %8602 = vmatpush1.bf16.msra.mxu0 %v8353
  %8603 = vmatprep.mubr.bf16.mxu0 %v7678
  %8604 = vmatmul.mubr.bf16.gmra.mrb[0].mxu0 %v7677
  %v8605 = vpop.f32.mrb[0].mxu0
  %v8606 = vadd.f32 0.0, %v8605
  %v8607 = vpop.f32.mrb[0].mxu0
  %v8608 = vadd.f32 0.0, %v8607
  %v8609 = vpop.f32.mrb[0].mxu0
  %v8610 = vadd.f32 0.0, %v8609
  %v8611 = vpop.f32.mrb[0].mxu0
  %v8612 = vadd.f32 0.0, %v8611
  %8613 = vdwg.mxu0
  %8614 = vmatprep.subr.bf16.mxu0 %v8236
  %8615 = vmatpush1.bf16.msra.mxu0 %v8235
  %8616 = vmatprep.subr.bf16.mxu0 %v8244
  %8617 = vmatpush1.bf16.msra.mxu0 %v8243
  %8618 = vmatprep.subr.bf16.mxu0 %v8252
  %8619 = vmatpush1.bf16.msra.mxu0 %v8251
  %8620 = vmatprep.subr.bf16.mxu0 %v8260
  %8621 = vmatpush1.bf16.msra.mxu0 %v8259
  %8622 = vmatprep.subr.bf16.mxu0 %v8268
  %8623 = vmatpush1.bf16.msra.mxu0 %v8267
  %8624 = vmatprep.subr.bf16.mxu0 %v8276
  %8625 = vmatpush1.bf16.msra.mxu0 %v8275
  %8626 = vmatprep.subr.bf16.mxu0 %v8284
  %8627 = vmatpush1.bf16.msra.mxu0 %v8283
  %8628 = vmatprep.subr.bf16.mxu0 %v8292
  %8629 = vmatpush1.bf16.msra.mxu0 %v8291
  %8630 = vmatprep.subr.bf16.mxu0 %v8300
  %8631 = vmatpush1.bf16.msra.mxu0 %v8299
  %8632 = vmatprep.subr.bf16.mxu0 %v8308
  %8633 = vmatpush1.bf16.msra.mxu0 %v8307
  %8634 = vmatprep.subr.bf16.mxu0 %v8316
  %8635 = vmatpush1.bf16.msra.mxu0 %v8315
  %8636 = vmatprep.subr.bf16.mxu0 %v8324
  %8637 = vmatpush1.bf16.msra.mxu0 %v8323
  %8638 = vmatprep.subr.bf16.mxu0 %v8332
  %8639 = vmatpush1.bf16.msra.mxu0 %v8331
  %8640 = vmatprep.subr.bf16.mxu0 %v8340
  %8641 = vmatpush1.bf16.msra.mxu0 %v8339
  %8642 = vmatprep.subr.bf16.mxu0 %v8348
  %8643 = vmatpush1.bf16.msra.mxu0 %v8347
  %8644 = vmatprep.subr.bf16.mxu0 %v8356
  %8645 = vmatpush1.bf16.msra.mxu0 %v8355
  %8646 = vmatprep.mubr.bf16.mxu0 %v7678
  %8647 = vmatmul.mubr.bf16.gmra.mrb[0].mxu0 %v7677
  %v8648 = vpop.f32.mrb[0].mxu0
  %v8649 = vadd.f32 0.0, %v8648
  %v8650 = vpop.f32.mrb[0].mxu0
  %v8651 = vadd.f32 0.0, %v8650
  %v8652 = vpop.f32.mrb[0].mxu0
  %v8653 = vadd.f32 0.0, %v8652
  %v8654 = vpop.f32.mrb[0].mxu0
  %v8655 = vadd.f32 0.0, %v8654
  %8656 = vdwg.mxu0
  %v8657 = vadd.f32 %v7701, %v8520
  %v8658 = vadd.f32 %v7702, %v8522
  %v8659 = vadd.f32 %v7703, %v8563
  %v8660 = vadd.f32 %v7704, %v8565
  %v8661 = vadd.f32 %v7705, %v8606
  %v8662 = vadd.f32 %v7706, %v8608
  %v8663 = vadd.f32 %v7707, %v8649
  %v8664 = vadd.f32 %v7708, %v8651
  %v8665 = vadd.f32 %v7709, %v8524
  %v8666 = vadd.f32 %v7710, %v8526
  %v8667 = vadd.f32 %v7711, %v8567
  %v8668 = vadd.f32 %v7712, %v8569
  %v8669 = vadd.f32 %v7713, %v8610
  %v8670 = vadd.f32 %v7714, %v8612
  %v8671 = vadd.f32 %v7715, %v8653
  %v8672 = vadd.f32 %v7716, %v8655
  %v8673 = vxor.u32 %v8657, 2147483648
  %v8674 = vxor.u32 %v8658, 2147483648
  %v8675 = vxor.u32 %v8659, 2147483648
  %v8676 = vxor.u32 %v8660, 2147483648
  %v8677 = vxor.u32 %v8661, 2147483648
  %v8678 = vxor.u32 %v8662, 2147483648
  %v8679 = vxor.u32 %v8665, 2147483648
  %v8680 = vxor.u32 %v8666, 2147483648
  %v8681 = vxor.u32 %v8667, 2147483648
  %v8682 = vxor.u32 %v8668, 2147483648
  %v8683 = vxor.u32 %v8669, 2147483648
  %v8684 = vxor.u32 %v8670, 2147483648
  %v8685 = vmul.f32 %v8673, 1.442695
  %v8686 = vpow.pop %v8685
  %v8687 = vmul.f32 %v8674, 1.442695
  %v8688 = vpow.pop %v8687
  %v8689 = vmul.f32 %v8675, 1.442695
  %v8690 = vpow.pop %v8689
  %v8691 = vmul.f32 %v8676, 1.442695
  %v8692 = vpow.pop %v8691
  %v8693 = vmul.f32 %v8677, 1.442695
  %v8694 = vpow.pop %v8693
  %v8695 = vmul.f32 %v8678, 1.442695
  %v8696 = vpow.pop %v8695
  %v8697 = vmul.f32 %v8679, 1.442695
  %v8698 = vpow.pop %v8697
  %v8699 = vmul.f32 %v8680, 1.442695
  %v8700 = vpow.pop %v8699
  %v8701 = vmul.f32 %v8681, 1.442695
  %v8702 = vpow.pop %v8701
  %v8703 = vmul.f32 %v8682, 1.442695
  %v8704 = vpow.pop %v8703
  %v8705 = vmul.f32 %v8683, 1.442695
  %v8706 = vpow.pop %v8705
  %v8707 = vmul.f32 %v8684, 1.442695
  %v8708 = vpow.pop %v8707
  %v8709 = vadd.f32 %v8686, 1.0
  %v8710 = vadd.f32 %v8688, 1.0
  %v8711 = vadd.f32 %v8690, 1.0
  %v8712 = vadd.f32 %v8692, 1.0
  %v8713 = vadd.f32 %v8694, 1.0
  %v8714 = vadd.f32 %v8696, 1.0
  %v8715 = vadd.f32 %v8698, 1.0
  %v8716 = vadd.f32 %v8700, 1.0
  %v8717 = vadd.f32 %v8702, 1.0
  %v8718 = vadd.f32 %v8704, 1.0
  %v8719 = vadd.f32 %v8706, 1.0
  %v8720 = vadd.f32 %v8708, 1.0
  %v8721 = vrcp.pop %v8709
  %v8722 = vmul.f32 1.0, %v8721
  %v8723 = vrcp.pop %v8710
  %v8724 = vmul.f32 1.0, %v8723
  %v8725 = vrcp.pop %v8711
  %v8726 = vmul.f32 1.0, %v8725
  %v8727 = vrcp.pop %v8712
  %v8728 = vmul.f32 1.0, %v8727
  %v8729 = vrcp.pop %v8713
  %v8730 = vmul.f32 1.0, %v8729
  %v8731 = vrcp.pop %v8714
  %v8732 = vmul.f32 1.0, %v8731
  %v8733 = vrcp.pop %v8715
  %v8734 = vmul.f32 1.0, %v8733
  %v8735 = vrcp.pop %v8716
  %v8736 = vmul.f32 1.0, %v8735
  %v8737 = vrcp.pop %v8717
  %v8738 = vmul.f32 1.0, %v8737
  %v8739 = vrcp.pop %v8718
  %v8740 = vmul.f32 1.0, %v8739
  %v8741 = vrcp.pop %v8719
  %v8742 = vmul.f32 1.0, %v8741
  %v8743 = vrcp.pop %v8720
  %v8744 = vmul.f32 1.0, %v8743
  %v8745 = vtanh.pop %v8663
  %v8746 = vtanh.pop %v8664
  %v8747 = vtanh.pop %v8671
  %v8748 = vtanh.pop %v8672
  %v8749 = vmul.f32 %v8726, %v7665
  %v8750 = vmul.f32 %v8728, %v7666
  %v8751 = vmul.f32 %v8738, %v7667
  %v8752 = vmul.f32 %v8740, %v7668
  %v8753 = vmul.f32 %v8722, %v8745
  %v8754 = vmul.f32 %v8724, %v8746
  %v8755 = vmul.f32 %v8734, %v8747
  %v8756 = vmul.f32 %v8736, %v8748
  %v8757 = vadd.f32 %v8749, %v8753
  %v8758 = vadd.f32 %v8750, %v8754
  %v8759 = vadd.f32 %v8751, %v8755
  %v8760 = vadd.f32 %v8752, %v8756
  %v8761 = vtanh.pop %v8757
  %v8762 = vtanh.pop %v8758
  %v8763 = vtanh.pop %v8759
  %v8764 = vtanh.pop %v8760
  %v8765 = vmul.f32 %v8730, %v8761
  %v8766 = vmul.f32 %v8732, %v8762
  %v8767 = vmul.f32 %v8742, %v8763
  %v8768 = vmul.f32 %v8744, %v8764
  %v8769 = vpack.c.bf16 %v8767, %v8765
  %v8770 = vpack.c.bf16 %v8768, %v8766
  %v8773 = vunpack.c.l.b16 %v8769
  %v8774 = vunpack.c.l.b16 %v8770
  %v8775 = vunpack.c.h.b16 %v8769
  %v8776 = vunpack.c.h.b16 %v8770
  %v8777 = vpack.c.b16 %v8774, %v8773
  %v8778 = vpack.c.b16 %v8776, %v8775
  %s8781 = scalar_lea.vmem %s4, 112
  %8782 = vst [vmem:[%s8781] sm:$0xff] %v8777
  %8783 = vst [vmem:[%s8781 + $0x8] sm:$0xff] %v8778
  %8784 = vst [vmem:[%s5] sm:$0xff] %v8765
  %8785 = vst [vmem:[%s5 + $0x8] sm:$0xff] %v8766
  %8786 = vst [vmem:[%s5 + $0x10] sm:$0xff] %v8767
  %8787 = vst [vmem:[%s5 + $0x18] sm:$0xff] %v8768
  %8788 = vst [vmem:[%s6] sm:$0xff] %v8757
  %8789 = vst [vmem:[%s6 + $0x8] sm:$0xff] %v8758
  %8790 = vst [vmem:[%s6 + $0x10] sm:$0xff] %v8759
  %8791 = vst [vmem:[%s6 + $0x18] sm:$0xff] %v8760
  // Predicated region
  $region22: #{char_lstm_forward.4} parent=0 // pred_check
    _
  $region23: #{char_lstm_forward.4} parent=0 // pred_check_branch
    %8793 = sbr.rel (0) target = $region25
  $region24: #{char_lstm_forward.4} parent=0 // pred_region
    _
  $region25: #{char_lstm_forward.4} parent=0 // pred_fallthru
    _
  // Predicated region
  $region26: #{char_lstm_forward.4} parent=0 // pred_check
    _
  $region27: #{char_lstm_forward.4} parent=0 // pred_check_branch
    %8795 = sbr.rel (0) target = $region29
  $region28: #{char_lstm_forward.4} parent=0 // pred_region
    _
  $region29: #{char_lstm_forward.4} parent=0 // pred_fallthru
    _
  // Predicated region
  $region30: #{char_lstm_forward.4} parent=0 // pred_check
    _
  $region31: #{char_lstm_forward.4} parent=0 // pred_check_branch
    %8797 = sbr.rel (0) target = $region33
  $region32: #{char_lstm_forward.4} parent=0 // pred_region
    _
  $region33: #{char_lstm_forward.4} parent=0 // pred_fallthru
    _
  // Predicated region
  $region34: #{char_lstm_forward.4} parent=0 // pred_check
    _
  $region35: #{char_lstm_forward.4} parent=0 // pred_check_branch
    %8799 = sbr.rel (0) target = $region37
  $region36: #{char_lstm_forward.4} parent=0 // pred_region
    _
  $region37: #{char_lstm_forward.4} parent=0 // pred_fallthru
    _
  // Predicated region
  $region38: #{char_lstm_forward.4} parent=0 // pred_check
    _
  $region39: #{char_lstm_forward.4} parent=0 // pred_check_branch
    %8801 = sbr.rel (0) target = $region41
  $region40: #{char_lstm_forward.4} parent=0 // pred_region
    _
  $region41: #{char_lstm_forward.4} parent=0 // pred_fallthru
    _
  // Predicated region
  $region42: #{char_lstm_forward.4} parent=0 // pred_check
    _
  $region43: #{char_lstm_forward.4} parent=0 // pred_check_branch
    %8803 = sbr.rel (0) target = $region45
  $region44: #{char_lstm_forward.4} parent=0 // pred_region
    _
  $region45: #{char_lstm_forward.4} parent=0 // pred_fallthru
    _

</llo_original>
